<compile_context>
chip_gen: v5e
topology: v5e:2x2
jax: 0.10.0
libtpu: 0.0.40
codegen_flags: <defaults>
</compile_context>

<pallas_src>
import jax
import jax.numpy as jnp
from jax import lax
from jax.experimental import pallas as pl
from jax.experimental.pallas import tpu as pltpu


def fused_feature_extractor_kernel(xpad_ref, w1_ref, b1_ref, w2_ref, b2_ref,
                                   wfc_ref, bfc_ref, o_ref, h1pad_ref):
    # xpad_ref:  (N, H+2, W+2, Cin)  spatially zero-padded NHWC input
    # w1_ref:    (9, Cin, C1)        conv1 weight, one (Cin, C1) matrix per tap
    # w2_ref:    (9, C1, C1)         conv2 weight, per-tap
    # wfc_ref:   (C1, Dout); b*_ref: (1, C)
    # o_ref:     (N, H, W, Dout)
    # h1pad_ref: (N, H+2, W+2, C1)   VMEM scratch: conv1 output with zero halo
    N, Hp, Wp, Cin = xpad_ref.shape
    H, W = Hp - 2, Wp - 2
    C1 = b1_ref.shape[-1]
    Dout = bfc_ref.shape[-1]
    M = N * H * W

    taps = [(dy, dx) for dy in range(3) for dx in range(3)]

    # ---- conv1 + bias + ReLU: 9 accumulate MXU matmuls over shifted taps ----
    acc1 = jnp.zeros((M, C1), jnp.float32)
    for t, (dy, dx) in enumerate(taps):
        tap = xpad_ref[:, dy:dy + H, dx:dx + W, :].reshape(M, Cin)
        acc1 = acc1 + jnp.dot(tap, w1_ref[t],
                              preferred_element_type=jnp.float32)
    h1 = jnp.maximum(acc1 + b1_ref[...], 0.0)                    # (M, C1)

    # Stage conv1's output on-chip with a zero halo (= SAME padding for conv2).
    h1pad_ref[...] = jnp.zeros_like(h1pad_ref)
    h1pad_ref[:, 1:H + 1, 1:W + 1, :] = h1.reshape(N, H, W, C1)

    # ---- conv2 + bias + ReLU ----
    acc2 = jnp.zeros((M, C1), jnp.float32)
    for t, (dy, dx) in enumerate(taps):
        tap = h1pad_ref[:, dy:dy + H, dx:dx + W, :].reshape(M, C1)
        acc2 = acc2 + jnp.dot(tap, w2_ref[t],
                              preferred_element_type=jnp.float32)
    h2 = jnp.maximum(acc2 + b2_ref[...], 0.0)                    # (M, C1)

    # ---- fc: Linear(C1 -> Dout), fused ----
    out = jnp.dot(h2, wfc_ref[...],
                  preferred_element_type=jnp.float32) + bfc_ref[...]
    o_ref[...] = out.reshape(N, H, W, Dout).astype(o_ref.dtype)


def feature_extractor_forward(x_nchw, params):
    """x_nchw: (N, input_dim, H, W) float32. Returns (N, H, W, 128) float32."""
    w1, b1, w2, b2, wfc, bfc = params
    N, Cin, H, W = x_nchw.shape
    C1 = b1.shape[-1]
    Dout = bfc.shape[-1]

    # NCHW -> NHWC, then spatial zero-pad up front so the kernel does no
    # masked interior stores for the input.
    x = jnp.transpose(x_nchw, (0, 2, 3, 1))
    x_pad = jnp.pad(x, ((0, 0), (1, 1), (1, 1), (0, 0)))
    # HWIO conv weights -> per-tap (Cin, Cout) matrices (tap index = 3*dy + dx).
    w1t = w1.reshape(9, Cin, C1)
    w2t = w2.reshape(9, C1, C1)

    return pl.pallas_call(
        fused_feature_extractor_kernel,
        out_shape=jax.ShapeDtypeStruct((N, H, W, Dout), jnp.float32),
        grid=(1,),
        in_specs=[
            pl.BlockSpec((N, H + 2, W + 2, Cin), lambda i: (0, 0, 0, 0)),
            pl.BlockSpec((9, Cin, C1), lambda i: (0, 0, 0)),
            pl.BlockSpec((1, C1), lambda i: (0, 0)),
            pl.BlockSpec((9, C1, C1), lambda i: (0, 0, 0)),
            pl.BlockSpec((1, C1), lambda i: (0, 0)),
            pl.BlockSpec((C1, Dout), lambda i: (0, 0)),
            pl.BlockSpec((1, Dout), lambda i: (0, 0)),
        ],
        out_specs=pl.BlockSpec((N, H, W, Dout), lambda i: (0, 0, 0, 0)),
        scratch_shapes=[
            pltpu.VMEM((N, H + 2, W + 2, C1), jnp.float32),   # padded conv1 out
        ],
        compiler_params=pltpu.CompilerParams(
            dimension_semantics=("arbitrary",)),
    )(x_pad, w1t, b1, w2t, b2, wfc, bfc)


def _reference_forward(x_nchw, params):
    """Pure-JAX reference matching the PyTorch forward semantics."""
    w1, b1, w2, b2, wfc, bfc = params
    hp = lax.Precision.HIGHEST
    x = jnp.transpose(x_nchw, (0, 2, 3, 1))                      # NHWC
    dn = ("NHWC", "HWIO", "NHWC")
    h1 = lax.conv_general_dilated(x, w1, (1, 1), "SAME",
                                  dimension_numbers=dn, precision=hp)
    h1 = jnp.maximum(h1 + b1.reshape(1, 1, 1, -1), 0.0)
    h2 = lax.conv_general_dilated(h1, w2, (1, 1), "SAME",
                                  dimension_numbers=dn, precision=hp)
    h2 = jnp.maximum(h2 + b2.reshape(1, 1, 1, -1), 0.0)
    return (jnp.einsum("nhwc,cd->nhwd", h2, wfc, precision=hp)
            + bfc.reshape(1, 1, 1, -1))


def init_params(key, input_dim=66):
    """Deterministic synthetic parameters (shapes follow the module __init__)."""
    k = jax.random.split(key, 6)
    w1 = jax.random.normal(k[0], (3, 3, input_dim, 64), jnp.float32) * 0.05  # HWIO
    b1 = jax.random.normal(k[1], (1, 64), jnp.float32) * 0.05
    w2 = jax.random.normal(k[2], (3, 3, 64, 64), jnp.float32) * 0.05
    b2 = jax.random.normal(k[3], (1, 64), jnp.float32) * 0.05
    wfc = jax.random.normal(k[4], (64, 128), jnp.float32) * 0.05             # (in, out)
    bfc = jax.random.normal(k[5], (1, 128), jnp.float32) * 0.05
    return (w1, b1, w2, b2, wfc, bfc)


if __name__ == "__main__":
    N, C, H, W = 2, 66, 16, 16                   # input_dim=66 (module default)
    root = jax.random.PRNGKey(0)
    pkey, xkey = jax.random.split(root)
    params = init_params(pkey, input_dim=C)
    x = jax.random.normal(xkey, (N, C, H, W), jnp.float32)

    out = jax.block_until_ready(feature_extractor_forward(x, params))  # embed_ln unused
    ref = jax.block_until_ready(_reference_forward(x, params))

    assert out.shape == (N, H, W, 128), out.shape
    assert jnp.allclose(out, ref, atol=1e-3, rtol=1e-3), float(
        jnp.max(jnp.abs(out - ref)))
    print("KERNEL_OK")
</pallas_src>

<mosaic_0001>
module attributes {stable_mosaic.version = 11 : i64} {
  func.func @fused_feature_extractor_kernel(%arg0: i32, %arg1: memref<2x18x18x66xf32, #tpu.memory_space<vmem>>, %arg2: memref<9x66x64xf32, #tpu.memory_space<vmem>>, %arg3: memref<1x64xf32, #tpu.memory_space<vmem>>, %arg4: memref<9x64x64xf32, #tpu.memory_space<vmem>>, %arg5: memref<1x64xf32, #tpu.memory_space<vmem>>, %arg6: memref<64x128xf32, #tpu.memory_space<vmem>>, %arg7: memref<1x128xf32, #tpu.memory_space<vmem>>, %arg8: memref<2x16x16x128xf32, #tpu.memory_space<vmem>>, %arg9: memref<2x18x18x64xf32, #tpu.memory_space<vmem>>) attributes {dimension_semantics = [#tpu.dimension_semantics<arbitrary>], iteration_bounds = array<i64: 1>, scalar_prefetch = 0 : i64, scratch_operands = 1 : i64, tpu.core_type = #tpu.core_type<tc>, window_params = [{pipeline_mode = #tpu.pipeline_mode<synchronous>, transform_indices = @transform_0, window_bounds = array<i64: 2, 18, 18, 66>}, {pipeline_mode = #tpu.pipeline_mode<synchronous>, transform_indices = @transform_1, window_bounds = array<i64: 9, 66, 64>}, {pipeline_mode = #tpu.pipeline_mode<synchronous>, transform_indices = @transform_2, window_bounds = array<i64: 1, 64>}, {pipeline_mode = #tpu.pipeline_mode<synchronous>, transform_indices = @transform_3, window_bounds = array<i64: 9, 64, 64>}, {pipeline_mode = #tpu.pipeline_mode<synchronous>, transform_indices = @transform_4, window_bounds = array<i64: 1, 64>}, {pipeline_mode = #tpu.pipeline_mode<synchronous>, transform_indices = @transform_5, window_bounds = array<i64: 64, 128>}, {pipeline_mode = #tpu.pipeline_mode<synchronous>, transform_indices = @transform_6, window_bounds = array<i64: 1, 128>}, {pipeline_mode = #tpu.pipeline_mode<synchronous>, transform_indices = @transform_7, window_bounds = array<i64: 2, 16, 16, 128>}]} {
    %cst = arith.constant 0.000000e+00 : f32
    %0 = vector.broadcast %cst : f32 to vector<512x64xf32>
    %c0 = arith.constant 0 : index
    %c0_0 = arith.constant 0 : index
    %c0_1 = arith.constant 0 : index
    %c0_2 = arith.constant 0 : index
    %1 = vector.load %arg1[%c0, %c0_0, %c0_1, %c0_2] : memref<2x18x18x66xf32, #tpu.memory_space<vmem>>, vector<2x16x16x66xf32>
    %2 = vector.shape_cast %1 : vector<2x16x16x66xf32> to vector<512x66xf32>
    %c0_3 = arith.constant 0 : index
    %c0_4 = arith.constant 0 : index
    %c0_5 = arith.constant 0 : index
    %3 = vector.load %arg2[%c0_3, %c0_4, %c0_5] : memref<9x66x64xf32, #tpu.memory_space<vmem>>, vector<1x66x64xf32>
    %4 = vector.shape_cast %3 : vector<1x66x64xf32> to vector<66x64xf32>
    %cst_6 = arith.constant dense<0.000000e+00> : vector<512x64xf32>
    %5 = tpu.matmul %2, %4, %cst_6 {dimension_numbers = #tpu.dot_dimension_numbers<[1], [0], [0], [1], [0, 0, 1, 1], [], []>} : vector<512x66xf32>, vector<66x64xf32>, vector<512x64xf32> -> vector<512x64xf32>
    %6 = arith.addf %0, %5 : vector<512x64xf32>
    %c0_7 = arith.constant 0 : index
    %c0_8 = arith.constant 0 : index
    %c1 = arith.constant 1 : index
    %c0_9 = arith.constant 0 : index
    %7 = vector.load %arg1[%c0_7, %c0_8, %c1, %c0_9] : memref<2x18x18x66xf32, #tpu.memory_space<vmem>>, vector<2x16x16x66xf32>
    %8 = vector.shape_cast %7 : vector<2x16x16x66xf32> to vector<512x66xf32>
    %c1_10 = arith.constant 1 : index
    %c0_11 = arith.constant 0 : index
    %c0_12 = arith.constant 0 : index
    %9 = vector.load %arg2[%c1_10, %c0_11, %c0_12] : memref<9x66x64xf32, #tpu.memory_space<vmem>>, vector<1x66x64xf32>
    %10 = vector.shape_cast %9 : vector<1x66x64xf32> to vector<66x64xf32>
    %cst_13 = arith.constant dense<0.000000e+00> : vector<512x64xf32>
    %11 = tpu.matmul %8, %10, %cst_13 {dimension_numbers = #tpu.dot_dimension_numbers<[1], [0], [0], [1], [0, 0, 1, 1], [], []>} : vector<512x66xf32>, vector<66x64xf32>, vector<512x64xf32> -> vector<512x64xf32>
    %12 = arith.addf %6, %11 : vector<512x64xf32>
    %c0_14 = arith.constant 0 : index
    %c0_15 = arith.constant 0 : index
    %c2 = arith.constant 2 : index
    %c0_16 = arith.constant 0 : index
    %13 = vector.load %arg1[%c0_14, %c0_15, %c2, %c0_16] : memref<2x18x18x66xf32, #tpu.memory_space<vmem>>, vector<2x16x16x66xf32>
    %14 = vector.shape_cast %13 : vector<2x16x16x66xf32> to vector<512x66xf32>
    %c2_17 = arith.constant 2 : index
    %c0_18 = arith.constant 0 : index
    %c0_19 = arith.constant 0 : index
    %15 = vector.load %arg2[%c2_17, %c0_18, %c0_19] : memref<9x66x64xf32, #tpu.memory_space<vmem>>, vector<1x66x64xf32>
    %16 = vector.shape_cast %15 : vector<1x66x64xf32> to vector<66x64xf32>
    %cst_20 = arith.constant dense<0.000000e+00> : vector<512x64xf32>
    %17 = tpu.matmul %14, %16, %cst_20 {dimension_numbers = #tpu.dot_dimension_numbers<[1], [0], [0], [1], [0, 0, 1, 1], [], []>} : vector<512x66xf32>, vector<66x64xf32>, vector<512x64xf32> -> vector<512x64xf32>
    %18 = arith.addf %12, %17 : vector<512x64xf32>
    %c0_21 = arith.constant 0 : index
    %c1_22 = arith.constant 1 : index
    %c0_23 = arith.constant 0 : index
    %c0_24 = arith.constant 0 : index
    %19 = vector.load %arg1[%c0_21, %c1_22, %c0_23, %c0_24] : memref<2x18x18x66xf32, #tpu.memory_space<vmem>>, vector<2x16x16x66xf32>
    %20 = vector.shape_cast %19 : vector<2x16x16x66xf32> to vector<512x66xf32>
    %c3 = arith.constant 3 : index
    %c0_25 = arith.constant 0 : index
    %c0_26 = arith.constant 0 : index
    %21 = vector.load %arg2[%c3, %c0_25, %c0_26] : memref<9x66x64xf32, #tpu.memory_space<vmem>>, vector<1x66x64xf32>
    %22 = vector.shape_cast %21 : vector<1x66x64xf32> to vector<66x64xf32>
    %cst_27 = arith.constant dense<0.000000e+00> : vector<512x64xf32>
    %23 = tpu.matmul %20, %22, %cst_27 {dimension_numbers = #tpu.dot_dimension_numbers<[1], [0], [0], [1], [0, 0, 1, 1], [], []>} : vector<512x66xf32>, vector<66x64xf32>, vector<512x64xf32> -> vector<512x64xf32>
    %24 = arith.addf %18, %23 : vector<512x64xf32>
    %c0_28 = arith.constant 0 : index
    %c1_29 = arith.constant 1 : index
    %c1_30 = arith.constant 1 : index
    %c0_31 = arith.constant 0 : index
    %25 = vector.load %arg1[%c0_28, %c1_29, %c1_30, %c0_31] : memref<2x18x18x66xf32, #tpu.memory_space<vmem>>, vector<2x16x16x66xf32>
    %26 = vector.shape_cast %25 : vector<2x16x16x66xf32> to vector<512x66xf32>
    %c4 = arith.constant 4 : index
    %c0_32 = arith.constant 0 : index
    %c0_33 = arith.constant 0 : index
    %27 = vector.load %arg2[%c4, %c0_32, %c0_33] : memref<9x66x64xf32, #tpu.memory_space<vmem>>, vector<1x66x64xf32>
    %28 = vector.shape_cast %27 : vector<1x66x64xf32> to vector<66x64xf32>
    %cst_34 = arith.constant dense<0.000000e+00> : vector<512x64xf32>
    %29 = tpu.matmul %26, %28, %cst_34 {dimension_numbers = #tpu.dot_dimension_numbers<[1], [0], [0], [1], [0, 0, 1, 1], [], []>} : vector<512x66xf32>, vector<66x64xf32>, vector<512x64xf32> -> vector<512x64xf32>
    %30 = arith.addf %24, %29 : vector<512x64xf32>
    %c0_35 = arith.constant 0 : index
    %c1_36 = arith.constant 1 : index
    %c2_37 = arith.constant 2 : index
    %c0_38 = arith.constant 0 : index
    %31 = vector.load %arg1[%c0_35, %c1_36, %c2_37, %c0_38] : memref<2x18x18x66xf32, #tpu.memory_space<vmem>>, vector<2x16x16x66xf32>
    %32 = vector.shape_cast %31 : vector<2x16x16x66xf32> to vector<512x66xf32>
    %c5 = arith.constant 5 : index
    %c0_39 = arith.constant 0 : index
    %c0_40 = arith.constant 0 : index
    %33 = vector.load %arg2[%c5, %c0_39, %c0_40] : memref<9x66x64xf32, #tpu.memory_space<vmem>>, vector<1x66x64xf32>
    %34 = vector.shape_cast %33 : vector<1x66x64xf32> to vector<66x64xf32>
    %cst_41 = arith.constant dense<0.000000e+00> : vector<512x64xf32>
    %35 = tpu.matmul %32, %34, %cst_41 {dimension_numbers = #tpu.dot_dimension_numbers<[1], [0], [0], [1], [0, 0, 1, 1], [], []>} : vector<512x66xf32>, vector<66x64xf32>, vector<512x64xf32> -> vector<512x64xf32>
    %36 = arith.addf %30, %35 : vector<512x64xf32>
    %c0_42 = arith.constant 0 : index
    %c2_43 = arith.constant 2 : index
    %c0_44 = arith.constant 0 : index
    %c0_45 = arith.constant 0 : index
    %37 = vector.load %arg1[%c0_42, %c2_43, %c0_44, %c0_45] : memref<2x18x18x66xf32, #tpu.memory_space<vmem>>, vector<2x16x16x66xf32>
    %38 = vector.shape_cast %37 : vector<2x16x16x66xf32> to vector<512x66xf32>
    %c6 = arith.constant 6 : index
    %c0_46 = arith.constant 0 : index
    %c0_47 = arith.constant 0 : index
    %39 = vector.load %arg2[%c6, %c0_46, %c0_47] : memref<9x66x64xf32, #tpu.memory_space<vmem>>, vector<1x66x64xf32>
    %40 = vector.shape_cast %39 : vector<1x66x64xf32> to vector<66x64xf32>
    %cst_48 = arith.constant dense<0.000000e+00> : vector<512x64xf32>
    %41 = tpu.matmul %38, %40, %cst_48 {dimension_numbers = #tpu.dot_dimension_numbers<[1], [0], [0], [1], [0, 0, 1, 1], [], []>} : vector<512x66xf32>, vector<66x64xf32>, vector<512x64xf32> -> vector<512x64xf32>
    %42 = arith.addf %36, %41 : vector<512x64xf32>
    %c0_49 = arith.constant 0 : index
    %c2_50 = arith.constant 2 : index
    %c1_51 = arith.constant 1 : index
    %c0_52 = arith.constant 0 : index
    %43 = vector.load %arg1[%c0_49, %c2_50, %c1_51, %c0_52] : memref<2x18x18x66xf32, #tpu.memory_space<vmem>>, vector<2x16x16x66xf32>
    %44 = vector.shape_cast %43 : vector<2x16x16x66xf32> to vector<512x66xf32>
    %c7 = arith.constant 7 : index
    %c0_53 = arith.constant 0 : index
    %c0_54 = arith.constant 0 : index
    %45 = vector.load %arg2[%c7, %c0_53, %c0_54] : memref<9x66x64xf32, #tpu.memory_space<vmem>>, vector<1x66x64xf32>
    %46 = vector.shape_cast %45 : vector<1x66x64xf32> to vector<66x64xf32>
    %cst_55 = arith.constant dense<0.000000e+00> : vector<512x64xf32>
    %47 = tpu.matmul %44, %46, %cst_55 {dimension_numbers = #tpu.dot_dimension_numbers<[1], [0], [0], [1], [0, 0, 1, 1], [], []>} : vector<512x66xf32>, vector<66x64xf32>, vector<512x64xf32> -> vector<512x64xf32>
    %48 = arith.addf %42, %47 : vector<512x64xf32>
    %c0_56 = arith.constant 0 : index
    %c2_57 = arith.constant 2 : index
    %c2_58 = arith.constant 2 : index
    %c0_59 = arith.constant 0 : index
    %49 = vector.load %arg1[%c0_56, %c2_57, %c2_58, %c0_59] : memref<2x18x18x66xf32, #tpu.memory_space<vmem>>, vector<2x16x16x66xf32>
    %50 = vector.shape_cast %49 : vector<2x16x16x66xf32> to vector<512x66xf32>
    %c8 = arith.constant 8 : index
    %c0_60 = arith.constant 0 : index
    %c0_61 = arith.constant 0 : index
    %51 = vector.load %arg2[%c8, %c0_60, %c0_61] : memref<9x66x64xf32, #tpu.memory_space<vmem>>, vector<1x66x64xf32>
    %52 = vector.shape_cast %51 : vector<1x66x64xf32> to vector<66x64xf32>
    %cst_62 = arith.constant dense<0.000000e+00> : vector<512x64xf32>
    %53 = tpu.matmul %50, %52, %cst_62 {dimension_numbers = #tpu.dot_dimension_numbers<[1], [0], [0], [1], [0, 0, 1, 1], [], []>} : vector<512x66xf32>, vector<66x64xf32>, vector<512x64xf32> -> vector<512x64xf32>
    %54 = arith.addf %48, %53 : vector<512x64xf32>
    %c0_63 = arith.constant 0 : index
    %c0_64 = arith.constant 0 : index
    %55 = vector.load %arg3[%c0_63, %c0_64] : memref<1x64xf32, #tpu.memory_space<vmem>>, vector<1x64xf32>
    %56 = vector.broadcast %55 : vector<1x64xf32> to vector<512x64xf32>
    %57 = arith.addf %54, %56 : vector<512x64xf32>
    %cst_65 = arith.constant 0.000000e+00 : f32
    %58 = vector.broadcast %cst_65 : f32 to vector<512x64xf32>
    %59 = arith.maximumf %57, %58 : vector<512x64xf32>
    %cst_66 = arith.constant 0.000000e+00 : f32
    %60 = vector.broadcast %cst_66 : f32 to vector<2x18x18x64xf32>
    %c0_67 = arith.constant 0 : index
    %c0_68 = arith.constant 0 : index
    %c0_69 = arith.constant 0 : index
    %c0_70 = arith.constant 0 : index
    %61 = vector.load %arg9[%c0_67, %c0_68, %c0_69, %c0_70] : memref<2x18x18x64xf32, #tpu.memory_space<vmem>>, vector<2x18x18x64xf32>
    tpu.vector_store %arg9[%c0_67, %c0_68, %c0_69, %c0_70], %60 {strides = array<i32>} : memref<2x18x18x64xf32, #tpu.memory_space<vmem>>, vector<2x18x18x64xf32>,
    %62 = vector.shape_cast %59 : vector<512x64xf32> to vector<2x16x16x64xf32>
    %c0_71 = arith.constant 0 : index
    %c1_72 = arith.constant 1 : index
    %c1_73 = arith.constant 1 : index
    %c0_74 = arith.constant 0 : index
    %63 = vector.load %arg9[%c0_71, %c1_72, %c1_73, %c0_74] : memref<2x18x18x64xf32, #tpu.memory_space<vmem>>, vector<2x16x16x64xf32>
    tpu.vector_store %arg9[%c0_71, %c1_72, %c1_73, %c0_74], %62 {strides = array<i32>} : memref<2x18x18x64xf32, #tpu.memory_space<vmem>>, vector<2x16x16x64xf32>,
    %cst_75 = arith.constant 0.000000e+00 : f32
    %64 = vector.broadcast %cst_75 : f32 to vector<512x64xf32>
    %c0_76 = arith.constant 0 : index
    %c0_77 = arith.constant 0 : index
    %c0_78 = arith.constant 0 : index
    %c0_79 = arith.constant 0 : index
    %65 = vector.load %arg9[%c0_76, %c0_77, %c0_78, %c0_79] : memref<2x18x18x64xf32, #tpu.memory_space<vmem>>, vector<2x16x16x64xf32>
    %66 = vector.shape_cast %65 : vector<2x16x16x64xf32> to vector<512x64xf32>
    %c0_80 = arith.constant 0 : index
    %c0_81 = arith.constant 0 : index
    %c0_82 = arith.constant 0 : index
    %67 = vector.load %arg4[%c0_80, %c0_81, %c0_82] : memref<9x64x64xf32, #tpu.memory_space<vmem>>, vector<1x64x64xf32>
    %68 = vector.shape_cast %67 : vector<1x64x64xf32> to vector<64x64xf32>
    %cst_83 = arith.constant dense<0.000000e+00> : vector<512x64xf32>
    %69 = tpu.matmul %66, %68, %cst_83 {dimension_numbers = #tpu.dot_dimension_numbers<[1], [0], [0], [1], [0, 0, 1, 1], [], []>} : vector<512x64xf32>, vector<64x64xf32>, vector<512x64xf32> -> vector<512x64xf32>
    %70 = arith.addf %64, %69 : vector<512x64xf32>
    %c0_84 = arith.constant 0 : index
    %c0_85 = arith.constant 0 : index
    %c1_86 = arith.constant 1 : index
    %c0_87 = arith.constant 0 : index
    %71 = vector.load %arg9[%c0_84, %c0_85, %c1_86, %c0_87] : memref<2x18x18x64xf32, #tpu.memory_space<vmem>>, vector<2x16x16x64xf32>
    %72 = vector.shape_cast %71 : vector<2x16x16x64xf32> to vector<512x64xf32>
    %c1_88 = arith.constant 1 : index
    %c0_89 = arith.constant 0 : index
    %c0_90 = arith.constant 0 : index
    %73 = vector.load %arg4[%c1_88, %c0_89, %c0_90] : memref<9x64x64xf32, #tpu.memory_space<vmem>>, vector<1x64x64xf32>
    %74 = vector.shape_cast %73 : vector<1x64x64xf32> to vector<64x64xf32>
    %cst_91 = arith.constant dense<0.000000e+00> : vector<512x64xf32>
    %75 = tpu.matmul %72, %74, %cst_91 {dimension_numbers = #tpu.dot_dimension_numbers<[1], [0], [0], [1], [0, 0, 1, 1], [], []>} : vector<512x64xf32>, vector<64x64xf32>, vector<512x64xf32> -> vector<512x64xf32>
    %76 = arith.addf %70, %75 : vector<512x64xf32>
    %c0_92 = arith.constant 0 : index
    %c0_93 = arith.constant 0 : index
    %c2_94 = arith.constant 2 : index
    %c0_95 = arith.constant 0 : index
    %77 = vector.load %arg9[%c0_92, %c0_93, %c2_94, %c0_95] : memref<2x18x18x64xf32, #tpu.memory_space<vmem>>, vector<2x16x16x64xf32>
    %78 = vector.shape_cast %77 : vector<2x16x16x64xf32> to vector<512x64xf32>
    %c2_96 = arith.constant 2 : index
    %c0_97 = arith.constant 0 : index
    %c0_98 = arith.constant 0 : index
    %79 = vector.load %arg4[%c2_96, %c0_97, %c0_98] : memref<9x64x64xf32, #tpu.memory_space<vmem>>, vector<1x64x64xf32>
    %80 = vector.shape_cast %79 : vector<1x64x64xf32> to vector<64x64xf32>
    %cst_99 = arith.constant dense<0.000000e+00> : vector<512x64xf32>
    %81 = tpu.matmul %78, %80, %cst_99 {dimension_numbers = #tpu.dot_dimension_numbers<[1], [0], [0], [1], [0, 0, 1, 1], [], []>} : vector<512x64xf32>, vector<64x64xf32>, vector<512x64xf32> -> vector<512x64xf32>
    %82 = arith.addf %76, %81 : vector<512x64xf32>
    %c0_100 = arith.constant 0 : index
    %c1_101 = arith.constant 1 : index
    %c0_102 = arith.constant 0 : index
    %c0_103 = arith.constant 0 : index
    %83 = vector.load %arg9[%c0_100, %c1_101, %c0_102, %c0_103] : memref<2x18x18x64xf32, #tpu.memory_space<vmem>>, vector<2x16x16x64xf32>
    %84 = vector.shape_cast %83 : vector<2x16x16x64xf32> to vector<512x64xf32>
    %c3_104 = arith.constant 3 : index
    %c0_105 = arith.constant 0 : index
    %c0_106 = arith.constant 0 : index
    %85 = vector.load %arg4[%c3_104, %c0_105, %c0_106] : memref<9x64x64xf32, #tpu.memory_space<vmem>>, vector<1x64x64xf32>
    %86 = vector.shape_cast %85 : vector<1x64x64xf32> to vector<64x64xf32>
    %cst_107 = arith.constant dense<0.000000e+00> : vector<512x64xf32>
    %87 = tpu.matmul %84, %86, %cst_107 {dimension_numbers = #tpu.dot_dimension_numbers<[1], [0], [0], [1], [0, 0, 1, 1], [], []>} : vector<512x64xf32>, vector<64x64xf32>, vector<512x64xf32> -> vector<512x64xf32>
    %88 = arith.addf %82, %87 : vector<512x64xf32>
    %c0_108 = arith.constant 0 : index
    %c1_109 = arith.constant 1 : index
    %c1_110 = arith.constant 1 : index
    %c0_111 = arith.constant 0 : index
    %89 = vector.load %arg9[%c0_108, %c1_109, %c1_110, %c0_111] : memref<2x18x18x64xf32, #tpu.memory_space<vmem>>, vector<2x16x16x64xf32>
    %90 = vector.shape_cast %89 : vector<2x16x16x64xf32> to vector<512x64xf32>
    %c4_112 = arith.constant 4 : index
    %c0_113 = arith.constant 0 : index
    %c0_114 = arith.constant 0 : index
    %91 = vector.load %arg4[%c4_112, %c0_113, %c0_114] : memref<9x64x64xf32, #tpu.memory_space<vmem>>, vector<1x64x64xf32>
    %92 = vector.shape_cast %91 : vector<1x64x64xf32> to vector<64x64xf32>
    %cst_115 = arith.constant dense<0.000000e+00> : vector<512x64xf32>
    %93 = tpu.matmul %90, %92, %cst_115 {dimension_numbers = #tpu.dot_dimension_numbers<[1], [0], [0], [1], [0, 0, 1, 1], [], []>} : vector<512x64xf32>, vector<64x64xf32>, vector<512x64xf32> -> vector<512x64xf32>
    %94 = arith.addf %88, %93 : vector<512x64xf32>
    %c0_116 = arith.constant 0 : index
    %c1_117 = arith.constant 1 : index
    %c2_118 = arith.constant 2 : index
    %c0_119 = arith.constant 0 : index
    %95 = vector.load %arg9[%c0_116, %c1_117, %c2_118, %c0_119] : memref<2x18x18x64xf32, #tpu.memory_space<vmem>>, vector<2x16x16x64xf32>
    %96 = vector.shape_cast %95 : vector<2x16x16x64xf32> to vector<512x64xf32>
    %c5_120 = arith.constant 5 : index
    %c0_121 = arith.constant 0 : index
    %c0_122 = arith.constant 0 : index
    %97 = vector.load %arg4[%c5_120, %c0_121, %c0_122] : memref<9x64x64xf32, #tpu.memory_space<vmem>>, vector<1x64x64xf32>
    %98 = vector.shape_cast %97 : vector<1x64x64xf32> to vector<64x64xf32>
    %cst_123 = arith.constant dense<0.000000e+00> : vector<512x64xf32>
    %99 = tpu.matmul %96, %98, %cst_123 {dimension_numbers = #tpu.dot_dimension_numbers<[1], [0], [0], [1], [0, 0, 1, 1], [], []>} : vector<512x64xf32>, vector<64x64xf32>, vector<512x64xf32> -> vector<512x64xf32>
    %100 = arith.addf %94, %99 : vector<512x64xf32>
    %c0_124 = arith.constant 0 : index
    %c2_125 = arith.constant 2 : index
    %c0_126 = arith.constant 0 : index
    %c0_127 = arith.constant 0 : index
    %101 = vector.load %arg9[%c0_124, %c2_125, %c0_126, %c0_127] : memref<2x18x18x64xf32, #tpu.memory_space<vmem>>, vector<2x16x16x64xf32>
    %102 = vector.shape_cast %101 : vector<2x16x16x64xf32> to vector<512x64xf32>
    %c6_128 = arith.constant 6 : index
    %c0_129 = arith.constant 0 : index
    %c0_130 = arith.constant 0 : index
    %103 = vector.load %arg4[%c6_128, %c0_129, %c0_130] : memref<9x64x64xf32, #tpu.memory_space<vmem>>, vector<1x64x64xf32>
    %104 = vector.shape_cast %103 : vector<1x64x64xf32> to vector<64x64xf32>
    %cst_131 = arith.constant dense<0.000000e+00> : vector<512x64xf32>
    %105 = tpu.matmul %102, %104, %cst_131 {dimension_numbers = #tpu.dot_dimension_numbers<[1], [0], [0], [1], [0, 0, 1, 1], [], []>} : vector<512x64xf32>, vector<64x64xf32>, vector<512x64xf32> -> vector<512x64xf32>
    %106 = arith.addf %100, %105 : vector<512x64xf32>
    %c0_132 = arith.constant 0 : index
    %c2_133 = arith.constant 2 : index
    %c1_134 = arith.constant 1 : index
    %c0_135 = arith.constant 0 : index
    %107 = vector.load %arg9[%c0_132, %c2_133, %c1_134, %c0_135] : memref<2x18x18x64xf32, #tpu.memory_space<vmem>>, vector<2x16x16x64xf32>
    %108 = vector.shape_cast %107 : vector<2x16x16x64xf32> to vector<512x64xf32>
    %c7_136 = arith.constant 7 : index
    %c0_137 = arith.constant 0 : index
    %c0_138 = arith.constant 0 : index
    %109 = vector.load %arg4[%c7_136, %c0_137, %c0_138] : memref<9x64x64xf32, #tpu.memory_space<vmem>>, vector<1x64x64xf32>
    %110 = vector.shape_cast %109 : vector<1x64x64xf32> to vector<64x64xf32>
    %cst_139 = arith.constant dense<0.000000e+00> : vector<512x64xf32>
    %111 = tpu.matmul %108, %110, %cst_139 {dimension_numbers = #tpu.dot_dimension_numbers<[1], [0], [0], [1], [0, 0, 1, 1], [], []>} : vector<512x64xf32>, vector<64x64xf32>, vector<512x64xf32> -> vector<512x64xf32>
    %112 = arith.addf %106, %111 : vector<512x64xf32>
    %c0_140 = arith.constant 0 : index
    %c2_141 = arith.constant 2 : index
    %c2_142 = arith.constant 2 : index
    %c0_143 = arith.constant 0 : index
    %113 = vector.load %arg9[%c0_140, %c2_141, %c2_142, %c0_143] : memref<2x18x18x64xf32, #tpu.memory_space<vmem>>, vector<2x16x16x64xf32>
    %114 = vector.shape_cast %113 : vector<2x16x16x64xf32> to vector<512x64xf32>
    %c8_144 = arith.constant 8 : index
    %c0_145 = arith.constant 0 : index
    %c0_146 = arith.constant 0 : index
    %115 = vector.load %arg4[%c8_144, %c0_145, %c0_146] : memref<9x64x64xf32, #tpu.memory_space<vmem>>, vector<1x64x64xf32>
    %116 = vector.shape_cast %115 : vector<1x64x64xf32> to vector<64x64xf32>
    %cst_147 = arith.constant dense<0.000000e+00> : vector<512x64xf32>
    %117 = tpu.matmul %114, %116, %cst_147 {dimension_numbers = #tpu.dot_dimension_numbers<[1], [0], [0], [1], [0, 0, 1, 1], [], []>} : vector<512x64xf32>, vector<64x64xf32>, vector<512x64xf32> -> vector<512x64xf32>
    %118 = arith.addf %112, %117 : vector<512x64xf32>
    %c0_148 = arith.constant 0 : index
    %c0_149 = arith.constant 0 : index
    %119 = vector.load %arg5[%c0_148, %c0_149] : memref<1x64xf32, #tpu.memory_space<vmem>>, vector<1x64xf32>
    %120 = vector.broadcast %119 : vector<1x64xf32> to vector<512x64xf32>
    %121 = arith.addf %118, %120 : vector<512x64xf32>
    %cst_150 = arith.constant 0.000000e+00 : f32
    %122 = vector.broadcast %cst_150 : f32 to vector<512x64xf32>
    %123 = arith.maximumf %121, %122 : vector<512x64xf32>
    %c0_151 = arith.constant 0 : index
    %c0_152 = arith.constant 0 : index
    %124 = vector.load %arg6[%c0_151, %c0_152] : memref<64x128xf32, #tpu.memory_space<vmem>>, vector<64x128xf32>
    %cst_153 = arith.constant dense<0.000000e+00> : vector<512x128xf32>
    %125 = tpu.matmul %123, %124, %cst_153 {dimension_numbers = #tpu.dot_dimension_numbers<[1], [0], [0], [1], [0, 0, 1, 1], [], []>} : vector<512x64xf32>, vector<64x128xf32>, vector<512x128xf32> -> vector<512x128xf32>
    %c0_154 = arith.constant 0 : index
    %c0_155 = arith.constant 0 : index
    %126 = vector.load %arg7[%c0_154, %c0_155] : memref<1x128xf32, #tpu.memory_space<vmem>>, vector<1x128xf32>
    %127 = vector.broadcast %126 : vector<1x128xf32> to vector<512x128xf32>
    %128 = arith.addf %125, %127 : vector<512x128xf32>
    %129 = vector.shape_cast %128 : vector<512x128xf32> to vector<2x16x16x128xf32>
    %c0_156 = arith.constant 0 : index
    %c0_157 = arith.constant 0 : index
    %c0_158 = arith.constant 0 : index
    %c0_159 = arith.constant 0 : index
    %130 = vector.load %arg8[%c0_156, %c0_157, %c0_158, %c0_159] : memref<2x16x16x128xf32, #tpu.memory_space<vmem>>, vector<2x16x16x128xf32>
    tpu.vector_store %arg8[%c0_156, %c0_157, %c0_158, %c0_159], %129 {strides = array<i32>} : memref<2x16x16x128xf32, #tpu.memory_space<vmem>>, vector<2x16x16x128xf32>,
    return
  }
  func.func @transform_0(%arg0: i32) -> (i32, i32, i32, i32) {
    %c0_i32 = arith.constant 0 : i32
    %c0_i32_0 = arith.constant 0 : i32
    %c0_i32_1 = arith.constant 0 : i32
    %c0_i32_2 = arith.constant 0 : i32
    %c0_i32_3 = arith.constant 0 : i32
    return %c0_i32, %c0_i32_0, %c0_i32_1, %c0_i32_2 : i32, i32, i32, i32
  }
  func.func @transform_1(%arg0: i32) -> (i32, i32, i32) {
    %c0_i32 = arith.constant 0 : i32
    %c0_i32_0 = arith.constant 0 : i32
    %c0_i32_1 = arith.constant 0 : i32
    %c0_i32_2 = arith.constant 0 : i32
    return %c0_i32, %c0_i32_0, %c0_i32_1 : i32, i32, i32
  }
  func.func @transform_2(%arg0: i32) -> (i32, i32) {
    %c0_i32 = arith.constant 0 : i32
    %c0_i32_0 = arith.constant 0 : i32
    %c0_i32_1 = arith.constant 0 : i32
    return %c0_i32, %c0_i32_0 : i32, i32
  }
  func.func @transform_3(%arg0: i32) -> (i32, i32, i32) {
    %c0_i32 = arith.constant 0 : i32
    %c0_i32_0 = arith.constant 0 : i32
    %c0_i32_1 = arith.constant 0 : i32
    %c0_i32_2 = arith.constant 0 : i32
    return %c0_i32, %c0_i32_0, %c0_i32_1 : i32, i32, i32
  }
  func.func @transform_4(%arg0: i32) -> (i32, i32) {
    %c0_i32 = arith.constant 0 : i32
    %c0_i32_0 = arith.constant 0 : i32
    %c0_i32_1 = arith.constant 0 : i32
    return %c0_i32, %c0_i32_0 : i32, i32
  }
  func.func @transform_5(%arg0: i32) -> (i32, i32) {
    %c0_i32 = arith.constant 0 : i32
    %c0_i32_0 = arith.constant 0 : i32
    %c0_i32_1 = arith.constant 0 : i32
    return %c0_i32, %c0_i32_0 : i32, i32
  }
  func.func @transform_6(%arg0: i32) -> (i32, i32) {
    %c0_i32 = arith.constant 0 : i32
    %c0_i32_0 = arith.constant 0 : i32
    %c0_i32_1 = arith.constant 0 : i32
    return %c0_i32, %c0_i32_0 : i32, i32
  }
  func.func @transform_7(%arg0: i32) -> (i32, i32, i32, i32) {
    %c0_i32 = arith.constant 0 : i32
    %c0_i32_0 = arith.constant 0 : i32
    %c0_i32_1 = arith.constant 0 : i32
    %c0_i32_2 = arith.constant 0 : i32
    %c0_i32_3 = arith.constant 0 : i32
    return %c0_i32, %c0_i32_0, %c0_i32_1, %c0_i32_2 : i32, i32, i32, i32
  }
}

</mosaic_0001>

<llo_original>
// kernel: tpu_custom_call.1
$region0: #{tpu_custom_call.1}
  #allocation0 [shape = 'u32[]', space=smem, size = 0x4, offset = 0x4, fixed_abs, tag = 'smem constant byte address 0x4 - core index']
  #allocation1 [shape = 'u32[72,128]{1,0:T(1,128)}', space=vmem, size = 0x9000, scoped, tag = 'internal scratch']
  #allocation2 [shape = 'f32[2,18,18,64]{3,2,1,0:T(8,128)}', space=vmem, size = 0x6c000, scoped, tag = 'scratch operand']
  %s0 = inlined_call_operand.vmem [shape: f32[2,18,18,66], index: 0, kind: input, shape index: {}]
  %s1 = inlined_call_operand.vmem [shape: f32[9,66,64], index: 1, kind: input, shape index: {}]
  %s2 = inlined_call_operand.vmem [shape: f32[1,64], index: 2, kind: input, shape index: {}]
  %s3 = inlined_call_operand.vmem [shape: f32[9,64,64], index: 3, kind: input, shape index: {}]
  %s4 = inlined_call_operand.vmem [shape: f32[1,64], index: 4, kind: input, shape index: {}]
  %s5 = inlined_call_operand.vmem [shape: f32[64,128], index: 5, kind: input, shape index: {}]
  %s6 = inlined_call_operand.vmem [shape: f32[1,128], index: 6, kind: input, shape index: {}]
  %s7 = inlined_call_operand.hbm [shape: f32[2,16,16,128], index: 7, kind: output, shape index: {}]
  %s8 = sld [smem:[#allocation0]]
  $region38: #{tpu_custom_call.1} parent=0
    _
  %s10 = ssub.s32 1, %s8
  %s11 = scalar_select 0, %s10, %s8
  $region1: #{tpu_custom_call.1} parent=0
    #allocation3 [shape = 'u8[262144]{0}', space=vmem, size = 0x40000, scoped, tag = 'output window, operand 0, single buffered']
    #allocation4 [shape = 's32[1]{0}', space=sflag, size = 0x4, scoped, tag = 'scoped memory for tpu_custom_call.1']
    %12 = vsyncpa [#allocation4], 0
    // Predicated region
    $region2: #{tpu_custom_call.1} parent=1 // pred_check
      _
    $region3: #{tpu_custom_call.1} parent=1 // pred_check_branch
      %14 = sbr.rel (0) target = $region5
    $region4: #{tpu_custom_call.1} parent=1 // pred_region
      _
    $region5: #{tpu_custom_call.1} parent=1 // pred_fallthru
      _
    // Predicated region
    $region6: #{tpu_custom_call.1} parent=1 // pred_check
      _
    $region7: #{tpu_custom_call.1} parent=1 // pred_check_branch
      %16 = sbr.rel (0) target = $region9
    $region8: #{tpu_custom_call.1} parent=1 // pred_region
      _
    $region9: #{tpu_custom_call.1} parent=1 // pred_fallthru
      _
    // Predicated region
    $region10: #{tpu_custom_call.1} parent=1 // pred_check
      _
    $region11: #{tpu_custom_call.1} parent=1 // pred_check_branch
      %18 = sbr.rel (0) target = $region13
    $region12: #{tpu_custom_call.1} parent=1 // pred_region
      _
    $region13: #{tpu_custom_call.1} parent=1 // pred_fallthru
      _
    // Predicated region
    $region14: #{tpu_custom_call.1} parent=1 // pred_check
      _
    $region15: #{tpu_custom_call.1} parent=1 // pred_check_branch
      %20 = sbr.rel (0) target = $region17
    $region16: #{tpu_custom_call.1} parent=1 // pred_region
      _
    $region17: #{tpu_custom_call.1} parent=1 // pred_fallthru
      _
    // Predicated region
    $region18: #{tpu_custom_call.1} parent=1 // pred_check
      _
    $region19: #{tpu_custom_call.1} parent=1 // pred_check_branch
      %22 = sbr.rel (0) target = $region21
    $region20: #{tpu_custom_call.1} parent=1 // pred_region
      _
    $region21: #{tpu_custom_call.1} parent=1 // pred_fallthru
      _
    // Predicated region
    $region22: #{tpu_custom_call.1} parent=1 // pred_check
      _
    $region23: #{tpu_custom_call.1} parent=1 // pred_check_branch
      %24 = sbr.rel (0) target = $region25
    $region24: #{tpu_custom_call.1} parent=1 // pred_region
      _
    $region25: #{tpu_custom_call.1} parent=1 // pred_fallthru
      _
    // Predicated region
    $region26: #{tpu_custom_call.1} parent=1 // pred_check
      _
    $region27: #{tpu_custom_call.1} parent=1 // pred_check_branch
      %26 = sbr.rel (0) target = $region29
    $region28: #{tpu_custom_call.1} parent=1 // pred_region
      _
    $region29: #{tpu_custom_call.1} parent=1 // pred_fallthru
      _
    %v27 = vld [vmem:[%s0] sm:$0xff]
    %v28 = vld [vmem:[%s0 + $0x8] sm:$0xff]
    %v29 = vld [vmem:[%s0 + $0x18] sm:$0xff]
    %v30 = vld [vmem:[%s0 + $0x20] sm:$0xff]
    %v31 = vld [vmem:[%s0 + $0x30] sm:$0xff]
    %v32 = vld [vmem:[%s0 + $0x38] sm:$0xff]
    %v33 = vld [vmem:[%s0 + $0x48] sm:$0xff]
    %v34 = vld [vmem:[%s0 + $0x50] sm:$0xff]
    %v35 = vld [vmem:[%s0 + $0x60] sm:$0xff]
    %v36 = vld [vmem:[%s0 + $0x68] sm:$0xff]
    %v37 = vld [vmem:[%s0 + $0x78] sm:$0xff]
    %v38 = vld [vmem:[%s0 + $0x80] sm:$0xff]
    %v39 = vld [vmem:[%s0 + $0x90] sm:$0xff]
    %v40 = vld [vmem:[%s0 + $0x98] sm:$0xff]
    %v41 = vld [vmem:[%s0 + $0xa8] sm:$0xff]
    %v42 = vld [vmem:[%s0 + $0xb0] sm:$0xff]
    %v43 = vld [vmem:[%s0 + $0xc0] sm:$0xff]
    %v44 = vld [vmem:[%s0 + $0xc8] sm:$0xff]
    %v45 = vld [vmem:[%s0 + $0xd8] sm:$0xff]
    %v46 = vld [vmem:[%s0 + $0xe0] sm:$0xff]
    %v47 = vld [vmem:[%s0 + $0xf0] sm:$0xff]
    %v48 = vld [vmem:[%s0 + $0xf8] sm:$0xff]
    %v49 = vld [vmem:[%s0 + $0x108] sm:$0xff]
    %v50 = vld [vmem:[%s0 + $0x110] sm:$0xff]
    %v51 = vld [vmem:[%s0 + $0x120] sm:$0xff]
    %v52 = vld [vmem:[%s0 + $0x128] sm:$0xff]
    %v53 = vld [vmem:[%s0 + $0x138] sm:$0xff]
    %v54 = vld [vmem:[%s0 + $0x140] sm:$0xff]
    %v55 = vld [vmem:[%s0 + $0x150] sm:$0xff]
    %v56 = vld [vmem:[%s0 + $0x158] sm:$0xff]
    %v57 = vld [vmem:[%s0 + $0x168] sm:$0xff]
    %v58 = vld [vmem:[%s0 + $0x170] sm:$0xff]
    %v59 = vld [vmem:[%s0 + $0x1b0] sm:$0xff]
    %v60 = vld [vmem:[%s0 + $0x1b8] sm:$0xff]
    %v61 = vld [vmem:[%s0 + $0x1c8] sm:$0xff]
    %v62 = vld [vmem:[%s0 + $0x1d0] sm:$0xff]
    %v63 = vld [vmem:[%s0 + $0x1e0] sm:$0xff]
    %v64 = vld [vmem:[%s0 + $0x1e8] sm:$0xff]
    %v65 = vld [vmem:[%s0 + $0x1f8] sm:$0xff]
    %v66 = vld [vmem:[%s0 + $0x200] sm:$0xff]
    %v67 = vld [vmem:[%s0 + $0x210] sm:$0xff]
    %v68 = vld [vmem:[%s0 + $0x218] sm:$0xff]
    %v69 = vld [vmem:[%s0 + $0x228] sm:$0xff]
    %v70 = vld [vmem:[%s0 + $0x230] sm:$0xff]
    %v71 = vld [vmem:[%s0 + $0x240] sm:$0xff]
    %v72 = vld [vmem:[%s0 + $0x248] sm:$0xff]
    %v73 = vld [vmem:[%s0 + $0x258] sm:$0xff]
    %v74 = vld [vmem:[%s0 + $0x260] sm:$0xff]
    %v75 = vld [vmem:[%s0 + $0x270] sm:$0xff]
    %v76 = vld [vmem:[%s0 + $0x278] sm:$0xff]
    %v77 = vld [vmem:[%s0 + $0x288] sm:$0xff]
    %v78 = vld [vmem:[%s0 + $0x290] sm:$0xff]
    %v79 = vld [vmem:[%s0 + $0x2a0] sm:$0xff]
    %v80 = vld [vmem:[%s0 + $0x2a8] sm:$0xff]
    %v81 = vld [vmem:[%s0 + $0x2b8] sm:$0xff]
    %v82 = vld [vmem:[%s0 + $0x2c0] sm:$0xff]
    %v83 = vld [vmem:[%s0 + $0x2d0] sm:$0xff]
    %v84 = vld [vmem:[%s0 + $0x2d8] sm:$0xff]
    %v85 = vld [vmem:[%s0 + $0x2e8] sm:$0xff]
    %v86 = vld [vmem:[%s0 + $0x2f0] sm:$0xff]
    %v87 = vld [vmem:[%s0 + $0x300] sm:$0xff]
    %v88 = vld [vmem:[%s0 + $0x308] sm:$0xff]
    %v89 = vld [vmem:[%s0 + $0x318] sm:$0xff]
    %v90 = vld [vmem:[%s0 + $0x320] sm:$0xff]
    %v91 = vld [vmem:[%s1] sm:$0xff]
    %v92 = vld [vmem:[%s1 + $0x8] sm:$0xff]
    %v93 = vld [vmem:[%s1 + $0x10] sm:$0xff]
    %v94 = vld [vmem:[%s1 + $0x18] sm:$0xff]
    %v95 = vld [vmem:[%s1 + $0x20] sm:$0xff]
    %v96 = vld [vmem:[%s1 + $0x28] sm:$0xff]
    %v97 = vld [vmem:[%s1 + $0x30] sm:$0xff]
    %v98 = vld [vmem:[%s1 + $0x38] sm:$0xff]
    %v99 = vld [vmem:[%s1 + $0x40] sm:$0x3]
    %v100 = vld [vmem:[%s0 + $0x1] sm:$0xff]
    %v101 = vld [vmem:[%s0 + $0x9] sm:$0xff]
    %v102 = vld [vmem:[%s0 + $0x19] sm:$0xff]
    %v103 = vld [vmem:[%s0 + $0x21] sm:$0xff]
    %v104 = vld [vmem:[%s0 + $0x31] sm:$0xff]
    %v105 = vld [vmem:[%s0 + $0x39] sm:$0xff]
    %v106 = vld [vmem:[%s0 + $0x49] sm:$0xff]
    %v107 = vld [vmem:[%s0 + $0x51] sm:$0xff]
    %v108 = vld [vmem:[%s0 + $0x61] sm:$0xff]
    %v109 = vld [vmem:[%s0 + $0x69] sm:$0xff]
    %v110 = vld [vmem:[%s0 + $0x79] sm:$0xff]
    %v111 = vld [vmem:[%s0 + $0x81] sm:$0xff]
    %v112 = vld [vmem:[%s0 + $0x91] sm:$0xff]
    %v113 = vld [vmem:[%s0 + $0x99] sm:$0xff]
    %v114 = vld [vmem:[%s0 + $0xa9] sm:$0xff]
    %v115 = vld [vmem:[%s0 + $0xb1] sm:$0xff]
    %v116 = vld [vmem:[%s0 + $0xc1] sm:$0xff]
    %v117 = vld [vmem:[%s0 + $0xc9] sm:$0xff]
    %v118 = vld [vmem:[%s0 + $0xd9] sm:$0xff]
    %v119 = vld [vmem:[%s0 + $0xe1] sm:$0xff]
    %v120 = vld [vmem:[%s0 + $0xf1] sm:$0xff]
    %v121 = vld [vmem:[%s0 + $0xf9] sm:$0xff]
    %v122 = vld [vmem:[%s0 + $0x109] sm:$0xff]
    %v123 = vld [vmem:[%s0 + $0x111] sm:$0xff]
    %v124 = vld [vmem:[%s0 + $0x121] sm:$0xff]
    %v125 = vld [vmem:[%s0 + $0x129] sm:$0xff]
    %v126 = vld [vmem:[%s0 + $0x139] sm:$0xff]
    %v127 = vld [vmem:[%s0 + $0x141] sm:$0xff]
    %v128 = vld [vmem:[%s0 + $0x151] sm:$0xff]
    %v129 = vld [vmem:[%s0 + $0x159] sm:$0xff]
    %v130 = vld [vmem:[%s0 + $0x169] sm:$0xff]
    %v131 = vld [vmem:[%s0 + $0x171] sm:$0xff]
    %v132 = vld [vmem:[%s0 + $0x1b1] sm:$0xff]
    %v133 = vld [vmem:[%s0 + $0x1b9] sm:$0xff]
    %v134 = vld [vmem:[%s0 + $0x1c9] sm:$0xff]
    %v135 = vld [vmem:[%s0 + $0x1d1] sm:$0xff]
    %v136 = vld [vmem:[%s0 + $0x1e1] sm:$0xff]
    %v137 = vld [vmem:[%s0 + $0x1e9] sm:$0xff]
    %v138 = vld [vmem:[%s0 + $0x1f9] sm:$0xff]
    %v139 = vld [vmem:[%s0 + $0x201] sm:$0xff]
    %v140 = vld [vmem:[%s0 + $0x211] sm:$0xff]
    %v141 = vld [vmem:[%s0 + $0x219] sm:$0xff]
    %v142 = vld [vmem:[%s0 + $0x229] sm:$0xff]
    %v143 = vld [vmem:[%s0 + $0x231] sm:$0xff]
    %v144 = vld [vmem:[%s0 + $0x241] sm:$0xff]
    %v145 = vld [vmem:[%s0 + $0x249] sm:$0xff]
    %v146 = vld [vmem:[%s0 + $0x259] sm:$0xff]
    %v147 = vld [vmem:[%s0 + $0x261] sm:$0xff]
    %v148 = vld [vmem:[%s0 + $0x271] sm:$0xff]
    %v149 = vld [vmem:[%s0 + $0x279] sm:$0xff]
    %v150 = vld [vmem:[%s0 + $0x289] sm:$0xff]
    %v151 = vld [vmem:[%s0 + $0x291] sm:$0xff]
    %v152 = vld [vmem:[%s0 + $0x2a1] sm:$0xff]
    %v153 = vld [vmem:[%s0 + $0x2a9] sm:$0xff]
    %v154 = vld [vmem:[%s0 + $0x2b9] sm:$0xff]
    %v155 = vld [vmem:[%s0 + $0x2c1] sm:$0xff]
    %v156 = vld [vmem:[%s0 + $0x2d1] sm:$0xff]
    %v157 = vld [vmem:[%s0 + $0x2d9] sm:$0xff]
    %v158 = vld [vmem:[%s0 + $0x2e9] sm:$0xff]
    %v159 = vld [vmem:[%s0 + $0x2f1] sm:$0xff]
    %v160 = vld [vmem:[%s0 + $0x301] sm:$0xff]
    %v161 = vld [vmem:[%s0 + $0x309] sm:$0xff]
    %v162 = vld [vmem:[%s0 + $0x319] sm:$0xff]
    %v163 = vld [vmem:[%s0 + $0x321] sm:$0xff]
    %s164 = scalar_lea.vmem %s1, 72
    %v165 = vld [vmem:[%s164] sm:$0xff]
    %v166 = vld [vmem:[%s164 + $0x8] sm:$0xff]
    %v167 = vld [vmem:[%s164 + $0x10] sm:$0xff]
    %v168 = vld [vmem:[%s164 + $0x18] sm:$0xff]
    %v169 = vld [vmem:[%s164 + $0x20] sm:$0xff]
    %v170 = vld [vmem:[%s164 + $0x28] sm:$0xff]
    %v171 = vld [vmem:[%s164 + $0x30] sm:$0xff]
    %v172 = vld [vmem:[%s164 + $0x38] sm:$0xff]
    %v173 = vld [vmem:[%s164 + $0x40] sm:$0x3]
    %vm174 = vcmask 539648
    %v176 = vsel %vm174, %v100, 0
    %v179 = vsel %vm174, %v101, 0
    %v182 = vsel %vm174, %v102, 0
    %v185 = vsel %vm174, %v103, 0
    %v188 = vsel %vm174, %v104, 0
    %v191 = vsel %vm174, %v105, 0
    %v194 = vsel %vm174, %v106, 0
    %v197 = vsel %vm174, %v107, 0
    %v200 = vsel %vm174, %v108, 0
    %v203 = vsel %vm174, %v109, 0
    %v206 = vsel %vm174, %v110, 0
    %v209 = vsel %vm174, %v111, 0
    %v212 = vsel %vm174, %v112, 0
    %v215 = vsel %vm174, %v113, 0
    %v218 = vsel %vm174, %v114, 0
    %v221 = vsel %vm174, %v115, 0
    %v224 = vsel %vm174, %v116, 0
    %v227 = vsel %vm174, %v117, 0
    %v230 = vsel %vm174, %v118, 0
    %v233 = vsel %vm174, %v119, 0
    %v236 = vsel %vm174, %v120, 0
    %v239 = vsel %vm174, %v121, 0
    %v242 = vsel %vm174, %v122, 0
    %v245 = vsel %vm174, %v123, 0
    %v248 = vsel %vm174, %v124, 0
    %v251 = vsel %vm174, %v125, 0
    %v254 = vsel %vm174, %v126, 0
    %v257 = vsel %vm174, %v127, 0
    %v260 = vsel %vm174, %v128, 0
    %v263 = vsel %vm174, %v129, 0
    %v266 = vsel %vm174, %v130, 0
    %v269 = vsel %vm174, %v131, 0
    %v272 = vsel %vm174, %v132, 0
    %v275 = vsel %vm174, %v133, 0
    %v278 = vsel %vm174, %v134, 0
    %v281 = vsel %vm174, %v135, 0
    %v284 = vsel %vm174, %v136, 0
    %v287 = vsel %vm174, %v137, 0
    %v290 = vsel %vm174, %v138, 0
    %v293 = vsel %vm174, %v139, 0
    %v296 = vsel %vm174, %v140, 0
    %v299 = vsel %vm174, %v141, 0
    %v302 = vsel %vm174, %v142, 0
    %v305 = vsel %vm174, %v143, 0
    %v308 = vsel %vm174, %v144, 0
    %v311 = vsel %vm174, %v145, 0
    %v314 = vsel %vm174, %v146, 0
    %v317 = vsel %vm174, %v147, 0
    %v320 = vsel %vm174, %v148, 0
    %v323 = vsel %vm174, %v149, 0
    %v326 = vsel %vm174, %v150, 0
    %v329 = vsel %vm174, %v151, 0
    %v332 = vsel %vm174, %v152, 0
    %v335 = vsel %vm174, %v153, 0
    %v338 = vsel %vm174, %v154, 0
    %v341 = vsel %vm174, %v155, 0
    %v344 = vsel %vm174, %v156, 0
    %v347 = vsel %vm174, %v157, 0
    %v350 = vsel %vm174, %v158, 0
    %v353 = vsel %vm174, %v159, 0
    %v356 = vsel %vm174, %v160, 0
    %v359 = vsel %vm174, %v161, 0
    %v362 = vsel %vm174, %v162, 0
    %v365 = vsel %vm174, %v163, 0
    %vm367 = vcmask 1041408
    %v369 = vsel %vm367, %v173, 0
    %371 = vmatpush.msra.mxu0 0.0
    %372 = vmatpush.msra.mxu0 0.0
    %373 = vmatpush.msra.mxu0 0.0
    %374 = vmatpush.msra.mxu0 0.0
    %375 = vmatpush.msra.mxu0 0.0
    %376 = vmatpush.msra.mxu0 0.0
    %377 = vmatpush.msra.mxu0 0.0
    %378 = vmatpush.msra.mxu0 %v369
    %379 = vmatpush.msra.mxu0 %v172
    %380 = vmatpush.msra.mxu0 %v171
    %381 = vmatpush.msra.mxu0 %v170
    %382 = vmatpush.msra.mxu0 %v169
    %383 = vmatpush.msra.mxu0 %v168
    %384 = vmatpush.msra.mxu0 %v167
    %385 = vmatpush.msra.mxu0 %v166
    %386 = vmatpush.msra.mxu0 %v165
    %387 = vmatmul.f32.gmra.mxu0 %v176
    %v388 = vpop.f32.mrf.mxu0
    %v389 = vadd.f32 0.0, %v388
    %390 = vmatmul.f32.gmra.mxu0 %v179
    %v391 = vpop.f32.mrf.mxu0
    %v392 = vadd.f32 0.0, %v391
    %393 = vmatmul.f32.gmra.mxu0 %v182
    %v394 = vpop.f32.mrf.mxu0
    %v395 = vadd.f32 0.0, %v394
    %396 = vmatmul.f32.gmra.mxu0 %v185
    %v397 = vpop.f32.mrf.mxu0
    %v398 = vadd.f32 0.0, %v397
    %399 = vmatmul.f32.gmra.mxu0 %v188
    %v400 = vpop.f32.mrf.mxu0
    %v401 = vadd.f32 0.0, %v400
    %402 = vmatmul.f32.gmra.mxu0 %v191
    %v403 = vpop.f32.mrf.mxu0
    %v404 = vadd.f32 0.0, %v403
    %405 = vmatmul.f32.gmra.mxu0 %v194
    %v406 = vpop.f32.mrf.mxu0
    %v407 = vadd.f32 0.0, %v406
    %408 = vmatmul.f32.gmra.mxu0 %v197
    %v409 = vpop.f32.mrf.mxu0
    %v410 = vadd.f32 0.0, %v409
    %411 = vmatmul.f32.gmra.mxu0 %v200
    %v412 = vpop.f32.mrf.mxu0
    %v413 = vadd.f32 0.0, %v412
    %414 = vmatmul.f32.gmra.mxu0 %v203
    %v415 = vpop.f32.mrf.mxu0
    %v416 = vadd.f32 0.0, %v415
    %417 = vmatmul.f32.gmra.mxu0 %v206
    %v418 = vpop.f32.mrf.mxu0
    %v419 = vadd.f32 0.0, %v418
    %420 = vmatmul.f32.gmra.mxu0 %v209
    %v421 = vpop.f32.mrf.mxu0
    %v422 = vadd.f32 0.0, %v421
    %423 = vmatmul.f32.gmra.mxu0 %v212
    %v424 = vpop.f32.mrf.mxu0
    %v425 = vadd.f32 0.0, %v424
    %426 = vmatmul.f32.gmra.mxu0 %v215
    %v427 = vpop.f32.mrf.mxu0
    %v428 = vadd.f32 0.0, %v427
    %429 = vmatmul.f32.gmra.mxu0 %v218
    %v430 = vpop.f32.mrf.mxu0
    %v431 = vadd.f32 0.0, %v430
    %432 = vmatmul.f32.gmra.mxu0 %v221
    %v433 = vpop.f32.mrf.mxu0
    %v434 = vadd.f32 0.0, %v433
    %435 = vmatmul.f32.gmra.mxu0 %v224
    %v436 = vpop.f32.mrf.mxu0
    %v437 = vadd.f32 0.0, %v436
    %438 = vmatmul.f32.gmra.mxu0 %v227
    %v439 = vpop.f32.mrf.mxu0
    %v440 = vadd.f32 0.0, %v439
    %441 = vmatmul.f32.gmra.mxu0 %v230
    %v442 = vpop.f32.mrf.mxu0
    %v443 = vadd.f32 0.0, %v442
    %444 = vmatmul.f32.gmra.mxu0 %v233
    %v445 = vpop.f32.mrf.mxu0
    %v446 = vadd.f32 0.0, %v445
    %447 = vmatmul.f32.gmra.mxu0 %v236
    %v448 = vpop.f32.mrf.mxu0
    %v449 = vadd.f32 0.0, %v448
    %450 = vmatmul.f32.gmra.mxu0 %v239
    %v451 = vpop.f32.mrf.mxu0
    %v452 = vadd.f32 0.0, %v451
    %453 = vmatmul.f32.gmra.mxu0 %v242
    %v454 = vpop.f32.mrf.mxu0
    %v455 = vadd.f32 0.0, %v454
    %456 = vmatmul.f32.gmra.mxu0 %v245
    %v457 = vpop.f32.mrf.mxu0
    %v458 = vadd.f32 0.0, %v457
    %459 = vmatmul.f32.gmra.mxu0 %v248
    %v460 = vpop.f32.mrf.mxu0
    %v461 = vadd.f32 0.0, %v460
    %462 = vmatmul.f32.gmra.mxu0 %v251
    %v463 = vpop.f32.mrf.mxu0
    %v464 = vadd.f32 0.0, %v463
    %465 = vmatmul.f32.gmra.mxu0 %v254
    %v466 = vpop.f32.mrf.mxu0
    %v467 = vadd.f32 0.0, %v466
    %468 = vmatmul.f32.gmra.mxu0 %v257
    %v469 = vpop.f32.mrf.mxu0
    %v470 = vadd.f32 0.0, %v469
    %471 = vmatmul.f32.gmra.mxu0 %v260
    %v472 = vpop.f32.mrf.mxu0
    %v473 = vadd.f32 0.0, %v472
    %474 = vmatmul.f32.gmra.mxu0 %v263
    %v475 = vpop.f32.mrf.mxu0
    %v476 = vadd.f32 0.0, %v475
    %477 = vmatmul.f32.gmra.mxu0 %v266
    %v478 = vpop.f32.mrf.mxu0
    %v479 = vadd.f32 0.0, %v478
    %480 = vmatmul.f32.gmra.mxu0 %v269
    %v481 = vpop.f32.mrf.mxu0
    %v482 = vadd.f32 0.0, %v481
    %483 = vmatmul.f32.gmra.mxu0 %v272
    %v484 = vpop.f32.mrf.mxu0
    %v485 = vadd.f32 0.0, %v484
    %486 = vmatmul.f32.gmra.mxu0 %v275
    %v487 = vpop.f32.mrf.mxu0
    %v488 = vadd.f32 0.0, %v487
    %489 = vmatmul.f32.gmra.mxu0 %v278
    %v490 = vpop.f32.mrf.mxu0
    %v491 = vadd.f32 0.0, %v490
    %492 = vmatmul.f32.gmra.mxu0 %v281
    %v493 = vpop.f32.mrf.mxu0
    %v494 = vadd.f32 0.0, %v493
    %495 = vmatmul.f32.gmra.mxu0 %v284
    %v496 = vpop.f32.mrf.mxu0
    %v497 = vadd.f32 0.0, %v496
    %498 = vmatmul.f32.gmra.mxu0 %v287
    %v499 = vpop.f32.mrf.mxu0
    %v500 = vadd.f32 0.0, %v499
    %501 = vmatmul.f32.gmra.mxu0 %v290
    %v502 = vpop.f32.mrf.mxu0
    %v503 = vadd.f32 0.0, %v502
    %504 = vmatmul.f32.gmra.mxu0 %v293
    %v505 = vpop.f32.mrf.mxu0
    %v506 = vadd.f32 0.0, %v505
    %507 = vmatmul.f32.gmra.mxu0 %v296
    %v508 = vpop.f32.mrf.mxu0
    %v509 = vadd.f32 0.0, %v508
    %510 = vmatmul.f32.gmra.mxu0 %v299
    %v511 = vpop.f32.mrf.mxu0
    %v512 = vadd.f32 0.0, %v511
    %513 = vmatmul.f32.gmra.mxu0 %v302
    %v514 = vpop.f32.mrf.mxu0
    %v515 = vadd.f32 0.0, %v514
    %516 = vmatmul.f32.gmra.mxu0 %v305
    %v517 = vpop.f32.mrf.mxu0
    %v518 = vadd.f32 0.0, %v517
    %519 = vmatmul.f32.gmra.mxu0 %v308
    %v520 = vpop.f32.mrf.mxu0
    %v521 = vadd.f32 0.0, %v520
    %522 = vmatmul.f32.gmra.mxu0 %v311
    %v523 = vpop.f32.mrf.mxu0
    %v524 = vadd.f32 0.0, %v523
    %525 = vmatmul.f32.gmra.mxu0 %v314
    %v526 = vpop.f32.mrf.mxu0
    %v527 = vadd.f32 0.0, %v526
    %528 = vmatmul.f32.gmra.mxu0 %v317
    %v529 = vpop.f32.mrf.mxu0
    %v530 = vadd.f32 0.0, %v529
    %531 = vmatmul.f32.gmra.mxu0 %v320
    %v532 = vpop.f32.mrf.mxu0
    %v533 = vadd.f32 0.0, %v532
    %534 = vmatmul.f32.gmra.mxu0 %v323
    %v535 = vpop.f32.mrf.mxu0
    %v536 = vadd.f32 0.0, %v535
    %537 = vmatmul.f32.gmra.mxu0 %v326
    %v538 = vpop.f32.mrf.mxu0
    %v539 = vadd.f32 0.0, %v538
    %540 = vmatmul.f32.gmra.mxu0 %v329
    %v541 = vpop.f32.mrf.mxu0
    %v542 = vadd.f32 0.0, %v541
    %543 = vmatmul.f32.gmra.mxu0 %v332
    %v544 = vpop.f32.mrf.mxu0
    %v545 = vadd.f32 0.0, %v544
    %546 = vmatmul.f32.gmra.mxu0 %v335
    %v547 = vpop.f32.mrf.mxu0
    %v548 = vadd.f32 0.0, %v547
    %549 = vmatmul.f32.gmra.mxu0 %v338
    %v550 = vpop.f32.mrf.mxu0
    %v551 = vadd.f32 0.0, %v550
    %552 = vmatmul.f32.gmra.mxu0 %v341
    %v553 = vpop.f32.mrf.mxu0
    %v554 = vadd.f32 0.0, %v553
    %555 = vmatmul.f32.gmra.mxu0 %v344
    %v556 = vpop.f32.mrf.mxu0
    %v557 = vadd.f32 0.0, %v556
    %558 = vmatmul.f32.gmra.mxu0 %v347
    %v559 = vpop.f32.mrf.mxu0
    %v560 = vadd.f32 0.0, %v559
    %561 = vmatmul.f32.gmra.mxu0 %v350
    %v562 = vpop.f32.mrf.mxu0
    %v563 = vadd.f32 0.0, %v562
    %564 = vmatmul.f32.gmra.mxu0 %v353
    %v565 = vpop.f32.mrf.mxu0
    %v566 = vadd.f32 0.0, %v565
    %567 = vmatmul.f32.gmra.mxu0 %v356
    %v568 = vpop.f32.mrf.mxu0
    %v569 = vadd.f32 0.0, %v568
    %570 = vmatmul.f32.gmra.mxu0 %v359
    %v571 = vpop.f32.mrf.mxu0
    %v572 = vadd.f32 0.0, %v571
    %573 = vmatmul.f32.gmra.mxu0 %v362
    %v574 = vpop.f32.mrf.mxu0
    %v575 = vadd.f32 0.0, %v574
    %576 = vmatmul.f32.gmra.mxu0 %v365
    %v577 = vpop.f32.mrf.mxu0
    %v578 = vadd.f32 0.0, %v577
    %579 = vdwg.mxu0
    %v581 = vsel %vm174, %v27, 0
    %v584 = vsel %vm174, %v28, 0
    %v587 = vsel %vm174, %v29, 0
    %v590 = vsel %vm174, %v30, 0
    %v593 = vsel %vm174, %v31, 0
    %v596 = vsel %vm174, %v32, 0
    %v599 = vsel %vm174, %v33, 0
    %v602 = vsel %vm174, %v34, 0
    %v605 = vsel %vm174, %v35, 0
    %v608 = vsel %vm174, %v36, 0
    %v611 = vsel %vm174, %v37, 0
    %v614 = vsel %vm174, %v38, 0
    %v617 = vsel %vm174, %v39, 0
    %v620 = vsel %vm174, %v40, 0
    %v623 = vsel %vm174, %v41, 0
    %v626 = vsel %vm174, %v42, 0
    %v629 = vsel %vm174, %v43, 0
    %v632 = vsel %vm174, %v44, 0
    %v635 = vsel %vm174, %v45, 0
    %v638 = vsel %vm174, %v46, 0
    %v641 = vsel %vm174, %v47, 0
    %v644 = vsel %vm174, %v48, 0
    %v647 = vsel %vm174, %v49, 0
    %v650 = vsel %vm174, %v50, 0
    %v653 = vsel %vm174, %v51, 0
    %v656 = vsel %vm174, %v52, 0
    %v659 = vsel %vm174, %v53, 0
    %v662 = vsel %vm174, %v54, 0
    %v665 = vsel %vm174, %v55, 0
    %v668 = vsel %vm174, %v56, 0
    %v671 = vsel %vm174, %v57, 0
    %v674 = vsel %vm174, %v58, 0
    %v677 = vsel %vm174, %v59, 0
    %v680 = vsel %vm174, %v60, 0
    %v683 = vsel %vm174, %v61, 0
    %v686 = vsel %vm174, %v62, 0
    %v689 = vsel %vm174, %v63, 0
    %v692 = vsel %vm174, %v64, 0
    %v695 = vsel %vm174, %v65, 0
    %v698 = vsel %vm174, %v66, 0
    %v701 = vsel %vm174, %v67, 0
    %v704 = vsel %vm174, %v68, 0
    %v707 = vsel %vm174, %v69, 0
    %v710 = vsel %vm174, %v70, 0
    %v713 = vsel %vm174, %v71, 0
    %v716 = vsel %vm174, %v72, 0
    %v719 = vsel %vm174, %v73, 0
    %v722 = vsel %vm174, %v74, 0
    %v725 = vsel %vm174, %v75, 0
    %v728 = vsel %vm174, %v76, 0
    %v731 = vsel %vm174, %v77, 0
    %v734 = vsel %vm174, %v78, 0
    %v737 = vsel %vm174, %v79, 0
    %v740 = vsel %vm174, %v80, 0
    %v743 = vsel %vm174, %v81, 0
    %v746 = vsel %vm174, %v82, 0
    %v749 = vsel %vm174, %v83, 0
    %v752 = vsel %vm174, %v84, 0
    %v755 = vsel %vm174, %v85, 0
    %v758 = vsel %vm174, %v86, 0
    %v761 = vsel %vm174, %v87, 0
    %v764 = vsel %vm174, %v88, 0
    %v767 = vsel %vm174, %v89, 0
    %v770 = vsel %vm174, %v90, 0
    %v773 = vsel %vm367, %v99, 0
    %775 = vmatpush.msra.mxu0 0.0
    %776 = vmatpush.msra.mxu0 0.0
    %777 = vmatpush.msra.mxu0 0.0
    %778 = vmatpush.msra.mxu0 0.0
    %779 = vmatpush.msra.mxu0 0.0
    %780 = vmatpush.msra.mxu0 0.0
    %781 = vmatpush.msra.mxu0 0.0
    %782 = vmatpush.msra.mxu0 %v773
    %783 = vmatpush.msra.mxu0 %v98
    %784 = vmatpush.msra.mxu0 %v97
    %785 = vmatpush.msra.mxu0 %v96
    %786 = vmatpush.msra.mxu0 %v95
    %787 = vmatpush.msra.mxu0 %v94
    %788 = vmatpush.msra.mxu0 %v93
    %789 = vmatpush.msra.mxu0 %v92
    %790 = vmatpush.msra.mxu0 %v91
    %791 = vmatmul.f32.gmra.mxu0 %v581
    %v792 = vpop.f32.mrf.mxu0
    %v793 = vadd.f32 %v389, %v792
    %794 = vmatmul.f32.gmra.mxu0 %v584
    %v795 = vpop.f32.mrf.mxu0
    %v796 = vadd.f32 %v392, %v795
    %797 = vmatmul.f32.gmra.mxu0 %v587
    %v798 = vpop.f32.mrf.mxu0
    %v799 = vadd.f32 %v395, %v798
    %800 = vmatmul.f32.gmra.mxu0 %v590
    %v801 = vpop.f32.mrf.mxu0
    %v802 = vadd.f32 %v398, %v801
    %803 = vmatmul.f32.gmra.mxu0 %v593
    %v804 = vpop.f32.mrf.mxu0
    %v805 = vadd.f32 %v401, %v804
    %806 = vmatmul.f32.gmra.mxu0 %v596
    %v807 = vpop.f32.mrf.mxu0
    %v808 = vadd.f32 %v404, %v807
    %809 = vmatmul.f32.gmra.mxu0 %v599
    %v810 = vpop.f32.mrf.mxu0
    %v811 = vadd.f32 %v407, %v810
    %812 = vmatmul.f32.gmra.mxu0 %v602
    %v813 = vpop.f32.mrf.mxu0
    %v814 = vadd.f32 %v410, %v813
    %815 = vmatmul.f32.gmra.mxu0 %v605
    %v816 = vpop.f32.mrf.mxu0
    %v817 = vadd.f32 %v413, %v816
    %818 = vmatmul.f32.gmra.mxu0 %v608
    %v819 = vpop.f32.mrf.mxu0
    %v820 = vadd.f32 %v416, %v819
    %821 = vmatmul.f32.gmra.mxu0 %v611
    %v822 = vpop.f32.mrf.mxu0
    %v823 = vadd.f32 %v419, %v822
    %824 = vmatmul.f32.gmra.mxu0 %v614
    %v825 = vpop.f32.mrf.mxu0
    %v826 = vadd.f32 %v422, %v825
    %827 = vmatmul.f32.gmra.mxu0 %v617
    %v828 = vpop.f32.mrf.mxu0
    %v829 = vadd.f32 %v425, %v828
    %830 = vmatmul.f32.gmra.mxu0 %v620
    %v831 = vpop.f32.mrf.mxu0
    %v832 = vadd.f32 %v428, %v831
    %833 = vmatmul.f32.gmra.mxu0 %v623
    %v834 = vpop.f32.mrf.mxu0
    %v835 = vadd.f32 %v431, %v834
    %836 = vmatmul.f32.gmra.mxu0 %v626
    %v837 = vpop.f32.mrf.mxu0
    %v838 = vadd.f32 %v434, %v837
    %839 = vmatmul.f32.gmra.mxu0 %v629
    %v840 = vpop.f32.mrf.mxu0
    %v841 = vadd.f32 %v437, %v840
    %842 = vmatmul.f32.gmra.mxu0 %v632
    %v843 = vpop.f32.mrf.mxu0
    %v844 = vadd.f32 %v440, %v843
    %845 = vmatmul.f32.gmra.mxu0 %v635
    %v846 = vpop.f32.mrf.mxu0
    %v847 = vadd.f32 %v443, %v846
    %848 = vmatmul.f32.gmra.mxu0 %v638
    %v849 = vpop.f32.mrf.mxu0
    %v850 = vadd.f32 %v446, %v849
    %851 = vmatmul.f32.gmra.mxu0 %v641
    %v852 = vpop.f32.mrf.mxu0
    %v853 = vadd.f32 %v449, %v852
    %854 = vmatmul.f32.gmra.mxu0 %v644
    %v855 = vpop.f32.mrf.mxu0
    %v856 = vadd.f32 %v452, %v855
    %857 = vmatmul.f32.gmra.mxu0 %v647
    %v858 = vpop.f32.mrf.mxu0
    %v859 = vadd.f32 %v455, %v858
    %860 = vmatmul.f32.gmra.mxu0 %v650
    %v861 = vpop.f32.mrf.mxu0
    %v862 = vadd.f32 %v458, %v861
    %863 = vmatmul.f32.gmra.mxu0 %v653
    %v864 = vpop.f32.mrf.mxu0
    %v865 = vadd.f32 %v461, %v864
    %866 = vmatmul.f32.gmra.mxu0 %v656
    %v867 = vpop.f32.mrf.mxu0
    %v868 = vadd.f32 %v464, %v867
    %869 = vmatmul.f32.gmra.mxu0 %v659
    %v870 = vpop.f32.mrf.mxu0
    %v871 = vadd.f32 %v467, %v870
    %872 = vmatmul.f32.gmra.mxu0 %v662
    %v873 = vpop.f32.mrf.mxu0
    %v874 = vadd.f32 %v470, %v873
    %875 = vmatmul.f32.gmra.mxu0 %v665
    %v876 = vpop.f32.mrf.mxu0
    %v877 = vadd.f32 %v473, %v876
    %878 = vmatmul.f32.gmra.mxu0 %v668
    %v879 = vpop.f32.mrf.mxu0
    %v880 = vadd.f32 %v476, %v879
    %881 = vmatmul.f32.gmra.mxu0 %v671
    %v882 = vpop.f32.mrf.mxu0
    %v883 = vadd.f32 %v479, %v882
    %884 = vmatmul.f32.gmra.mxu0 %v674
    %v885 = vpop.f32.mrf.mxu0
    %v886 = vadd.f32 %v482, %v885
    %887 = vmatmul.f32.gmra.mxu0 %v677
    %v888 = vpop.f32.mrf.mxu0
    %v889 = vadd.f32 %v485, %v888
    %890 = vmatmul.f32.gmra.mxu0 %v680
    %v891 = vpop.f32.mrf.mxu0
    %v892 = vadd.f32 %v488, %v891
    %893 = vmatmul.f32.gmra.mxu0 %v683
    %v894 = vpop.f32.mrf.mxu0
    %v895 = vadd.f32 %v491, %v894
    %896 = vmatmul.f32.gmra.mxu0 %v686
    %v897 = vpop.f32.mrf.mxu0
    %v898 = vadd.f32 %v494, %v897
    %899 = vmatmul.f32.gmra.mxu0 %v689
    %v900 = vpop.f32.mrf.mxu0
    %v901 = vadd.f32 %v497, %v900
    %902 = vmatmul.f32.gmra.mxu0 %v692
    %v903 = vpop.f32.mrf.mxu0
    %v904 = vadd.f32 %v500, %v903
    %905 = vmatmul.f32.gmra.mxu0 %v695
    %v906 = vpop.f32.mrf.mxu0
    %v907 = vadd.f32 %v503, %v906
    %908 = vmatmul.f32.gmra.mxu0 %v698
    %v909 = vpop.f32.mrf.mxu0
    %v910 = vadd.f32 %v506, %v909
    %911 = vmatmul.f32.gmra.mxu0 %v701
    %v912 = vpop.f32.mrf.mxu0
    %v913 = vadd.f32 %v509, %v912
    %914 = vmatmul.f32.gmra.mxu0 %v704
    %v915 = vpop.f32.mrf.mxu0
    %v916 = vadd.f32 %v512, %v915
    %917 = vmatmul.f32.gmra.mxu0 %v707
    %v918 = vpop.f32.mrf.mxu0
    %v919 = vadd.f32 %v515, %v918
    %920 = vmatmul.f32.gmra.mxu0 %v710
    %v921 = vpop.f32.mrf.mxu0
    %v922 = vadd.f32 %v518, %v921
    %923 = vmatmul.f32.gmra.mxu0 %v713
    %v924 = vpop.f32.mrf.mxu0
    %v925 = vadd.f32 %v521, %v924
    %926 = vmatmul.f32.gmra.mxu0 %v716
    %v927 = vpop.f32.mrf.mxu0
    %v928 = vadd.f32 %v524, %v927
    %929 = vmatmul.f32.gmra.mxu0 %v719
    %v930 = vpop.f32.mrf.mxu0
    %v931 = vadd.f32 %v527, %v930
    %932 = vmatmul.f32.gmra.mxu0 %v722
    %v933 = vpop.f32.mrf.mxu0
    %v934 = vadd.f32 %v530, %v933
    %935 = vmatmul.f32.gmra.mxu0 %v725
    %v936 = vpop.f32.mrf.mxu0
    %v937 = vadd.f32 %v533, %v936
    %938 = vmatmul.f32.gmra.mxu0 %v728
    %v939 = vpop.f32.mrf.mxu0
    %v940 = vadd.f32 %v536, %v939
    %941 = vmatmul.f32.gmra.mxu0 %v731
    %v942 = vpop.f32.mrf.mxu0
    %v943 = vadd.f32 %v539, %v942
    %944 = vmatmul.f32.gmra.mxu0 %v734
    %v945 = vpop.f32.mrf.mxu0
    %v946 = vadd.f32 %v542, %v945
    %947 = vmatmul.f32.gmra.mxu0 %v737
    %v948 = vpop.f32.mrf.mxu0
    %v949 = vadd.f32 %v545, %v948
    %950 = vmatmul.f32.gmra.mxu0 %v740
    %v951 = vpop.f32.mrf.mxu0
    %v952 = vadd.f32 %v548, %v951
    %953 = vmatmul.f32.gmra.mxu0 %v743
    %v954 = vpop.f32.mrf.mxu0
    %v955 = vadd.f32 %v551, %v954
    %956 = vmatmul.f32.gmra.mxu0 %v746
    %v957 = vpop.f32.mrf.mxu0
    %v958 = vadd.f32 %v554, %v957
    %959 = vmatmul.f32.gmra.mxu0 %v749
    %v960 = vpop.f32.mrf.mxu0
    %v961 = vadd.f32 %v557, %v960
    %962 = vmatmul.f32.gmra.mxu0 %v752
    %v963 = vpop.f32.mrf.mxu0
    %v964 = vadd.f32 %v560, %v963
    %965 = vmatmul.f32.gmra.mxu0 %v755
    %v966 = vpop.f32.mrf.mxu0
    %v967 = vadd.f32 %v563, %v966
    %968 = vmatmul.f32.gmra.mxu0 %v758
    %v969 = vpop.f32.mrf.mxu0
    %v970 = vadd.f32 %v566, %v969
    %971 = vmatmul.f32.gmra.mxu0 %v761
    %v972 = vpop.f32.mrf.mxu0
    %v973 = vadd.f32 %v569, %v972
    %974 = vmatmul.f32.gmra.mxu0 %v764
    %v975 = vpop.f32.mrf.mxu0
    %v976 = vadd.f32 %v572, %v975
    %977 = vmatmul.f32.gmra.mxu0 %v767
    %v978 = vpop.f32.mrf.mxu0
    %v979 = vadd.f32 %v575, %v978
    %980 = vmatmul.f32.gmra.mxu0 %v770
    %v981 = vpop.f32.mrf.mxu0
    %v982 = vadd.f32 %v578, %v981
    %983 = vdwg.mxu0
    %v984 = vld [vmem:[%s0 + $0x2] sm:$0xff]
    %v985 = vld [vmem:[%s0 + $0xa] sm:$0xff]
    %v986 = vld [vmem:[%s0 + $0x1a] sm:$0xff]
    %v987 = vld [vmem:[%s0 + $0x22] sm:$0xff]
    %v988 = vld [vmem:[%s0 + $0x32] sm:$0xff]
    %v989 = vld [vmem:[%s0 + $0x3a] sm:$0xff]
    %v990 = vld [vmem:[%s0 + $0x4a] sm:$0xff]
    %v991 = vld [vmem:[%s0 + $0x52] sm:$0xff]
    %v992 = vld [vmem:[%s0 + $0x62] sm:$0xff]
    %v993 = vld [vmem:[%s0 + $0x6a] sm:$0xff]
    %v994 = vld [vmem:[%s0 + $0x7a] sm:$0xff]
    %v995 = vld [vmem:[%s0 + $0x82] sm:$0xff]
    %v996 = vld [vmem:[%s0 + $0x92] sm:$0xff]
    %v997 = vld [vmem:[%s0 + $0x9a] sm:$0xff]
    %v998 = vld [vmem:[%s0 + $0xaa] sm:$0xff]
    %v999 = vld [vmem:[%s0 + $0xb2] sm:$0xff]
    %v1000 = vld [vmem:[%s0 + $0xc2] sm:$0xff]
    %v1001 = vld [vmem:[%s0 + $0xca] sm:$0xff]
    %v1002 = vld [vmem:[%s0 + $0xda] sm:$0xff]
    %v1003 = vld [vmem:[%s0 + $0xe2] sm:$0xff]
    %v1004 = vld [vmem:[%s0 + $0xf2] sm:$0xff]
    %v1005 = vld [vmem:[%s0 + $0xfa] sm:$0xff]
    %v1006 = vld [vmem:[%s0 + $0x10a] sm:$0xff]
    %v1007 = vld [vmem:[%s0 + $0x112] sm:$0xff]
    %v1008 = vld [vmem:[%s0 + $0x122] sm:$0xff]
    %v1009 = vld [vmem:[%s0 + $0x12a] sm:$0xff]
    %v1010 = vld [vmem:[%s0 + $0x13a] sm:$0xff]
    %v1011 = vld [vmem:[%s0 + $0x142] sm:$0xff]
    %v1012 = vld [vmem:[%s0 + $0x152] sm:$0xff]
    %v1013 = vld [vmem:[%s0 + $0x15a] sm:$0xff]
    %v1014 = vld [vmem:[%s0 + $0x16a] sm:$0xff]
    %v1015 = vld [vmem:[%s0 + $0x172] sm:$0xff]
    %v1016 = vld [vmem:[%s0 + $0x1b2] sm:$0xff]
    %v1017 = vld [vmem:[%s0 + $0x1ba] sm:$0xff]
    %v1018 = vld [vmem:[%s0 + $0x1ca] sm:$0xff]
    %v1019 = vld [vmem:[%s0 + $0x1d2] sm:$0xff]
    %v1020 = vld [vmem:[%s0 + $0x1e2] sm:$0xff]
    %v1021 = vld [vmem:[%s0 + $0x1ea] sm:$0xff]
    %v1022 = vld [vmem:[%s0 + $0x1fa] sm:$0xff]
    %v1023 = vld [vmem:[%s0 + $0x202] sm:$0xff]
    %v1024 = vld [vmem:[%s0 + $0x212] sm:$0xff]
    %v1025 = vld [vmem:[%s0 + $0x21a] sm:$0xff]
    %v1026 = vld [vmem:[%s0 + $0x22a] sm:$0xff]
    %v1027 = vld [vmem:[%s0 + $0x232] sm:$0xff]
    %v1028 = vld [vmem:[%s0 + $0x242] sm:$0xff]
    %v1029 = vld [vmem:[%s0 + $0x24a] sm:$0xff]
    %v1030 = vld [vmem:[%s0 + $0x25a] sm:$0xff]
    %v1031 = vld [vmem:[%s0 + $0x262] sm:$0xff]
    %v1032 = vld [vmem:[%s0 + $0x272] sm:$0xff]
    %v1033 = vld [vmem:[%s0 + $0x27a] sm:$0xff]
    %v1034 = vld [vmem:[%s0 + $0x28a] sm:$0xff]
    %v1035 = vld [vmem:[%s0 + $0x292] sm:$0xff]
    %v1036 = vld [vmem:[%s0 + $0x2a2] sm:$0xff]
    %v1037 = vld [vmem:[%s0 + $0x2aa] sm:$0xff]
    %v1038 = vld [vmem:[%s0 + $0x2ba] sm:$0xff]
    %v1039 = vld [vmem:[%s0 + $0x2c2] sm:$0xff]
    %v1040 = vld [vmem:[%s0 + $0x2d2] sm:$0xff]
    %v1041 = vld [vmem:[%s0 + $0x2da] sm:$0xff]
    %v1042 = vld [vmem:[%s0 + $0x2ea] sm:$0xff]
    %v1043 = vld [vmem:[%s0 + $0x2f2] sm:$0xff]
    %v1044 = vld [vmem:[%s0 + $0x302] sm:$0xff]
    %v1045 = vld [vmem:[%s0 + $0x30a] sm:$0xff]
    %v1046 = vld [vmem:[%s0 + $0x31a] sm:$0xff]
    %v1047 = vld [vmem:[%s0 + $0x322] sm:$0xff]
    %s1048 = scalar_lea.vmem %s1, 144
    %v1049 = vld [vmem:[%s1048] sm:$0xff]
    %v1050 = vld [vmem:[%s1048 + $0x8] sm:$0xff]
    %v1051 = vld [vmem:[%s1048 + $0x10] sm:$0xff]
    %v1052 = vld [vmem:[%s1048 + $0x18] sm:$0xff]
    %v1053 = vld [vmem:[%s1048 + $0x20] sm:$0xff]
    %v1054 = vld [vmem:[%s1048 + $0x28] sm:$0xff]
    %v1055 = vld [vmem:[%s1048 + $0x30] sm:$0xff]
    %v1056 = vld [vmem:[%s1048 + $0x38] sm:$0xff]
    %v1057 = vld [vmem:[%s1048 + $0x40] sm:$0x3]
    %v1059 = vsel %vm174, %v984, 0
    %v1062 = vsel %vm174, %v985, 0
    %v1065 = vsel %vm174, %v986, 0
    %v1068 = vsel %vm174, %v987, 0
    %v1071 = vsel %vm174, %v988, 0
    %v1074 = vsel %vm174, %v989, 0
    %v1077 = vsel %vm174, %v990, 0
    %v1080 = vsel %vm174, %v991, 0
    %v1083 = vsel %vm174, %v992, 0
    %v1086 = vsel %vm174, %v993, 0
    %v1089 = vsel %vm174, %v994, 0
    %v1092 = vsel %vm174, %v995, 0
    %v1095 = vsel %vm174, %v996, 0
    %v1098 = vsel %vm174, %v997, 0
    %v1101 = vsel %vm174, %v998, 0
    %v1104 = vsel %vm174, %v999, 0
    %v1107 = vsel %vm174, %v1000, 0
    %v1110 = vsel %vm174, %v1001, 0
    %v1113 = vsel %vm174, %v1002, 0
    %v1116 = vsel %vm174, %v1003, 0
    %v1119 = vsel %vm174, %v1004, 0
    %v1122 = vsel %vm174, %v1005, 0
    %v1125 = vsel %vm174, %v1006, 0
    %v1128 = vsel %vm174, %v1007, 0
    %v1131 = vsel %vm174, %v1008, 0
    %v1134 = vsel %vm174, %v1009, 0
    %v1137 = vsel %vm174, %v1010, 0
    %v1140 = vsel %vm174, %v1011, 0
    %v1143 = vsel %vm174, %v1012, 0
    %v1146 = vsel %vm174, %v1013, 0
    %v1149 = vsel %vm174, %v1014, 0
    %v1152 = vsel %vm174, %v1015, 0
    %v1155 = vsel %vm174, %v1016, 0
    %v1158 = vsel %vm174, %v1017, 0
    %v1161 = vsel %vm174, %v1018, 0
    %v1164 = vsel %vm174, %v1019, 0
    %v1167 = vsel %vm174, %v1020, 0
    %v1170 = vsel %vm174, %v1021, 0
    %v1173 = vsel %vm174, %v1022, 0
    %v1176 = vsel %vm174, %v1023, 0
    %v1179 = vsel %vm174, %v1024, 0
    %v1182 = vsel %vm174, %v1025, 0
    %v1185 = vsel %vm174, %v1026, 0
    %v1188 = vsel %vm174, %v1027, 0
    %v1191 = vsel %vm174, %v1028, 0
    %v1194 = vsel %vm174, %v1029, 0
    %v1197 = vsel %vm174, %v1030, 0
    %v1200 = vsel %vm174, %v1031, 0
    %v1203 = vsel %vm174, %v1032, 0
    %v1206 = vsel %vm174, %v1033, 0
    %v1209 = vsel %vm174, %v1034, 0
    %v1212 = vsel %vm174, %v1035, 0
    %v1215 = vsel %vm174, %v1036, 0
    %v1218 = vsel %vm174, %v1037, 0
    %v1221 = vsel %vm174, %v1038, 0
    %v1224 = vsel %vm174, %v1039, 0
    %v1227 = vsel %vm174, %v1040, 0
    %v1230 = vsel %vm174, %v1041, 0
    %v1233 = vsel %vm174, %v1042, 0
    %v1236 = vsel %vm174, %v1043, 0
    %v1239 = vsel %vm174, %v1044, 0
    %v1242 = vsel %vm174, %v1045, 0
    %v1245 = vsel %vm174, %v1046, 0
    %v1248 = vsel %vm174, %v1047, 0
    %v1251 = vsel %vm367, %v1057, 0
    %1253 = vmatpush.msra.mxu0 0.0
    %1254 = vmatpush.msra.mxu0 0.0
    %1255 = vmatpush.msra.mxu0 0.0
    %1256 = vmatpush.msra.mxu0 0.0
    %1257 = vmatpush.msra.mxu0 0.0
    %1258 = vmatpush.msra.mxu0 0.0
    %1259 = vmatpush.msra.mxu0 0.0
    %1260 = vmatpush.msra.mxu0 %v1251
    %1261 = vmatpush.msra.mxu0 %v1056
    %1262 = vmatpush.msra.mxu0 %v1055
    %1263 = vmatpush.msra.mxu0 %v1054
    %1264 = vmatpush.msra.mxu0 %v1053
    %1265 = vmatpush.msra.mxu0 %v1052
    %1266 = vmatpush.msra.mxu0 %v1051
    %1267 = vmatpush.msra.mxu0 %v1050
    %1268 = vmatpush.msra.mxu0 %v1049
    %1269 = vmatmul.f32.gmra.mxu0 %v1059
    %v1270 = vpop.f32.mrf.mxu0
    %v1271 = vadd.f32 0.0, %v1270
    %1272 = vmatmul.f32.gmra.mxu0 %v1062
    %v1273 = vpop.f32.mrf.mxu0
    %v1274 = vadd.f32 0.0, %v1273
    %1275 = vmatmul.f32.gmra.mxu0 %v1065
    %v1276 = vpop.f32.mrf.mxu0
    %v1277 = vadd.f32 0.0, %v1276
    %1278 = vmatmul.f32.gmra.mxu0 %v1068
    %v1279 = vpop.f32.mrf.mxu0
    %v1280 = vadd.f32 0.0, %v1279
    %1281 = vmatmul.f32.gmra.mxu0 %v1071
    %v1282 = vpop.f32.mrf.mxu0
    %v1283 = vadd.f32 0.0, %v1282
    %1284 = vmatmul.f32.gmra.mxu0 %v1074
    %v1285 = vpop.f32.mrf.mxu0
    %v1286 = vadd.f32 0.0, %v1285
    %1287 = vmatmul.f32.gmra.mxu0 %v1077
    %v1288 = vpop.f32.mrf.mxu0
    %v1289 = vadd.f32 0.0, %v1288
    %1290 = vmatmul.f32.gmra.mxu0 %v1080
    %v1291 = vpop.f32.mrf.mxu0
    %v1292 = vadd.f32 0.0, %v1291
    %1293 = vmatmul.f32.gmra.mxu0 %v1083
    %v1294 = vpop.f32.mrf.mxu0
    %v1295 = vadd.f32 0.0, %v1294
    %1296 = vmatmul.f32.gmra.mxu0 %v1086
    %v1297 = vpop.f32.mrf.mxu0
    %v1298 = vadd.f32 0.0, %v1297
    %1299 = vmatmul.f32.gmra.mxu0 %v1089
    %v1300 = vpop.f32.mrf.mxu0
    %v1301 = vadd.f32 0.0, %v1300
    %1302 = vmatmul.f32.gmra.mxu0 %v1092
    %v1303 = vpop.f32.mrf.mxu0
    %v1304 = vadd.f32 0.0, %v1303
    %1305 = vmatmul.f32.gmra.mxu0 %v1095
    %v1306 = vpop.f32.mrf.mxu0
    %v1307 = vadd.f32 0.0, %v1306
    %1308 = vmatmul.f32.gmra.mxu0 %v1098
    %v1309 = vpop.f32.mrf.mxu0
    %v1310 = vadd.f32 0.0, %v1309
    %1311 = vmatmul.f32.gmra.mxu0 %v1101
    %v1312 = vpop.f32.mrf.mxu0
    %v1313 = vadd.f32 0.0, %v1312
    %1314 = vmatmul.f32.gmra.mxu0 %v1104
    %v1315 = vpop.f32.mrf.mxu0
    %v1316 = vadd.f32 0.0, %v1315
    %1317 = vmatmul.f32.gmra.mxu0 %v1107
    %v1318 = vpop.f32.mrf.mxu0
    %v1319 = vadd.f32 0.0, %v1318
    %1320 = vmatmul.f32.gmra.mxu0 %v1110
    %v1321 = vpop.f32.mrf.mxu0
    %v1322 = vadd.f32 0.0, %v1321
    %1323 = vmatmul.f32.gmra.mxu0 %v1113
    %v1324 = vpop.f32.mrf.mxu0
    %v1325 = vadd.f32 0.0, %v1324
    %1326 = vmatmul.f32.gmra.mxu0 %v1116
    %v1327 = vpop.f32.mrf.mxu0
    %v1328 = vadd.f32 0.0, %v1327
    %1329 = vmatmul.f32.gmra.mxu0 %v1119
    %v1330 = vpop.f32.mrf.mxu0
    %v1331 = vadd.f32 0.0, %v1330
    %1332 = vmatmul.f32.gmra.mxu0 %v1122
    %v1333 = vpop.f32.mrf.mxu0
    %v1334 = vadd.f32 0.0, %v1333
    %1335 = vmatmul.f32.gmra.mxu0 %v1125
    %v1336 = vpop.f32.mrf.mxu0
    %v1337 = vadd.f32 0.0, %v1336
    %1338 = vmatmul.f32.gmra.mxu0 %v1128
    %v1339 = vpop.f32.mrf.mxu0
    %v1340 = vadd.f32 0.0, %v1339
    %1341 = vmatmul.f32.gmra.mxu0 %v1131
    %v1342 = vpop.f32.mrf.mxu0
    %v1343 = vadd.f32 0.0, %v1342
    %1344 = vmatmul.f32.gmra.mxu0 %v1134
    %v1345 = vpop.f32.mrf.mxu0
    %v1346 = vadd.f32 0.0, %v1345
    %1347 = vmatmul.f32.gmra.mxu0 %v1137
    %v1348 = vpop.f32.mrf.mxu0
    %v1349 = vadd.f32 0.0, %v1348
    %1350 = vmatmul.f32.gmra.mxu0 %v1140
    %v1351 = vpop.f32.mrf.mxu0
    %v1352 = vadd.f32 0.0, %v1351
    %1353 = vmatmul.f32.gmra.mxu0 %v1143
    %v1354 = vpop.f32.mrf.mxu0
    %v1355 = vadd.f32 0.0, %v1354
    %1356 = vmatmul.f32.gmra.mxu0 %v1146
    %v1357 = vpop.f32.mrf.mxu0
    %v1358 = vadd.f32 0.0, %v1357
    %1359 = vmatmul.f32.gmra.mxu0 %v1149
    %v1360 = vpop.f32.mrf.mxu0
    %v1361 = vadd.f32 0.0, %v1360
    %1362 = vmatmul.f32.gmra.mxu0 %v1152
    %v1363 = vpop.f32.mrf.mxu0
    %v1364 = vadd.f32 0.0, %v1363
    %1365 = vmatmul.f32.gmra.mxu0 %v1155
    %v1366 = vpop.f32.mrf.mxu0
    %v1367 = vadd.f32 0.0, %v1366
    %1368 = vmatmul.f32.gmra.mxu0 %v1158
    %v1369 = vpop.f32.mrf.mxu0
    %v1370 = vadd.f32 0.0, %v1369
    %1371 = vmatmul.f32.gmra.mxu0 %v1161
    %v1372 = vpop.f32.mrf.mxu0
    %v1373 = vadd.f32 0.0, %v1372
    %1374 = vmatmul.f32.gmra.mxu0 %v1164
    %v1375 = vpop.f32.mrf.mxu0
    %v1376 = vadd.f32 0.0, %v1375
    %1377 = vmatmul.f32.gmra.mxu0 %v1167
    %v1378 = vpop.f32.mrf.mxu0
    %v1379 = vadd.f32 0.0, %v1378
    %1380 = vmatmul.f32.gmra.mxu0 %v1170
    %v1381 = vpop.f32.mrf.mxu0
    %v1382 = vadd.f32 0.0, %v1381
    %1383 = vmatmul.f32.gmra.mxu0 %v1173
    %v1384 = vpop.f32.mrf.mxu0
    %v1385 = vadd.f32 0.0, %v1384
    %1386 = vmatmul.f32.gmra.mxu0 %v1176
    %v1387 = vpop.f32.mrf.mxu0
    %v1388 = vadd.f32 0.0, %v1387
    %1389 = vmatmul.f32.gmra.mxu0 %v1179
    %v1390 = vpop.f32.mrf.mxu0
    %v1391 = vadd.f32 0.0, %v1390
    %1392 = vmatmul.f32.gmra.mxu0 %v1182
    %v1393 = vpop.f32.mrf.mxu0
    %v1394 = vadd.f32 0.0, %v1393
    %1395 = vmatmul.f32.gmra.mxu0 %v1185
    %v1396 = vpop.f32.mrf.mxu0
    %v1397 = vadd.f32 0.0, %v1396
    %1398 = vmatmul.f32.gmra.mxu0 %v1188
    %v1399 = vpop.f32.mrf.mxu0
    %v1400 = vadd.f32 0.0, %v1399
    %1401 = vmatmul.f32.gmra.mxu0 %v1191
    %v1402 = vpop.f32.mrf.mxu0
    %v1403 = vadd.f32 0.0, %v1402
    %1404 = vmatmul.f32.gmra.mxu0 %v1194
    %v1405 = vpop.f32.mrf.mxu0
    %v1406 = vadd.f32 0.0, %v1405
    %1407 = vmatmul.f32.gmra.mxu0 %v1197
    %v1408 = vpop.f32.mrf.mxu0
    %v1409 = vadd.f32 0.0, %v1408
    %1410 = vmatmul.f32.gmra.mxu0 %v1200
    %v1411 = vpop.f32.mrf.mxu0
    %v1412 = vadd.f32 0.0, %v1411
    %1413 = vmatmul.f32.gmra.mxu0 %v1203
    %v1414 = vpop.f32.mrf.mxu0
    %v1415 = vadd.f32 0.0, %v1414
    %1416 = vmatmul.f32.gmra.mxu0 %v1206
    %v1417 = vpop.f32.mrf.mxu0
    %v1418 = vadd.f32 0.0, %v1417
    %1419 = vmatmul.f32.gmra.mxu0 %v1209
    %v1420 = vpop.f32.mrf.mxu0
    %v1421 = vadd.f32 0.0, %v1420
    %1422 = vmatmul.f32.gmra.mxu0 %v1212
    %v1423 = vpop.f32.mrf.mxu0
    %v1424 = vadd.f32 0.0, %v1423
    %1425 = vmatmul.f32.gmra.mxu0 %v1215
    %v1426 = vpop.f32.mrf.mxu0
    %v1427 = vadd.f32 0.0, %v1426
    %1428 = vmatmul.f32.gmra.mxu0 %v1218
    %v1429 = vpop.f32.mrf.mxu0
    %v1430 = vadd.f32 0.0, %v1429
    %1431 = vmatmul.f32.gmra.mxu0 %v1221
    %v1432 = vpop.f32.mrf.mxu0
    %v1433 = vadd.f32 0.0, %v1432
    %1434 = vmatmul.f32.gmra.mxu0 %v1224
    %v1435 = vpop.f32.mrf.mxu0
    %v1436 = vadd.f32 0.0, %v1435
    %1437 = vmatmul.f32.gmra.mxu0 %v1227
    %v1438 = vpop.f32.mrf.mxu0
    %v1439 = vadd.f32 0.0, %v1438
    %1440 = vmatmul.f32.gmra.mxu0 %v1230
    %v1441 = vpop.f32.mrf.mxu0
    %v1442 = vadd.f32 0.0, %v1441
    %1443 = vmatmul.f32.gmra.mxu0 %v1233
    %v1444 = vpop.f32.mrf.mxu0
    %v1445 = vadd.f32 0.0, %v1444
    %1446 = vmatmul.f32.gmra.mxu0 %v1236
    %v1447 = vpop.f32.mrf.mxu0
    %v1448 = vadd.f32 0.0, %v1447
    %1449 = vmatmul.f32.gmra.mxu0 %v1239
    %v1450 = vpop.f32.mrf.mxu0
    %v1451 = vadd.f32 0.0, %v1450
    %1452 = vmatmul.f32.gmra.mxu0 %v1242
    %v1453 = vpop.f32.mrf.mxu0
    %v1454 = vadd.f32 0.0, %v1453
    %1455 = vmatmul.f32.gmra.mxu0 %v1245
    %v1456 = vpop.f32.mrf.mxu0
    %v1457 = vadd.f32 0.0, %v1456
    %1458 = vmatmul.f32.gmra.mxu0 %v1248
    %v1459 = vpop.f32.mrf.mxu0
    %v1460 = vadd.f32 0.0, %v1459
    %1461 = vdwg.mxu0
    %v1462 = vadd.f32 %v793, %v1271
    %v1463 = vadd.f32 %v796, %v1274
    %v1464 = vadd.f32 %v799, %v1277
    %v1465 = vadd.f32 %v802, %v1280
    %v1466 = vadd.f32 %v805, %v1283
    %v1467 = vadd.f32 %v808, %v1286
    %v1468 = vadd.f32 %v811, %v1289
    %v1469 = vadd.f32 %v814, %v1292
    %v1470 = vadd.f32 %v817, %v1295
    %v1471 = vadd.f32 %v820, %v1298
    %v1472 = vadd.f32 %v823, %v1301
    %v1473 = vadd.f32 %v826, %v1304
    %v1474 = vadd.f32 %v829, %v1307
    %v1475 = vadd.f32 %v832, %v1310
    %v1476 = vadd.f32 %v835, %v1313
    %v1477 = vadd.f32 %v838, %v1316
    %v1478 = vadd.f32 %v841, %v1319
    %v1479 = vadd.f32 %v844, %v1322
    %v1480 = vadd.f32 %v847, %v1325
    %v1481 = vadd.f32 %v850, %v1328
    %v1482 = vadd.f32 %v853, %v1331
    %v1483 = vadd.f32 %v856, %v1334
    %v1484 = vadd.f32 %v859, %v1337
    %v1485 = vadd.f32 %v862, %v1340
    %v1486 = vadd.f32 %v865, %v1343
    %v1487 = vadd.f32 %v868, %v1346
    %v1488 = vadd.f32 %v871, %v1349
    %v1489 = vadd.f32 %v874, %v1352
    %v1490 = vadd.f32 %v877, %v1355
    %v1491 = vadd.f32 %v880, %v1358
    %v1492 = vadd.f32 %v883, %v1361
    %v1493 = vadd.f32 %v886, %v1364
    %v1494 = vadd.f32 %v889, %v1367
    %v1495 = vadd.f32 %v892, %v1370
    %v1496 = vadd.f32 %v895, %v1373
    %v1497 = vadd.f32 %v898, %v1376
    %v1498 = vadd.f32 %v901, %v1379
    %v1499 = vadd.f32 %v904, %v1382
    %v1500 = vadd.f32 %v907, %v1385
    %v1501 = vadd.f32 %v910, %v1388
    %v1502 = vadd.f32 %v913, %v1391
    %v1503 = vadd.f32 %v916, %v1394
    %v1504 = vadd.f32 %v919, %v1397
    %v1505 = vadd.f32 %v922, %v1400
    %v1506 = vadd.f32 %v925, %v1403
    %v1507 = vadd.f32 %v928, %v1406
    %v1508 = vadd.f32 %v931, %v1409
    %v1509 = vadd.f32 %v934, %v1412
    %v1510 = vadd.f32 %v937, %v1415
    %v1511 = vadd.f32 %v940, %v1418
    %v1512 = vadd.f32 %v943, %v1421
    %v1513 = vadd.f32 %v946, %v1424
    %v1514 = vadd.f32 %v949, %v1427
    %v1515 = vadd.f32 %v952, %v1430
    %v1516 = vadd.f32 %v955, %v1433
    %v1517 = vadd.f32 %v958, %v1436
    %v1518 = vadd.f32 %v961, %v1439
    %v1519 = vadd.f32 %v964, %v1442
    %v1520 = vadd.f32 %v967, %v1445
    %v1521 = vadd.f32 %v970, %v1448
    %v1522 = vadd.f32 %v973, %v1451
    %v1523 = vadd.f32 %v976, %v1454
    %v1524 = vadd.f32 %v979, %v1457
    %v1525 = vadd.f32 %v982, %v1460
    %s1526 = scalar_lea.vmem %s0, 24
    %v1527 = vld [vmem:[%s1526] sm:$0xff]
    %v1528 = vld [vmem:[%s1526 + $0x8] sm:$0xff]
    %v1529 = vld [vmem:[%s1526 + $0x18] sm:$0xff]
    %v1530 = vld [vmem:[%s1526 + $0x20] sm:$0xff]
    %v1531 = vld [vmem:[%s1526 + $0x30] sm:$0xff]
    %v1532 = vld [vmem:[%s1526 + $0x38] sm:$0xff]
    %v1533 = vld [vmem:[%s1526 + $0x48] sm:$0xff]
    %v1534 = vld [vmem:[%s1526 + $0x50] sm:$0xff]
    %v1535 = vld [vmem:[%s1526 + $0x60] sm:$0xff]
    %v1536 = vld [vmem:[%s1526 + $0x68] sm:$0xff]
    %v1537 = vld [vmem:[%s1526 + $0x78] sm:$0xff]
    %v1538 = vld [vmem:[%s1526 + $0x80] sm:$0xff]
    %v1539 = vld [vmem:[%s1526 + $0x90] sm:$0xff]
    %v1540 = vld [vmem:[%s1526 + $0x98] sm:$0xff]
    %v1541 = vld [vmem:[%s1526 + $0xa8] sm:$0xff]
    %v1542 = vld [vmem:[%s1526 + $0xb0] sm:$0xff]
    %v1543 = vld [vmem:[%s1526 + $0xc0] sm:$0xff]
    %v1544 = vld [vmem:[%s1526 + $0xc8] sm:$0xff]
    %v1545 = vld [vmem:[%s1526 + $0xd8] sm:$0xff]
    %v1546 = vld [vmem:[%s1526 + $0xe0] sm:$0xff]
    %v1547 = vld [vmem:[%s1526 + $0xf0] sm:$0xff]
    %v1548 = vld [vmem:[%s1526 + $0xf8] sm:$0xff]
    %v1549 = vld [vmem:[%s1526 + $0x108] sm:$0xff]
    %v1550 = vld [vmem:[%s1526 + $0x110] sm:$0xff]
    %v1551 = vld [vmem:[%s1526 + $0x120] sm:$0xff]
    %v1552 = vld [vmem:[%s1526 + $0x128] sm:$0xff]
    %v1553 = vld [vmem:[%s1526 + $0x138] sm:$0xff]
    %v1554 = vld [vmem:[%s1526 + $0x140] sm:$0xff]
    %v1555 = vld [vmem:[%s1526 + $0x150] sm:$0xff]
    %v1556 = vld [vmem:[%s1526 + $0x158] sm:$0xff]
    %v1557 = vld [vmem:[%s1526 + $0x168] sm:$0xff]
    %v1558 = vld [vmem:[%s1526 + $0x170] sm:$0xff]
    %v1559 = vld [vmem:[%s1526 + $0x1b0] sm:$0xff]
    %v1560 = vld [vmem:[%s1526 + $0x1b8] sm:$0xff]
    %v1561 = vld [vmem:[%s1526 + $0x1c8] sm:$0xff]
    %v1562 = vld [vmem:[%s1526 + $0x1d0] sm:$0xff]
    %v1563 = vld [vmem:[%s1526 + $0x1e0] sm:$0xff]
    %v1564 = vld [vmem:[%s1526 + $0x1e8] sm:$0xff]
    %v1565 = vld [vmem:[%s1526 + $0x1f8] sm:$0xff]
    %v1566 = vld [vmem:[%s1526 + $0x200] sm:$0xff]
    %v1567 = vld [vmem:[%s1526 + $0x210] sm:$0xff]
    %v1568 = vld [vmem:[%s1526 + $0x218] sm:$0xff]
    %v1569 = vld [vmem:[%s1526 + $0x228] sm:$0xff]
    %v1570 = vld [vmem:[%s1526 + $0x230] sm:$0xff]
    %v1571 = vld [vmem:[%s1526 + $0x240] sm:$0xff]
    %v1572 = vld [vmem:[%s1526 + $0x248] sm:$0xff]
    %v1573 = vld [vmem:[%s1526 + $0x258] sm:$0xff]
    %v1574 = vld [vmem:[%s1526 + $0x260] sm:$0xff]
    %v1575 = vld [vmem:[%s1526 + $0x270] sm:$0xff]
    %v1576 = vld [vmem:[%s1526 + $0x278] sm:$0xff]
    %v1577 = vld [vmem:[%s1526 + $0x288] sm:$0xff]
    %v1578 = vld [vmem:[%s1526 + $0x290] sm:$0xff]
    %v1579 = vld [vmem:[%s1526 + $0x2a0] sm:$0xff]
    %v1580 = vld [vmem:[%s1526 + $0x2a8] sm:$0xff]
    %v1581 = vld [vmem:[%s1526 + $0x2b8] sm:$0xff]
    %v1582 = vld [vmem:[%s1526 + $0x2c0] sm:$0xff]
    %v1583 = vld [vmem:[%s1526 + $0x2d0] sm:$0xff]
    %v1584 = vld [vmem:[%s1526 + $0x2d8] sm:$0xff]
    %v1585 = vld [vmem:[%s1526 + $0x2e8] sm:$0xff]
    %v1586 = vld [vmem:[%s1526 + $0x2f0] sm:$0xff]
    %v1587 = vld [vmem:[%s1526 + $0x300] sm:$0xff]
    %v1588 = vld [vmem:[%s1526 + $0x308] sm:$0xff]
    %v1589 = vld [vmem:[%s1526 + $0x318] sm:$0xff]
    %v1590 = vld [vmem:[%s1526 + $0x320] sm:$0xff]
    %s1591 = scalar_lea.vmem %s1, 216
    %v1592 = vld [vmem:[%s1591] sm:$0xff]
    %v1593 = vld [vmem:[%s1591 + $0x8] sm:$0xff]
    %v1594 = vld [vmem:[%s1591 + $0x10] sm:$0xff]
    %v1595 = vld [vmem:[%s1591 + $0x18] sm:$0xff]
    %v1596 = vld [vmem:[%s1591 + $0x20] sm:$0xff]
    %v1597 = vld [vmem:[%s1591 + $0x28] sm:$0xff]
    %v1598 = vld [vmem:[%s1591 + $0x30] sm:$0xff]
    %v1599 = vld [vmem:[%s1591 + $0x38] sm:$0xff]
    %v1600 = vld [vmem:[%s1591 + $0x40] sm:$0x3]
    %v1602 = vsel %vm174, %v1527, 0
    %v1605 = vsel %vm174, %v1528, 0
    %v1608 = vsel %vm174, %v1529, 0
    %v1611 = vsel %vm174, %v1530, 0
    %v1614 = vsel %vm174, %v1531, 0
    %v1617 = vsel %vm174, %v1532, 0
    %v1620 = vsel %vm174, %v1533, 0
    %v1623 = vsel %vm174, %v1534, 0
    %v1626 = vsel %vm174, %v1535, 0
    %v1629 = vsel %vm174, %v1536, 0
    %v1632 = vsel %vm174, %v1537, 0
    %v1635 = vsel %vm174, %v1538, 0
    %v1638 = vsel %vm174, %v1539, 0
    %v1641 = vsel %vm174, %v1540, 0
    %v1644 = vsel %vm174, %v1541, 0
    %v1647 = vsel %vm174, %v1542, 0
    %v1650 = vsel %vm174, %v1543, 0
    %v1653 = vsel %vm174, %v1544, 0
    %v1656 = vsel %vm174, %v1545, 0
    %v1659 = vsel %vm174, %v1546, 0
    %v1662 = vsel %vm174, %v1547, 0
    %v1665 = vsel %vm174, %v1548, 0
    %v1668 = vsel %vm174, %v1549, 0
    %v1671 = vsel %vm174, %v1550, 0
    %v1674 = vsel %vm174, %v1551, 0
    %v1677 = vsel %vm174, %v1552, 0
    %v1680 = vsel %vm174, %v1553, 0
    %v1683 = vsel %vm174, %v1554, 0
    %v1686 = vsel %vm174, %v1555, 0
    %v1689 = vsel %vm174, %v1556, 0
    %v1692 = vsel %vm174, %v1557, 0
    %v1695 = vsel %vm174, %v1558, 0
    %v1698 = vsel %vm174, %v1559, 0
    %v1701 = vsel %vm174, %v1560, 0
    %v1704 = vsel %vm174, %v1561, 0
    %v1707 = vsel %vm174, %v1562, 0
    %v1710 = vsel %vm174, %v1563, 0
    %v1713 = vsel %vm174, %v1564, 0
    %v1716 = vsel %vm174, %v1565, 0
    %v1719 = vsel %vm174, %v1566, 0
    %v1722 = vsel %vm174, %v1567, 0
    %v1725 = vsel %vm174, %v1568, 0
    %v1728 = vsel %vm174, %v1569, 0
    %v1731 = vsel %vm174, %v1570, 0
    %v1734 = vsel %vm174, %v1571, 0
    %v1737 = vsel %vm174, %v1572, 0
    %v1740 = vsel %vm174, %v1573, 0
    %v1743 = vsel %vm174, %v1574, 0
    %v1746 = vsel %vm174, %v1575, 0
    %v1749 = vsel %vm174, %v1576, 0
    %v1752 = vsel %vm174, %v1577, 0
    %v1755 = vsel %vm174, %v1578, 0
    %v1758 = vsel %vm174, %v1579, 0
    %v1761 = vsel %vm174, %v1580, 0
    %v1764 = vsel %vm174, %v1581, 0
    %v1767 = vsel %vm174, %v1582, 0
    %v1770 = vsel %vm174, %v1583, 0
    %v1773 = vsel %vm174, %v1584, 0
    %v1776 = vsel %vm174, %v1585, 0
    %v1779 = vsel %vm174, %v1586, 0
    %v1782 = vsel %vm174, %v1587, 0
    %v1785 = vsel %vm174, %v1588, 0
    %v1788 = vsel %vm174, %v1589, 0
    %v1791 = vsel %vm174, %v1590, 0
    %v1794 = vsel %vm367, %v1600, 0
    %1796 = vmatpush.msra.mxu0 0.0
    %1797 = vmatpush.msra.mxu0 0.0
    %1798 = vmatpush.msra.mxu0 0.0
    %1799 = vmatpush.msra.mxu0 0.0
    %1800 = vmatpush.msra.mxu0 0.0
    %1801 = vmatpush.msra.mxu0 0.0
    %1802 = vmatpush.msra.mxu0 0.0
    %1803 = vmatpush.msra.mxu0 %v1794
    %1804 = vmatpush.msra.mxu0 %v1599
    %1805 = vmatpush.msra.mxu0 %v1598
    %1806 = vmatpush.msra.mxu0 %v1597
    %1807 = vmatpush.msra.mxu0 %v1596
    %1808 = vmatpush.msra.mxu0 %v1595
    %1809 = vmatpush.msra.mxu0 %v1594
    %1810 = vmatpush.msra.mxu0 %v1593
    %1811 = vmatpush.msra.mxu0 %v1592
    %1812 = vmatmul.f32.gmra.mxu0 %v1602
    %v1813 = vpop.f32.mrf.mxu0
    %v1814 = vadd.f32 0.0, %v1813
    %1815 = vmatmul.f32.gmra.mxu0 %v1605
    %v1816 = vpop.f32.mrf.mxu0
    %v1817 = vadd.f32 0.0, %v1816
    %1818 = vmatmul.f32.gmra.mxu0 %v1608
    %v1819 = vpop.f32.mrf.mxu0
    %v1820 = vadd.f32 0.0, %v1819
    %1821 = vmatmul.f32.gmra.mxu0 %v1611
    %v1822 = vpop.f32.mrf.mxu0
    %v1823 = vadd.f32 0.0, %v1822
    %1824 = vmatmul.f32.gmra.mxu0 %v1614
    %v1825 = vpop.f32.mrf.mxu0
    %v1826 = vadd.f32 0.0, %v1825
    %1827 = vmatmul.f32.gmra.mxu0 %v1617
    %v1828 = vpop.f32.mrf.mxu0
    %v1829 = vadd.f32 0.0, %v1828
    %1830 = vmatmul.f32.gmra.mxu0 %v1620
    %v1831 = vpop.f32.mrf.mxu0
    %v1832 = vadd.f32 0.0, %v1831
    %1833 = vmatmul.f32.gmra.mxu0 %v1623
    %v1834 = vpop.f32.mrf.mxu0
    %v1835 = vadd.f32 0.0, %v1834
    %1836 = vmatmul.f32.gmra.mxu0 %v1626
    %v1837 = vpop.f32.mrf.mxu0
    %v1838 = vadd.f32 0.0, %v1837
    %1839 = vmatmul.f32.gmra.mxu0 %v1629
    %v1840 = vpop.f32.mrf.mxu0
    %v1841 = vadd.f32 0.0, %v1840
    %1842 = vmatmul.f32.gmra.mxu0 %v1632
    %v1843 = vpop.f32.mrf.mxu0
    %v1844 = vadd.f32 0.0, %v1843
    %1845 = vmatmul.f32.gmra.mxu0 %v1635
    %v1846 = vpop.f32.mrf.mxu0
    %v1847 = vadd.f32 0.0, %v1846
    %1848 = vmatmul.f32.gmra.mxu0 %v1638
    %v1849 = vpop.f32.mrf.mxu0
    %v1850 = vadd.f32 0.0, %v1849
    %1851 = vmatmul.f32.gmra.mxu0 %v1641
    %v1852 = vpop.f32.mrf.mxu0
    %v1853 = vadd.f32 0.0, %v1852
    %1854 = vmatmul.f32.gmra.mxu0 %v1644
    %v1855 = vpop.f32.mrf.mxu0
    %v1856 = vadd.f32 0.0, %v1855
    %1857 = vmatmul.f32.gmra.mxu0 %v1647
    %v1858 = vpop.f32.mrf.mxu0
    %v1859 = vadd.f32 0.0, %v1858
    %1860 = vmatmul.f32.gmra.mxu0 %v1650
    %v1861 = vpop.f32.mrf.mxu0
    %v1862 = vadd.f32 0.0, %v1861
    %1863 = vmatmul.f32.gmra.mxu0 %v1653
    %v1864 = vpop.f32.mrf.mxu0
    %v1865 = vadd.f32 0.0, %v1864
    %1866 = vmatmul.f32.gmra.mxu0 %v1656
    %v1867 = vpop.f32.mrf.mxu0
    %v1868 = vadd.f32 0.0, %v1867
    %1869 = vmatmul.f32.gmra.mxu0 %v1659
    %v1870 = vpop.f32.mrf.mxu0
    %v1871 = vadd.f32 0.0, %v1870
    %1872 = vmatmul.f32.gmra.mxu0 %v1662
    %v1873 = vpop.f32.mrf.mxu0
    %v1874 = vadd.f32 0.0, %v1873
    %1875 = vmatmul.f32.gmra.mxu0 %v1665
    %v1876 = vpop.f32.mrf.mxu0
    %v1877 = vadd.f32 0.0, %v1876
    %1878 = vmatmul.f32.gmra.mxu0 %v1668
    %v1879 = vpop.f32.mrf.mxu0
    %v1880 = vadd.f32 0.0, %v1879
    %1881 = vmatmul.f32.gmra.mxu0 %v1671
    %v1882 = vpop.f32.mrf.mxu0
    %v1883 = vadd.f32 0.0, %v1882
    %1884 = vmatmul.f32.gmra.mxu0 %v1674
    %v1885 = vpop.f32.mrf.mxu0
    %v1886 = vadd.f32 0.0, %v1885
    %1887 = vmatmul.f32.gmra.mxu0 %v1677
    %v1888 = vpop.f32.mrf.mxu0
    %v1889 = vadd.f32 0.0, %v1888
    %1890 = vmatmul.f32.gmra.mxu0 %v1680
    %v1891 = vpop.f32.mrf.mxu0
    %v1892 = vadd.f32 0.0, %v1891
    %1893 = vmatmul.f32.gmra.mxu0 %v1683
    %v1894 = vpop.f32.mrf.mxu0
    %v1895 = vadd.f32 0.0, %v1894
    %1896 = vmatmul.f32.gmra.mxu0 %v1686
    %v1897 = vpop.f32.mrf.mxu0
    %v1898 = vadd.f32 0.0, %v1897
    %1899 = vmatmul.f32.gmra.mxu0 %v1689
    %v1900 = vpop.f32.mrf.mxu0
    %v1901 = vadd.f32 0.0, %v1900
    %1902 = vmatmul.f32.gmra.mxu0 %v1692
    %v1903 = vpop.f32.mrf.mxu0
    %v1904 = vadd.f32 0.0, %v1903
    %1905 = vmatmul.f32.gmra.mxu0 %v1695
    %v1906 = vpop.f32.mrf.mxu0
    %v1907 = vadd.f32 0.0, %v1906
    %1908 = vmatmul.f32.gmra.mxu0 %v1698
    %v1909 = vpop.f32.mrf.mxu0
    %v1910 = vadd.f32 0.0, %v1909
    %1911 = vmatmul.f32.gmra.mxu0 %v1701
    %v1912 = vpop.f32.mrf.mxu0
    %v1913 = vadd.f32 0.0, %v1912
    %1914 = vmatmul.f32.gmra.mxu0 %v1704
    %v1915 = vpop.f32.mrf.mxu0
    %v1916 = vadd.f32 0.0, %v1915
    %1917 = vmatmul.f32.gmra.mxu0 %v1707
    %v1918 = vpop.f32.mrf.mxu0
    %v1919 = vadd.f32 0.0, %v1918
    %1920 = vmatmul.f32.gmra.mxu0 %v1710
    %v1921 = vpop.f32.mrf.mxu0
    %v1922 = vadd.f32 0.0, %v1921
    %1923 = vmatmul.f32.gmra.mxu0 %v1713
    %v1924 = vpop.f32.mrf.mxu0
    %v1925 = vadd.f32 0.0, %v1924
    %1926 = vmatmul.f32.gmra.mxu0 %v1716
    %v1927 = vpop.f32.mrf.mxu0
    %v1928 = vadd.f32 0.0, %v1927
    %1929 = vmatmul.f32.gmra.mxu0 %v1719
    %v1930 = vpop.f32.mrf.mxu0
    %v1931 = vadd.f32 0.0, %v1930
    %1932 = vmatmul.f32.gmra.mxu0 %v1722
    %v1933 = vpop.f32.mrf.mxu0
    %v1934 = vadd.f32 0.0, %v1933
    %1935 = vmatmul.f32.gmra.mxu0 %v1725
    %v1936 = vpop.f32.mrf.mxu0
    %v1937 = vadd.f32 0.0, %v1936
    %1938 = vmatmul.f32.gmra.mxu0 %v1728
    %v1939 = vpop.f32.mrf.mxu0
    %v1940 = vadd.f32 0.0, %v1939
    %1941 = vmatmul.f32.gmra.mxu0 %v1731
    %v1942 = vpop.f32.mrf.mxu0
    %v1943 = vadd.f32 0.0, %v1942
    %1944 = vmatmul.f32.gmra.mxu0 %v1734
    %v1945 = vpop.f32.mrf.mxu0
    %v1946 = vadd.f32 0.0, %v1945
    %1947 = vmatmul.f32.gmra.mxu0 %v1737
    %v1948 = vpop.f32.mrf.mxu0
    %v1949 = vadd.f32 0.0, %v1948
    %1950 = vmatmul.f32.gmra.mxu0 %v1740
    %v1951 = vpop.f32.mrf.mxu0
    %v1952 = vadd.f32 0.0, %v1951
    %1953 = vmatmul.f32.gmra.mxu0 %v1743
    %v1954 = vpop.f32.mrf.mxu0
    %v1955 = vadd.f32 0.0, %v1954
    %1956 = vmatmul.f32.gmra.mxu0 %v1746
    %v1957 = vpop.f32.mrf.mxu0
    %v1958 = vadd.f32 0.0, %v1957
    %1959 = vmatmul.f32.gmra.mxu0 %v1749
    %v1960 = vpop.f32.mrf.mxu0
    %v1961 = vadd.f32 0.0, %v1960
    %1962 = vmatmul.f32.gmra.mxu0 %v1752
    %v1963 = vpop.f32.mrf.mxu0
    %v1964 = vadd.f32 0.0, %v1963
    %1965 = vmatmul.f32.gmra.mxu0 %v1755
    %v1966 = vpop.f32.mrf.mxu0
    %v1967 = vadd.f32 0.0, %v1966
    %1968 = vmatmul.f32.gmra.mxu0 %v1758
    %v1969 = vpop.f32.mrf.mxu0
    %v1970 = vadd.f32 0.0, %v1969
    %1971 = vmatmul.f32.gmra.mxu0 %v1761
    %v1972 = vpop.f32.mrf.mxu0
    %v1973 = vadd.f32 0.0, %v1972
    %1974 = vmatmul.f32.gmra.mxu0 %v1764
    %v1975 = vpop.f32.mrf.mxu0
    %v1976 = vadd.f32 0.0, %v1975
    %1977 = vmatmul.f32.gmra.mxu0 %v1767
    %v1978 = vpop.f32.mrf.mxu0
    %v1979 = vadd.f32 0.0, %v1978
    %1980 = vmatmul.f32.gmra.mxu0 %v1770
    %v1981 = vpop.f32.mrf.mxu0
    %v1982 = vadd.f32 0.0, %v1981
    %1983 = vmatmul.f32.gmra.mxu0 %v1773
    %v1984 = vpop.f32.mrf.mxu0
    %v1985 = vadd.f32 0.0, %v1984
    %1986 = vmatmul.f32.gmra.mxu0 %v1776
    %v1987 = vpop.f32.mrf.mxu0
    %v1988 = vadd.f32 0.0, %v1987
    %1989 = vmatmul.f32.gmra.mxu0 %v1779
    %v1990 = vpop.f32.mrf.mxu0
    %v1991 = vadd.f32 0.0, %v1990
    %1992 = vmatmul.f32.gmra.mxu0 %v1782
    %v1993 = vpop.f32.mrf.mxu0
    %v1994 = vadd.f32 0.0, %v1993
    %1995 = vmatmul.f32.gmra.mxu0 %v1785
    %v1996 = vpop.f32.mrf.mxu0
    %v1997 = vadd.f32 0.0, %v1996
    %1998 = vmatmul.f32.gmra.mxu0 %v1788
    %v1999 = vpop.f32.mrf.mxu0
    %v2000 = vadd.f32 0.0, %v1999
    %2001 = vmatmul.f32.gmra.mxu0 %v1791
    %v2002 = vpop.f32.mrf.mxu0
    %v2003 = vadd.f32 0.0, %v2002
    %2004 = vdwg.mxu0
    %v2005 = vadd.f32 %v1462, %v1814
    %v2006 = vadd.f32 %v1463, %v1817
    %v2007 = vadd.f32 %v1464, %v1820
    %v2008 = vadd.f32 %v1465, %v1823
    %v2009 = vadd.f32 %v1466, %v1826
    %v2010 = vadd.f32 %v1467, %v1829
    %v2011 = vadd.f32 %v1468, %v1832
    %v2012 = vadd.f32 %v1469, %v1835
    %v2013 = vadd.f32 %v1470, %v1838
    %v2014 = vadd.f32 %v1471, %v1841
    %v2015 = vadd.f32 %v1472, %v1844
    %v2016 = vadd.f32 %v1473, %v1847
    %v2017 = vadd.f32 %v1474, %v1850
    %v2018 = vadd.f32 %v1475, %v1853
    %v2019 = vadd.f32 %v1476, %v1856
    %v2020 = vadd.f32 %v1477, %v1859
    %v2021 = vadd.f32 %v1478, %v1862
    %v2022 = vadd.f32 %v1479, %v1865
    %v2023 = vadd.f32 %v1480, %v1868
    %v2024 = vadd.f32 %v1481, %v1871
    %v2025 = vadd.f32 %v1482, %v1874
    %v2026 = vadd.f32 %v1483, %v1877
    %v2027 = vadd.f32 %v1484, %v1880
    %v2028 = vadd.f32 %v1485, %v1883
    %v2029 = vadd.f32 %v1486, %v1886
    %v2030 = vadd.f32 %v1487, %v1889
    %v2031 = vadd.f32 %v1488, %v1892
    %v2032 = vadd.f32 %v1489, %v1895
    %v2033 = vadd.f32 %v1490, %v1898
    %v2034 = vadd.f32 %v1491, %v1901
    %v2035 = vadd.f32 %v1492, %v1904
    %v2036 = vadd.f32 %v1493, %v1907
    %v2037 = vadd.f32 %v1494, %v1910
    %v2038 = vadd.f32 %v1495, %v1913
    %v2039 = vadd.f32 %v1496, %v1916
    %v2040 = vadd.f32 %v1497, %v1919
    %v2041 = vadd.f32 %v1498, %v1922
    %v2042 = vadd.f32 %v1499, %v1925
    %v2043 = vadd.f32 %v1500, %v1928
    %v2044 = vadd.f32 %v1501, %v1931
    %v2045 = vadd.f32 %v1502, %v1934
    %v2046 = vadd.f32 %v1503, %v1937
    %v2047 = vadd.f32 %v1504, %v1940
    %v2048 = vadd.f32 %v1505, %v1943
    %v2049 = vadd.f32 %v1506, %v1946
    %v2050 = vadd.f32 %v1507, %v1949
    %v2051 = vadd.f32 %v1508, %v1952
    %v2052 = vadd.f32 %v1509, %v1955
    %v2053 = vadd.f32 %v1510, %v1958
    %v2054 = vadd.f32 %v1511, %v1961
    %v2055 = vadd.f32 %v1512, %v1964
    %v2056 = vadd.f32 %v1513, %v1967
    %v2057 = vadd.f32 %v1514, %v1970
    %v2058 = vadd.f32 %v1515, %v1973
    %v2059 = vadd.f32 %v1516, %v1976
    %v2060 = vadd.f32 %v1517, %v1979
    %v2061 = vadd.f32 %v1518, %v1982
    %v2062 = vadd.f32 %v1519, %v1985
    %v2063 = vadd.f32 %v1520, %v1988
    %v2064 = vadd.f32 %v1521, %v1991
    %v2065 = vadd.f32 %v1522, %v1994
    %v2066 = vadd.f32 %v1523, %v1997
    %v2067 = vadd.f32 %v1524, %v2000
    %v2068 = vadd.f32 %v1525, %v2003
    %v2069 = vld [vmem:[%s1526 + $0x1] sm:$0xff]
    %v2070 = vld [vmem:[%s1526 + $0x9] sm:$0xff]
    %v2071 = vld [vmem:[%s1526 + $0x19] sm:$0xff]
    %v2072 = vld [vmem:[%s1526 + $0x21] sm:$0xff]
    %v2073 = vld [vmem:[%s1526 + $0x31] sm:$0xff]
    %v2074 = vld [vmem:[%s1526 + $0x39] sm:$0xff]
    %v2075 = vld [vmem:[%s1526 + $0x49] sm:$0xff]
    %v2076 = vld [vmem:[%s1526 + $0x51] sm:$0xff]
    %v2077 = vld [vmem:[%s1526 + $0x61] sm:$0xff]
    %v2078 = vld [vmem:[%s1526 + $0x69] sm:$0xff]
    %v2079 = vld [vmem:[%s1526 + $0x79] sm:$0xff]
    %v2080 = vld [vmem:[%s1526 + $0x81] sm:$0xff]
    %v2081 = vld [vmem:[%s1526 + $0x91] sm:$0xff]
    %v2082 = vld [vmem:[%s1526 + $0x99] sm:$0xff]
    %v2083 = vld [vmem:[%s1526 + $0xa9] sm:$0xff]
    %v2084 = vld [vmem:[%s1526 + $0xb1] sm:$0xff]
    %v2085 = vld [vmem:[%s1526 + $0xc1] sm:$0xff]
    %v2086 = vld [vmem:[%s1526 + $0xc9] sm:$0xff]
    %v2087 = vld [vmem:[%s1526 + $0xd9] sm:$0xff]
    %v2088 = vld [vmem:[%s1526 + $0xe1] sm:$0xff]
    %v2089 = vld [vmem:[%s1526 + $0xf1] sm:$0xff]
    %v2090 = vld [vmem:[%s1526 + $0xf9] sm:$0xff]
    %v2091 = vld [vmem:[%s1526 + $0x109] sm:$0xff]
    %v2092 = vld [vmem:[%s1526 + $0x111] sm:$0xff]
    %v2093 = vld [vmem:[%s1526 + $0x121] sm:$0xff]
    %v2094 = vld [vmem:[%s1526 + $0x129] sm:$0xff]
    %v2095 = vld [vmem:[%s1526 + $0x139] sm:$0xff]
    %v2096 = vld [vmem:[%s1526 + $0x141] sm:$0xff]
    %v2097 = vld [vmem:[%s1526 + $0x151] sm:$0xff]
    %v2098 = vld [vmem:[%s1526 + $0x159] sm:$0xff]
    %v2099 = vld [vmem:[%s1526 + $0x169] sm:$0xff]
    %v2100 = vld [vmem:[%s1526 + $0x171] sm:$0xff]
    %v2101 = vld [vmem:[%s1526 + $0x1b1] sm:$0xff]
    %v2102 = vld [vmem:[%s1526 + $0x1b9] sm:$0xff]
    %v2103 = vld [vmem:[%s1526 + $0x1c9] sm:$0xff]
    %v2104 = vld [vmem:[%s1526 + $0x1d1] sm:$0xff]
    %v2105 = vld [vmem:[%s1526 + $0x1e1] sm:$0xff]
    %v2106 = vld [vmem:[%s1526 + $0x1e9] sm:$0xff]
    %v2107 = vld [vmem:[%s1526 + $0x1f9] sm:$0xff]
    %v2108 = vld [vmem:[%s1526 + $0x201] sm:$0xff]
    %v2109 = vld [vmem:[%s1526 + $0x211] sm:$0xff]
    %v2110 = vld [vmem:[%s1526 + $0x219] sm:$0xff]
    %v2111 = vld [vmem:[%s1526 + $0x229] sm:$0xff]
    %v2112 = vld [vmem:[%s1526 + $0x231] sm:$0xff]
    %v2113 = vld [vmem:[%s1526 + $0x241] sm:$0xff]
    %v2114 = vld [vmem:[%s1526 + $0x249] sm:$0xff]
    %v2115 = vld [vmem:[%s1526 + $0x259] sm:$0xff]
    %v2116 = vld [vmem:[%s1526 + $0x261] sm:$0xff]
    %v2117 = vld [vmem:[%s1526 + $0x271] sm:$0xff]
    %v2118 = vld [vmem:[%s1526 + $0x279] sm:$0xff]
    %v2119 = vld [vmem:[%s1526 + $0x289] sm:$0xff]
    %v2120 = vld [vmem:[%s1526 + $0x291] sm:$0xff]
    %v2121 = vld [vmem:[%s1526 + $0x2a1] sm:$0xff]
    %v2122 = vld [vmem:[%s1526 + $0x2a9] sm:$0xff]
    %v2123 = vld [vmem:[%s1526 + $0x2b9] sm:$0xff]
    %v2124 = vld [vmem:[%s1526 + $0x2c1] sm:$0xff]
    %v2125 = vld [vmem:[%s1526 + $0x2d1] sm:$0xff]
    %v2126 = vld [vmem:[%s1526 + $0x2d9] sm:$0xff]
    %v2127 = vld [vmem:[%s1526 + $0x2e9] sm:$0xff]
    %v2128 = vld [vmem:[%s1526 + $0x2f1] sm:$0xff]
    %v2129 = vld [vmem:[%s1526 + $0x301] sm:$0xff]
    %v2130 = vld [vmem:[%s1526 + $0x309] sm:$0xff]
    %v2131 = vld [vmem:[%s1526 + $0x319] sm:$0xff]
    %v2132 = vld [vmem:[%s1526 + $0x321] sm:$0xff]
    %s2133 = scalar_lea.vmem %s1, 288
    %v2134 = vld [vmem:[%s2133] sm:$0xff]
    %v2135 = vld [vmem:[%s2133 + $0x8] sm:$0xff]
    %v2136 = vld [vmem:[%s2133 + $0x10] sm:$0xff]
    %v2137 = vld [vmem:[%s2133 + $0x18] sm:$0xff]
    %v2138 = vld [vmem:[%s2133 + $0x20] sm:$0xff]
    %v2139 = vld [vmem:[%s2133 + $0x28] sm:$0xff]
    %v2140 = vld [vmem:[%s2133 + $0x30] sm:$0xff]
    %v2141 = vld [vmem:[%s2133 + $0x38] sm:$0xff]
    %v2142 = vld [vmem:[%s2133 + $0x40] sm:$0x3]
    %v2144 = vsel %vm174, %v2069, 0
    %v2147 = vsel %vm174, %v2070, 0
    %v2150 = vsel %vm174, %v2071, 0
    %v2153 = vsel %vm174, %v2072, 0
    %v2156 = vsel %vm174, %v2073, 0
    %v2159 = vsel %vm174, %v2074, 0
    %v2162 = vsel %vm174, %v2075, 0
    %v2165 = vsel %vm174, %v2076, 0
    %v2168 = vsel %vm174, %v2077, 0
    %v2171 = vsel %vm174, %v2078, 0
    %v2174 = vsel %vm174, %v2079, 0
    %v2177 = vsel %vm174, %v2080, 0
    %v2180 = vsel %vm174, %v2081, 0
    %v2183 = vsel %vm174, %v2082, 0
    %v2186 = vsel %vm174, %v2083, 0
    %v2189 = vsel %vm174, %v2084, 0
    %v2192 = vsel %vm174, %v2085, 0
    %v2195 = vsel %vm174, %v2086, 0
    %v2198 = vsel %vm174, %v2087, 0
    %v2201 = vsel %vm174, %v2088, 0
    %v2204 = vsel %vm174, %v2089, 0
    %v2207 = vsel %vm174, %v2090, 0
    %v2210 = vsel %vm174, %v2091, 0
    %v2213 = vsel %vm174, %v2092, 0
    %v2216 = vsel %vm174, %v2093, 0
    %v2219 = vsel %vm174, %v2094, 0
    %v2222 = vsel %vm174, %v2095, 0
    %v2225 = vsel %vm174, %v2096, 0
    %v2228 = vsel %vm174, %v2097, 0
    %v2231 = vsel %vm174, %v2098, 0
    %v2234 = vsel %vm174, %v2099, 0
    %v2237 = vsel %vm174, %v2100, 0
    %v2240 = vsel %vm174, %v2101, 0
    %v2243 = vsel %vm174, %v2102, 0
    %v2246 = vsel %vm174, %v2103, 0
    %v2249 = vsel %vm174, %v2104, 0
    %v2252 = vsel %vm174, %v2105, 0
    %v2255 = vsel %vm174, %v2106, 0
    %v2258 = vsel %vm174, %v2107, 0
    %v2261 = vsel %vm174, %v2108, 0
    %v2264 = vsel %vm174, %v2109, 0
    %v2267 = vsel %vm174, %v2110, 0
    %v2270 = vsel %vm174, %v2111, 0
    %v2273 = vsel %vm174, %v2112, 0
    %v2276 = vsel %vm174, %v2113, 0
    %v2279 = vsel %vm174, %v2114, 0
    %v2282 = vsel %vm174, %v2115, 0
    %v2285 = vsel %vm174, %v2116, 0
    %v2288 = vsel %vm174, %v2117, 0
    %v2291 = vsel %vm174, %v2118, 0
    %v2294 = vsel %vm174, %v2119, 0
    %v2297 = vsel %vm174, %v2120, 0
    %v2300 = vsel %vm174, %v2121, 0
    %v2303 = vsel %vm174, %v2122, 0
    %v2306 = vsel %vm174, %v2123, 0
    %v2309 = vsel %vm174, %v2124, 0
    %v2312 = vsel %vm174, %v2125, 0
    %v2315 = vsel %vm174, %v2126, 0
    %v2318 = vsel %vm174, %v2127, 0
    %v2321 = vsel %vm174, %v2128, 0
    %v2324 = vsel %vm174, %v2129, 0
    %v2327 = vsel %vm174, %v2130, 0
    %v2330 = vsel %vm174, %v2131, 0
    %v2333 = vsel %vm174, %v2132, 0
    %v2336 = vsel %vm367, %v2142, 0
    %2338 = vmatpush.msra.mxu0 0.0
    %2339 = vmatpush.msra.mxu0 0.0
    %2340 = vmatpush.msra.mxu0 0.0
    %2341 = vmatpush.msra.mxu0 0.0
    %2342 = vmatpush.msra.mxu0 0.0
    %2343 = vmatpush.msra.mxu0 0.0
    %2344 = vmatpush.msra.mxu0 0.0
    %2345 = vmatpush.msra.mxu0 %v2336
    %2346 = vmatpush.msra.mxu0 %v2141
    %2347 = vmatpush.msra.mxu0 %v2140
    %2348 = vmatpush.msra.mxu0 %v2139
    %2349 = vmatpush.msra.mxu0 %v2138
    %2350 = vmatpush.msra.mxu0 %v2137
    %2351 = vmatpush.msra.mxu0 %v2136
    %2352 = vmatpush.msra.mxu0 %v2135
    %2353 = vmatpush.msra.mxu0 %v2134
    %2354 = vmatmul.f32.gmra.mxu0 %v2144
    %v2355 = vpop.f32.mrf.mxu0
    %v2356 = vadd.f32 0.0, %v2355
    %2357 = vmatmul.f32.gmra.mxu0 %v2147
    %v2358 = vpop.f32.mrf.mxu0
    %v2359 = vadd.f32 0.0, %v2358
    %2360 = vmatmul.f32.gmra.mxu0 %v2150
    %v2361 = vpop.f32.mrf.mxu0
    %v2362 = vadd.f32 0.0, %v2361
    %2363 = vmatmul.f32.gmra.mxu0 %v2153
    %v2364 = vpop.f32.mrf.mxu0
    %v2365 = vadd.f32 0.0, %v2364
    %2366 = vmatmul.f32.gmra.mxu0 %v2156
    %v2367 = vpop.f32.mrf.mxu0
    %v2368 = vadd.f32 0.0, %v2367
    %2369 = vmatmul.f32.gmra.mxu0 %v2159
    %v2370 = vpop.f32.mrf.mxu0
    %v2371 = vadd.f32 0.0, %v2370
    %2372 = vmatmul.f32.gmra.mxu0 %v2162
    %v2373 = vpop.f32.mrf.mxu0
    %v2374 = vadd.f32 0.0, %v2373
    %2375 = vmatmul.f32.gmra.mxu0 %v2165
    %v2376 = vpop.f32.mrf.mxu0
    %v2377 = vadd.f32 0.0, %v2376
    %2378 = vmatmul.f32.gmra.mxu0 %v2168
    %v2379 = vpop.f32.mrf.mxu0
    %v2380 = vadd.f32 0.0, %v2379
    %2381 = vmatmul.f32.gmra.mxu0 %v2171
    %v2382 = vpop.f32.mrf.mxu0
    %v2383 = vadd.f32 0.0, %v2382
    %2384 = vmatmul.f32.gmra.mxu0 %v2174
    %v2385 = vpop.f32.mrf.mxu0
    %v2386 = vadd.f32 0.0, %v2385
    %2387 = vmatmul.f32.gmra.mxu0 %v2177
    %v2388 = vpop.f32.mrf.mxu0
    %v2389 = vadd.f32 0.0, %v2388
    %2390 = vmatmul.f32.gmra.mxu0 %v2180
    %v2391 = vpop.f32.mrf.mxu0
    %v2392 = vadd.f32 0.0, %v2391
    %2393 = vmatmul.f32.gmra.mxu0 %v2183
    %v2394 = vpop.f32.mrf.mxu0
    %v2395 = vadd.f32 0.0, %v2394
    %2396 = vmatmul.f32.gmra.mxu0 %v2186
    %v2397 = vpop.f32.mrf.mxu0
    %v2398 = vadd.f32 0.0, %v2397
    %2399 = vmatmul.f32.gmra.mxu0 %v2189
    %v2400 = vpop.f32.mrf.mxu0
    %v2401 = vadd.f32 0.0, %v2400
    %2402 = vmatmul.f32.gmra.mxu0 %v2192
    %v2403 = vpop.f32.mrf.mxu0
    %v2404 = vadd.f32 0.0, %v2403
    %2405 = vmatmul.f32.gmra.mxu0 %v2195
    %v2406 = vpop.f32.mrf.mxu0
    %v2407 = vadd.f32 0.0, %v2406
    %2408 = vmatmul.f32.gmra.mxu0 %v2198
    %v2409 = vpop.f32.mrf.mxu0
    %v2410 = vadd.f32 0.0, %v2409
    %2411 = vmatmul.f32.gmra.mxu0 %v2201
    %v2412 = vpop.f32.mrf.mxu0
    %v2413 = vadd.f32 0.0, %v2412
    %2414 = vmatmul.f32.gmra.mxu0 %v2204
    %v2415 = vpop.f32.mrf.mxu0
    %v2416 = vadd.f32 0.0, %v2415
    %2417 = vmatmul.f32.gmra.mxu0 %v2207
    %v2418 = vpop.f32.mrf.mxu0
    %v2419 = vadd.f32 0.0, %v2418
    %2420 = vmatmul.f32.gmra.mxu0 %v2210
    %v2421 = vpop.f32.mrf.mxu0
    %v2422 = vadd.f32 0.0, %v2421
    %2423 = vmatmul.f32.gmra.mxu0 %v2213
    %v2424 = vpop.f32.mrf.mxu0
    %v2425 = vadd.f32 0.0, %v2424
    %2426 = vmatmul.f32.gmra.mxu0 %v2216
    %v2427 = vpop.f32.mrf.mxu0
    %v2428 = vadd.f32 0.0, %v2427
    %2429 = vmatmul.f32.gmra.mxu0 %v2219
    %v2430 = vpop.f32.mrf.mxu0
    %v2431 = vadd.f32 0.0, %v2430
    %2432 = vmatmul.f32.gmra.mxu0 %v2222
    %v2433 = vpop.f32.mrf.mxu0
    %v2434 = vadd.f32 0.0, %v2433
    %2435 = vmatmul.f32.gmra.mxu0 %v2225
    %v2436 = vpop.f32.mrf.mxu0
    %v2437 = vadd.f32 0.0, %v2436
    %2438 = vmatmul.f32.gmra.mxu0 %v2228
    %v2439 = vpop.f32.mrf.mxu0
    %v2440 = vadd.f32 0.0, %v2439
    %2441 = vmatmul.f32.gmra.mxu0 %v2231
    %v2442 = vpop.f32.mrf.mxu0
    %v2443 = vadd.f32 0.0, %v2442
    %2444 = vmatmul.f32.gmra.mxu0 %v2234
    %v2445 = vpop.f32.mrf.mxu0
    %v2446 = vadd.f32 0.0, %v2445
    %2447 = vmatmul.f32.gmra.mxu0 %v2237
    %v2448 = vpop.f32.mrf.mxu0
    %v2449 = vadd.f32 0.0, %v2448
    %2450 = vmatmul.f32.gmra.mxu0 %v2240
    %v2451 = vpop.f32.mrf.mxu0
    %v2452 = vadd.f32 0.0, %v2451
    %2453 = vmatmul.f32.gmra.mxu0 %v2243
    %v2454 = vpop.f32.mrf.mxu0
    %v2455 = vadd.f32 0.0, %v2454
    %2456 = vmatmul.f32.gmra.mxu0 %v2246
    %v2457 = vpop.f32.mrf.mxu0
    %v2458 = vadd.f32 0.0, %v2457
    %2459 = vmatmul.f32.gmra.mxu0 %v2249
    %v2460 = vpop.f32.mrf.mxu0
    %v2461 = vadd.f32 0.0, %v2460
    %2462 = vmatmul.f32.gmra.mxu0 %v2252
    %v2463 = vpop.f32.mrf.mxu0
    %v2464 = vadd.f32 0.0, %v2463
    %2465 = vmatmul.f32.gmra.mxu0 %v2255
    %v2466 = vpop.f32.mrf.mxu0
    %v2467 = vadd.f32 0.0, %v2466
    %2468 = vmatmul.f32.gmra.mxu0 %v2258
    %v2469 = vpop.f32.mrf.mxu0
    %v2470 = vadd.f32 0.0, %v2469
    %2471 = vmatmul.f32.gmra.mxu0 %v2261
    %v2472 = vpop.f32.mrf.mxu0
    %v2473 = vadd.f32 0.0, %v2472
    %2474 = vmatmul.f32.gmra.mxu0 %v2264
    %v2475 = vpop.f32.mrf.mxu0
    %v2476 = vadd.f32 0.0, %v2475
    %2477 = vmatmul.f32.gmra.mxu0 %v2267
    %v2478 = vpop.f32.mrf.mxu0
    %v2479 = vadd.f32 0.0, %v2478
    %2480 = vmatmul.f32.gmra.mxu0 %v2270
    %v2481 = vpop.f32.mrf.mxu0
    %v2482 = vadd.f32 0.0, %v2481
    %2483 = vmatmul.f32.gmra.mxu0 %v2273
    %v2484 = vpop.f32.mrf.mxu0
    %v2485 = vadd.f32 0.0, %v2484
    %2486 = vmatmul.f32.gmra.mxu0 %v2276
    %v2487 = vpop.f32.mrf.mxu0
    %v2488 = vadd.f32 0.0, %v2487
    %2489 = vmatmul.f32.gmra.mxu0 %v2279
    %v2490 = vpop.f32.mrf.mxu0
    %v2491 = vadd.f32 0.0, %v2490
    %2492 = vmatmul.f32.gmra.mxu0 %v2282
    %v2493 = vpop.f32.mrf.mxu0
    %v2494 = vadd.f32 0.0, %v2493
    %2495 = vmatmul.f32.gmra.mxu0 %v2285
    %v2496 = vpop.f32.mrf.mxu0
    %v2497 = vadd.f32 0.0, %v2496
    %2498 = vmatmul.f32.gmra.mxu0 %v2288
    %v2499 = vpop.f32.mrf.mxu0
    %v2500 = vadd.f32 0.0, %v2499
    %2501 = vmatmul.f32.gmra.mxu0 %v2291
    %v2502 = vpop.f32.mrf.mxu0
    %v2503 = vadd.f32 0.0, %v2502
    %2504 = vmatmul.f32.gmra.mxu0 %v2294
    %v2505 = vpop.f32.mrf.mxu0
    %v2506 = vadd.f32 0.0, %v2505
    %2507 = vmatmul.f32.gmra.mxu0 %v2297
    %v2508 = vpop.f32.mrf.mxu0
    %v2509 = vadd.f32 0.0, %v2508
    %2510 = vmatmul.f32.gmra.mxu0 %v2300
    %v2511 = vpop.f32.mrf.mxu0
    %v2512 = vadd.f32 0.0, %v2511
    %2513 = vmatmul.f32.gmra.mxu0 %v2303
    %v2514 = vpop.f32.mrf.mxu0
    %v2515 = vadd.f32 0.0, %v2514
    %2516 = vmatmul.f32.gmra.mxu0 %v2306
    %v2517 = vpop.f32.mrf.mxu0
    %v2518 = vadd.f32 0.0, %v2517
    %2519 = vmatmul.f32.gmra.mxu0 %v2309
    %v2520 = vpop.f32.mrf.mxu0
    %v2521 = vadd.f32 0.0, %v2520
    %2522 = vmatmul.f32.gmra.mxu0 %v2312
    %v2523 = vpop.f32.mrf.mxu0
    %v2524 = vadd.f32 0.0, %v2523
    %2525 = vmatmul.f32.gmra.mxu0 %v2315
    %v2526 = vpop.f32.mrf.mxu0
    %v2527 = vadd.f32 0.0, %v2526
    %2528 = vmatmul.f32.gmra.mxu0 %v2318
    %v2529 = vpop.f32.mrf.mxu0
    %v2530 = vadd.f32 0.0, %v2529
    %2531 = vmatmul.f32.gmra.mxu0 %v2321
    %v2532 = vpop.f32.mrf.mxu0
    %v2533 = vadd.f32 0.0, %v2532
    %2534 = vmatmul.f32.gmra.mxu0 %v2324
    %v2535 = vpop.f32.mrf.mxu0
    %v2536 = vadd.f32 0.0, %v2535
    %2537 = vmatmul.f32.gmra.mxu0 %v2327
    %v2538 = vpop.f32.mrf.mxu0
    %v2539 = vadd.f32 0.0, %v2538
    %2540 = vmatmul.f32.gmra.mxu0 %v2330
    %v2541 = vpop.f32.mrf.mxu0
    %v2542 = vadd.f32 0.0, %v2541
    %2543 = vmatmul.f32.gmra.mxu0 %v2333
    %v2544 = vpop.f32.mrf.mxu0
    %v2545 = vadd.f32 0.0, %v2544
    %2546 = vdwg.mxu0
    %v2547 = vadd.f32 %v2005, %v2356
    %v2548 = vadd.f32 %v2006, %v2359
    %v2549 = vadd.f32 %v2007, %v2362
    %v2550 = vadd.f32 %v2008, %v2365
    %v2551 = vadd.f32 %v2009, %v2368
    %v2552 = vadd.f32 %v2010, %v2371
    %v2553 = vadd.f32 %v2011, %v2374
    %v2554 = vadd.f32 %v2012, %v2377
    %v2555 = vadd.f32 %v2013, %v2380
    %v2556 = vadd.f32 %v2014, %v2383
    %v2557 = vadd.f32 %v2015, %v2386
    %v2558 = vadd.f32 %v2016, %v2389
    %v2559 = vadd.f32 %v2017, %v2392
    %v2560 = vadd.f32 %v2018, %v2395
    %v2561 = vadd.f32 %v2019, %v2398
    %v2562 = vadd.f32 %v2020, %v2401
    %v2563 = vadd.f32 %v2021, %v2404
    %v2564 = vadd.f32 %v2022, %v2407
    %v2565 = vadd.f32 %v2023, %v2410
    %v2566 = vadd.f32 %v2024, %v2413
    %v2567 = vadd.f32 %v2025, %v2416
    %v2568 = vadd.f32 %v2026, %v2419
    %v2569 = vadd.f32 %v2027, %v2422
    %v2570 = vadd.f32 %v2028, %v2425
    %v2571 = vadd.f32 %v2029, %v2428
    %v2572 = vadd.f32 %v2030, %v2431
    %v2573 = vadd.f32 %v2031, %v2434
    %v2574 = vadd.f32 %v2032, %v2437
    %v2575 = vadd.f32 %v2033, %v2440
    %v2576 = vadd.f32 %v2034, %v2443
    %v2577 = vadd.f32 %v2035, %v2446
    %v2578 = vadd.f32 %v2036, %v2449
    %v2579 = vadd.f32 %v2037, %v2452
    %v2580 = vadd.f32 %v2038, %v2455
    %v2581 = vadd.f32 %v2039, %v2458
    %v2582 = vadd.f32 %v2040, %v2461
    %v2583 = vadd.f32 %v2041, %v2464
    %v2584 = vadd.f32 %v2042, %v2467
    %v2585 = vadd.f32 %v2043, %v2470
    %v2586 = vadd.f32 %v2044, %v2473
    %v2587 = vadd.f32 %v2045, %v2476
    %v2588 = vadd.f32 %v2046, %v2479
    %v2589 = vadd.f32 %v2047, %v2482
    %v2590 = vadd.f32 %v2048, %v2485
    %v2591 = vadd.f32 %v2049, %v2488
    %v2592 = vadd.f32 %v2050, %v2491
    %v2593 = vadd.f32 %v2051, %v2494
    %v2594 = vadd.f32 %v2052, %v2497
    %v2595 = vadd.f32 %v2053, %v2500
    %v2596 = vadd.f32 %v2054, %v2503
    %v2597 = vadd.f32 %v2055, %v2506
    %v2598 = vadd.f32 %v2056, %v2509
    %v2599 = vadd.f32 %v2057, %v2512
    %v2600 = vadd.f32 %v2058, %v2515
    %v2601 = vadd.f32 %v2059, %v2518
    %v2602 = vadd.f32 %v2060, %v2521
    %v2603 = vadd.f32 %v2061, %v2524
    %v2604 = vadd.f32 %v2062, %v2527
    %v2605 = vadd.f32 %v2063, %v2530
    %v2606 = vadd.f32 %v2064, %v2533
    %v2607 = vadd.f32 %v2065, %v2536
    %v2608 = vadd.f32 %v2066, %v2539
    %v2609 = vadd.f32 %v2067, %v2542
    %v2610 = vadd.f32 %v2068, %v2545
    %v2611 = vld [vmem:[%s1526 + $0x2] sm:$0xff]
    %v2612 = vld [vmem:[%s1526 + $0xa] sm:$0xff]
    %v2613 = vld [vmem:[%s1526 + $0x1a] sm:$0xff]
    %v2614 = vld [vmem:[%s1526 + $0x22] sm:$0xff]
    %v2615 = vld [vmem:[%s1526 + $0x32] sm:$0xff]
    %v2616 = vld [vmem:[%s1526 + $0x3a] sm:$0xff]
    %v2617 = vld [vmem:[%s1526 + $0x4a] sm:$0xff]
    %v2618 = vld [vmem:[%s1526 + $0x52] sm:$0xff]
    %v2619 = vld [vmem:[%s1526 + $0x62] sm:$0xff]
    %v2620 = vld [vmem:[%s1526 + $0x6a] sm:$0xff]
    %v2621 = vld [vmem:[%s1526 + $0x7a] sm:$0xff]
    %v2622 = vld [vmem:[%s1526 + $0x82] sm:$0xff]
    %v2623 = vld [vmem:[%s1526 + $0x92] sm:$0xff]
    %v2624 = vld [vmem:[%s1526 + $0x9a] sm:$0xff]
    %v2625 = vld [vmem:[%s1526 + $0xaa] sm:$0xff]
    %v2626 = vld [vmem:[%s1526 + $0xb2] sm:$0xff]
    %v2627 = vld [vmem:[%s1526 + $0xc2] sm:$0xff]
    %v2628 = vld [vmem:[%s1526 + $0xca] sm:$0xff]
    %v2629 = vld [vmem:[%s1526 + $0xda] sm:$0xff]
    %v2630 = vld [vmem:[%s1526 + $0xe2] sm:$0xff]
    %v2631 = vld [vmem:[%s1526 + $0xf2] sm:$0xff]
    %v2632 = vld [vmem:[%s1526 + $0xfa] sm:$0xff]
    %v2633 = vld [vmem:[%s1526 + $0x10a] sm:$0xff]
    %v2634 = vld [vmem:[%s1526 + $0x112] sm:$0xff]
    %v2635 = vld [vmem:[%s1526 + $0x122] sm:$0xff]
    %v2636 = vld [vmem:[%s1526 + $0x12a] sm:$0xff]
    %v2637 = vld [vmem:[%s1526 + $0x13a] sm:$0xff]
    %v2638 = vld [vmem:[%s1526 + $0x142] sm:$0xff]
    %v2639 = vld [vmem:[%s1526 + $0x152] sm:$0xff]
    %v2640 = vld [vmem:[%s1526 + $0x15a] sm:$0xff]
    %v2641 = vld [vmem:[%s1526 + $0x16a] sm:$0xff]
    %v2642 = vld [vmem:[%s1526 + $0x172] sm:$0xff]
    %v2643 = vld [vmem:[%s1526 + $0x1b2] sm:$0xff]
    %v2644 = vld [vmem:[%s1526 + $0x1ba] sm:$0xff]
    %v2645 = vld [vmem:[%s1526 + $0x1ca] sm:$0xff]
    %v2646 = vld [vmem:[%s1526 + $0x1d2] sm:$0xff]
    %v2647 = vld [vmem:[%s1526 + $0x1e2] sm:$0xff]
    %v2648 = vld [vmem:[%s1526 + $0x1ea] sm:$0xff]
    %v2649 = vld [vmem:[%s1526 + $0x1fa] sm:$0xff]
    %v2650 = vld [vmem:[%s1526 + $0x202] sm:$0xff]
    %v2651 = vld [vmem:[%s1526 + $0x212] sm:$0xff]
    %v2652 = vld [vmem:[%s1526 + $0x21a] sm:$0xff]
    %v2653 = vld [vmem:[%s1526 + $0x22a] sm:$0xff]
    %v2654 = vld [vmem:[%s1526 + $0x232] sm:$0xff]
    %v2655 = vld [vmem:[%s1526 + $0x242] sm:$0xff]
    %v2656 = vld [vmem:[%s1526 + $0x24a] sm:$0xff]
    %v2657 = vld [vmem:[%s1526 + $0x25a] sm:$0xff]
    %v2658 = vld [vmem:[%s1526 + $0x262] sm:$0xff]
    %v2659 = vld [vmem:[%s1526 + $0x272] sm:$0xff]
    %v2660 = vld [vmem:[%s1526 + $0x27a] sm:$0xff]
    %v2661 = vld [vmem:[%s1526 + $0x28a] sm:$0xff]
    %v2662 = vld [vmem:[%s1526 + $0x292] sm:$0xff]
    %v2663 = vld [vmem:[%s1526 + $0x2a2] sm:$0xff]
    %v2664 = vld [vmem:[%s1526 + $0x2aa] sm:$0xff]
    %v2665 = vld [vmem:[%s1526 + $0x2ba] sm:$0xff]
    %v2666 = vld [vmem:[%s1526 + $0x2c2] sm:$0xff]
    %v2667 = vld [vmem:[%s1526 + $0x2d2] sm:$0xff]
    %v2668 = vld [vmem:[%s1526 + $0x2da] sm:$0xff]
    %v2669 = vld [vmem:[%s1526 + $0x2ea] sm:$0xff]
    %v2670 = vld [vmem:[%s1526 + $0x2f2] sm:$0xff]
    %v2671 = vld [vmem:[%s1526 + $0x302] sm:$0xff]
    %v2672 = vld [vmem:[%s1526 + $0x30a] sm:$0xff]
    %v2673 = vld [vmem:[%s1526 + $0x31a] sm:$0xff]
    %v2674 = vld [vmem:[%s1526 + $0x322] sm:$0xff]
    %s2675 = scalar_lea.vmem %s1, 360
    %v2676 = vld [vmem:[%s2675] sm:$0xff]
    %v2677 = vld [vmem:[%s2675 + $0x8] sm:$0xff]
    %v2678 = vld [vmem:[%s2675 + $0x10] sm:$0xff]
    %v2679 = vld [vmem:[%s2675 + $0x18] sm:$0xff]
    %v2680 = vld [vmem:[%s2675 + $0x20] sm:$0xff]
    %v2681 = vld [vmem:[%s2675 + $0x28] sm:$0xff]
    %v2682 = vld [vmem:[%s2675 + $0x30] sm:$0xff]
    %v2683 = vld [vmem:[%s2675 + $0x38] sm:$0xff]
    %v2684 = vld [vmem:[%s2675 + $0x40] sm:$0x3]
    %v2686 = vsel %vm174, %v2611, 0
    %v2689 = vsel %vm174, %v2612, 0
    %v2692 = vsel %vm174, %v2613, 0
    %v2695 = vsel %vm174, %v2614, 0
    %v2698 = vsel %vm174, %v2615, 0
    %v2701 = vsel %vm174, %v2616, 0
    %v2704 = vsel %vm174, %v2617, 0
    %v2707 = vsel %vm174, %v2618, 0
    %v2710 = vsel %vm174, %v2619, 0
    %v2713 = vsel %vm174, %v2620, 0
    %v2716 = vsel %vm174, %v2621, 0
    %v2719 = vsel %vm174, %v2622, 0
    %v2722 = vsel %vm174, %v2623, 0
    %v2725 = vsel %vm174, %v2624, 0
    %v2728 = vsel %vm174, %v2625, 0
    %v2731 = vsel %vm174, %v2626, 0
    %v2734 = vsel %vm174, %v2627, 0
    %v2737 = vsel %vm174, %v2628, 0
    %v2740 = vsel %vm174, %v2629, 0
    %v2743 = vsel %vm174, %v2630, 0
    %v2746 = vsel %vm174, %v2631, 0
    %v2749 = vsel %vm174, %v2632, 0
    %v2752 = vsel %vm174, %v2633, 0
    %v2755 = vsel %vm174, %v2634, 0
    %v2758 = vsel %vm174, %v2635, 0
    %v2761 = vsel %vm174, %v2636, 0
    %v2764 = vsel %vm174, %v2637, 0
    %v2767 = vsel %vm174, %v2638, 0
    %v2770 = vsel %vm174, %v2639, 0
    %v2773 = vsel %vm174, %v2640, 0
    %v2776 = vsel %vm174, %v2641, 0
    %v2779 = vsel %vm174, %v2642, 0
    %v2782 = vsel %vm174, %v2643, 0
    %v2785 = vsel %vm174, %v2644, 0
    %v2788 = vsel %vm174, %v2645, 0
    %v2791 = vsel %vm174, %v2646, 0
    %v2794 = vsel %vm174, %v2647, 0
    %v2797 = vsel %vm174, %v2648, 0
    %v2800 = vsel %vm174, %v2649, 0
    %v2803 = vsel %vm174, %v2650, 0
    %v2806 = vsel %vm174, %v2651, 0
    %v2809 = vsel %vm174, %v2652, 0
    %v2812 = vsel %vm174, %v2653, 0
    %v2815 = vsel %vm174, %v2654, 0
    %v2818 = vsel %vm174, %v2655, 0
    %v2821 = vsel %vm174, %v2656, 0
    %v2824 = vsel %vm174, %v2657, 0
    %v2827 = vsel %vm174, %v2658, 0
    %v2830 = vsel %vm174, %v2659, 0
    %v2833 = vsel %vm174, %v2660, 0
    %v2836 = vsel %vm174, %v2661, 0
    %v2839 = vsel %vm174, %v2662, 0
    %v2842 = vsel %vm174, %v2663, 0
    %v2845 = vsel %vm174, %v2664, 0
    %v2848 = vsel %vm174, %v2665, 0
    %v2851 = vsel %vm174, %v2666, 0
    %v2854 = vsel %vm174, %v2667, 0
    %v2857 = vsel %vm174, %v2668, 0
    %v2860 = vsel %vm174, %v2669, 0
    %v2863 = vsel %vm174, %v2670, 0
    %v2866 = vsel %vm174, %v2671, 0
    %v2869 = vsel %vm174, %v2672, 0
    %v2872 = vsel %vm174, %v2673, 0
    %v2875 = vsel %vm174, %v2674, 0
    %v2878 = vsel %vm367, %v2684, 0
    %2880 = vmatpush.msra.mxu0 0.0
    %2881 = vmatpush.msra.mxu0 0.0
    %2882 = vmatpush.msra.mxu0 0.0
    %2883 = vmatpush.msra.mxu0 0.0
    %2884 = vmatpush.msra.mxu0 0.0
    %2885 = vmatpush.msra.mxu0 0.0
    %2886 = vmatpush.msra.mxu0 0.0
    %2887 = vmatpush.msra.mxu0 %v2878
    %2888 = vmatpush.msra.mxu0 %v2683
    %2889 = vmatpush.msra.mxu0 %v2682
    %2890 = vmatpush.msra.mxu0 %v2681
    %2891 = vmatpush.msra.mxu0 %v2680
    %2892 = vmatpush.msra.mxu0 %v2679
    %2893 = vmatpush.msra.mxu0 %v2678
    %2894 = vmatpush.msra.mxu0 %v2677
    %2895 = vmatpush.msra.mxu0 %v2676
    %2896 = vmatmul.f32.gmra.mxu0 %v2686
    %v2897 = vpop.f32.mrf.mxu0
    %v2898 = vadd.f32 0.0, %v2897
    %2899 = vmatmul.f32.gmra.mxu0 %v2689
    %v2900 = vpop.f32.mrf.mxu0
    %v2901 = vadd.f32 0.0, %v2900
    %2902 = vmatmul.f32.gmra.mxu0 %v2692
    %v2903 = vpop.f32.mrf.mxu0
    %v2904 = vadd.f32 0.0, %v2903
    %2905 = vmatmul.f32.gmra.mxu0 %v2695
    %v2906 = vpop.f32.mrf.mxu0
    %v2907 = vadd.f32 0.0, %v2906
    %2908 = vmatmul.f32.gmra.mxu0 %v2698
    %v2909 = vpop.f32.mrf.mxu0
    %v2910 = vadd.f32 0.0, %v2909
    %2911 = vmatmul.f32.gmra.mxu0 %v2701
    %v2912 = vpop.f32.mrf.mxu0
    %v2913 = vadd.f32 0.0, %v2912
    %2914 = vmatmul.f32.gmra.mxu0 %v2704
    %v2915 = vpop.f32.mrf.mxu0
    %v2916 = vadd.f32 0.0, %v2915
    %2917 = vmatmul.f32.gmra.mxu0 %v2707
    %v2918 = vpop.f32.mrf.mxu0
    %v2919 = vadd.f32 0.0, %v2918
    %2920 = vmatmul.f32.gmra.mxu0 %v2710
    %v2921 = vpop.f32.mrf.mxu0
    %v2922 = vadd.f32 0.0, %v2921
    %2923 = vmatmul.f32.gmra.mxu0 %v2713
    %v2924 = vpop.f32.mrf.mxu0
    %v2925 = vadd.f32 0.0, %v2924
    %2926 = vmatmul.f32.gmra.mxu0 %v2716
    %v2927 = vpop.f32.mrf.mxu0
    %v2928 = vadd.f32 0.0, %v2927
    %2929 = vmatmul.f32.gmra.mxu0 %v2719
    %v2930 = vpop.f32.mrf.mxu0
    %v2931 = vadd.f32 0.0, %v2930
    %2932 = vmatmul.f32.gmra.mxu0 %v2722
    %v2933 = vpop.f32.mrf.mxu0
    %v2934 = vadd.f32 0.0, %v2933
    %2935 = vmatmul.f32.gmra.mxu0 %v2725
    %v2936 = vpop.f32.mrf.mxu0
    %v2937 = vadd.f32 0.0, %v2936
    %2938 = vmatmul.f32.gmra.mxu0 %v2728
    %v2939 = vpop.f32.mrf.mxu0
    %v2940 = vadd.f32 0.0, %v2939
    %2941 = vmatmul.f32.gmra.mxu0 %v2731
    %v2942 = vpop.f32.mrf.mxu0
    %v2943 = vadd.f32 0.0, %v2942
    %2944 = vmatmul.f32.gmra.mxu0 %v2734
    %v2945 = vpop.f32.mrf.mxu0
    %v2946 = vadd.f32 0.0, %v2945
    %2947 = vmatmul.f32.gmra.mxu0 %v2737
    %v2948 = vpop.f32.mrf.mxu0
    %v2949 = vadd.f32 0.0, %v2948
    %2950 = vmatmul.f32.gmra.mxu0 %v2740
    %v2951 = vpop.f32.mrf.mxu0
    %v2952 = vadd.f32 0.0, %v2951
    %2953 = vmatmul.f32.gmra.mxu0 %v2743
    %v2954 = vpop.f32.mrf.mxu0
    %v2955 = vadd.f32 0.0, %v2954
    %2956 = vmatmul.f32.gmra.mxu0 %v2746
    %v2957 = vpop.f32.mrf.mxu0
    %v2958 = vadd.f32 0.0, %v2957
    %2959 = vmatmul.f32.gmra.mxu0 %v2749
    %v2960 = vpop.f32.mrf.mxu0
    %v2961 = vadd.f32 0.0, %v2960
    %2962 = vmatmul.f32.gmra.mxu0 %v2752
    %v2963 = vpop.f32.mrf.mxu0
    %v2964 = vadd.f32 0.0, %v2963
    %2965 = vmatmul.f32.gmra.mxu0 %v2755
    %v2966 = vpop.f32.mrf.mxu0
    %v2967 = vadd.f32 0.0, %v2966
    %2968 = vmatmul.f32.gmra.mxu0 %v2758
    %v2969 = vpop.f32.mrf.mxu0
    %v2970 = vadd.f32 0.0, %v2969
    %2971 = vmatmul.f32.gmra.mxu0 %v2761
    %v2972 = vpop.f32.mrf.mxu0
    %v2973 = vadd.f32 0.0, %v2972
    %2974 = vmatmul.f32.gmra.mxu0 %v2764
    %v2975 = vpop.f32.mrf.mxu0
    %v2976 = vadd.f32 0.0, %v2975
    %2977 = vmatmul.f32.gmra.mxu0 %v2767
    %v2978 = vpop.f32.mrf.mxu0
    %v2979 = vadd.f32 0.0, %v2978
    %2980 = vmatmul.f32.gmra.mxu0 %v2770
    %v2981 = vpop.f32.mrf.mxu0
    %v2982 = vadd.f32 0.0, %v2981
    %2983 = vmatmul.f32.gmra.mxu0 %v2773
    %v2984 = vpop.f32.mrf.mxu0
    %v2985 = vadd.f32 0.0, %v2984
    %2986 = vmatmul.f32.gmra.mxu0 %v2776
    %v2987 = vpop.f32.mrf.mxu0
    %v2988 = vadd.f32 0.0, %v2987
    %2989 = vmatmul.f32.gmra.mxu0 %v2779
    %v2990 = vpop.f32.mrf.mxu0
    %v2991 = vadd.f32 0.0, %v2990
    %2992 = vmatmul.f32.gmra.mxu0 %v2782
    %v2993 = vpop.f32.mrf.mxu0
    %v2994 = vadd.f32 0.0, %v2993
    %2995 = vmatmul.f32.gmra.mxu0 %v2785
    %v2996 = vpop.f32.mrf.mxu0
    %v2997 = vadd.f32 0.0, %v2996
    %2998 = vmatmul.f32.gmra.mxu0 %v2788
    %v2999 = vpop.f32.mrf.mxu0
    %v3000 = vadd.f32 0.0, %v2999
    %3001 = vmatmul.f32.gmra.mxu0 %v2791
    %v3002 = vpop.f32.mrf.mxu0
    %v3003 = vadd.f32 0.0, %v3002
    %3004 = vmatmul.f32.gmra.mxu0 %v2794
    %v3005 = vpop.f32.mrf.mxu0
    %v3006 = vadd.f32 0.0, %v3005
    %3007 = vmatmul.f32.gmra.mxu0 %v2797
    %v3008 = vpop.f32.mrf.mxu0
    %v3009 = vadd.f32 0.0, %v3008
    %3010 = vmatmul.f32.gmra.mxu0 %v2800
    %v3011 = vpop.f32.mrf.mxu0
    %v3012 = vadd.f32 0.0, %v3011
    %3013 = vmatmul.f32.gmra.mxu0 %v2803
    %v3014 = vpop.f32.mrf.mxu0
    %v3015 = vadd.f32 0.0, %v3014
    %3016 = vmatmul.f32.gmra.mxu0 %v2806
    %v3017 = vpop.f32.mrf.mxu0
    %v3018 = vadd.f32 0.0, %v3017
    %3019 = vmatmul.f32.gmra.mxu0 %v2809
    %v3020 = vpop.f32.mrf.mxu0
    %v3021 = vadd.f32 0.0, %v3020
    %3022 = vmatmul.f32.gmra.mxu0 %v2812
    %v3023 = vpop.f32.mrf.mxu0
    %v3024 = vadd.f32 0.0, %v3023
    %3025 = vmatmul.f32.gmra.mxu0 %v2815
    %v3026 = vpop.f32.mrf.mxu0
    %v3027 = vadd.f32 0.0, %v3026
    %3028 = vmatmul.f32.gmra.mxu0 %v2818
    %v3029 = vpop.f32.mrf.mxu0
    %v3030 = vadd.f32 0.0, %v3029
    %3031 = vmatmul.f32.gmra.mxu0 %v2821
    %v3032 = vpop.f32.mrf.mxu0
    %v3033 = vadd.f32 0.0, %v3032
    %3034 = vmatmul.f32.gmra.mxu0 %v2824
    %v3035 = vpop.f32.mrf.mxu0
    %v3036 = vadd.f32 0.0, %v3035
    %3037 = vmatmul.f32.gmra.mxu0 %v2827
    %v3038 = vpop.f32.mrf.mxu0
    %v3039 = vadd.f32 0.0, %v3038
    %3040 = vmatmul.f32.gmra.mxu0 %v2830
    %v3041 = vpop.f32.mrf.mxu0
    %v3042 = vadd.f32 0.0, %v3041
    %3043 = vmatmul.f32.gmra.mxu0 %v2833
    %v3044 = vpop.f32.mrf.mxu0
    %v3045 = vadd.f32 0.0, %v3044
    %3046 = vmatmul.f32.gmra.mxu0 %v2836
    %v3047 = vpop.f32.mrf.mxu0
    %v3048 = vadd.f32 0.0, %v3047
    %3049 = vmatmul.f32.gmra.mxu0 %v2839
    %v3050 = vpop.f32.mrf.mxu0
    %v3051 = vadd.f32 0.0, %v3050
    %3052 = vmatmul.f32.gmra.mxu0 %v2842
    %v3053 = vpop.f32.mrf.mxu0
    %v3054 = vadd.f32 0.0, %v3053
    %3055 = vmatmul.f32.gmra.mxu0 %v2845
    %v3056 = vpop.f32.mrf.mxu0
    %v3057 = vadd.f32 0.0, %v3056
    %3058 = vmatmul.f32.gmra.mxu0 %v2848
    %v3059 = vpop.f32.mrf.mxu0
    %v3060 = vadd.f32 0.0, %v3059
    %3061 = vmatmul.f32.gmra.mxu0 %v2851
    %v3062 = vpop.f32.mrf.mxu0
    %v3063 = vadd.f32 0.0, %v3062
    %3064 = vmatmul.f32.gmra.mxu0 %v2854
    %v3065 = vpop.f32.mrf.mxu0
    %v3066 = vadd.f32 0.0, %v3065
    %3067 = vmatmul.f32.gmra.mxu0 %v2857
    %v3068 = vpop.f32.mrf.mxu0
    %v3069 = vadd.f32 0.0, %v3068
    %3070 = vmatmul.f32.gmra.mxu0 %v2860
    %v3071 = vpop.f32.mrf.mxu0
    %v3072 = vadd.f32 0.0, %v3071
    %3073 = vmatmul.f32.gmra.mxu0 %v2863
    %v3074 = vpop.f32.mrf.mxu0
    %v3075 = vadd.f32 0.0, %v3074
    %3076 = vmatmul.f32.gmra.mxu0 %v2866
    %v3077 = vpop.f32.mrf.mxu0
    %v3078 = vadd.f32 0.0, %v3077
    %3079 = vmatmul.f32.gmra.mxu0 %v2869
    %v3080 = vpop.f32.mrf.mxu0
    %v3081 = vadd.f32 0.0, %v3080
    %3082 = vmatmul.f32.gmra.mxu0 %v2872
    %v3083 = vpop.f32.mrf.mxu0
    %v3084 = vadd.f32 0.0, %v3083
    %3085 = vmatmul.f32.gmra.mxu0 %v2875
    %v3086 = vpop.f32.mrf.mxu0
    %v3087 = vadd.f32 0.0, %v3086
    %3088 = vdwg.mxu0
    %v3089 = vadd.f32 %v2547, %v2898
    %v3090 = vadd.f32 %v2548, %v2901
    %v3091 = vadd.f32 %v2549, %v2904
    %v3092 = vadd.f32 %v2550, %v2907
    %v3093 = vadd.f32 %v2551, %v2910
    %v3094 = vadd.f32 %v2552, %v2913
    %v3095 = vadd.f32 %v2553, %v2916
    %v3096 = vadd.f32 %v2554, %v2919
    %v3097 = vadd.f32 %v2555, %v2922
    %v3098 = vadd.f32 %v2556, %v2925
    %v3099 = vadd.f32 %v2557, %v2928
    %v3100 = vadd.f32 %v2558, %v2931
    %v3101 = vadd.f32 %v2559, %v2934
    %v3102 = vadd.f32 %v2560, %v2937
    %v3103 = vadd.f32 %v2561, %v2940
    %v3104 = vadd.f32 %v2562, %v2943
    %v3105 = vadd.f32 %v2563, %v2946
    %v3106 = vadd.f32 %v2564, %v2949
    %v3107 = vadd.f32 %v2565, %v2952
    %v3108 = vadd.f32 %v2566, %v2955
    %v3109 = vadd.f32 %v2567, %v2958
    %v3110 = vadd.f32 %v2568, %v2961
    %v3111 = vadd.f32 %v2569, %v2964
    %v3112 = vadd.f32 %v2570, %v2967
    %v3113 = vadd.f32 %v2571, %v2970
    %v3114 = vadd.f32 %v2572, %v2973
    %v3115 = vadd.f32 %v2573, %v2976
    %v3116 = vadd.f32 %v2574, %v2979
    %v3117 = vadd.f32 %v2575, %v2982
    %v3118 = vadd.f32 %v2576, %v2985
    %v3119 = vadd.f32 %v2577, %v2988
    %v3120 = vadd.f32 %v2578, %v2991
    %v3121 = vadd.f32 %v2579, %v2994
    %v3122 = vadd.f32 %v2580, %v2997
    %v3123 = vadd.f32 %v2581, %v3000
    %v3124 = vadd.f32 %v2582, %v3003
    %v3125 = vadd.f32 %v2583, %v3006
    %v3126 = vadd.f32 %v2584, %v3009
    %v3127 = vadd.f32 %v2585, %v3012
    %v3128 = vadd.f32 %v2586, %v3015
    %v3129 = vadd.f32 %v2587, %v3018
    %v3130 = vadd.f32 %v2588, %v3021
    %v3131 = vadd.f32 %v2589, %v3024
    %v3132 = vadd.f32 %v2590, %v3027
    %v3133 = vadd.f32 %v2591, %v3030
    %v3134 = vadd.f32 %v2592, %v3033
    %v3135 = vadd.f32 %v2593, %v3036
    %v3136 = vadd.f32 %v2594, %v3039
    %v3137 = vadd.f32 %v2595, %v3042
    %v3138 = vadd.f32 %v2596, %v3045
    %v3139 = vadd.f32 %v2597, %v3048
    %v3140 = vadd.f32 %v2598, %v3051
    %v3141 = vadd.f32 %v2599, %v3054
    %v3142 = vadd.f32 %v2600, %v3057
    %v3143 = vadd.f32 %v2601, %v3060
    %v3144 = vadd.f32 %v2602, %v3063
    %v3145 = vadd.f32 %v2603, %v3066
    %v3146 = vadd.f32 %v2604, %v3069
    %v3147 = vadd.f32 %v2605, %v3072
    %v3148 = vadd.f32 %v2606, %v3075
    %v3149 = vadd.f32 %v2607, %v3078
    %v3150 = vadd.f32 %v2608, %v3081
    %v3151 = vadd.f32 %v2609, %v3084
    %v3152 = vadd.f32 %v2610, %v3087
    %s3153 = scalar_lea.vmem %s0, 48
    %v3154 = vld [vmem:[%s3153] sm:$0xff]
    %v3155 = vld [vmem:[%s3153 + $0x8] sm:$0xff]
    %v3156 = vld [vmem:[%s3153 + $0x18] sm:$0xff]
    %v3157 = vld [vmem:[%s3153 + $0x20] sm:$0xff]
    %v3158 = vld [vmem:[%s3153 + $0x30] sm:$0xff]
    %v3159 = vld [vmem:[%s3153 + $0x38] sm:$0xff]
    %v3160 = vld [vmem:[%s3153 + $0x48] sm:$0xff]
    %v3161 = vld [vmem:[%s3153 + $0x50] sm:$0xff]
    %v3162 = vld [vmem:[%s3153 + $0x60] sm:$0xff]
    %v3163 = vld [vmem:[%s3153 + $0x68] sm:$0xff]
    %v3164 = vld [vmem:[%s3153 + $0x78] sm:$0xff]
    %v3165 = vld [vmem:[%s3153 + $0x80] sm:$0xff]
    %v3166 = vld [vmem:[%s3153 + $0x90] sm:$0xff]
    %v3167 = vld [vmem:[%s3153 + $0x98] sm:$0xff]
    %v3168 = vld [vmem:[%s3153 + $0xa8] sm:$0xff]
    %v3169 = vld [vmem:[%s3153 + $0xb0] sm:$0xff]
    %v3170 = vld [vmem:[%s3153 + $0xc0] sm:$0xff]
    %v3171 = vld [vmem:[%s3153 + $0xc8] sm:$0xff]
    %v3172 = vld [vmem:[%s3153 + $0xd8] sm:$0xff]
    %v3173 = vld [vmem:[%s3153 + $0xe0] sm:$0xff]
    %v3174 = vld [vmem:[%s3153 + $0xf0] sm:$0xff]
    %v3175 = vld [vmem:[%s3153 + $0xf8] sm:$0xff]
    %v3176 = vld [vmem:[%s3153 + $0x108] sm:$0xff]
    %v3177 = vld [vmem:[%s3153 + $0x110] sm:$0xff]
    %v3178 = vld [vmem:[%s3153 + $0x120] sm:$0xff]
    %v3179 = vld [vmem:[%s3153 + $0x128] sm:$0xff]
    %v3180 = vld [vmem:[%s3153 + $0x138] sm:$0xff]
    %v3181 = vld [vmem:[%s3153 + $0x140] sm:$0xff]
    %v3182 = vld [vmem:[%s3153 + $0x150] sm:$0xff]
    %v3183 = vld [vmem:[%s3153 + $0x158] sm:$0xff]
    %v3184 = vld [vmem:[%s3153 + $0x168] sm:$0xff]
    %v3185 = vld [vmem:[%s3153 + $0x170] sm:$0xff]
    %v3186 = vld [vmem:[%s3153 + $0x1b0] sm:$0xff]
    %v3187 = vld [vmem:[%s3153 + $0x1b8] sm:$0xff]
    %v3188 = vld [vmem:[%s3153 + $0x1c8] sm:$0xff]
    %v3189 = vld [vmem:[%s3153 + $0x1d0] sm:$0xff]
    %v3190 = vld [vmem:[%s3153 + $0x1e0] sm:$0xff]
    %v3191 = vld [vmem:[%s3153 + $0x1e8] sm:$0xff]
    %v3192 = vld [vmem:[%s3153 + $0x1f8] sm:$0xff]
    %v3193 = vld [vmem:[%s3153 + $0x200] sm:$0xff]
    %v3194 = vld [vmem:[%s3153 + $0x210] sm:$0xff]
    %v3195 = vld [vmem:[%s3153 + $0x218] sm:$0xff]
    %v3196 = vld [vmem:[%s3153 + $0x228] sm:$0xff]
    %v3197 = vld [vmem:[%s3153 + $0x230] sm:$0xff]
    %v3198 = vld [vmem:[%s3153 + $0x240] sm:$0xff]
    %v3199 = vld [vmem:[%s3153 + $0x248] sm:$0xff]
    %v3200 = vld [vmem:[%s3153 + $0x258] sm:$0xff]
    %v3201 = vld [vmem:[%s3153 + $0x260] sm:$0xff]
    %v3202 = vld [vmem:[%s3153 + $0x270] sm:$0xff]
    %v3203 = vld [vmem:[%s3153 + $0x278] sm:$0xff]
    %v3204 = vld [vmem:[%s3153 + $0x288] sm:$0xff]
    %v3205 = vld [vmem:[%s3153 + $0x290] sm:$0xff]
    %v3206 = vld [vmem:[%s3153 + $0x2a0] sm:$0xff]
    %v3207 = vld [vmem:[%s3153 + $0x2a8] sm:$0xff]
    %v3208 = vld [vmem:[%s3153 + $0x2b8] sm:$0xff]
    %v3209 = vld [vmem:[%s3153 + $0x2c0] sm:$0xff]
    %v3210 = vld [vmem:[%s3153 + $0x2d0] sm:$0xff]
    %v3211 = vld [vmem:[%s3153 + $0x2d8] sm:$0xff]
    %v3212 = vld [vmem:[%s3153 + $0x2e8] sm:$0xff]
    %v3213 = vld [vmem:[%s3153 + $0x2f0] sm:$0xff]
    %v3214 = vld [vmem:[%s3153 + $0x300] sm:$0xff]
    %v3215 = vld [vmem:[%s3153 + $0x308] sm:$0xff]
    %v3216 = vld [vmem:[%s3153 + $0x318] sm:$0xff]
    %v3217 = vld [vmem:[%s3153 + $0x320] sm:$0xff]
    %s3218 = scalar_lea.vmem %s1, 432
    %v3219 = vld [vmem:[%s3218] sm:$0xff]
    %v3220 = vld [vmem:[%s3218 + $0x8] sm:$0xff]
    %v3221 = vld [vmem:[%s3218 + $0x10] sm:$0xff]
    %v3222 = vld [vmem:[%s3218 + $0x18] sm:$0xff]
    %v3223 = vld [vmem:[%s3218 + $0x20] sm:$0xff]
    %v3224 = vld [vmem:[%s3218 + $0x28] sm:$0xff]
    %v3225 = vld [vmem:[%s3218 + $0x30] sm:$0xff]
    %v3226 = vld [vmem:[%s3218 + $0x38] sm:$0xff]
    %v3227 = vld [vmem:[%s3218 + $0x40] sm:$0x3]
    %v3229 = vsel %vm174, %v3154, 0
    %v3232 = vsel %vm174, %v3155, 0
    %v3235 = vsel %vm174, %v3156, 0
    %v3238 = vsel %vm174, %v3157, 0
    %v3241 = vsel %vm174, %v3158, 0
    %v3244 = vsel %vm174, %v3159, 0
    %v3247 = vsel %vm174, %v3160, 0
    %v3250 = vsel %vm174, %v3161, 0
    %v3253 = vsel %vm174, %v3162, 0
    %v3256 = vsel %vm174, %v3163, 0
    %v3259 = vsel %vm174, %v3164, 0
    %v3262 = vsel %vm174, %v3165, 0
    %v3265 = vsel %vm174, %v3166, 0
    %v3268 = vsel %vm174, %v3167, 0
    %v3271 = vsel %vm174, %v3168, 0
    %v3274 = vsel %vm174, %v3169, 0
    %v3277 = vsel %vm174, %v3170, 0
    %v3280 = vsel %vm174, %v3171, 0
    %v3283 = vsel %vm174, %v3172, 0
    %v3286 = vsel %vm174, %v3173, 0
    %v3289 = vsel %vm174, %v3174, 0
    %v3292 = vsel %vm174, %v3175, 0
    %v3295 = vsel %vm174, %v3176, 0
    %v3298 = vsel %vm174, %v3177, 0
    %v3301 = vsel %vm174, %v3178, 0
    %v3304 = vsel %vm174, %v3179, 0
    %v3307 = vsel %vm174, %v3180, 0
    %v3310 = vsel %vm174, %v3181, 0
    %v3313 = vsel %vm174, %v3182, 0
    %v3316 = vsel %vm174, %v3183, 0
    %v3319 = vsel %vm174, %v3184, 0
    %v3322 = vsel %vm174, %v3185, 0
    %v3325 = vsel %vm174, %v3186, 0
    %v3328 = vsel %vm174, %v3187, 0
    %v3331 = vsel %vm174, %v3188, 0
    %v3334 = vsel %vm174, %v3189, 0
    %v3337 = vsel %vm174, %v3190, 0
    %v3340 = vsel %vm174, %v3191, 0
    %v3343 = vsel %vm174, %v3192, 0
    %v3346 = vsel %vm174, %v3193, 0
    %v3349 = vsel %vm174, %v3194, 0
    %v3352 = vsel %vm174, %v3195, 0
    %v3355 = vsel %vm174, %v3196, 0
    %v3358 = vsel %vm174, %v3197, 0
    %v3361 = vsel %vm174, %v3198, 0
    %v3364 = vsel %vm174, %v3199, 0
    %v3367 = vsel %vm174, %v3200, 0
    %v3370 = vsel %vm174, %v3201, 0
    %v3373 = vsel %vm174, %v3202, 0
    %v3376 = vsel %vm174, %v3203, 0
    %v3379 = vsel %vm174, %v3204, 0
    %v3382 = vsel %vm174, %v3205, 0
    %v3385 = vsel %vm174, %v3206, 0
    %v3388 = vsel %vm174, %v3207, 0
    %v3391 = vsel %vm174, %v3208, 0
    %v3394 = vsel %vm174, %v3209, 0
    %v3397 = vsel %vm174, %v3210, 0
    %v3400 = vsel %vm174, %v3211, 0
    %v3403 = vsel %vm174, %v3212, 0
    %v3406 = vsel %vm174, %v3213, 0
    %v3409 = vsel %vm174, %v3214, 0
    %v3412 = vsel %vm174, %v3215, 0
    %v3415 = vsel %vm174, %v3216, 0
    %v3418 = vsel %vm174, %v3217, 0
    %v3421 = vsel %vm367, %v3227, 0
    %3423 = vmatpush.msra.mxu0 0.0
    %3424 = vmatpush.msra.mxu0 0.0
    %3425 = vmatpush.msra.mxu0 0.0
    %3426 = vmatpush.msra.mxu0 0.0
    %3427 = vmatpush.msra.mxu0 0.0
    %3428 = vmatpush.msra.mxu0 0.0
    %3429 = vmatpush.msra.mxu0 0.0
    %3430 = vmatpush.msra.mxu0 %v3421
    %3431 = vmatpush.msra.mxu0 %v3226
    %3432 = vmatpush.msra.mxu0 %v3225
    %3433 = vmatpush.msra.mxu0 %v3224
    %3434 = vmatpush.msra.mxu0 %v3223
    %3435 = vmatpush.msra.mxu0 %v3222
    %3436 = vmatpush.msra.mxu0 %v3221
    %3437 = vmatpush.msra.mxu0 %v3220
    %3438 = vmatpush.msra.mxu0 %v3219
    %3439 = vmatmul.f32.gmra.mxu0 %v3229
    %v3440 = vpop.f32.mrf.mxu0
    %v3441 = vadd.f32 0.0, %v3440
    %3442 = vmatmul.f32.gmra.mxu0 %v3232
    %v3443 = vpop.f32.mrf.mxu0
    %v3444 = vadd.f32 0.0, %v3443
    %3445 = vmatmul.f32.gmra.mxu0 %v3235
    %v3446 = vpop.f32.mrf.mxu0
    %v3447 = vadd.f32 0.0, %v3446
    %3448 = vmatmul.f32.gmra.mxu0 %v3238
    %v3449 = vpop.f32.mrf.mxu0
    %v3450 = vadd.f32 0.0, %v3449
    %3451 = vmatmul.f32.gmra.mxu0 %v3241
    %v3452 = vpop.f32.mrf.mxu0
    %v3453 = vadd.f32 0.0, %v3452
    %3454 = vmatmul.f32.gmra.mxu0 %v3244
    %v3455 = vpop.f32.mrf.mxu0
    %v3456 = vadd.f32 0.0, %v3455
    %3457 = vmatmul.f32.gmra.mxu0 %v3247
    %v3458 = vpop.f32.mrf.mxu0
    %v3459 = vadd.f32 0.0, %v3458
    %3460 = vmatmul.f32.gmra.mxu0 %v3250
    %v3461 = vpop.f32.mrf.mxu0
    %v3462 = vadd.f32 0.0, %v3461
    %3463 = vmatmul.f32.gmra.mxu0 %v3253
    %v3464 = vpop.f32.mrf.mxu0
    %v3465 = vadd.f32 0.0, %v3464
    %3466 = vmatmul.f32.gmra.mxu0 %v3256
    %v3467 = vpop.f32.mrf.mxu0
    %v3468 = vadd.f32 0.0, %v3467
    %3469 = vmatmul.f32.gmra.mxu0 %v3259
    %v3470 = vpop.f32.mrf.mxu0
    %v3471 = vadd.f32 0.0, %v3470
    %3472 = vmatmul.f32.gmra.mxu0 %v3262
    %v3473 = vpop.f32.mrf.mxu0
    %v3474 = vadd.f32 0.0, %v3473
    %3475 = vmatmul.f32.gmra.mxu0 %v3265
    %v3476 = vpop.f32.mrf.mxu0
    %v3477 = vadd.f32 0.0, %v3476
    %3478 = vmatmul.f32.gmra.mxu0 %v3268
    %v3479 = vpop.f32.mrf.mxu0
    %v3480 = vadd.f32 0.0, %v3479
    %3481 = vmatmul.f32.gmra.mxu0 %v3271
    %v3482 = vpop.f32.mrf.mxu0
    %v3483 = vadd.f32 0.0, %v3482
    %3484 = vmatmul.f32.gmra.mxu0 %v3274
    %v3485 = vpop.f32.mrf.mxu0
    %v3486 = vadd.f32 0.0, %v3485
    %3487 = vmatmul.f32.gmra.mxu0 %v3277
    %v3488 = vpop.f32.mrf.mxu0
    %v3489 = vadd.f32 0.0, %v3488
    %3490 = vmatmul.f32.gmra.mxu0 %v3280
    %v3491 = vpop.f32.mrf.mxu0
    %v3492 = vadd.f32 0.0, %v3491
    %3493 = vmatmul.f32.gmra.mxu0 %v3283
    %v3494 = vpop.f32.mrf.mxu0
    %v3495 = vadd.f32 0.0, %v3494
    %3496 = vmatmul.f32.gmra.mxu0 %v3286
    %v3497 = vpop.f32.mrf.mxu0
    %v3498 = vadd.f32 0.0, %v3497
    %3499 = vmatmul.f32.gmra.mxu0 %v3289
    %v3500 = vpop.f32.mrf.mxu0
    %v3501 = vadd.f32 0.0, %v3500
    %3502 = vmatmul.f32.gmra.mxu0 %v3292
    %v3503 = vpop.f32.mrf.mxu0
    %v3504 = vadd.f32 0.0, %v3503
    %3505 = vmatmul.f32.gmra.mxu0 %v3295
    %v3506 = vpop.f32.mrf.mxu0
    %v3507 = vadd.f32 0.0, %v3506
    %3508 = vmatmul.f32.gmra.mxu0 %v3298
    %v3509 = vpop.f32.mrf.mxu0
    %v3510 = vadd.f32 0.0, %v3509
    %3511 = vmatmul.f32.gmra.mxu0 %v3301
    %v3512 = vpop.f32.mrf.mxu0
    %v3513 = vadd.f32 0.0, %v3512
    %3514 = vmatmul.f32.gmra.mxu0 %v3304
    %v3515 = vpop.f32.mrf.mxu0
    %v3516 = vadd.f32 0.0, %v3515
    %3517 = vmatmul.f32.gmra.mxu0 %v3307
    %v3518 = vpop.f32.mrf.mxu0
    %v3519 = vadd.f32 0.0, %v3518
    %3520 = vmatmul.f32.gmra.mxu0 %v3310
    %v3521 = vpop.f32.mrf.mxu0
    %v3522 = vadd.f32 0.0, %v3521
    %3523 = vmatmul.f32.gmra.mxu0 %v3313
    %v3524 = vpop.f32.mrf.mxu0
    %v3525 = vadd.f32 0.0, %v3524
    %3526 = vmatmul.f32.gmra.mxu0 %v3316
    %v3527 = vpop.f32.mrf.mxu0
    %v3528 = vadd.f32 0.0, %v3527
    %3529 = vmatmul.f32.gmra.mxu0 %v3319
    %v3530 = vpop.f32.mrf.mxu0
    %v3531 = vadd.f32 0.0, %v3530
    %3532 = vmatmul.f32.gmra.mxu0 %v3322
    %v3533 = vpop.f32.mrf.mxu0
    %v3534 = vadd.f32 0.0, %v3533
    %3535 = vmatmul.f32.gmra.mxu0 %v3325
    %v3536 = vpop.f32.mrf.mxu0
    %v3537 = vadd.f32 0.0, %v3536
    %3538 = vmatmul.f32.gmra.mxu0 %v3328
    %v3539 = vpop.f32.mrf.mxu0
    %v3540 = vadd.f32 0.0, %v3539
    %3541 = vmatmul.f32.gmra.mxu0 %v3331
    %v3542 = vpop.f32.mrf.mxu0
    %v3543 = vadd.f32 0.0, %v3542
    %3544 = vmatmul.f32.gmra.mxu0 %v3334
    %v3545 = vpop.f32.mrf.mxu0
    %v3546 = vadd.f32 0.0, %v3545
    %3547 = vmatmul.f32.gmra.mxu0 %v3337
    %v3548 = vpop.f32.mrf.mxu0
    %v3549 = vadd.f32 0.0, %v3548
    %3550 = vmatmul.f32.gmra.mxu0 %v3340
    %v3551 = vpop.f32.mrf.mxu0
    %v3552 = vadd.f32 0.0, %v3551
    %3553 = vmatmul.f32.gmra.mxu0 %v3343
    %v3554 = vpop.f32.mrf.mxu0
    %v3555 = vadd.f32 0.0, %v3554
    %3556 = vmatmul.f32.gmra.mxu0 %v3346
    %v3557 = vpop.f32.mrf.mxu0
    %v3558 = vadd.f32 0.0, %v3557
    %3559 = vmatmul.f32.gmra.mxu0 %v3349
    %v3560 = vpop.f32.mrf.mxu0
    %v3561 = vadd.f32 0.0, %v3560
    %3562 = vmatmul.f32.gmra.mxu0 %v3352
    %v3563 = vpop.f32.mrf.mxu0
    %v3564 = vadd.f32 0.0, %v3563
    %3565 = vmatmul.f32.gmra.mxu0 %v3355
    %v3566 = vpop.f32.mrf.mxu0
    %v3567 = vadd.f32 0.0, %v3566
    %3568 = vmatmul.f32.gmra.mxu0 %v3358
    %v3569 = vpop.f32.mrf.mxu0
    %v3570 = vadd.f32 0.0, %v3569
    %3571 = vmatmul.f32.gmra.mxu0 %v3361
    %v3572 = vpop.f32.mrf.mxu0
    %v3573 = vadd.f32 0.0, %v3572
    %3574 = vmatmul.f32.gmra.mxu0 %v3364
    %v3575 = vpop.f32.mrf.mxu0
    %v3576 = vadd.f32 0.0, %v3575
    %3577 = vmatmul.f32.gmra.mxu0 %v3367
    %v3578 = vpop.f32.mrf.mxu0
    %v3579 = vadd.f32 0.0, %v3578
    %3580 = vmatmul.f32.gmra.mxu0 %v3370
    %v3581 = vpop.f32.mrf.mxu0
    %v3582 = vadd.f32 0.0, %v3581
    %3583 = vmatmul.f32.gmra.mxu0 %v3373
    %v3584 = vpop.f32.mrf.mxu0
    %v3585 = vadd.f32 0.0, %v3584
    %3586 = vmatmul.f32.gmra.mxu0 %v3376
    %v3587 = vpop.f32.mrf.mxu0
    %v3588 = vadd.f32 0.0, %v3587
    %3589 = vmatmul.f32.gmra.mxu0 %v3379
    %v3590 = vpop.f32.mrf.mxu0
    %v3591 = vadd.f32 0.0, %v3590
    %3592 = vmatmul.f32.gmra.mxu0 %v3382
    %v3593 = vpop.f32.mrf.mxu0
    %v3594 = vadd.f32 0.0, %v3593
    %3595 = vmatmul.f32.gmra.mxu0 %v3385
    %v3596 = vpop.f32.mrf.mxu0
    %v3597 = vadd.f32 0.0, %v3596
    %3598 = vmatmul.f32.gmra.mxu0 %v3388
    %v3599 = vpop.f32.mrf.mxu0
    %v3600 = vadd.f32 0.0, %v3599
    %3601 = vmatmul.f32.gmra.mxu0 %v3391
    %v3602 = vpop.f32.mrf.mxu0
    %v3603 = vadd.f32 0.0, %v3602
    %3604 = vmatmul.f32.gmra.mxu0 %v3394
    %v3605 = vpop.f32.mrf.mxu0
    %v3606 = vadd.f32 0.0, %v3605
    %3607 = vmatmul.f32.gmra.mxu0 %v3397
    %v3608 = vpop.f32.mrf.mxu0
    %v3609 = vadd.f32 0.0, %v3608
    %3610 = vmatmul.f32.gmra.mxu0 %v3400
    %v3611 = vpop.f32.mrf.mxu0
    %v3612 = vadd.f32 0.0, %v3611
    %3613 = vmatmul.f32.gmra.mxu0 %v3403
    %v3614 = vpop.f32.mrf.mxu0
    %v3615 = vadd.f32 0.0, %v3614
    %3616 = vmatmul.f32.gmra.mxu0 %v3406
    %v3617 = vpop.f32.mrf.mxu0
    %v3618 = vadd.f32 0.0, %v3617
    %3619 = vmatmul.f32.gmra.mxu0 %v3409
    %v3620 = vpop.f32.mrf.mxu0
    %v3621 = vadd.f32 0.0, %v3620
    %3622 = vmatmul.f32.gmra.mxu0 %v3412
    %v3623 = vpop.f32.mrf.mxu0
    %v3624 = vadd.f32 0.0, %v3623
    %3625 = vmatmul.f32.gmra.mxu0 %v3415
    %v3626 = vpop.f32.mrf.mxu0
    %v3627 = vadd.f32 0.0, %v3626
    %3628 = vmatmul.f32.gmra.mxu0 %v3418
    %v3629 = vpop.f32.mrf.mxu0
    %v3630 = vadd.f32 0.0, %v3629
    %3631 = vdwg.mxu0
    %v3632 = vadd.f32 %v3089, %v3441
    %v3633 = vadd.f32 %v3090, %v3444
    %v3634 = vadd.f32 %v3091, %v3447
    %v3635 = vadd.f32 %v3092, %v3450
    %v3636 = vadd.f32 %v3093, %v3453
    %v3637 = vadd.f32 %v3094, %v3456
    %v3638 = vadd.f32 %v3095, %v3459
    %v3639 = vadd.f32 %v3096, %v3462
    %v3640 = vadd.f32 %v3097, %v3465
    %v3641 = vadd.f32 %v3098, %v3468
    %v3642 = vadd.f32 %v3099, %v3471
    %v3643 = vadd.f32 %v3100, %v3474
    %v3644 = vadd.f32 %v3101, %v3477
    %v3645 = vadd.f32 %v3102, %v3480
    %v3646 = vadd.f32 %v3103, %v3483
    %v3647 = vadd.f32 %v3104, %v3486
    %v3648 = vadd.f32 %v3105, %v3489
    %v3649 = vadd.f32 %v3106, %v3492
    %v3650 = vadd.f32 %v3107, %v3495
    %v3651 = vadd.f32 %v3108, %v3498
    %v3652 = vadd.f32 %v3109, %v3501
    %v3653 = vadd.f32 %v3110, %v3504
    %v3654 = vadd.f32 %v3111, %v3507
    %v3655 = vadd.f32 %v3112, %v3510
    %v3656 = vadd.f32 %v3113, %v3513
    %v3657 = vadd.f32 %v3114, %v3516
    %v3658 = vadd.f32 %v3115, %v3519
    %v3659 = vadd.f32 %v3116, %v3522
    %v3660 = vadd.f32 %v3117, %v3525
    %v3661 = vadd.f32 %v3118, %v3528
    %v3662 = vadd.f32 %v3119, %v3531
    %v3663 = vadd.f32 %v3120, %v3534
    %v3664 = vadd.f32 %v3121, %v3537
    %v3665 = vadd.f32 %v3122, %v3540
    %v3666 = vadd.f32 %v3123, %v3543
    %v3667 = vadd.f32 %v3124, %v3546
    %v3668 = vadd.f32 %v3125, %v3549
    %v3669 = vadd.f32 %v3126, %v3552
    %v3670 = vadd.f32 %v3127, %v3555
    %v3671 = vadd.f32 %v3128, %v3558
    %v3672 = vadd.f32 %v3129, %v3561
    %v3673 = vadd.f32 %v3130, %v3564
    %v3674 = vadd.f32 %v3131, %v3567
    %v3675 = vadd.f32 %v3132, %v3570
    %v3676 = vadd.f32 %v3133, %v3573
    %v3677 = vadd.f32 %v3134, %v3576
    %v3678 = vadd.f32 %v3135, %v3579
    %v3679 = vadd.f32 %v3136, %v3582
    %v3680 = vadd.f32 %v3137, %v3585
    %v3681 = vadd.f32 %v3138, %v3588
    %v3682 = vadd.f32 %v3139, %v3591
    %v3683 = vadd.f32 %v3140, %v3594
    %v3684 = vadd.f32 %v3141, %v3597
    %v3685 = vadd.f32 %v3142, %v3600
    %v3686 = vadd.f32 %v3143, %v3603
    %v3687 = vadd.f32 %v3144, %v3606
    %v3688 = vadd.f32 %v3145, %v3609
    %v3689 = vadd.f32 %v3146, %v3612
    %v3690 = vadd.f32 %v3147, %v3615
    %v3691 = vadd.f32 %v3148, %v3618
    %v3692 = vadd.f32 %v3149, %v3621
    %v3693 = vadd.f32 %v3150, %v3624
    %v3694 = vadd.f32 %v3151, %v3627
    %v3695 = vadd.f32 %v3152, %v3630
    %v3696 = vld [vmem:[%s3153 + $0x1] sm:$0xff]
    %v3697 = vld [vmem:[%s3153 + $0x9] sm:$0xff]
    %v3698 = vld [vmem:[%s3153 + $0x19] sm:$0xff]
    %v3699 = vld [vmem:[%s3153 + $0x21] sm:$0xff]
    %v3700 = vld [vmem:[%s3153 + $0x31] sm:$0xff]
    %v3701 = vld [vmem:[%s3153 + $0x39] sm:$0xff]
    %v3702 = vld [vmem:[%s3153 + $0x49] sm:$0xff]
    %v3703 = vld [vmem:[%s3153 + $0x51] sm:$0xff]
    %v3704 = vld [vmem:[%s3153 + $0x61] sm:$0xff]
    %v3705 = vld [vmem:[%s3153 + $0x69] sm:$0xff]
    %v3706 = vld [vmem:[%s3153 + $0x79] sm:$0xff]
    %v3707 = vld [vmem:[%s3153 + $0x81] sm:$0xff]
    %v3708 = vld [vmem:[%s3153 + $0x91] sm:$0xff]
    %v3709 = vld [vmem:[%s3153 + $0x99] sm:$0xff]
    %v3710 = vld [vmem:[%s3153 + $0xa9] sm:$0xff]
    %v3711 = vld [vmem:[%s3153 + $0xb1] sm:$0xff]
    %v3712 = vld [vmem:[%s3153 + $0xc1] sm:$0xff]
    %v3713 = vld [vmem:[%s3153 + $0xc9] sm:$0xff]
    %v3714 = vld [vmem:[%s3153 + $0xd9] sm:$0xff]
    %v3715 = vld [vmem:[%s3153 + $0xe1] sm:$0xff]
    %v3716 = vld [vmem:[%s3153 + $0xf1] sm:$0xff]
    %v3717 = vld [vmem:[%s3153 + $0xf9] sm:$0xff]
    %v3718 = vld [vmem:[%s3153 + $0x109] sm:$0xff]
    %v3719 = vld [vmem:[%s3153 + $0x111] sm:$0xff]
    %v3720 = vld [vmem:[%s3153 + $0x121] sm:$0xff]
    %v3721 = vld [vmem:[%s3153 + $0x129] sm:$0xff]
    %v3722 = vld [vmem:[%s3153 + $0x139] sm:$0xff]
    %v3723 = vld [vmem:[%s3153 + $0x141] sm:$0xff]
    %v3724 = vld [vmem:[%s3153 + $0x151] sm:$0xff]
    %v3725 = vld [vmem:[%s3153 + $0x159] sm:$0xff]
    %v3726 = vld [vmem:[%s3153 + $0x169] sm:$0xff]
    %v3727 = vld [vmem:[%s3153 + $0x171] sm:$0xff]
    %v3728 = vld [vmem:[%s3153 + $0x1b1] sm:$0xff]
    %v3729 = vld [vmem:[%s3153 + $0x1b9] sm:$0xff]
    %v3730 = vld [vmem:[%s3153 + $0x1c9] sm:$0xff]
    %v3731 = vld [vmem:[%s3153 + $0x1d1] sm:$0xff]
    %v3732 = vld [vmem:[%s3153 + $0x1e1] sm:$0xff]
    %v3733 = vld [vmem:[%s3153 + $0x1e9] sm:$0xff]
    %v3734 = vld [vmem:[%s3153 + $0x1f9] sm:$0xff]
    %v3735 = vld [vmem:[%s3153 + $0x201] sm:$0xff]
    %v3736 = vld [vmem:[%s3153 + $0x211] sm:$0xff]
    %v3737 = vld [vmem:[%s3153 + $0x219] sm:$0xff]
    %v3738 = vld [vmem:[%s3153 + $0x229] sm:$0xff]
    %v3739 = vld [vmem:[%s3153 + $0x231] sm:$0xff]
    %v3740 = vld [vmem:[%s3153 + $0x241] sm:$0xff]
    %v3741 = vld [vmem:[%s3153 + $0x249] sm:$0xff]
    %v3742 = vld [vmem:[%s3153 + $0x259] sm:$0xff]
    %v3743 = vld [vmem:[%s3153 + $0x261] sm:$0xff]
    %v3744 = vld [vmem:[%s3153 + $0x271] sm:$0xff]
    %v3745 = vld [vmem:[%s3153 + $0x279] sm:$0xff]
    %v3746 = vld [vmem:[%s3153 + $0x289] sm:$0xff]
    %v3747 = vld [vmem:[%s3153 + $0x291] sm:$0xff]
    %v3748 = vld [vmem:[%s3153 + $0x2a1] sm:$0xff]
    %v3749 = vld [vmem:[%s3153 + $0x2a9] sm:$0xff]
    %v3750 = vld [vmem:[%s3153 + $0x2b9] sm:$0xff]
    %v3751 = vld [vmem:[%s3153 + $0x2c1] sm:$0xff]
    %v3752 = vld [vmem:[%s3153 + $0x2d1] sm:$0xff]
    %v3753 = vld [vmem:[%s3153 + $0x2d9] sm:$0xff]
    %v3754 = vld [vmem:[%s3153 + $0x2e9] sm:$0xff]
    %v3755 = vld [vmem:[%s3153 + $0x2f1] sm:$0xff]
    %v3756 = vld [vmem:[%s3153 + $0x301] sm:$0xff]
    %v3757 = vld [vmem:[%s3153 + $0x309] sm:$0xff]
    %v3758 = vld [vmem:[%s3153 + $0x319] sm:$0xff]
    %v3759 = vld [vmem:[%s3153 + $0x321] sm:$0xff]
    %s3760 = scalar_lea.vmem %s1, 504
    %v3761 = vld [vmem:[%s3760] sm:$0xff]
    %v3762 = vld [vmem:[%s3760 + $0x8] sm:$0xff]
    %v3763 = vld [vmem:[%s3760 + $0x10] sm:$0xff]
    %v3764 = vld [vmem:[%s3760 + $0x18] sm:$0xff]
    %v3765 = vld [vmem:[%s3760 + $0x20] sm:$0xff]
    %v3766 = vld [vmem:[%s3760 + $0x28] sm:$0xff]
    %v3767 = vld [vmem:[%s3760 + $0x30] sm:$0xff]
    %v3768 = vld [vmem:[%s3760 + $0x38] sm:$0xff]
    %v3769 = vld [vmem:[%s3760 + $0x40] sm:$0x3]
    %v3771 = vsel %vm174, %v3696, 0
    %v3774 = vsel %vm174, %v3697, 0
    %v3777 = vsel %vm174, %v3698, 0
    %v3780 = vsel %vm174, %v3699, 0
    %v3783 = vsel %vm174, %v3700, 0
    %v3786 = vsel %vm174, %v3701, 0
    %v3789 = vsel %vm174, %v3702, 0
    %v3792 = vsel %vm174, %v3703, 0
    %v3795 = vsel %vm174, %v3704, 0
    %v3798 = vsel %vm174, %v3705, 0
    %v3801 = vsel %vm174, %v3706, 0
    %v3804 = vsel %vm174, %v3707, 0
    %v3807 = vsel %vm174, %v3708, 0
    %v3810 = vsel %vm174, %v3709, 0
    %v3813 = vsel %vm174, %v3710, 0
    %v3816 = vsel %vm174, %v3711, 0
    %v3819 = vsel %vm174, %v3712, 0
    %v3822 = vsel %vm174, %v3713, 0
    %v3825 = vsel %vm174, %v3714, 0
    %v3828 = vsel %vm174, %v3715, 0
    %v3831 = vsel %vm174, %v3716, 0
    %v3834 = vsel %vm174, %v3717, 0
    %v3837 = vsel %vm174, %v3718, 0
    %v3840 = vsel %vm174, %v3719, 0
    %v3843 = vsel %vm174, %v3720, 0
    %v3846 = vsel %vm174, %v3721, 0
    %v3849 = vsel %vm174, %v3722, 0
    %v3852 = vsel %vm174, %v3723, 0
    %v3855 = vsel %vm174, %v3724, 0
    %v3858 = vsel %vm174, %v3725, 0
    %v3861 = vsel %vm174, %v3726, 0
    %v3864 = vsel %vm174, %v3727, 0
    %v3867 = vsel %vm174, %v3728, 0
    %v3870 = vsel %vm174, %v3729, 0
    %v3873 = vsel %vm174, %v3730, 0
    %v3876 = vsel %vm174, %v3731, 0
    %v3879 = vsel %vm174, %v3732, 0
    %v3882 = vsel %vm174, %v3733, 0
    %v3885 = vsel %vm174, %v3734, 0
    %v3888 = vsel %vm174, %v3735, 0
    %v3891 = vsel %vm174, %v3736, 0
    %v3894 = vsel %vm174, %v3737, 0
    %v3897 = vsel %vm174, %v3738, 0
    %v3900 = vsel %vm174, %v3739, 0
    %v3903 = vsel %vm174, %v3740, 0
    %v3906 = vsel %vm174, %v3741, 0
    %v3909 = vsel %vm174, %v3742, 0
    %v3912 = vsel %vm174, %v3743, 0
    %v3915 = vsel %vm174, %v3744, 0
    %v3918 = vsel %vm174, %v3745, 0
    %v3921 = vsel %vm174, %v3746, 0
    %v3924 = vsel %vm174, %v3747, 0
    %v3927 = vsel %vm174, %v3748, 0
    %v3930 = vsel %vm174, %v3749, 0
    %v3933 = vsel %vm174, %v3750, 0
    %v3936 = vsel %vm174, %v3751, 0
    %v3939 = vsel %vm174, %v3752, 0
    %v3942 = vsel %vm174, %v3753, 0
    %v3945 = vsel %vm174, %v3754, 0
    %v3948 = vsel %vm174, %v3755, 0
    %v3951 = vsel %vm174, %v3756, 0
    %v3954 = vsel %vm174, %v3757, 0
    %v3957 = vsel %vm174, %v3758, 0
    %v3960 = vsel %vm174, %v3759, 0
    %v3963 = vsel %vm367, %v3769, 0
    %3965 = vmatpush.msra.mxu0 0.0
    %3966 = vmatpush.msra.mxu0 0.0
    %3967 = vmatpush.msra.mxu0 0.0
    %3968 = vmatpush.msra.mxu0 0.0
    %3969 = vmatpush.msra.mxu0 0.0
    %3970 = vmatpush.msra.mxu0 0.0
    %3971 = vmatpush.msra.mxu0 0.0
    %3972 = vmatpush.msra.mxu0 %v3963
    %3973 = vmatpush.msra.mxu0 %v3768
    %3974 = vmatpush.msra.mxu0 %v3767
    %3975 = vmatpush.msra.mxu0 %v3766
    %3976 = vmatpush.msra.mxu0 %v3765
    %3977 = vmatpush.msra.mxu0 %v3764
    %3978 = vmatpush.msra.mxu0 %v3763
    %3979 = vmatpush.msra.mxu0 %v3762
    %3980 = vmatpush.msra.mxu0 %v3761
    %3981 = vmatmul.f32.gmra.mxu0 %v3771
    %v3982 = vpop.f32.mrf.mxu0
    %v3983 = vadd.f32 0.0, %v3982
    %3984 = vmatmul.f32.gmra.mxu0 %v3774
    %v3985 = vpop.f32.mrf.mxu0
    %v3986 = vadd.f32 0.0, %v3985
    %3987 = vmatmul.f32.gmra.mxu0 %v3777
    %v3988 = vpop.f32.mrf.mxu0
    %v3989 = vadd.f32 0.0, %v3988
    %3990 = vmatmul.f32.gmra.mxu0 %v3780
    %v3991 = vpop.f32.mrf.mxu0
    %v3992 = vadd.f32 0.0, %v3991
    %3993 = vmatmul.f32.gmra.mxu0 %v3783
    %v3994 = vpop.f32.mrf.mxu0
    %v3995 = vadd.f32 0.0, %v3994
    %3996 = vmatmul.f32.gmra.mxu0 %v3786
    %v3997 = vpop.f32.mrf.mxu0
    %v3998 = vadd.f32 0.0, %v3997
    %3999 = vmatmul.f32.gmra.mxu0 %v3789
    %v4000 = vpop.f32.mrf.mxu0
    %v4001 = vadd.f32 0.0, %v4000
    %4002 = vmatmul.f32.gmra.mxu0 %v3792
    %v4003 = vpop.f32.mrf.mxu0
    %v4004 = vadd.f32 0.0, %v4003
    %4005 = vmatmul.f32.gmra.mxu0 %v3795
    %v4006 = vpop.f32.mrf.mxu0
    %v4007 = vadd.f32 0.0, %v4006
    %4008 = vmatmul.f32.gmra.mxu0 %v3798
    %v4009 = vpop.f32.mrf.mxu0
    %v4010 = vadd.f32 0.0, %v4009
    %4011 = vmatmul.f32.gmra.mxu0 %v3801
    %v4012 = vpop.f32.mrf.mxu0
    %v4013 = vadd.f32 0.0, %v4012
    %4014 = vmatmul.f32.gmra.mxu0 %v3804
    %v4015 = vpop.f32.mrf.mxu0
    %v4016 = vadd.f32 0.0, %v4015
    %4017 = vmatmul.f32.gmra.mxu0 %v3807
    %v4018 = vpop.f32.mrf.mxu0
    %v4019 = vadd.f32 0.0, %v4018
    %4020 = vmatmul.f32.gmra.mxu0 %v3810
    %v4021 = vpop.f32.mrf.mxu0
    %v4022 = vadd.f32 0.0, %v4021
    %4023 = vmatmul.f32.gmra.mxu0 %v3813
    %v4024 = vpop.f32.mrf.mxu0
    %v4025 = vadd.f32 0.0, %v4024
    %4026 = vmatmul.f32.gmra.mxu0 %v3816
    %v4027 = vpop.f32.mrf.mxu0
    %v4028 = vadd.f32 0.0, %v4027
    %4029 = vmatmul.f32.gmra.mxu0 %v3819
    %v4030 = vpop.f32.mrf.mxu0
    %v4031 = vadd.f32 0.0, %v4030
    %4032 = vmatmul.f32.gmra.mxu0 %v3822
    %v4033 = vpop.f32.mrf.mxu0
    %v4034 = vadd.f32 0.0, %v4033
    %4035 = vmatmul.f32.gmra.mxu0 %v3825
    %v4036 = vpop.f32.mrf.mxu0
    %v4037 = vadd.f32 0.0, %v4036
    %4038 = vmatmul.f32.gmra.mxu0 %v3828
    %v4039 = vpop.f32.mrf.mxu0
    %v4040 = vadd.f32 0.0, %v4039
    %4041 = vmatmul.f32.gmra.mxu0 %v3831
    %v4042 = vpop.f32.mrf.mxu0
    %v4043 = vadd.f32 0.0, %v4042
    %4044 = vmatmul.f32.gmra.mxu0 %v3834
    %v4045 = vpop.f32.mrf.mxu0
    %v4046 = vadd.f32 0.0, %v4045
    %4047 = vmatmul.f32.gmra.mxu0 %v3837
    %v4048 = vpop.f32.mrf.mxu0
    %v4049 = vadd.f32 0.0, %v4048
    %4050 = vmatmul.f32.gmra.mxu0 %v3840
    %v4051 = vpop.f32.mrf.mxu0
    %v4052 = vadd.f32 0.0, %v4051
    %4053 = vmatmul.f32.gmra.mxu0 %v3843
    %v4054 = vpop.f32.mrf.mxu0
    %v4055 = vadd.f32 0.0, %v4054
    %4056 = vmatmul.f32.gmra.mxu0 %v3846
    %v4057 = vpop.f32.mrf.mxu0
    %v4058 = vadd.f32 0.0, %v4057
    %4059 = vmatmul.f32.gmra.mxu0 %v3849
    %v4060 = vpop.f32.mrf.mxu0
    %v4061 = vadd.f32 0.0, %v4060
    %4062 = vmatmul.f32.gmra.mxu0 %v3852
    %v4063 = vpop.f32.mrf.mxu0
    %v4064 = vadd.f32 0.0, %v4063
    %4065 = vmatmul.f32.gmra.mxu0 %v3855
    %v4066 = vpop.f32.mrf.mxu0
    %v4067 = vadd.f32 0.0, %v4066
    %4068 = vmatmul.f32.gmra.mxu0 %v3858
    %v4069 = vpop.f32.mrf.mxu0
    %v4070 = vadd.f32 0.0, %v4069
    %4071 = vmatmul.f32.gmra.mxu0 %v3861
    %v4072 = vpop.f32.mrf.mxu0
    %v4073 = vadd.f32 0.0, %v4072
    %4074 = vmatmul.f32.gmra.mxu0 %v3864
    %v4075 = vpop.f32.mrf.mxu0
    %v4076 = vadd.f32 0.0, %v4075
    %4077 = vmatmul.f32.gmra.mxu0 %v3867
    %v4078 = vpop.f32.mrf.mxu0
    %v4079 = vadd.f32 0.0, %v4078
    %4080 = vmatmul.f32.gmra.mxu0 %v3870
    %v4081 = vpop.f32.mrf.mxu0
    %v4082 = vadd.f32 0.0, %v4081
    %4083 = vmatmul.f32.gmra.mxu0 %v3873
    %v4084 = vpop.f32.mrf.mxu0
    %v4085 = vadd.f32 0.0, %v4084
    %4086 = vmatmul.f32.gmra.mxu0 %v3876
    %v4087 = vpop.f32.mrf.mxu0
    %v4088 = vadd.f32 0.0, %v4087
    %4089 = vmatmul.f32.gmra.mxu0 %v3879
    %v4090 = vpop.f32.mrf.mxu0
    %v4091 = vadd.f32 0.0, %v4090
    %4092 = vmatmul.f32.gmra.mxu0 %v3882
    %v4093 = vpop.f32.mrf.mxu0
    %v4094 = vadd.f32 0.0, %v4093
    %4095 = vmatmul.f32.gmra.mxu0 %v3885
    %v4096 = vpop.f32.mrf.mxu0
    %v4097 = vadd.f32 0.0, %v4096
    %4098 = vmatmul.f32.gmra.mxu0 %v3888
    %v4099 = vpop.f32.mrf.mxu0
    %v4100 = vadd.f32 0.0, %v4099
    %4101 = vmatmul.f32.gmra.mxu0 %v3891
    %v4102 = vpop.f32.mrf.mxu0
    %v4103 = vadd.f32 0.0, %v4102
    %4104 = vmatmul.f32.gmra.mxu0 %v3894
    %v4105 = vpop.f32.mrf.mxu0
    %v4106 = vadd.f32 0.0, %v4105
    %4107 = vmatmul.f32.gmra.mxu0 %v3897
    %v4108 = vpop.f32.mrf.mxu0
    %v4109 = vadd.f32 0.0, %v4108
    %4110 = vmatmul.f32.gmra.mxu0 %v3900
    %v4111 = vpop.f32.mrf.mxu0
    %v4112 = vadd.f32 0.0, %v4111
    %4113 = vmatmul.f32.gmra.mxu0 %v3903
    %v4114 = vpop.f32.mrf.mxu0
    %v4115 = vadd.f32 0.0, %v4114
    %4116 = vmatmul.f32.gmra.mxu0 %v3906
    %v4117 = vpop.f32.mrf.mxu0
    %v4118 = vadd.f32 0.0, %v4117
    %4119 = vmatmul.f32.gmra.mxu0 %v3909
    %v4120 = vpop.f32.mrf.mxu0
    %v4121 = vadd.f32 0.0, %v4120
    %4122 = vmatmul.f32.gmra.mxu0 %v3912
    %v4123 = vpop.f32.mrf.mxu0
    %v4124 = vadd.f32 0.0, %v4123
    %4125 = vmatmul.f32.gmra.mxu0 %v3915
    %v4126 = vpop.f32.mrf.mxu0
    %v4127 = vadd.f32 0.0, %v4126
    %4128 = vmatmul.f32.gmra.mxu0 %v3918
    %v4129 = vpop.f32.mrf.mxu0
    %v4130 = vadd.f32 0.0, %v4129
    %4131 = vmatmul.f32.gmra.mxu0 %v3921
    %v4132 = vpop.f32.mrf.mxu0
    %v4133 = vadd.f32 0.0, %v4132
    %4134 = vmatmul.f32.gmra.mxu0 %v3924
    %v4135 = vpop.f32.mrf.mxu0
    %v4136 = vadd.f32 0.0, %v4135
    %4137 = vmatmul.f32.gmra.mxu0 %v3927
    %v4138 = vpop.f32.mrf.mxu0
    %v4139 = vadd.f32 0.0, %v4138
    %4140 = vmatmul.f32.gmra.mxu0 %v3930
    %v4141 = vpop.f32.mrf.mxu0
    %v4142 = vadd.f32 0.0, %v4141
    %4143 = vmatmul.f32.gmra.mxu0 %v3933
    %v4144 = vpop.f32.mrf.mxu0
    %v4145 = vadd.f32 0.0, %v4144
    %4146 = vmatmul.f32.gmra.mxu0 %v3936
    %v4147 = vpop.f32.mrf.mxu0
    %v4148 = vadd.f32 0.0, %v4147
    %4149 = vmatmul.f32.gmra.mxu0 %v3939
    %v4150 = vpop.f32.mrf.mxu0
    %v4151 = vadd.f32 0.0, %v4150
    %4152 = vmatmul.f32.gmra.mxu0 %v3942
    %v4153 = vpop.f32.mrf.mxu0
    %v4154 = vadd.f32 0.0, %v4153
    %4155 = vmatmul.f32.gmra.mxu0 %v3945
    %v4156 = vpop.f32.mrf.mxu0
    %v4157 = vadd.f32 0.0, %v4156
    %4158 = vmatmul.f32.gmra.mxu0 %v3948
    %v4159 = vpop.f32.mrf.mxu0
    %v4160 = vadd.f32 0.0, %v4159
    %4161 = vmatmul.f32.gmra.mxu0 %v3951
    %v4162 = vpop.f32.mrf.mxu0
    %v4163 = vadd.f32 0.0, %v4162
    %4164 = vmatmul.f32.gmra.mxu0 %v3954
    %v4165 = vpop.f32.mrf.mxu0
    %v4166 = vadd.f32 0.0, %v4165
    %4167 = vmatmul.f32.gmra.mxu0 %v3957
    %v4168 = vpop.f32.mrf.mxu0
    %v4169 = vadd.f32 0.0, %v4168
    %4170 = vmatmul.f32.gmra.mxu0 %v3960
    %v4171 = vpop.f32.mrf.mxu0
    %v4172 = vadd.f32 0.0, %v4171
    %4173 = vdwg.mxu0
    %v4174 = vadd.f32 %v3632, %v3983
    %v4175 = vadd.f32 %v3633, %v3986
    %v4176 = vadd.f32 %v3634, %v3989
    %v4177 = vadd.f32 %v3635, %v3992
    %v4178 = vadd.f32 %v3636, %v3995
    %v4179 = vadd.f32 %v3637, %v3998
    %v4180 = vadd.f32 %v3638, %v4001
    %v4181 = vadd.f32 %v3639, %v4004
    %v4182 = vadd.f32 %v3640, %v4007
    %v4183 = vadd.f32 %v3641, %v4010
    %v4184 = vadd.f32 %v3642, %v4013
    %v4185 = vadd.f32 %v3643, %v4016
    %v4186 = vadd.f32 %v3644, %v4019
    %v4187 = vadd.f32 %v3645, %v4022
    %v4188 = vadd.f32 %v3646, %v4025
    %v4189 = vadd.f32 %v3647, %v4028
    %v4190 = vadd.f32 %v3648, %v4031
    %v4191 = vadd.f32 %v3649, %v4034
    %v4192 = vadd.f32 %v3650, %v4037
    %v4193 = vadd.f32 %v3651, %v4040
    %v4194 = vadd.f32 %v3652, %v4043
    %v4195 = vadd.f32 %v3653, %v4046
    %v4196 = vadd.f32 %v3654, %v4049
    %v4197 = vadd.f32 %v3655, %v4052
    %v4198 = vadd.f32 %v3656, %v4055
    %v4199 = vadd.f32 %v3657, %v4058
    %v4200 = vadd.f32 %v3658, %v4061
    %v4201 = vadd.f32 %v3659, %v4064
    %v4202 = vadd.f32 %v3660, %v4067
    %v4203 = vadd.f32 %v3661, %v4070
    %v4204 = vadd.f32 %v3662, %v4073
    %v4205 = vadd.f32 %v3663, %v4076
    %v4206 = vadd.f32 %v3664, %v4079
    %v4207 = vadd.f32 %v3665, %v4082
    %v4208 = vadd.f32 %v3666, %v4085
    %v4209 = vadd.f32 %v3667, %v4088
    %v4210 = vadd.f32 %v3668, %v4091
    %v4211 = vadd.f32 %v3669, %v4094
    %v4212 = vadd.f32 %v3670, %v4097
    %v4213 = vadd.f32 %v3671, %v4100
    %v4214 = vadd.f32 %v3672, %v4103
    %v4215 = vadd.f32 %v3673, %v4106
    %v4216 = vadd.f32 %v3674, %v4109
    %v4217 = vadd.f32 %v3675, %v4112
    %v4218 = vadd.f32 %v3676, %v4115
    %v4219 = vadd.f32 %v3677, %v4118
    %v4220 = vadd.f32 %v3678, %v4121
    %v4221 = vadd.f32 %v3679, %v4124
    %v4222 = vadd.f32 %v3680, %v4127
    %v4223 = vadd.f32 %v3681, %v4130
    %v4224 = vadd.f32 %v3682, %v4133
    %v4225 = vadd.f32 %v3683, %v4136
    %v4226 = vadd.f32 %v3684, %v4139
    %v4227 = vadd.f32 %v3685, %v4142
    %v4228 = vadd.f32 %v3686, %v4145
    %v4229 = vadd.f32 %v3687, %v4148
    %v4230 = vadd.f32 %v3688, %v4151
    %v4231 = vadd.f32 %v3689, %v4154
    %v4232 = vadd.f32 %v3690, %v4157
    %v4233 = vadd.f32 %v3691, %v4160
    %v4234 = vadd.f32 %v3692, %v4163
    %v4235 = vadd.f32 %v3693, %v4166
    %v4236 = vadd.f32 %v3694, %v4169
    %v4237 = vadd.f32 %v3695, %v4172
    %v4238 = vld [vmem:[%s3153 + $0x2] sm:$0xff]
    %v4239 = vld [vmem:[%s3153 + $0xa] sm:$0xff]
    %v4240 = vld [vmem:[%s3153 + $0x1a] sm:$0xff]
    %v4241 = vld [vmem:[%s3153 + $0x22] sm:$0xff]
    %v4242 = vld [vmem:[%s3153 + $0x32] sm:$0xff]
    %v4243 = vld [vmem:[%s3153 + $0x3a] sm:$0xff]
    %v4244 = vld [vmem:[%s3153 + $0x4a] sm:$0xff]
    %v4245 = vld [vmem:[%s3153 + $0x52] sm:$0xff]
    %v4246 = vld [vmem:[%s3153 + $0x62] sm:$0xff]
    %v4247 = vld [vmem:[%s3153 + $0x6a] sm:$0xff]
    %v4248 = vld [vmem:[%s3153 + $0x7a] sm:$0xff]
    %v4249 = vld [vmem:[%s3153 + $0x82] sm:$0xff]
    %v4250 = vld [vmem:[%s3153 + $0x92] sm:$0xff]
    %v4251 = vld [vmem:[%s3153 + $0x9a] sm:$0xff]
    %v4252 = vld [vmem:[%s3153 + $0xaa] sm:$0xff]
    %v4253 = vld [vmem:[%s3153 + $0xb2] sm:$0xff]
    %v4254 = vld [vmem:[%s3153 + $0xc2] sm:$0xff]
    %v4255 = vld [vmem:[%s3153 + $0xca] sm:$0xff]
    %v4256 = vld [vmem:[%s3153 + $0xda] sm:$0xff]
    %v4257 = vld [vmem:[%s3153 + $0xe2] sm:$0xff]
    %v4258 = vld [vmem:[%s3153 + $0xf2] sm:$0xff]
    %v4259 = vld [vmem:[%s3153 + $0xfa] sm:$0xff]
    %v4260 = vld [vmem:[%s3153 + $0x10a] sm:$0xff]
    %v4261 = vld [vmem:[%s3153 + $0x112] sm:$0xff]
    %v4262 = vld [vmem:[%s3153 + $0x122] sm:$0xff]
    %v4263 = vld [vmem:[%s3153 + $0x12a] sm:$0xff]
    %v4264 = vld [vmem:[%s3153 + $0x13a] sm:$0xff]
    %v4265 = vld [vmem:[%s3153 + $0x142] sm:$0xff]
    %v4266 = vld [vmem:[%s3153 + $0x152] sm:$0xff]
    %v4267 = vld [vmem:[%s3153 + $0x15a] sm:$0xff]
    %v4268 = vld [vmem:[%s3153 + $0x16a] sm:$0xff]
    %v4269 = vld [vmem:[%s3153 + $0x172] sm:$0xff]
    %v4270 = vld [vmem:[%s3153 + $0x1b2] sm:$0xff]
    %v4271 = vld [vmem:[%s3153 + $0x1ba] sm:$0xff]
    %v4272 = vld [vmem:[%s3153 + $0x1ca] sm:$0xff]
    %v4273 = vld [vmem:[%s3153 + $0x1d2] sm:$0xff]
    %v4274 = vld [vmem:[%s3153 + $0x1e2] sm:$0xff]
    %v4275 = vld [vmem:[%s3153 + $0x1ea] sm:$0xff]
    %v4276 = vld [vmem:[%s3153 + $0x1fa] sm:$0xff]
    %v4277 = vld [vmem:[%s3153 + $0x202] sm:$0xff]
    %v4278 = vld [vmem:[%s3153 + $0x212] sm:$0xff]
    %v4279 = vld [vmem:[%s3153 + $0x21a] sm:$0xff]
    %v4280 = vld [vmem:[%s3153 + $0x22a] sm:$0xff]
    %v4281 = vld [vmem:[%s3153 + $0x232] sm:$0xff]
    %v4282 = vld [vmem:[%s3153 + $0x242] sm:$0xff]
    %v4283 = vld [vmem:[%s3153 + $0x24a] sm:$0xff]
    %v4284 = vld [vmem:[%s3153 + $0x25a] sm:$0xff]
    %v4285 = vld [vmem:[%s3153 + $0x262] sm:$0xff]
    %v4286 = vld [vmem:[%s3153 + $0x272] sm:$0xff]
    %v4287 = vld [vmem:[%s3153 + $0x27a] sm:$0xff]
    %v4288 = vld [vmem:[%s3153 + $0x28a] sm:$0xff]
    %v4289 = vld [vmem:[%s3153 + $0x292] sm:$0xff]
    %v4290 = vld [vmem:[%s3153 + $0x2a2] sm:$0xff]
    %v4291 = vld [vmem:[%s3153 + $0x2aa] sm:$0xff]
    %v4292 = vld [vmem:[%s3153 + $0x2ba] sm:$0xff]
    %v4293 = vld [vmem:[%s3153 + $0x2c2] sm:$0xff]
    %v4294 = vld [vmem:[%s3153 + $0x2d2] sm:$0xff]
    %v4295 = vld [vmem:[%s3153 + $0x2da] sm:$0xff]
    %v4296 = vld [vmem:[%s3153 + $0x2ea] sm:$0xff]
    %v4297 = vld [vmem:[%s3153 + $0x2f2] sm:$0xff]
    %v4298 = vld [vmem:[%s3153 + $0x302] sm:$0xff]
    %v4299 = vld [vmem:[%s3153 + $0x30a] sm:$0xff]
    %v4300 = vld [vmem:[%s3153 + $0x31a] sm:$0xff]
    %v4301 = vld [vmem:[%s3153 + $0x322] sm:$0xff]
    %s4302 = scalar_lea.vmem %s1, 576
    %v4303 = vld [vmem:[%s4302] sm:$0xff]
    %v4304 = vld [vmem:[%s4302 + $0x8] sm:$0xff]
    %v4305 = vld [vmem:[%s4302 + $0x10] sm:$0xff]
    %v4306 = vld [vmem:[%s4302 + $0x18] sm:$0xff]
    %v4307 = vld [vmem:[%s4302 + $0x20] sm:$0xff]
    %v4308 = vld [vmem:[%s4302 + $0x28] sm:$0xff]
    %v4309 = vld [vmem:[%s4302 + $0x30] sm:$0xff]
    %v4310 = vld [vmem:[%s4302 + $0x38] sm:$0xff]
    %v4311 = vld [vmem:[%s4302 + $0x40] sm:$0x3]
    %v4313 = vsel %vm174, %v4238, 0
    %v4316 = vsel %vm174, %v4239, 0
    %v4319 = vsel %vm174, %v4240, 0
    %v4322 = vsel %vm174, %v4241, 0
    %v4325 = vsel %vm174, %v4242, 0
    %v4328 = vsel %vm174, %v4243, 0
    %v4331 = vsel %vm174, %v4244, 0
    %v4334 = vsel %vm174, %v4245, 0
    %v4337 = vsel %vm174, %v4246, 0
    %v4340 = vsel %vm174, %v4247, 0
    %v4343 = vsel %vm174, %v4248, 0
    %v4346 = vsel %vm174, %v4249, 0
    %v4349 = vsel %vm174, %v4250, 0
    %v4352 = vsel %vm174, %v4251, 0
    %v4355 = vsel %vm174, %v4252, 0
    %v4358 = vsel %vm174, %v4253, 0
    %v4361 = vsel %vm174, %v4254, 0
    %v4364 = vsel %vm174, %v4255, 0
    %v4367 = vsel %vm174, %v4256, 0
    %v4370 = vsel %vm174, %v4257, 0
    %v4373 = vsel %vm174, %v4258, 0
    %v4376 = vsel %vm174, %v4259, 0
    %v4379 = vsel %vm174, %v4260, 0
    %v4382 = vsel %vm174, %v4261, 0
    %v4385 = vsel %vm174, %v4262, 0
    %v4388 = vsel %vm174, %v4263, 0
    %v4391 = vsel %vm174, %v4264, 0
    %v4394 = vsel %vm174, %v4265, 0
    %v4397 = vsel %vm174, %v4266, 0
    %v4400 = vsel %vm174, %v4267, 0
    %v4403 = vsel %vm174, %v4268, 0
    %v4406 = vsel %vm174, %v4269, 0
    %v4409 = vsel %vm174, %v4270, 0
    %v4412 = vsel %vm174, %v4271, 0
    %v4415 = vsel %vm174, %v4272, 0
    %v4418 = vsel %vm174, %v4273, 0
    %v4421 = vsel %vm174, %v4274, 0
    %v4424 = vsel %vm174, %v4275, 0
    %v4427 = vsel %vm174, %v4276, 0
    %v4430 = vsel %vm174, %v4277, 0
    %v4433 = vsel %vm174, %v4278, 0
    %v4436 = vsel %vm174, %v4279, 0
    %v4439 = vsel %vm174, %v4280, 0
    %v4442 = vsel %vm174, %v4281, 0
    %v4445 = vsel %vm174, %v4282, 0
    %v4448 = vsel %vm174, %v4283, 0
    %v4451 = vsel %vm174, %v4284, 0
    %v4454 = vsel %vm174, %v4285, 0
    %v4457 = vsel %vm174, %v4286, 0
    %v4460 = vsel %vm174, %v4287, 0
    %v4463 = vsel %vm174, %v4288, 0
    %v4466 = vsel %vm174, %v4289, 0
    %v4469 = vsel %vm174, %v4290, 0
    %v4472 = vsel %vm174, %v4291, 0
    %v4475 = vsel %vm174, %v4292, 0
    %v4478 = vsel %vm174, %v4293, 0
    %v4481 = vsel %vm174, %v4294, 0
    %v4484 = vsel %vm174, %v4295, 0
    %v4487 = vsel %vm174, %v4296, 0
    %v4490 = vsel %vm174, %v4297, 0
    %v4493 = vsel %vm174, %v4298, 0
    %v4496 = vsel %vm174, %v4299, 0
    %v4499 = vsel %vm174, %v4300, 0
    %v4502 = vsel %vm174, %v4301, 0
    %v4505 = vsel %vm367, %v4311, 0
    %4507 = vmatpush.msra.mxu0 0.0
    %4508 = vmatpush.msra.mxu0 0.0
    %4509 = vmatpush.msra.mxu0 0.0
    %4510 = vmatpush.msra.mxu0 0.0
    %4511 = vmatpush.msra.mxu0 0.0
    %4512 = vmatpush.msra.mxu0 0.0
    %4513 = vmatpush.msra.mxu0 0.0
    %4514 = vmatpush.msra.mxu0 %v4505
    %4515 = vmatpush.msra.mxu0 %v4310
    %4516 = vmatpush.msra.mxu0 %v4309
    %4517 = vmatpush.msra.mxu0 %v4308
    %4518 = vmatpush.msra.mxu0 %v4307
    %4519 = vmatpush.msra.mxu0 %v4306
    %4520 = vmatpush.msra.mxu0 %v4305
    %4521 = vmatpush.msra.mxu0 %v4304
    %4522 = vmatpush.msra.mxu0 %v4303
    %4523 = vmatmul.f32.gmra.mxu0 %v4313
    %v4524 = vpop.f32.mrf.mxu0
    %v4525 = vadd.f32 0.0, %v4524
    %4526 = vmatmul.f32.gmra.mxu0 %v4316
    %v4527 = vpop.f32.mrf.mxu0
    %v4528 = vadd.f32 0.0, %v4527
    %4529 = vmatmul.f32.gmra.mxu0 %v4319
    %v4530 = vpop.f32.mrf.mxu0
    %v4531 = vadd.f32 0.0, %v4530
    %4532 = vmatmul.f32.gmra.mxu0 %v4322
    %v4533 = vpop.f32.mrf.mxu0
    %v4534 = vadd.f32 0.0, %v4533
    %4535 = vmatmul.f32.gmra.mxu0 %v4325
    %v4536 = vpop.f32.mrf.mxu0
    %v4537 = vadd.f32 0.0, %v4536
    %4538 = vmatmul.f32.gmra.mxu0 %v4328
    %v4539 = vpop.f32.mrf.mxu0
    %v4540 = vadd.f32 0.0, %v4539
    %4541 = vmatmul.f32.gmra.mxu0 %v4331
    %v4542 = vpop.f32.mrf.mxu0
    %v4543 = vadd.f32 0.0, %v4542
    %4544 = vmatmul.f32.gmra.mxu0 %v4334
    %v4545 = vpop.f32.mrf.mxu0
    %v4546 = vadd.f32 0.0, %v4545
    %4547 = vmatmul.f32.gmra.mxu0 %v4337
    %v4548 = vpop.f32.mrf.mxu0
    %v4549 = vadd.f32 0.0, %v4548
    %4550 = vmatmul.f32.gmra.mxu0 %v4340
    %v4551 = vpop.f32.mrf.mxu0
    %v4552 = vadd.f32 0.0, %v4551
    %4553 = vmatmul.f32.gmra.mxu0 %v4343
    %v4554 = vpop.f32.mrf.mxu0
    %v4555 = vadd.f32 0.0, %v4554
    %4556 = vmatmul.f32.gmra.mxu0 %v4346
    %v4557 = vpop.f32.mrf.mxu0
    %v4558 = vadd.f32 0.0, %v4557
    %4559 = vmatmul.f32.gmra.mxu0 %v4349
    %v4560 = vpop.f32.mrf.mxu0
    %v4561 = vadd.f32 0.0, %v4560
    %4562 = vmatmul.f32.gmra.mxu0 %v4352
    %v4563 = vpop.f32.mrf.mxu0
    %v4564 = vadd.f32 0.0, %v4563
    %4565 = vmatmul.f32.gmra.mxu0 %v4355
    %v4566 = vpop.f32.mrf.mxu0
    %v4567 = vadd.f32 0.0, %v4566
    %4568 = vmatmul.f32.gmra.mxu0 %v4358
    %v4569 = vpop.f32.mrf.mxu0
    %v4570 = vadd.f32 0.0, %v4569
    %4571 = vmatmul.f32.gmra.mxu0 %v4361
    %v4572 = vpop.f32.mrf.mxu0
    %v4573 = vadd.f32 0.0, %v4572
    %4574 = vmatmul.f32.gmra.mxu0 %v4364
    %v4575 = vpop.f32.mrf.mxu0
    %v4576 = vadd.f32 0.0, %v4575
    %4577 = vmatmul.f32.gmra.mxu0 %v4367
    %v4578 = vpop.f32.mrf.mxu0
    %v4579 = vadd.f32 0.0, %v4578
    %4580 = vmatmul.f32.gmra.mxu0 %v4370
    %v4581 = vpop.f32.mrf.mxu0
    %v4582 = vadd.f32 0.0, %v4581
    %4583 = vmatmul.f32.gmra.mxu0 %v4373
    %v4584 = vpop.f32.mrf.mxu0
    %v4585 = vadd.f32 0.0, %v4584
    %4586 = vmatmul.f32.gmra.mxu0 %v4376
    %v4587 = vpop.f32.mrf.mxu0
    %v4588 = vadd.f32 0.0, %v4587
    %4589 = vmatmul.f32.gmra.mxu0 %v4379
    %v4590 = vpop.f32.mrf.mxu0
    %v4591 = vadd.f32 0.0, %v4590
    %4592 = vmatmul.f32.gmra.mxu0 %v4382
    %v4593 = vpop.f32.mrf.mxu0
    %v4594 = vadd.f32 0.0, %v4593
    %4595 = vmatmul.f32.gmra.mxu0 %v4385
    %v4596 = vpop.f32.mrf.mxu0
    %v4597 = vadd.f32 0.0, %v4596
    %4598 = vmatmul.f32.gmra.mxu0 %v4388
    %v4599 = vpop.f32.mrf.mxu0
    %v4600 = vadd.f32 0.0, %v4599
    %4601 = vmatmul.f32.gmra.mxu0 %v4391
    %v4602 = vpop.f32.mrf.mxu0
    %v4603 = vadd.f32 0.0, %v4602
    %4604 = vmatmul.f32.gmra.mxu0 %v4394
    %v4605 = vpop.f32.mrf.mxu0
    %v4606 = vadd.f32 0.0, %v4605
    %4607 = vmatmul.f32.gmra.mxu0 %v4397
    %v4608 = vpop.f32.mrf.mxu0
    %v4609 = vadd.f32 0.0, %v4608
    %4610 = vmatmul.f32.gmra.mxu0 %v4400
    %v4611 = vpop.f32.mrf.mxu0
    %v4612 = vadd.f32 0.0, %v4611
    %4613 = vmatmul.f32.gmra.mxu0 %v4403
    %v4614 = vpop.f32.mrf.mxu0
    %v4615 = vadd.f32 0.0, %v4614
    %4616 = vmatmul.f32.gmra.mxu0 %v4406
    %v4617 = vpop.f32.mrf.mxu0
    %v4618 = vadd.f32 0.0, %v4617
    %4619 = vmatmul.f32.gmra.mxu0 %v4409
    %v4620 = vpop.f32.mrf.mxu0
    %v4621 = vadd.f32 0.0, %v4620
    %4622 = vmatmul.f32.gmra.mxu0 %v4412
    %v4623 = vpop.f32.mrf.mxu0
    %v4624 = vadd.f32 0.0, %v4623
    %4625 = vmatmul.f32.gmra.mxu0 %v4415
    %v4626 = vpop.f32.mrf.mxu0
    %v4627 = vadd.f32 0.0, %v4626
    %4628 = vmatmul.f32.gmra.mxu0 %v4418
    %v4629 = vpop.f32.mrf.mxu0
    %v4630 = vadd.f32 0.0, %v4629
    %4631 = vmatmul.f32.gmra.mxu0 %v4421
    %v4632 = vpop.f32.mrf.mxu0
    %v4633 = vadd.f32 0.0, %v4632
    %4634 = vmatmul.f32.gmra.mxu0 %v4424
    %v4635 = vpop.f32.mrf.mxu0
    %v4636 = vadd.f32 0.0, %v4635
    %4637 = vmatmul.f32.gmra.mxu0 %v4427
    %v4638 = vpop.f32.mrf.mxu0
    %v4639 = vadd.f32 0.0, %v4638
    %4640 = vmatmul.f32.gmra.mxu0 %v4430
    %v4641 = vpop.f32.mrf.mxu0
    %v4642 = vadd.f32 0.0, %v4641
    %4643 = vmatmul.f32.gmra.mxu0 %v4433
    %v4644 = vpop.f32.mrf.mxu0
    %v4645 = vadd.f32 0.0, %v4644
    %4646 = vmatmul.f32.gmra.mxu0 %v4436
    %v4647 = vpop.f32.mrf.mxu0
    %v4648 = vadd.f32 0.0, %v4647
    %4649 = vmatmul.f32.gmra.mxu0 %v4439
    %v4650 = vpop.f32.mrf.mxu0
    %v4651 = vadd.f32 0.0, %v4650
    %4652 = vmatmul.f32.gmra.mxu0 %v4442
    %v4653 = vpop.f32.mrf.mxu0
    %v4654 = vadd.f32 0.0, %v4653
    %4655 = vmatmul.f32.gmra.mxu0 %v4445
    %v4656 = vpop.f32.mrf.mxu0
    %v4657 = vadd.f32 0.0, %v4656
    %4658 = vmatmul.f32.gmra.mxu0 %v4448
    %v4659 = vpop.f32.mrf.mxu0
    %v4660 = vadd.f32 0.0, %v4659
    %4661 = vmatmul.f32.gmra.mxu0 %v4451
    %v4662 = vpop.f32.mrf.mxu0
    %v4663 = vadd.f32 0.0, %v4662
    %4664 = vmatmul.f32.gmra.mxu0 %v4454
    %v4665 = vpop.f32.mrf.mxu0
    %v4666 = vadd.f32 0.0, %v4665
    %4667 = vmatmul.f32.gmra.mxu0 %v4457
    %v4668 = vpop.f32.mrf.mxu0
    %v4669 = vadd.f32 0.0, %v4668
    %4670 = vmatmul.f32.gmra.mxu0 %v4460
    %v4671 = vpop.f32.mrf.mxu0
    %v4672 = vadd.f32 0.0, %v4671
    %4673 = vmatmul.f32.gmra.mxu0 %v4463
    %v4674 = vpop.f32.mrf.mxu0
    %v4675 = vadd.f32 0.0, %v4674
    %4676 = vmatmul.f32.gmra.mxu0 %v4466
    %v4677 = vpop.f32.mrf.mxu0
    %v4678 = vadd.f32 0.0, %v4677
    %4679 = vmatmul.f32.gmra.mxu0 %v4469
    %v4680 = vpop.f32.mrf.mxu0
    %v4681 = vadd.f32 0.0, %v4680
    %4682 = vmatmul.f32.gmra.mxu0 %v4472
    %v4683 = vpop.f32.mrf.mxu0
    %v4684 = vadd.f32 0.0, %v4683
    %4685 = vmatmul.f32.gmra.mxu0 %v4475
    %v4686 = vpop.f32.mrf.mxu0
    %v4687 = vadd.f32 0.0, %v4686
    %4688 = vmatmul.f32.gmra.mxu0 %v4478
    %v4689 = vpop.f32.mrf.mxu0
    %v4690 = vadd.f32 0.0, %v4689
    %4691 = vmatmul.f32.gmra.mxu0 %v4481
    %v4692 = vpop.f32.mrf.mxu0
    %v4693 = vadd.f32 0.0, %v4692
    %4694 = vmatmul.f32.gmra.mxu0 %v4484
    %v4695 = vpop.f32.mrf.mxu0
    %v4696 = vadd.f32 0.0, %v4695
    %4697 = vmatmul.f32.gmra.mxu0 %v4487
    %v4698 = vpop.f32.mrf.mxu0
    %v4699 = vadd.f32 0.0, %v4698
    %4700 = vmatmul.f32.gmra.mxu0 %v4490
    %v4701 = vpop.f32.mrf.mxu0
    %v4702 = vadd.f32 0.0, %v4701
    %4703 = vmatmul.f32.gmra.mxu0 %v4493
    %v4704 = vpop.f32.mrf.mxu0
    %v4705 = vadd.f32 0.0, %v4704
    %4706 = vmatmul.f32.gmra.mxu0 %v4496
    %v4707 = vpop.f32.mrf.mxu0
    %v4708 = vadd.f32 0.0, %v4707
    %4709 = vmatmul.f32.gmra.mxu0 %v4499
    %v4710 = vpop.f32.mrf.mxu0
    %v4711 = vadd.f32 0.0, %v4710
    %4712 = vmatmul.f32.gmra.mxu0 %v4502
    %v4713 = vpop.f32.mrf.mxu0
    %v4714 = vadd.f32 0.0, %v4713
    %4715 = vdwg.mxu0
    %v4716 = vadd.f32 %v4174, %v4525
    %v4717 = vadd.f32 %v4175, %v4528
    %v4718 = vadd.f32 %v4176, %v4531
    %v4719 = vadd.f32 %v4177, %v4534
    %v4720 = vadd.f32 %v4178, %v4537
    %v4721 = vadd.f32 %v4179, %v4540
    %v4722 = vadd.f32 %v4180, %v4543
    %v4723 = vadd.f32 %v4181, %v4546
    %v4724 = vadd.f32 %v4182, %v4549
    %v4725 = vadd.f32 %v4183, %v4552
    %v4726 = vadd.f32 %v4184, %v4555
    %v4727 = vadd.f32 %v4185, %v4558
    %v4728 = vadd.f32 %v4186, %v4561
    %v4729 = vadd.f32 %v4187, %v4564
    %v4730 = vadd.f32 %v4188, %v4567
    %v4731 = vadd.f32 %v4189, %v4570
    %v4732 = vadd.f32 %v4190, %v4573
    %v4733 = vadd.f32 %v4191, %v4576
    %v4734 = vadd.f32 %v4192, %v4579
    %v4735 = vadd.f32 %v4193, %v4582
    %v4736 = vadd.f32 %v4194, %v4585
    %v4737 = vadd.f32 %v4195, %v4588
    %v4738 = vadd.f32 %v4196, %v4591
    %v4739 = vadd.f32 %v4197, %v4594
    %v4740 = vadd.f32 %v4198, %v4597
    %v4741 = vadd.f32 %v4199, %v4600
    %v4742 = vadd.f32 %v4200, %v4603
    %v4743 = vadd.f32 %v4201, %v4606
    %v4744 = vadd.f32 %v4202, %v4609
    %v4745 = vadd.f32 %v4203, %v4612
    %v4746 = vadd.f32 %v4204, %v4615
    %v4747 = vadd.f32 %v4205, %v4618
    %v4748 = vadd.f32 %v4206, %v4621
    %v4749 = vadd.f32 %v4207, %v4624
    %v4750 = vadd.f32 %v4208, %v4627
    %v4751 = vadd.f32 %v4209, %v4630
    %v4752 = vadd.f32 %v4210, %v4633
    %v4753 = vadd.f32 %v4211, %v4636
    %v4754 = vadd.f32 %v4212, %v4639
    %v4755 = vadd.f32 %v4213, %v4642
    %v4756 = vadd.f32 %v4214, %v4645
    %v4757 = vadd.f32 %v4215, %v4648
    %v4758 = vadd.f32 %v4216, %v4651
    %v4759 = vadd.f32 %v4217, %v4654
    %v4760 = vadd.f32 %v4218, %v4657
    %v4761 = vadd.f32 %v4219, %v4660
    %v4762 = vadd.f32 %v4220, %v4663
    %v4763 = vadd.f32 %v4221, %v4666
    %v4764 = vadd.f32 %v4222, %v4669
    %v4765 = vadd.f32 %v4223, %v4672
    %v4766 = vadd.f32 %v4224, %v4675
    %v4767 = vadd.f32 %v4225, %v4678
    %v4768 = vadd.f32 %v4226, %v4681
    %v4769 = vadd.f32 %v4227, %v4684
    %v4770 = vadd.f32 %v4228, %v4687
    %v4771 = vadd.f32 %v4229, %v4690
    %v4772 = vadd.f32 %v4230, %v4693
    %v4773 = vadd.f32 %v4231, %v4696
    %v4774 = vadd.f32 %v4232, %v4699
    %v4775 = vadd.f32 %v4233, %v4702
    %v4776 = vadd.f32 %v4234, %v4705
    %v4777 = vadd.f32 %v4235, %v4708
    %v4778 = vadd.f32 %v4236, %v4711
    %v4779 = vadd.f32 %v4237, %v4714
    %v4780 = vld [vmem:[%s2] sm:$0x1]
    %v4782 = vperm.slane %v4780, 0
    %v4784 = vadd.f32 %v4716, %v4782
    %v4785 = vadd.f32 %v4717, %v4782
    %v4786 = vadd.f32 %v4718, %v4782
    %v4787 = vadd.f32 %v4719, %v4782
    %v4788 = vadd.f32 %v4720, %v4782
    %v4789 = vadd.f32 %v4721, %v4782
    %v4790 = vadd.f32 %v4722, %v4782
    %v4791 = vadd.f32 %v4723, %v4782
    %v4792 = vadd.f32 %v4724, %v4782
    %v4793 = vadd.f32 %v4725, %v4782
    %v4794 = vadd.f32 %v4726, %v4782
    %v4795 = vadd.f32 %v4727, %v4782
    %v4796 = vadd.f32 %v4728, %v4782
    %v4797 = vadd.f32 %v4729, %v4782
    %v4798 = vadd.f32 %v4730, %v4782
    %v4799 = vadd.f32 %v4731, %v4782
    %v4800 = vadd.f32 %v4732, %v4782
    %v4801 = vadd.f32 %v4733, %v4782
    %v4802 = vadd.f32 %v4734, %v4782
    %v4803 = vadd.f32 %v4735, %v4782
    %v4804 = vadd.f32 %v4736, %v4782
    %v4805 = vadd.f32 %v4737, %v4782
    %v4806 = vadd.f32 %v4738, %v4782
    %v4807 = vadd.f32 %v4739, %v4782
    %v4808 = vadd.f32 %v4740, %v4782
    %v4809 = vadd.f32 %v4741, %v4782
    %v4810 = vadd.f32 %v4742, %v4782
    %v4811 = vadd.f32 %v4743, %v4782
    %v4812 = vadd.f32 %v4744, %v4782
    %v4813 = vadd.f32 %v4745, %v4782
    %v4814 = vadd.f32 %v4746, %v4782
    %v4815 = vadd.f32 %v4747, %v4782
    %v4816 = vadd.f32 %v4748, %v4782
    %v4817 = vadd.f32 %v4749, %v4782
    %v4818 = vadd.f32 %v4750, %v4782
    %v4819 = vadd.f32 %v4751, %v4782
    %v4820 = vadd.f32 %v4752, %v4782
    %v4821 = vadd.f32 %v4753, %v4782
    %v4822 = vadd.f32 %v4754, %v4782
    %v4823 = vadd.f32 %v4755, %v4782
    %v4824 = vadd.f32 %v4756, %v4782
    %v4825 = vadd.f32 %v4757, %v4782
    %v4826 = vadd.f32 %v4758, %v4782
    %v4827 = vadd.f32 %v4759, %v4782
    %v4828 = vadd.f32 %v4760, %v4782
    %v4829 = vadd.f32 %v4761, %v4782
    %v4830 = vadd.f32 %v4762, %v4782
    %v4831 = vadd.f32 %v4763, %v4782
    %v4832 = vadd.f32 %v4764, %v4782
    %v4833 = vadd.f32 %v4765, %v4782
    %v4834 = vadd.f32 %v4766, %v4782
    %v4835 = vadd.f32 %v4767, %v4782
    %v4836 = vadd.f32 %v4768, %v4782
    %v4837 = vadd.f32 %v4769, %v4782
    %v4838 = vadd.f32 %v4770, %v4782
    %v4839 = vadd.f32 %v4771, %v4782
    %v4840 = vadd.f32 %v4772, %v4782
    %v4841 = vadd.f32 %v4773, %v4782
    %v4842 = vadd.f32 %v4774, %v4782
    %v4843 = vadd.f32 %v4775, %v4782
    %v4844 = vadd.f32 %v4776, %v4782
    %v4845 = vadd.f32 %v4777, %v4782
    %v4846 = vadd.f32 %v4778, %v4782
    %v4847 = vadd.f32 %v4779, %v4782
    %v4848 = vmax.f32 %v4784, 0.0
    %v4849 = vmax.f32 %v4785, 0.0
    %v4850 = vmax.f32 %v4786, 0.0
    %v4851 = vmax.f32 %v4787, 0.0
    %v4852 = vmax.f32 %v4788, 0.0
    %v4853 = vmax.f32 %v4789, 0.0
    %v4854 = vmax.f32 %v4790, 0.0
    %v4855 = vmax.f32 %v4791, 0.0
    %v4856 = vmax.f32 %v4792, 0.0
    %v4857 = vmax.f32 %v4793, 0.0
    %v4858 = vmax.f32 %v4794, 0.0
    %v4859 = vmax.f32 %v4795, 0.0
    %v4860 = vmax.f32 %v4796, 0.0
    %v4861 = vmax.f32 %v4797, 0.0
    %v4862 = vmax.f32 %v4798, 0.0
    %v4863 = vmax.f32 %v4799, 0.0
    %v4864 = vmax.f32 %v4800, 0.0
    %v4865 = vmax.f32 %v4801, 0.0
    %v4866 = vmax.f32 %v4802, 0.0
    %v4867 = vmax.f32 %v4803, 0.0
    %v4868 = vmax.f32 %v4804, 0.0
    %v4869 = vmax.f32 %v4805, 0.0
    %v4870 = vmax.f32 %v4806, 0.0
    %v4871 = vmax.f32 %v4807, 0.0
    %v4872 = vmax.f32 %v4808, 0.0
    %v4873 = vmax.f32 %v4809, 0.0
    %v4874 = vmax.f32 %v4810, 0.0
    %v4875 = vmax.f32 %v4811, 0.0
    %v4876 = vmax.f32 %v4812, 0.0
    %v4877 = vmax.f32 %v4813, 0.0
    %v4878 = vmax.f32 %v4814, 0.0
    %v4879 = vmax.f32 %v4815, 0.0
    %v4880 = vmax.f32 %v4816, 0.0
    %v4881 = vmax.f32 %v4817, 0.0
    %v4882 = vmax.f32 %v4818, 0.0
    %v4883 = vmax.f32 %v4819, 0.0
    %v4884 = vmax.f32 %v4820, 0.0
    %v4885 = vmax.f32 %v4821, 0.0
    %v4886 = vmax.f32 %v4822, 0.0
    %v4887 = vmax.f32 %v4823, 0.0
    %v4888 = vmax.f32 %v4824, 0.0
    %v4889 = vmax.f32 %v4825, 0.0
    %v4890 = vmax.f32 %v4826, 0.0
    %v4891 = vmax.f32 %v4827, 0.0
    %v4892 = vmax.f32 %v4828, 0.0
    %v4893 = vmax.f32 %v4829, 0.0
    %v4894 = vmax.f32 %v4830, 0.0
    %v4895 = vmax.f32 %v4831, 0.0
    %v4896 = vmax.f32 %v4832, 0.0
    %v4897 = vmax.f32 %v4833, 0.0
    %v4898 = vmax.f32 %v4834, 0.0
    %v4899 = vmax.f32 %v4835, 0.0
    %v4900 = vmax.f32 %v4836, 0.0
    %v4901 = vmax.f32 %v4837, 0.0
    %v4902 = vmax.f32 %v4838, 0.0
    %v4903 = vmax.f32 %v4839, 0.0
    %v4904 = vmax.f32 %v4840, 0.0
    %v4905 = vmax.f32 %v4841, 0.0
    %v4906 = vmax.f32 %v4842, 0.0
    %v4907 = vmax.f32 %v4843, 0.0
    %v4908 = vmax.f32 %v4844, 0.0
    %v4909 = vmax.f32 %v4845, 0.0
    %v4910 = vmax.f32 %v4846, 0.0
    %v4911 = vmax.f32 %v4847, 0.0
    %vm4912 = vcmask 523264
    %4913 = vst.msk [vmem:[#allocation2] sm:$0xff] %vm4912, 0.0
    %4914 = vst.msk [vmem:[#allocation2 + $0x8] sm:$0xff] %vm4912, 0.0
    %vm4915 = vcmask 517120
    %4916 = vst.msk [vmem:[#allocation2 + $0x10] sm:$0x3] %vm4915, 0.0
    %4917 = vst.msk [vmem:[#allocation2 + $0x18] sm:$0xff] %vm4912, 0.0
    %4918 = vst.msk [vmem:[#allocation2 + $0x20] sm:$0xff] %vm4912, 0.0
    %4919 = vst.msk [vmem:[#allocation2 + $0x28] sm:$0x3] %vm4915, 0.0
    %4920 = vst.msk [vmem:[#allocation2 + $0x30] sm:$0xff] %vm4912, 0.0
    %4921 = vst.msk [vmem:[#allocation2 + $0x38] sm:$0xff] %vm4912, 0.0
    %4922 = vst.msk [vmem:[#allocation2 + $0x40] sm:$0x3] %vm4915, 0.0
    %4923 = vst.msk [vmem:[#allocation2 + $0x48] sm:$0xff] %vm4912, 0.0
    %4924 = vst.msk [vmem:[#allocation2 + $0x50] sm:$0xff] %vm4912, 0.0
    %4925 = vst.msk [vmem:[#allocation2 + $0x58] sm:$0x3] %vm4915, 0.0
    %4926 = vst.msk [vmem:[#allocation2 + $0x60] sm:$0xff] %vm4912, 0.0
    %4927 = vst.msk [vmem:[#allocation2 + $0x68] sm:$0xff] %vm4912, 0.0
    %4928 = vst.msk [vmem:[#allocation2 + $0x70] sm:$0x3] %vm4915, 0.0
    %4929 = vst.msk [vmem:[#allocation2 + $0x78] sm:$0xff] %vm4912, 0.0
    %4930 = vst.msk [vmem:[#allocation2 + $0x80] sm:$0xff] %vm4912, 0.0
    %4931 = vst.msk [vmem:[#allocation2 + $0x88] sm:$0x3] %vm4915, 0.0
    %4932 = vst.msk [vmem:[#allocation2 + $0x90] sm:$0xff] %vm4912, 0.0
    %4933 = vst.msk [vmem:[#allocation2 + $0x98] sm:$0xff] %vm4912, 0.0
    %4934 = vst.msk [vmem:[#allocation2 + $0xa0] sm:$0x3] %vm4915, 0.0
    %4935 = vst.msk [vmem:[#allocation2 + $0xa8] sm:$0xff] %vm4912, 0.0
    %4936 = vst.msk [vmem:[#allocation2 + $0xb0] sm:$0xff] %vm4912, 0.0
    %4937 = vst.msk [vmem:[#allocation2 + $0xb8] sm:$0x3] %vm4915, 0.0
    %4938 = vst.msk [vmem:[#allocation2 + $0xc0] sm:$0xff] %vm4912, 0.0
    %4939 = vst.msk [vmem:[#allocation2 + $0xc8] sm:$0xff] %vm4912, 0.0
    %4940 = vst.msk [vmem:[#allocation2 + $0xd0] sm:$0x3] %vm4915, 0.0
    %4941 = vst.msk [vmem:[#allocation2 + $0xd8] sm:$0xff] %vm4912, 0.0
    %4942 = vst.msk [vmem:[#allocation2 + $0xe0] sm:$0xff] %vm4912, 0.0
    %4943 = vst.msk [vmem:[#allocation2 + $0xe8] sm:$0x3] %vm4915, 0.0
    %4944 = vst.msk [vmem:[#allocation2 + $0xf0] sm:$0xff] %vm4912, 0.0
    %4945 = vst.msk [vmem:[#allocation2 + $0xf8] sm:$0xff] %vm4912, 0.0
    %4946 = vst.msk [vmem:[#allocation2 + $0x100] sm:$0x3] %vm4915, 0.0
    %4947 = vst.msk [vmem:[#allocation2 + $0x108] sm:$0xff] %vm4912, 0.0
    %4948 = vst.msk [vmem:[#allocation2 + $0x110] sm:$0xff] %vm4912, 0.0
    %4949 = vst.msk [vmem:[#allocation2 + $0x118] sm:$0x3] %vm4915, 0.0
    %4950 = vst.msk [vmem:[#allocation2 + $0x120] sm:$0xff] %vm4912, 0.0
    %4951 = vst.msk [vmem:[#allocation2 + $0x128] sm:$0xff] %vm4912, 0.0
    %4952 = vst.msk [vmem:[#allocation2 + $0x130] sm:$0x3] %vm4915, 0.0
    %4953 = vst.msk [vmem:[#allocation2 + $0x138] sm:$0xff] %vm4912, 0.0
    %4954 = vst.msk [vmem:[#allocation2 + $0x140] sm:$0xff] %vm4912, 0.0
    %4955 = vst.msk [vmem:[#allocation2 + $0x148] sm:$0x3] %vm4915, 0.0
    %4956 = vst.msk [vmem:[#allocation2 + $0x150] sm:$0xff] %vm4912, 0.0
    %4957 = vst.msk [vmem:[#allocation2 + $0x158] sm:$0xff] %vm4912, 0.0
    %4958 = vst.msk [vmem:[#allocation2 + $0x160] sm:$0x3] %vm4915, 0.0
    %4959 = vst.msk [vmem:[#allocation2 + $0x168] sm:$0xff] %vm4912, 0.0
    %4960 = vst.msk [vmem:[#allocation2 + $0x170] sm:$0xff] %vm4912, 0.0
    %4961 = vst.msk [vmem:[#allocation2 + $0x178] sm:$0x3] %vm4915, 0.0
    %4962 = vst.msk [vmem:[#allocation2 + $0x180] sm:$0xff] %vm4912, 0.0
    %4963 = vst.msk [vmem:[#allocation2 + $0x188] sm:$0xff] %vm4912, 0.0
    %4964 = vst.msk [vmem:[#allocation2 + $0x190] sm:$0x3] %vm4915, 0.0
    %4965 = vst.msk [vmem:[#allocation2 + $0x198] sm:$0xff] %vm4912, 0.0
    %4966 = vst.msk [vmem:[#allocation2 + $0x1a0] sm:$0xff] %vm4912, 0.0
    %4967 = vst.msk [vmem:[#allocation2 + $0x1a8] sm:$0x3] %vm4915, 0.0
    %4968 = vst.msk [vmem:[#allocation2 + $0x1b0] sm:$0xff] %vm4912, 0.0
    %4969 = vst.msk [vmem:[#allocation2 + $0x1b8] sm:$0xff] %vm4912, 0.0
    %4970 = vst.msk [vmem:[#allocation2 + $0x1c0] sm:$0x3] %vm4915, 0.0
    %4971 = vst.msk [vmem:[#allocation2 + $0x1c8] sm:$0xff] %vm4912, 0.0
    %4972 = vst.msk [vmem:[#allocation2 + $0x1d0] sm:$0xff] %vm4912, 0.0
    %4973 = vst.msk [vmem:[#allocation2 + $0x1d8] sm:$0x3] %vm4915, 0.0
    %4974 = vst.msk [vmem:[#allocation2 + $0x1e0] sm:$0xff] %vm4912, 0.0
    %4975 = vst.msk [vmem:[#allocation2 + $0x1e8] sm:$0xff] %vm4912, 0.0
    %4976 = vst.msk [vmem:[#allocation2 + $0x1f0] sm:$0x3] %vm4915, 0.0
    %4977 = vst.msk [vmem:[#allocation2 + $0x1f8] sm:$0xff] %vm4912, 0.0
    %4978 = vst.msk [vmem:[#allocation2 + $0x200] sm:$0xff] %vm4912, 0.0
    %4979 = vst.msk [vmem:[#allocation2 + $0x208] sm:$0x3] %vm4915, 0.0
    %4980 = vst.msk [vmem:[#allocation2 + $0x210] sm:$0xff] %vm4912, 0.0
    %4981 = vst.msk [vmem:[#allocation2 + $0x218] sm:$0xff] %vm4912, 0.0
    %4982 = vst.msk [vmem:[#allocation2 + $0x220] sm:$0x3] %vm4915, 0.0
    %4983 = vst.msk [vmem:[#allocation2 + $0x228] sm:$0xff] %vm4912, 0.0
    %4984 = vst.msk [vmem:[#allocation2 + $0x230] sm:$0xff] %vm4912, 0.0
    %4985 = vst.msk [vmem:[#allocation2 + $0x238] sm:$0x3] %vm4915, 0.0
    %4986 = vst.msk [vmem:[#allocation2 + $0x240] sm:$0xff] %vm4912, 0.0
    %4987 = vst.msk [vmem:[#allocation2 + $0x248] sm:$0xff] %vm4912, 0.0
    %4988 = vst.msk [vmem:[#allocation2 + $0x250] sm:$0x3] %vm4915, 0.0
    %4989 = vst.msk [vmem:[#allocation2 + $0x258] sm:$0xff] %vm4912, 0.0
    %4990 = vst.msk [vmem:[#allocation2 + $0x260] sm:$0xff] %vm4912, 0.0
    %4991 = vst.msk [vmem:[#allocation2 + $0x268] sm:$0x3] %vm4915, 0.0
    %4992 = vst.msk [vmem:[#allocation2 + $0x270] sm:$0xff] %vm4912, 0.0
    %4993 = vst.msk [vmem:[#allocation2 + $0x278] sm:$0xff] %vm4912, 0.0
    %4994 = vst.msk [vmem:[#allocation2 + $0x280] sm:$0x3] %vm4915, 0.0
    %4995 = vst.msk [vmem:[#allocation2 + $0x288] sm:$0xff] %vm4912, 0.0
    %4996 = vst.msk [vmem:[#allocation2 + $0x290] sm:$0xff] %vm4912, 0.0
    %4997 = vst.msk [vmem:[#allocation2 + $0x298] sm:$0x3] %vm4915, 0.0
    %4998 = vst.msk [vmem:[#allocation2 + $0x2a0] sm:$0xff] %vm4912, 0.0
    %4999 = vst.msk [vmem:[#allocation2 + $0x2a8] sm:$0xff] %vm4912, 0.0
    %5000 = vst.msk [vmem:[#allocation2 + $0x2b0] sm:$0x3] %vm4915, 0.0
    %5001 = vst.msk [vmem:[#allocation2 + $0x2b8] sm:$0xff] %vm4912, 0.0
    %5002 = vst.msk [vmem:[#allocation2 + $0x2c0] sm:$0xff] %vm4912, 0.0
    %5003 = vst.msk [vmem:[#allocation2 + $0x2c8] sm:$0x3] %vm4915, 0.0
    %5004 = vst.msk [vmem:[#allocation2 + $0x2d0] sm:$0xff] %vm4912, 0.0
    %5005 = vst.msk [vmem:[#allocation2 + $0x2d8] sm:$0xff] %vm4912, 0.0
    %5006 = vst.msk [vmem:[#allocation2 + $0x2e0] sm:$0x3] %vm4915, 0.0
    %5007 = vst.msk [vmem:[#allocation2 + $0x2e8] sm:$0xff] %vm4912, 0.0
    %5008 = vst.msk [vmem:[#allocation2 + $0x2f0] sm:$0xff] %vm4912, 0.0
    %5009 = vst.msk [vmem:[#allocation2 + $0x2f8] sm:$0x3] %vm4915, 0.0
    %5010 = vst.msk [vmem:[#allocation2 + $0x300] sm:$0xff] %vm4912, 0.0
    %5011 = vst.msk [vmem:[#allocation2 + $0x308] sm:$0xff] %vm4912, 0.0
    %5012 = vst.msk [vmem:[#allocation2 + $0x310] sm:$0x3] %vm4915, 0.0
    %5013 = vst.msk [vmem:[#allocation2 + $0x318] sm:$0xff] %vm4912, 0.0
    %5014 = vst.msk [vmem:[#allocation2 + $0x320] sm:$0xff] %vm4912, 0.0
    %5015 = vst.msk [vmem:[#allocation2 + $0x328] sm:$0x3] %vm4915, 0.0
    %5016 = vst.msk [vmem:[#allocation2 + $0x330] sm:$0xff] %vm4912, 0.0
    %5017 = vst.msk [vmem:[#allocation2 + $0x338] sm:$0xff] %vm4912, 0.0
    %5018 = vst.msk [vmem:[#allocation2 + $0x340] sm:$0x3] %vm4915, 0.0
    %5019 = vst.msk [vmem:[#allocation2 + $0x348] sm:$0xff] %vm4912, 0.0
    %5020 = vst.msk [vmem:[#allocation2 + $0x350] sm:$0xff] %vm4912, 0.0
    %5021 = vst.msk [vmem:[#allocation2 + $0x358] sm:$0x3] %vm4915, 0.0
    %s5022 = scalar_lea.vmem [#allocation2], 24
    %5023 = vst.msk [vmem:[%s5022 + $0x1] sm:$0xff] %vm4912, %v4848
    %5024 = vst.msk [vmem:[%s5022 + $0x9] sm:$0xff] %vm4912, %v4849
    %5025 = vst.msk [vmem:[%s5022 + $0x19] sm:$0xff] %vm4912, %v4850
    %5026 = vst.msk [vmem:[%s5022 + $0x21] sm:$0xff] %vm4912, %v4851
    %5027 = vst.msk [vmem:[%s5022 + $0x31] sm:$0xff] %vm4912, %v4852
    %5028 = vst.msk [vmem:[%s5022 + $0x39] sm:$0xff] %vm4912, %v4853
    %5029 = vst.msk [vmem:[%s5022 + $0x49] sm:$0xff] %vm4912, %v4854
    %5030 = vst.msk [vmem:[%s5022 + $0x51] sm:$0xff] %vm4912, %v4855
    %5031 = vst.msk [vmem:[%s5022 + $0x61] sm:$0xff] %vm4912, %v4856
    %5032 = vst.msk [vmem:[%s5022 + $0x69] sm:$0xff] %vm4912, %v4857
    %5033 = vst.msk [vmem:[%s5022 + $0x79] sm:$0xff] %vm4912, %v4858
    %5034 = vst.msk [vmem:[%s5022 + $0x81] sm:$0xff] %vm4912, %v4859
    %5035 = vst.msk [vmem:[%s5022 + $0x91] sm:$0xff] %vm4912, %v4860
    %5036 = vst.msk [vmem:[%s5022 + $0x99] sm:$0xff] %vm4912, %v4861
    %5037 = vst.msk [vmem:[%s5022 + $0xa9] sm:$0xff] %vm4912, %v4862
    %5038 = vst.msk [vmem:[%s5022 + $0xb1] sm:$0xff] %vm4912, %v4863
    %5039 = vst.msk [vmem:[%s5022 + $0xc1] sm:$0xff] %vm4912, %v4864
    %5040 = vst.msk [vmem:[%s5022 + $0xc9] sm:$0xff] %vm4912, %v4865
    %5041 = vst.msk [vmem:[%s5022 + $0xd9] sm:$0xff] %vm4912, %v4866
    %5042 = vst.msk [vmem:[%s5022 + $0xe1] sm:$0xff] %vm4912, %v4867
    %5043 = vst.msk [vmem:[%s5022 + $0xf1] sm:$0xff] %vm4912, %v4868
    %5044 = vst.msk [vmem:[%s5022 + $0xf9] sm:$0xff] %vm4912, %v4869
    %5045 = vst.msk [vmem:[%s5022 + $0x109] sm:$0xff] %vm4912, %v4870
    %5046 = vst.msk [vmem:[%s5022 + $0x111] sm:$0xff] %vm4912, %v4871
    %5047 = vst.msk [vmem:[%s5022 + $0x121] sm:$0xff] %vm4912, %v4872
    %5048 = vst.msk [vmem:[%s5022 + $0x129] sm:$0xff] %vm4912, %v4873
    %5049 = vst.msk [vmem:[%s5022 + $0x139] sm:$0xff] %vm4912, %v4874
    %5050 = vst.msk [vmem:[%s5022 + $0x141] sm:$0xff] %vm4912, %v4875
    %5051 = vst.msk [vmem:[%s5022 + $0x151] sm:$0xff] %vm4912, %v4876
    %5052 = vst.msk [vmem:[%s5022 + $0x159] sm:$0xff] %vm4912, %v4877
    %5053 = vst.msk [vmem:[%s5022 + $0x169] sm:$0xff] %vm4912, %v4878
    %5054 = vst.msk [vmem:[%s5022 + $0x171] sm:$0xff] %vm4912, %v4879
    %5055 = vst.msk [vmem:[%s5022 + $0x1b1] sm:$0xff] %vm4912, %v4880
    %5056 = vst.msk [vmem:[%s5022 + $0x1b9] sm:$0xff] %vm4912, %v4881
    %5057 = vst.msk [vmem:[%s5022 + $0x1c9] sm:$0xff] %vm4912, %v4882
    %5058 = vst.msk [vmem:[%s5022 + $0x1d1] sm:$0xff] %vm4912, %v4883
    %5059 = vst.msk [vmem:[%s5022 + $0x1e1] sm:$0xff] %vm4912, %v4884
    %5060 = vst.msk [vmem:[%s5022 + $0x1e9] sm:$0xff] %vm4912, %v4885
    %5061 = vst.msk [vmem:[%s5022 + $0x1f9] sm:$0xff] %vm4912, %v4886
    %5062 = vst.msk [vmem:[%s5022 + $0x201] sm:$0xff] %vm4912, %v4887
    %5063 = vst.msk [vmem:[%s5022 + $0x211] sm:$0xff] %vm4912, %v4888
    %5064 = vst.msk [vmem:[%s5022 + $0x219] sm:$0xff] %vm4912, %v4889
    %5065 = vst.msk [vmem:[%s5022 + $0x229] sm:$0xff] %vm4912, %v4890
    %5066 = vst.msk [vmem:[%s5022 + $0x231] sm:$0xff] %vm4912, %v4891
    %5067 = vst.msk [vmem:[%s5022 + $0x241] sm:$0xff] %vm4912, %v4892
    %5068 = vst.msk [vmem:[%s5022 + $0x249] sm:$0xff] %vm4912, %v4893
    %5069 = vst.msk [vmem:[%s5022 + $0x259] sm:$0xff] %vm4912, %v4894
    %5070 = vst.msk [vmem:[%s5022 + $0x261] sm:$0xff] %vm4912, %v4895
    %5071 = vst.msk [vmem:[%s5022 + $0x271] sm:$0xff] %vm4912, %v4896
    %5072 = vst.msk [vmem:[%s5022 + $0x279] sm:$0xff] %vm4912, %v4897
    %5073 = vst.msk [vmem:[%s5022 + $0x289] sm:$0xff] %vm4912, %v4898
    %5074 = vst.msk [vmem:[%s5022 + $0x291] sm:$0xff] %vm4912, %v4899
    %5075 = vst.msk [vmem:[%s5022 + $0x2a1] sm:$0xff] %vm4912, %v4900
    %5076 = vst.msk [vmem:[%s5022 + $0x2a9] sm:$0xff] %vm4912, %v4901
    %5077 = vst.msk [vmem:[%s5022 + $0x2b9] sm:$0xff] %vm4912, %v4902
    %5078 = vst.msk [vmem:[%s5022 + $0x2c1] sm:$0xff] %vm4912, %v4903
    %5079 = vst.msk [vmem:[%s5022 + $0x2d1] sm:$0xff] %vm4912, %v4904
    %5080 = vst.msk [vmem:[%s5022 + $0x2d9] sm:$0xff] %vm4912, %v4905
    %5081 = vst.msk [vmem:[%s5022 + $0x2e9] sm:$0xff] %vm4912, %v4906
    %5082 = vst.msk [vmem:[%s5022 + $0x2f1] sm:$0xff] %vm4912, %v4907
    %5083 = vst.msk [vmem:[%s5022 + $0x301] sm:$0xff] %vm4912, %v4908
    %5084 = vst.msk [vmem:[%s5022 + $0x309] sm:$0xff] %vm4912, %v4909
    %5085 = vst.msk [vmem:[%s5022 + $0x319] sm:$0xff] %vm4912, %v4910
    %5086 = vst.msk [vmem:[%s5022 + $0x321] sm:$0xff] %vm4912, %v4911
    %v5087 = vld [vmem:[#allocation2] sm:$0xff]
    %v5088 = vld [vmem:[#allocation2 + $0x8] sm:$0xff]
    %v5089 = vld [vmem:[#allocation2 + $0x18] sm:$0xff]
    %v5090 = vld [vmem:[#allocation2 + $0x20] sm:$0xff]
    %v5091 = vld [vmem:[#allocation2 + $0x30] sm:$0xff]
    %v5092 = vld [vmem:[#allocation2 + $0x38] sm:$0xff]
    %v5093 = vld [vmem:[#allocation2 + $0x48] sm:$0xff]
    %v5094 = vld [vmem:[#allocation2 + $0x50] sm:$0xff]
    %v5095 = vld [vmem:[#allocation2 + $0x60] sm:$0xff]
    %v5096 = vld [vmem:[#allocation2 + $0x68] sm:$0xff]
    %v5097 = vld [vmem:[#allocation2 + $0x78] sm:$0xff]
    %v5098 = vld [vmem:[#allocation2 + $0x80] sm:$0xff]
    %v5099 = vld [vmem:[#allocation2 + $0x90] sm:$0xff]
    %v5100 = vld [vmem:[#allocation2 + $0x98] sm:$0xff]
    %v5101 = vld [vmem:[#allocation2 + $0xa8] sm:$0xff]
    %v5102 = vld [vmem:[#allocation2 + $0xb0] sm:$0xff]
    %v5103 = vld [vmem:[#allocation2 + $0xc0] sm:$0xff]
    %v5104 = vld [vmem:[#allocation2 + $0xc8] sm:$0xff]
    %v5105 = vld [vmem:[#allocation2 + $0xd8] sm:$0xff]
    %v5106 = vld [vmem:[#allocation2 + $0xe0] sm:$0xff]
    %v5107 = vld [vmem:[#allocation2 + $0xf0] sm:$0xff]
    %v5108 = vld [vmem:[#allocation2 + $0xf8] sm:$0xff]
    %v5109 = vld [vmem:[#allocation2 + $0x108] sm:$0xff]
    %v5110 = vld [vmem:[#allocation2 + $0x110] sm:$0xff]
    %v5111 = vld [vmem:[#allocation2 + $0x120] sm:$0xff]
    %v5112 = vld [vmem:[#allocation2 + $0x128] sm:$0xff]
    %v5113 = vld [vmem:[#allocation2 + $0x138] sm:$0xff]
    %v5114 = vld [vmem:[#allocation2 + $0x140] sm:$0xff]
    %v5115 = vld [vmem:[#allocation2 + $0x150] sm:$0xff]
    %v5116 = vld [vmem:[#allocation2 + $0x158] sm:$0xff]
    %v5117 = vld [vmem:[#allocation2 + $0x168] sm:$0xff]
    %v5118 = vld [vmem:[#allocation2 + $0x170] sm:$0xff]
    %v5119 = vld [vmem:[#allocation2 + $0x1b0] sm:$0xff]
    %v5120 = vld [vmem:[#allocation2 + $0x1b8] sm:$0xff]
    %v5121 = vld [vmem:[#allocation2 + $0x1c8] sm:$0xff]
    %v5122 = vld [vmem:[#allocation2 + $0x1d0] sm:$0xff]
    %v5123 = vld [vmem:[#allocation2 + $0x1e0] sm:$0xff]
    %v5124 = vld [vmem:[#allocation2 + $0x1e8] sm:$0xff]
    %v5125 = vld [vmem:[#allocation2 + $0x1f8] sm:$0xff]
    %v5126 = vld [vmem:[#allocation2 + $0x200] sm:$0xff]
    %v5127 = vld [vmem:[#allocation2 + $0x210] sm:$0xff]
    %v5128 = vld [vmem:[#allocation2 + $0x218] sm:$0xff]
    %v5129 = vld [vmem:[#allocation2 + $0x228] sm:$0xff]
    %v5130 = vld [vmem:[#allocation2 + $0x230] sm:$0xff]
    %v5131 = vld [vmem:[#allocation2 + $0x240] sm:$0xff]
    %v5132 = vld [vmem:[#allocation2 + $0x248] sm:$0xff]
    %v5133 = vld [vmem:[#allocation2 + $0x258] sm:$0xff]
    %v5134 = vld [vmem:[#allocation2 + $0x260] sm:$0xff]
    %v5135 = vld [vmem:[#allocation2 + $0x270] sm:$0xff]
    %v5136 = vld [vmem:[#allocation2 + $0x278] sm:$0xff]
    %v5137 = vld [vmem:[#allocation2 + $0x288] sm:$0xff]
    %v5138 = vld [vmem:[#allocation2 + $0x290] sm:$0xff]
    %v5139 = vld [vmem:[#allocation2 + $0x2a0] sm:$0xff]
    %v5140 = vld [vmem:[#allocation2 + $0x2a8] sm:$0xff]
    %v5141 = vld [vmem:[#allocation2 + $0x2b8] sm:$0xff]
    %v5142 = vld [vmem:[#allocation2 + $0x2c0] sm:$0xff]
    %v5143 = vld [vmem:[#allocation2 + $0x2d0] sm:$0xff]
    %v5144 = vld [vmem:[#allocation2 + $0x2d8] sm:$0xff]
    %v5145 = vld [vmem:[#allocation2 + $0x2e8] sm:$0xff]
    %v5146 = vld [vmem:[#allocation2 + $0x2f0] sm:$0xff]
    %v5147 = vld [vmem:[#allocation2 + $0x300] sm:$0xff]
    %v5148 = vld [vmem:[#allocation2 + $0x308] sm:$0xff]
    %v5149 = vld [vmem:[#allocation2 + $0x318] sm:$0xff]
    %v5150 = vld [vmem:[#allocation2 + $0x320] sm:$0xff]
    %v5151 = vld [vmem:[%s3] sm:$0xff]
    %v5152 = vld [vmem:[%s3 + $0x8] sm:$0xff]
    %v5153 = vld [vmem:[%s3 + $0x10] sm:$0xff]
    %v5154 = vld [vmem:[%s3 + $0x18] sm:$0xff]
    %v5155 = vld [vmem:[%s3 + $0x20] sm:$0xff]
    %v5156 = vld [vmem:[%s3 + $0x28] sm:$0xff]
    %v5157 = vld [vmem:[%s3 + $0x30] sm:$0xff]
    %v5158 = vld [vmem:[%s3 + $0x38] sm:$0xff]
    %v5159 = vld [vmem:[#allocation2 + $0x1] sm:$0xff]
    %v5160 = vld [vmem:[#allocation2 + $0x9] sm:$0xff]
    %v5161 = vld [vmem:[#allocation2 + $0x19] sm:$0xff]
    %v5162 = vld [vmem:[#allocation2 + $0x21] sm:$0xff]
    %v5163 = vld [vmem:[#allocation2 + $0x31] sm:$0xff]
    %v5164 = vld [vmem:[#allocation2 + $0x39] sm:$0xff]
    %v5165 = vld [vmem:[#allocation2 + $0x49] sm:$0xff]
    %v5166 = vld [vmem:[#allocation2 + $0x51] sm:$0xff]
    %v5167 = vld [vmem:[#allocation2 + $0x61] sm:$0xff]
    %v5168 = vld [vmem:[#allocation2 + $0x69] sm:$0xff]
    %v5169 = vld [vmem:[#allocation2 + $0x79] sm:$0xff]
    %v5170 = vld [vmem:[#allocation2 + $0x81] sm:$0xff]
    %v5171 = vld [vmem:[#allocation2 + $0x91] sm:$0xff]
    %v5172 = vld [vmem:[#allocation2 + $0x99] sm:$0xff]
    %v5173 = vld [vmem:[#allocation2 + $0xa9] sm:$0xff]
    %v5174 = vld [vmem:[#allocation2 + $0xb1] sm:$0xff]
    %v5175 = vld [vmem:[#allocation2 + $0xc1] sm:$0xff]
    %v5176 = vld [vmem:[#allocation2 + $0xc9] sm:$0xff]
    %v5177 = vld [vmem:[#allocation2 + $0xd9] sm:$0xff]
    %v5178 = vld [vmem:[#allocation2 + $0xe1] sm:$0xff]
    %v5179 = vld [vmem:[#allocation2 + $0xf1] sm:$0xff]
    %v5180 = vld [vmem:[#allocation2 + $0xf9] sm:$0xff]
    %v5181 = vld [vmem:[#allocation2 + $0x109] sm:$0xff]
    %v5182 = vld [vmem:[#allocation2 + $0x111] sm:$0xff]
    %v5183 = vld [vmem:[#allocation2 + $0x121] sm:$0xff]
    %v5184 = vld [vmem:[#allocation2 + $0x129] sm:$0xff]
    %v5185 = vld [vmem:[#allocation2 + $0x139] sm:$0xff]
    %v5186 = vld [vmem:[#allocation2 + $0x141] sm:$0xff]
    %v5187 = vld [vmem:[#allocation2 + $0x151] sm:$0xff]
    %v5188 = vld [vmem:[#allocation2 + $0x159] sm:$0xff]
    %v5189 = vld [vmem:[#allocation2 + $0x169] sm:$0xff]
    %v5190 = vld [vmem:[#allocation2 + $0x171] sm:$0xff]
    %v5191 = vld [vmem:[#allocation2 + $0x1b1] sm:$0xff]
    %v5192 = vld [vmem:[#allocation2 + $0x1b9] sm:$0xff]
    %v5193 = vld [vmem:[#allocation2 + $0x1c9] sm:$0xff]
    %v5194 = vld [vmem:[#allocation2 + $0x1d1] sm:$0xff]
    %v5195 = vld [vmem:[#allocation2 + $0x1e1] sm:$0xff]
    %v5196 = vld [vmem:[#allocation2 + $0x1e9] sm:$0xff]
    %v5197 = vld [vmem:[#allocation2 + $0x1f9] sm:$0xff]
    %v5198 = vld [vmem:[#allocation2 + $0x201] sm:$0xff]
    %v5199 = vld [vmem:[#allocation2 + $0x211] sm:$0xff]
    %v5200 = vld [vmem:[#allocation2 + $0x219] sm:$0xff]
    %v5201 = vld [vmem:[#allocation2 + $0x229] sm:$0xff]
    %v5202 = vld [vmem:[#allocation2 + $0x231] sm:$0xff]
    %v5203 = vld [vmem:[#allocation2 + $0x241] sm:$0xff]
    %v5204 = vld [vmem:[#allocation2 + $0x249] sm:$0xff]
    %v5205 = vld [vmem:[#allocation2 + $0x259] sm:$0xff]
    %v5206 = vld [vmem:[#allocation2 + $0x261] sm:$0xff]
    %v5207 = vld [vmem:[#allocation2 + $0x271] sm:$0xff]
    %v5208 = vld [vmem:[#allocation2 + $0x279] sm:$0xff]
    %v5209 = vld [vmem:[#allocation2 + $0x289] sm:$0xff]
    %v5210 = vld [vmem:[#allocation2 + $0x291] sm:$0xff]
    %v5211 = vld [vmem:[#allocation2 + $0x2a1] sm:$0xff]
    %v5212 = vld [vmem:[#allocation2 + $0x2a9] sm:$0xff]
    %v5213 = vld [vmem:[#allocation2 + $0x2b9] sm:$0xff]
    %v5214 = vld [vmem:[#allocation2 + $0x2c1] sm:$0xff]
    %v5215 = vld [vmem:[#allocation2 + $0x2d1] sm:$0xff]
    %v5216 = vld [vmem:[#allocation2 + $0x2d9] sm:$0xff]
    %v5217 = vld [vmem:[#allocation2 + $0x2e9] sm:$0xff]
    %v5218 = vld [vmem:[#allocation2 + $0x2f1] sm:$0xff]
    %v5219 = vld [vmem:[#allocation2 + $0x301] sm:$0xff]
    %v5220 = vld [vmem:[#allocation2 + $0x309] sm:$0xff]
    %v5221 = vld [vmem:[#allocation2 + $0x319] sm:$0xff]
    %v5222 = vld [vmem:[#allocation2 + $0x321] sm:$0xff]
    %s5223 = scalar_lea.vmem %s3, 64
    %v5224 = vld [vmem:[%s5223] sm:$0xff]
    %v5225 = vld [vmem:[%s5223 + $0x8] sm:$0xff]
    %v5226 = vld [vmem:[%s5223 + $0x10] sm:$0xff]
    %v5227 = vld [vmem:[%s5223 + $0x18] sm:$0xff]
    %v5228 = vld [vmem:[%s5223 + $0x20] sm:$0xff]
    %v5229 = vld [vmem:[%s5223 + $0x28] sm:$0xff]
    %v5230 = vld [vmem:[%s5223 + $0x30] sm:$0xff]
    %v5231 = vld [vmem:[%s5223 + $0x38] sm:$0xff]
    %v5233 = vsel %vm4912, %v5159, 0
    %v5236 = vsel %vm4912, %v5160, 0
    %v5239 = vsel %vm4912, %v5161, 0
    %v5242 = vsel %vm4912, %v5162, 0
    %v5245 = vsel %vm4912, %v5163, 0
    %v5248 = vsel %vm4912, %v5164, 0
    %v5251 = vsel %vm4912, %v5165, 0
    %v5254 = vsel %vm4912, %v5166, 0
    %v5257 = vsel %vm4912, %v5167, 0
    %v5260 = vsel %vm4912, %v5168, 0
    %v5263 = vsel %vm4912, %v5169, 0
    %v5266 = vsel %vm4912, %v5170, 0
    %v5269 = vsel %vm4912, %v5171, 0
    %v5272 = vsel %vm4912, %v5172, 0
    %v5275 = vsel %vm4912, %v5173, 0
    %v5278 = vsel %vm4912, %v5174, 0
    %v5281 = vsel %vm4912, %v5175, 0
    %v5284 = vsel %vm4912, %v5176, 0
    %v5287 = vsel %vm4912, %v5177, 0
    %v5290 = vsel %vm4912, %v5178, 0
    %v5293 = vsel %vm4912, %v5179, 0
    %v5296 = vsel %vm4912, %v5180, 0
    %v5299 = vsel %vm4912, %v5181, 0
    %v5302 = vsel %vm4912, %v5182, 0
    %v5305 = vsel %vm4912, %v5183, 0
    %v5308 = vsel %vm4912, %v5184, 0
    %v5311 = vsel %vm4912, %v5185, 0
    %v5314 = vsel %vm4912, %v5186, 0
    %v5317 = vsel %vm4912, %v5187, 0
    %v5320 = vsel %vm4912, %v5188, 0
    %v5323 = vsel %vm4912, %v5189, 0
    %v5326 = vsel %vm4912, %v5190, 0
    %v5329 = vsel %vm4912, %v5191, 0
    %v5332 = vsel %vm4912, %v5192, 0
    %v5335 = vsel %vm4912, %v5193, 0
    %v5338 = vsel %vm4912, %v5194, 0
    %v5341 = vsel %vm4912, %v5195, 0
    %v5344 = vsel %vm4912, %v5196, 0
    %v5347 = vsel %vm4912, %v5197, 0
    %v5350 = vsel %vm4912, %v5198, 0
    %v5353 = vsel %vm4912, %v5199, 0
    %v5356 = vsel %vm4912, %v5200, 0
    %v5359 = vsel %vm4912, %v5201, 0
    %v5362 = vsel %vm4912, %v5202, 0
    %v5365 = vsel %vm4912, %v5203, 0
    %v5368 = vsel %vm4912, %v5204, 0
    %v5371 = vsel %vm4912, %v5205, 0
    %v5374 = vsel %vm4912, %v5206, 0
    %v5377 = vsel %vm4912, %v5207, 0
    %v5380 = vsel %vm4912, %v5208, 0
    %v5383 = vsel %vm4912, %v5209, 0
    %v5386 = vsel %vm4912, %v5210, 0
    %v5389 = vsel %vm4912, %v5211, 0
    %v5392 = vsel %vm4912, %v5212, 0
    %v5395 = vsel %vm4912, %v5213, 0
    %v5398 = vsel %vm4912, %v5214, 0
    %v5401 = vsel %vm4912, %v5215, 0
    %v5404 = vsel %vm4912, %v5216, 0
    %v5407 = vsel %vm4912, %v5217, 0
    %v5410 = vsel %vm4912, %v5218, 0
    %v5413 = vsel %vm4912, %v5219, 0
    %v5416 = vsel %vm4912, %v5220, 0
    %v5419 = vsel %vm4912, %v5221, 0
    %v5422 = vsel %vm4912, %v5222, 0
    %5424 = vmatpush.msra.mxu0 0.0
    %5425 = vmatpush.msra.mxu0 0.0
    %5426 = vmatpush.msra.mxu0 0.0
    %5427 = vmatpush.msra.mxu0 0.0
    %5428 = vmatpush.msra.mxu0 0.0
    %5429 = vmatpush.msra.mxu0 0.0
    %5430 = vmatpush.msra.mxu0 0.0
    %5431 = vmatpush.msra.mxu0 0.0
    %5432 = vmatpush.msra.mxu0 %v5231
    %5433 = vmatpush.msra.mxu0 %v5230
    %5434 = vmatpush.msra.mxu0 %v5229
    %5435 = vmatpush.msra.mxu0 %v5228
    %5436 = vmatpush.msra.mxu0 %v5227
    %5437 = vmatpush.msra.mxu0 %v5226
    %5438 = vmatpush.msra.mxu0 %v5225
    %5439 = vmatpush.msra.mxu0 %v5224
    %5440 = vmatmul.f32.gmra.mxu0 %v5233
    %v5441 = vpop.f32.mrf.mxu0
    %v5442 = vadd.f32 0.0, %v5441
    %5443 = vmatmul.f32.gmra.mxu0 %v5236
    %v5444 = vpop.f32.mrf.mxu0
    %v5445 = vadd.f32 0.0, %v5444
    %5446 = vmatmul.f32.gmra.mxu0 %v5239
    %v5447 = vpop.f32.mrf.mxu0
    %v5448 = vadd.f32 0.0, %v5447
    %5449 = vmatmul.f32.gmra.mxu0 %v5242
    %v5450 = vpop.f32.mrf.mxu0
    %v5451 = vadd.f32 0.0, %v5450
    %5452 = vmatmul.f32.gmra.mxu0 %v5245
    %v5453 = vpop.f32.mrf.mxu0
    %v5454 = vadd.f32 0.0, %v5453
    %5455 = vmatmul.f32.gmra.mxu0 %v5248
    %v5456 = vpop.f32.mrf.mxu0
    %v5457 = vadd.f32 0.0, %v5456
    %5458 = vmatmul.f32.gmra.mxu0 %v5251
    %v5459 = vpop.f32.mrf.mxu0
    %v5460 = vadd.f32 0.0, %v5459
    %5461 = vmatmul.f32.gmra.mxu0 %v5254
    %v5462 = vpop.f32.mrf.mxu0
    %v5463 = vadd.f32 0.0, %v5462
    %5464 = vmatmul.f32.gmra.mxu0 %v5257
    %v5465 = vpop.f32.mrf.mxu0
    %v5466 = vadd.f32 0.0, %v5465
    %5467 = vmatmul.f32.gmra.mxu0 %v5260
    %v5468 = vpop.f32.mrf.mxu0
    %v5469 = vadd.f32 0.0, %v5468
    %5470 = vmatmul.f32.gmra.mxu0 %v5263
    %v5471 = vpop.f32.mrf.mxu0
    %v5472 = vadd.f32 0.0, %v5471
    %5473 = vmatmul.f32.gmra.mxu0 %v5266
    %v5474 = vpop.f32.mrf.mxu0
    %v5475 = vadd.f32 0.0, %v5474
    %5476 = vmatmul.f32.gmra.mxu0 %v5269
    %v5477 = vpop.f32.mrf.mxu0
    %v5478 = vadd.f32 0.0, %v5477
    %5479 = vmatmul.f32.gmra.mxu0 %v5272
    %v5480 = vpop.f32.mrf.mxu0
    %v5481 = vadd.f32 0.0, %v5480
    %5482 = vmatmul.f32.gmra.mxu0 %v5275
    %v5483 = vpop.f32.mrf.mxu0
    %v5484 = vadd.f32 0.0, %v5483
    %5485 = vmatmul.f32.gmra.mxu0 %v5278
    %v5486 = vpop.f32.mrf.mxu0
    %v5487 = vadd.f32 0.0, %v5486
    %5488 = vmatmul.f32.gmra.mxu0 %v5281
    %v5489 = vpop.f32.mrf.mxu0
    %v5490 = vadd.f32 0.0, %v5489
    %5491 = vmatmul.f32.gmra.mxu0 %v5284
    %v5492 = vpop.f32.mrf.mxu0
    %v5493 = vadd.f32 0.0, %v5492
    %5494 = vmatmul.f32.gmra.mxu0 %v5287
    %v5495 = vpop.f32.mrf.mxu0
    %v5496 = vadd.f32 0.0, %v5495
    %5497 = vmatmul.f32.gmra.mxu0 %v5290
    %v5498 = vpop.f32.mrf.mxu0
    %v5499 = vadd.f32 0.0, %v5498
    %5500 = vmatmul.f32.gmra.mxu0 %v5293
    %v5501 = vpop.f32.mrf.mxu0
    %v5502 = vadd.f32 0.0, %v5501
    %5503 = vmatmul.f32.gmra.mxu0 %v5296
    %v5504 = vpop.f32.mrf.mxu0
    %v5505 = vadd.f32 0.0, %v5504
    %5506 = vmatmul.f32.gmra.mxu0 %v5299
    %v5507 = vpop.f32.mrf.mxu0
    %v5508 = vadd.f32 0.0, %v5507
    %5509 = vmatmul.f32.gmra.mxu0 %v5302
    %v5510 = vpop.f32.mrf.mxu0
    %v5511 = vadd.f32 0.0, %v5510
    %5512 = vmatmul.f32.gmra.mxu0 %v5305
    %v5513 = vpop.f32.mrf.mxu0
    %v5514 = vadd.f32 0.0, %v5513
    %5515 = vmatmul.f32.gmra.mxu0 %v5308
    %v5516 = vpop.f32.mrf.mxu0
    %v5517 = vadd.f32 0.0, %v5516
    %5518 = vmatmul.f32.gmra.mxu0 %v5311
    %v5519 = vpop.f32.mrf.mxu0
    %v5520 = vadd.f32 0.0, %v5519
    %5521 = vmatmul.f32.gmra.mxu0 %v5314
    %v5522 = vpop.f32.mrf.mxu0
    %v5523 = vadd.f32 0.0, %v5522
    %5524 = vmatmul.f32.gmra.mxu0 %v5317
    %v5525 = vpop.f32.mrf.mxu0
    %v5526 = vadd.f32 0.0, %v5525
    %5527 = vmatmul.f32.gmra.mxu0 %v5320
    %v5528 = vpop.f32.mrf.mxu0
    %v5529 = vadd.f32 0.0, %v5528
    %5530 = vmatmul.f32.gmra.mxu0 %v5323
    %v5531 = vpop.f32.mrf.mxu0
    %v5532 = vadd.f32 0.0, %v5531
    %5533 = vmatmul.f32.gmra.mxu0 %v5326
    %v5534 = vpop.f32.mrf.mxu0
    %v5535 = vadd.f32 0.0, %v5534
    %5536 = vmatmul.f32.gmra.mxu0 %v5329
    %v5537 = vpop.f32.mrf.mxu0
    %v5538 = vadd.f32 0.0, %v5537
    %5539 = vmatmul.f32.gmra.mxu0 %v5332
    %v5540 = vpop.f32.mrf.mxu0
    %v5541 = vadd.f32 0.0, %v5540
    %5542 = vmatmul.f32.gmra.mxu0 %v5335
    %v5543 = vpop.f32.mrf.mxu0
    %v5544 = vadd.f32 0.0, %v5543
    %5545 = vmatmul.f32.gmra.mxu0 %v5338
    %v5546 = vpop.f32.mrf.mxu0
    %v5547 = vadd.f32 0.0, %v5546
    %5548 = vmatmul.f32.gmra.mxu0 %v5341
    %v5549 = vpop.f32.mrf.mxu0
    %v5550 = vadd.f32 0.0, %v5549
    %5551 = vmatmul.f32.gmra.mxu0 %v5344
    %v5552 = vpop.f32.mrf.mxu0
    %v5553 = vadd.f32 0.0, %v5552
    %5554 = vmatmul.f32.gmra.mxu0 %v5347
    %v5555 = vpop.f32.mrf.mxu0
    %v5556 = vadd.f32 0.0, %v5555
    %5557 = vmatmul.f32.gmra.mxu0 %v5350
    %v5558 = vpop.f32.mrf.mxu0
    %v5559 = vadd.f32 0.0, %v5558
    %5560 = vmatmul.f32.gmra.mxu0 %v5353
    %v5561 = vpop.f32.mrf.mxu0
    %v5562 = vadd.f32 0.0, %v5561
    %5563 = vmatmul.f32.gmra.mxu0 %v5356
    %v5564 = vpop.f32.mrf.mxu0
    %v5565 = vadd.f32 0.0, %v5564
    %5566 = vmatmul.f32.gmra.mxu0 %v5359
    %v5567 = vpop.f32.mrf.mxu0
    %v5568 = vadd.f32 0.0, %v5567
    %5569 = vmatmul.f32.gmra.mxu0 %v5362
    %v5570 = vpop.f32.mrf.mxu0
    %v5571 = vadd.f32 0.0, %v5570
    %5572 = vmatmul.f32.gmra.mxu0 %v5365
    %v5573 = vpop.f32.mrf.mxu0
    %v5574 = vadd.f32 0.0, %v5573
    %5575 = vmatmul.f32.gmra.mxu0 %v5368
    %v5576 = vpop.f32.mrf.mxu0
    %v5577 = vadd.f32 0.0, %v5576
    %5578 = vmatmul.f32.gmra.mxu0 %v5371
    %v5579 = vpop.f32.mrf.mxu0
    %v5580 = vadd.f32 0.0, %v5579
    %5581 = vmatmul.f32.gmra.mxu0 %v5374
    %v5582 = vpop.f32.mrf.mxu0
    %v5583 = vadd.f32 0.0, %v5582
    %5584 = vmatmul.f32.gmra.mxu0 %v5377
    %v5585 = vpop.f32.mrf.mxu0
    %v5586 = vadd.f32 0.0, %v5585
    %5587 = vmatmul.f32.gmra.mxu0 %v5380
    %v5588 = vpop.f32.mrf.mxu0
    %v5589 = vadd.f32 0.0, %v5588
    %5590 = vmatmul.f32.gmra.mxu0 %v5383
    %v5591 = vpop.f32.mrf.mxu0
    %v5592 = vadd.f32 0.0, %v5591
    %5593 = vmatmul.f32.gmra.mxu0 %v5386
    %v5594 = vpop.f32.mrf.mxu0
    %v5595 = vadd.f32 0.0, %v5594
    %5596 = vmatmul.f32.gmra.mxu0 %v5389
    %v5597 = vpop.f32.mrf.mxu0
    %v5598 = vadd.f32 0.0, %v5597
    %5599 = vmatmul.f32.gmra.mxu0 %v5392
    %v5600 = vpop.f32.mrf.mxu0
    %v5601 = vadd.f32 0.0, %v5600
    %5602 = vmatmul.f32.gmra.mxu0 %v5395
    %v5603 = vpop.f32.mrf.mxu0
    %v5604 = vadd.f32 0.0, %v5603
    %5605 = vmatmul.f32.gmra.mxu0 %v5398
    %v5606 = vpop.f32.mrf.mxu0
    %v5607 = vadd.f32 0.0, %v5606
    %5608 = vmatmul.f32.gmra.mxu0 %v5401
    %v5609 = vpop.f32.mrf.mxu0
    %v5610 = vadd.f32 0.0, %v5609
    %5611 = vmatmul.f32.gmra.mxu0 %v5404
    %v5612 = vpop.f32.mrf.mxu0
    %v5613 = vadd.f32 0.0, %v5612
    %5614 = vmatmul.f32.gmra.mxu0 %v5407
    %v5615 = vpop.f32.mrf.mxu0
    %v5616 = vadd.f32 0.0, %v5615
    %5617 = vmatmul.f32.gmra.mxu0 %v5410
    %v5618 = vpop.f32.mrf.mxu0
    %v5619 = vadd.f32 0.0, %v5618
    %5620 = vmatmul.f32.gmra.mxu0 %v5413
    %v5621 = vpop.f32.mrf.mxu0
    %v5622 = vadd.f32 0.0, %v5621
    %5623 = vmatmul.f32.gmra.mxu0 %v5416
    %v5624 = vpop.f32.mrf.mxu0
    %v5625 = vadd.f32 0.0, %v5624
    %5626 = vmatmul.f32.gmra.mxu0 %v5419
    %v5627 = vpop.f32.mrf.mxu0
    %v5628 = vadd.f32 0.0, %v5627
    %5629 = vmatmul.f32.gmra.mxu0 %v5422
    %v5630 = vpop.f32.mrf.mxu0
    %v5631 = vadd.f32 0.0, %v5630
    %5632 = vdwg.mxu0
    %v5634 = vsel %vm4912, %v5087, 0
    %v5637 = vsel %vm4912, %v5088, 0
    %v5640 = vsel %vm4912, %v5089, 0
    %v5643 = vsel %vm4912, %v5090, 0
    %v5646 = vsel %vm4912, %v5091, 0
    %v5649 = vsel %vm4912, %v5092, 0
    %v5652 = vsel %vm4912, %v5093, 0
    %v5655 = vsel %vm4912, %v5094, 0
    %v5658 = vsel %vm4912, %v5095, 0
    %v5661 = vsel %vm4912, %v5096, 0
    %v5664 = vsel %vm4912, %v5097, 0
    %v5667 = vsel %vm4912, %v5098, 0
    %v5670 = vsel %vm4912, %v5099, 0
    %v5673 = vsel %vm4912, %v5100, 0
    %v5676 = vsel %vm4912, %v5101, 0
    %v5679 = vsel %vm4912, %v5102, 0
    %v5682 = vsel %vm4912, %v5103, 0
    %v5685 = vsel %vm4912, %v5104, 0
    %v5688 = vsel %vm4912, %v5105, 0
    %v5691 = vsel %vm4912, %v5106, 0
    %v5694 = vsel %vm4912, %v5107, 0
    %v5697 = vsel %vm4912, %v5108, 0
    %v5700 = vsel %vm4912, %v5109, 0
    %v5703 = vsel %vm4912, %v5110, 0
    %v5706 = vsel %vm4912, %v5111, 0
    %v5709 = vsel %vm4912, %v5112, 0
    %v5712 = vsel %vm4912, %v5113, 0
    %v5715 = vsel %vm4912, %v5114, 0
    %v5718 = vsel %vm4912, %v5115, 0
    %v5721 = vsel %vm4912, %v5116, 0
    %v5724 = vsel %vm4912, %v5117, 0
    %v5727 = vsel %vm4912, %v5118, 0
    %v5730 = vsel %vm4912, %v5119, 0
    %v5733 = vsel %vm4912, %v5120, 0
    %v5736 = vsel %vm4912, %v5121, 0
    %v5739 = vsel %vm4912, %v5122, 0
    %v5742 = vsel %vm4912, %v5123, 0
    %v5745 = vsel %vm4912, %v5124, 0
    %v5748 = vsel %vm4912, %v5125, 0
    %v5751 = vsel %vm4912, %v5126, 0
    %v5754 = vsel %vm4912, %v5127, 0
    %v5757 = vsel %vm4912, %v5128, 0
    %v5760 = vsel %vm4912, %v5129, 0
    %v5763 = vsel %vm4912, %v5130, 0
    %v5766 = vsel %vm4912, %v5131, 0
    %v5769 = vsel %vm4912, %v5132, 0
    %v5772 = vsel %vm4912, %v5133, 0
    %v5775 = vsel %vm4912, %v5134, 0
    %v5778 = vsel %vm4912, %v5135, 0
    %v5781 = vsel %vm4912, %v5136, 0
    %v5784 = vsel %vm4912, %v5137, 0
    %v5787 = vsel %vm4912, %v5138, 0
    %v5790 = vsel %vm4912, %v5139, 0
    %v5793 = vsel %vm4912, %v5140, 0
    %v5796 = vsel %vm4912, %v5141, 0
    %v5799 = vsel %vm4912, %v5142, 0
    %v5802 = vsel %vm4912, %v5143, 0
    %v5805 = vsel %vm4912, %v5144, 0
    %v5808 = vsel %vm4912, %v5145, 0
    %v5811 = vsel %vm4912, %v5146, 0
    %v5814 = vsel %vm4912, %v5147, 0
    %v5817 = vsel %vm4912, %v5148, 0
    %v5820 = vsel %vm4912, %v5149, 0
    %v5823 = vsel %vm4912, %v5150, 0
    %5825 = vmatpush.msra.mxu0 0.0
    %5826 = vmatpush.msra.mxu0 0.0
    %5827 = vmatpush.msra.mxu0 0.0
    %5828 = vmatpush.msra.mxu0 0.0
    %5829 = vmatpush.msra.mxu0 0.0
    %5830 = vmatpush.msra.mxu0 0.0
    %5831 = vmatpush.msra.mxu0 0.0
    %5832 = vmatpush.msra.mxu0 0.0
    %5833 = vmatpush.msra.mxu0 %v5158
    %5834 = vmatpush.msra.mxu0 %v5157
    %5835 = vmatpush.msra.mxu0 %v5156
    %5836 = vmatpush.msra.mxu0 %v5155
    %5837 = vmatpush.msra.mxu0 %v5154
    %5838 = vmatpush.msra.mxu0 %v5153
    %5839 = vmatpush.msra.mxu0 %v5152
    %5840 = vmatpush.msra.mxu0 %v5151
    %5841 = vmatmul.f32.gmra.mxu0 %v5634
    %v5842 = vpop.f32.mrf.mxu0
    %v5843 = vadd.f32 %v5442, %v5842
    %5844 = vmatmul.f32.gmra.mxu0 %v5637
    %v5845 = vpop.f32.mrf.mxu0
    %v5846 = vadd.f32 %v5445, %v5845
    %5847 = vmatmul.f32.gmra.mxu0 %v5640
    %v5848 = vpop.f32.mrf.mxu0
    %v5849 = vadd.f32 %v5448, %v5848
    %5850 = vmatmul.f32.gmra.mxu0 %v5643
    %v5851 = vpop.f32.mrf.mxu0
    %v5852 = vadd.f32 %v5451, %v5851
    %5853 = vmatmul.f32.gmra.mxu0 %v5646
    %v5854 = vpop.f32.mrf.mxu0
    %v5855 = vadd.f32 %v5454, %v5854
    %5856 = vmatmul.f32.gmra.mxu0 %v5649
    %v5857 = vpop.f32.mrf.mxu0
    %v5858 = vadd.f32 %v5457, %v5857
    %5859 = vmatmul.f32.gmra.mxu0 %v5652
    %v5860 = vpop.f32.mrf.mxu0
    %v5861 = vadd.f32 %v5460, %v5860
    %5862 = vmatmul.f32.gmra.mxu0 %v5655
    %v5863 = vpop.f32.mrf.mxu0
    %v5864 = vadd.f32 %v5463, %v5863
    %5865 = vmatmul.f32.gmra.mxu0 %v5658
    %v5866 = vpop.f32.mrf.mxu0
    %v5867 = vadd.f32 %v5466, %v5866
    %5868 = vmatmul.f32.gmra.mxu0 %v5661
    %v5869 = vpop.f32.mrf.mxu0
    %v5870 = vadd.f32 %v5469, %v5869
    %5871 = vmatmul.f32.gmra.mxu0 %v5664
    %v5872 = vpop.f32.mrf.mxu0
    %v5873 = vadd.f32 %v5472, %v5872
    %5874 = vmatmul.f32.gmra.mxu0 %v5667
    %v5875 = vpop.f32.mrf.mxu0
    %v5876 = vadd.f32 %v5475, %v5875
    %5877 = vmatmul.f32.gmra.mxu0 %v5670
    %v5878 = vpop.f32.mrf.mxu0
    %v5879 = vadd.f32 %v5478, %v5878
    %5880 = vmatmul.f32.gmra.mxu0 %v5673
    %v5881 = vpop.f32.mrf.mxu0
    %v5882 = vadd.f32 %v5481, %v5881
    %5883 = vmatmul.f32.gmra.mxu0 %v5676
    %v5884 = vpop.f32.mrf.mxu0
    %v5885 = vadd.f32 %v5484, %v5884
    %5886 = vmatmul.f32.gmra.mxu0 %v5679
    %v5887 = vpop.f32.mrf.mxu0
    %v5888 = vadd.f32 %v5487, %v5887
    %5889 = vmatmul.f32.gmra.mxu0 %v5682
    %v5890 = vpop.f32.mrf.mxu0
    %v5891 = vadd.f32 %v5490, %v5890
    %5892 = vmatmul.f32.gmra.mxu0 %v5685
    %v5893 = vpop.f32.mrf.mxu0
    %v5894 = vadd.f32 %v5493, %v5893
    %5895 = vmatmul.f32.gmra.mxu0 %v5688
    %v5896 = vpop.f32.mrf.mxu0
    %v5897 = vadd.f32 %v5496, %v5896
    %5898 = vmatmul.f32.gmra.mxu0 %v5691
    %v5899 = vpop.f32.mrf.mxu0
    %v5900 = vadd.f32 %v5499, %v5899
    %5901 = vmatmul.f32.gmra.mxu0 %v5694
    %v5902 = vpop.f32.mrf.mxu0
    %v5903 = vadd.f32 %v5502, %v5902
    %5904 = vmatmul.f32.gmra.mxu0 %v5697
    %v5905 = vpop.f32.mrf.mxu0
    %v5906 = vadd.f32 %v5505, %v5905
    %5907 = vmatmul.f32.gmra.mxu0 %v5700
    %v5908 = vpop.f32.mrf.mxu0
    %v5909 = vadd.f32 %v5508, %v5908
    %5910 = vmatmul.f32.gmra.mxu0 %v5703
    %v5911 = vpop.f32.mrf.mxu0
    %v5912 = vadd.f32 %v5511, %v5911
    %5913 = vmatmul.f32.gmra.mxu0 %v5706
    %v5914 = vpop.f32.mrf.mxu0
    %v5915 = vadd.f32 %v5514, %v5914
    %5916 = vmatmul.f32.gmra.mxu0 %v5709
    %v5917 = vpop.f32.mrf.mxu0
    %v5918 = vadd.f32 %v5517, %v5917
    %5919 = vmatmul.f32.gmra.mxu0 %v5712
    %v5920 = vpop.f32.mrf.mxu0
    %v5921 = vadd.f32 %v5520, %v5920
    %5922 = vmatmul.f32.gmra.mxu0 %v5715
    %v5923 = vpop.f32.mrf.mxu0
    %v5924 = vadd.f32 %v5523, %v5923
    %5925 = vmatmul.f32.gmra.mxu0 %v5718
    %v5926 = vpop.f32.mrf.mxu0
    %v5927 = vadd.f32 %v5526, %v5926
    %5928 = vmatmul.f32.gmra.mxu0 %v5721
    %v5929 = vpop.f32.mrf.mxu0
    %v5930 = vadd.f32 %v5529, %v5929
    %5931 = vmatmul.f32.gmra.mxu0 %v5724
    %v5932 = vpop.f32.mrf.mxu0
    %v5933 = vadd.f32 %v5532, %v5932
    %5934 = vmatmul.f32.gmra.mxu0 %v5727
    %v5935 = vpop.f32.mrf.mxu0
    %v5936 = vadd.f32 %v5535, %v5935
    %5937 = vmatmul.f32.gmra.mxu0 %v5730
    %v5938 = vpop.f32.mrf.mxu0
    %v5939 = vadd.f32 %v5538, %v5938
    %5940 = vmatmul.f32.gmra.mxu0 %v5733
    %v5941 = vpop.f32.mrf.mxu0
    %v5942 = vadd.f32 %v5541, %v5941
    %5943 = vmatmul.f32.gmra.mxu0 %v5736
    %v5944 = vpop.f32.mrf.mxu0
    %v5945 = vadd.f32 %v5544, %v5944
    %5946 = vmatmul.f32.gmra.mxu0 %v5739
    %v5947 = vpop.f32.mrf.mxu0
    %v5948 = vadd.f32 %v5547, %v5947
    %5949 = vmatmul.f32.gmra.mxu0 %v5742
    %v5950 = vpop.f32.mrf.mxu0
    %v5951 = vadd.f32 %v5550, %v5950
    %5952 = vmatmul.f32.gmra.mxu0 %v5745
    %v5953 = vpop.f32.mrf.mxu0
    %v5954 = vadd.f32 %v5553, %v5953
    %5955 = vmatmul.f32.gmra.mxu0 %v5748
    %v5956 = vpop.f32.mrf.mxu0
    %v5957 = vadd.f32 %v5556, %v5956
    %5958 = vmatmul.f32.gmra.mxu0 %v5751
    %v5959 = vpop.f32.mrf.mxu0
    %v5960 = vadd.f32 %v5559, %v5959
    %5961 = vmatmul.f32.gmra.mxu0 %v5754
    %v5962 = vpop.f32.mrf.mxu0
    %v5963 = vadd.f32 %v5562, %v5962
    %5964 = vmatmul.f32.gmra.mxu0 %v5757
    %v5965 = vpop.f32.mrf.mxu0
    %v5966 = vadd.f32 %v5565, %v5965
    %5967 = vmatmul.f32.gmra.mxu0 %v5760
    %v5968 = vpop.f32.mrf.mxu0
    %v5969 = vadd.f32 %v5568, %v5968
    %5970 = vmatmul.f32.gmra.mxu0 %v5763
    %v5971 = vpop.f32.mrf.mxu0
    %v5972 = vadd.f32 %v5571, %v5971
    %5973 = vmatmul.f32.gmra.mxu0 %v5766
    %v5974 = vpop.f32.mrf.mxu0
    %v5975 = vadd.f32 %v5574, %v5974
    %5976 = vmatmul.f32.gmra.mxu0 %v5769
    %v5977 = vpop.f32.mrf.mxu0
    %v5978 = vadd.f32 %v5577, %v5977
    %5979 = vmatmul.f32.gmra.mxu0 %v5772
    %v5980 = vpop.f32.mrf.mxu0
    %v5981 = vadd.f32 %v5580, %v5980
    %5982 = vmatmul.f32.gmra.mxu0 %v5775
    %v5983 = vpop.f32.mrf.mxu0
    %v5984 = vadd.f32 %v5583, %v5983
    %5985 = vmatmul.f32.gmra.mxu0 %v5778
    %v5986 = vpop.f32.mrf.mxu0
    %v5987 = vadd.f32 %v5586, %v5986
    %5988 = vmatmul.f32.gmra.mxu0 %v5781
    %v5989 = vpop.f32.mrf.mxu0
    %v5990 = vadd.f32 %v5589, %v5989
    %5991 = vmatmul.f32.gmra.mxu0 %v5784
    %v5992 = vpop.f32.mrf.mxu0
    %v5993 = vadd.f32 %v5592, %v5992
    %5994 = vmatmul.f32.gmra.mxu0 %v5787
    %v5995 = vpop.f32.mrf.mxu0
    %v5996 = vadd.f32 %v5595, %v5995
    %5997 = vmatmul.f32.gmra.mxu0 %v5790
    %v5998 = vpop.f32.mrf.mxu0
    %v5999 = vadd.f32 %v5598, %v5998
    %6000 = vmatmul.f32.gmra.mxu0 %v5793
    %v6001 = vpop.f32.mrf.mxu0
    %v6002 = vadd.f32 %v5601, %v6001
    %6003 = vmatmul.f32.gmra.mxu0 %v5796
    %v6004 = vpop.f32.mrf.mxu0
    %v6005 = vadd.f32 %v5604, %v6004
    %6006 = vmatmul.f32.gmra.mxu0 %v5799
    %v6007 = vpop.f32.mrf.mxu0
    %v6008 = vadd.f32 %v5607, %v6007
    %6009 = vmatmul.f32.gmra.mxu0 %v5802
    %v6010 = vpop.f32.mrf.mxu0
    %v6011 = vadd.f32 %v5610, %v6010
    %6012 = vmatmul.f32.gmra.mxu0 %v5805
    %v6013 = vpop.f32.mrf.mxu0
    %v6014 = vadd.f32 %v5613, %v6013
    %6015 = vmatmul.f32.gmra.mxu0 %v5808
    %v6016 = vpop.f32.mrf.mxu0
    %v6017 = vadd.f32 %v5616, %v6016
    %6018 = vmatmul.f32.gmra.mxu0 %v5811
    %v6019 = vpop.f32.mrf.mxu0
    %v6020 = vadd.f32 %v5619, %v6019
    %6021 = vmatmul.f32.gmra.mxu0 %v5814
    %v6022 = vpop.f32.mrf.mxu0
    %v6023 = vadd.f32 %v5622, %v6022
    %6024 = vmatmul.f32.gmra.mxu0 %v5817
    %v6025 = vpop.f32.mrf.mxu0
    %v6026 = vadd.f32 %v5625, %v6025
    %6027 = vmatmul.f32.gmra.mxu0 %v5820
    %v6028 = vpop.f32.mrf.mxu0
    %v6029 = vadd.f32 %v5628, %v6028
    %6030 = vmatmul.f32.gmra.mxu0 %v5823
    %v6031 = vpop.f32.mrf.mxu0
    %v6032 = vadd.f32 %v5631, %v6031
    %6033 = vdwg.mxu0
    %v6034 = vld [vmem:[#allocation2 + $0x2] sm:$0xff]
    %v6035 = vld [vmem:[#allocation2 + $0xa] sm:$0xff]
    %v6036 = vld [vmem:[#allocation2 + $0x1a] sm:$0xff]
    %v6037 = vld [vmem:[#allocation2 + $0x22] sm:$0xff]
    %v6038 = vld [vmem:[#allocation2 + $0x32] sm:$0xff]
    %v6039 = vld [vmem:[#allocation2 + $0x3a] sm:$0xff]
    %v6040 = vld [vmem:[#allocation2 + $0x4a] sm:$0xff]
    %v6041 = vld [vmem:[#allocation2 + $0x52] sm:$0xff]
    %v6042 = vld [vmem:[#allocation2 + $0x62] sm:$0xff]
    %v6043 = vld [vmem:[#allocation2 + $0x6a] sm:$0xff]
    %v6044 = vld [vmem:[#allocation2 + $0x7a] sm:$0xff]
    %v6045 = vld [vmem:[#allocation2 + $0x82] sm:$0xff]
    %v6046 = vld [vmem:[#allocation2 + $0x92] sm:$0xff]
    %v6047 = vld [vmem:[#allocation2 + $0x9a] sm:$0xff]
    %v6048 = vld [vmem:[#allocation2 + $0xaa] sm:$0xff]
    %v6049 = vld [vmem:[#allocation2 + $0xb2] sm:$0xff]
    %v6050 = vld [vmem:[#allocation2 + $0xc2] sm:$0xff]
    %v6051 = vld [vmem:[#allocation2 + $0xca] sm:$0xff]
    %v6052 = vld [vmem:[#allocation2 + $0xda] sm:$0xff]
    %v6053 = vld [vmem:[#allocation2 + $0xe2] sm:$0xff]
    %v6054 = vld [vmem:[#allocation2 + $0xf2] sm:$0xff]
    %v6055 = vld [vmem:[#allocation2 + $0xfa] sm:$0xff]
    %v6056 = vld [vmem:[#allocation2 + $0x10a] sm:$0xff]
    %v6057 = vld [vmem:[#allocation2 + $0x112] sm:$0xff]
    %v6058 = vld [vmem:[#allocation2 + $0x122] sm:$0xff]
    %v6059 = vld [vmem:[#allocation2 + $0x12a] sm:$0xff]
    %v6060 = vld [vmem:[#allocation2 + $0x13a] sm:$0xff]
    %v6061 = vld [vmem:[#allocation2 + $0x142] sm:$0xff]
    %v6062 = vld [vmem:[#allocation2 + $0x152] sm:$0xff]
    %v6063 = vld [vmem:[#allocation2 + $0x15a] sm:$0xff]
    %v6064 = vld [vmem:[#allocation2 + $0x16a] sm:$0xff]
    %v6065 = vld [vmem:[#allocation2 + $0x172] sm:$0xff]
    %v6066 = vld [vmem:[#allocation2 + $0x1b2] sm:$0xff]
    %v6067 = vld [vmem:[#allocation2 + $0x1ba] sm:$0xff]
    %v6068 = vld [vmem:[#allocation2 + $0x1ca] sm:$0xff]
    %v6069 = vld [vmem:[#allocation2 + $0x1d2] sm:$0xff]
    %v6070 = vld [vmem:[#allocation2 + $0x1e2] sm:$0xff]
    %v6071 = vld [vmem:[#allocation2 + $0x1ea] sm:$0xff]
    %v6072 = vld [vmem:[#allocation2 + $0x1fa] sm:$0xff]
    %v6073 = vld [vmem:[#allocation2 + $0x202] sm:$0xff]
    %v6074 = vld [vmem:[#allocation2 + $0x212] sm:$0xff]
    %v6075 = vld [vmem:[#allocation2 + $0x21a] sm:$0xff]
    %v6076 = vld [vmem:[#allocation2 + $0x22a] sm:$0xff]
    %v6077 = vld [vmem:[#allocation2 + $0x232] sm:$0xff]
    %v6078 = vld [vmem:[#allocation2 + $0x242] sm:$0xff]
    %v6079 = vld [vmem:[#allocation2 + $0x24a] sm:$0xff]
    %v6080 = vld [vmem:[#allocation2 + $0x25a] sm:$0xff]
    %v6081 = vld [vmem:[#allocation2 + $0x262] sm:$0xff]
    %v6082 = vld [vmem:[#allocation2 + $0x272] sm:$0xff]
    %v6083 = vld [vmem:[#allocation2 + $0x27a] sm:$0xff]
    %v6084 = vld [vmem:[#allocation2 + $0x28a] sm:$0xff]
    %v6085 = vld [vmem:[#allocation2 + $0x292] sm:$0xff]
    %v6086 = vld [vmem:[#allocation2 + $0x2a2] sm:$0xff]
    %v6087 = vld [vmem:[#allocation2 + $0x2aa] sm:$0xff]
    %v6088 = vld [vmem:[#allocation2 + $0x2ba] sm:$0xff]
    %v6089 = vld [vmem:[#allocation2 + $0x2c2] sm:$0xff]
    %v6090 = vld [vmem:[#allocation2 + $0x2d2] sm:$0xff]
    %v6091 = vld [vmem:[#allocation2 + $0x2da] sm:$0xff]
    %v6092 = vld [vmem:[#allocation2 + $0x2ea] sm:$0xff]
    %v6093 = vld [vmem:[#allocation2 + $0x2f2] sm:$0xff]
    %v6094 = vld [vmem:[#allocation2 + $0x302] sm:$0xff]
    %v6095 = vld [vmem:[#allocation2 + $0x30a] sm:$0xff]
    %v6096 = vld [vmem:[#allocation2 + $0x31a] sm:$0xff]
    %v6097 = vld [vmem:[#allocation2 + $0x322] sm:$0xff]
    %s6098 = scalar_lea.vmem %s3, 128
    %v6099 = vld [vmem:[%s6098] sm:$0xff]
    %v6100 = vld [vmem:[%s6098 + $0x8] sm:$0xff]
    %v6101 = vld [vmem:[%s6098 + $0x10] sm:$0xff]
    %v6102 = vld [vmem:[%s6098 + $0x18] sm:$0xff]
    %v6103 = vld [vmem:[%s6098 + $0x20] sm:$0xff]
    %v6104 = vld [vmem:[%s6098 + $0x28] sm:$0xff]
    %v6105 = vld [vmem:[%s6098 + $0x30] sm:$0xff]
    %v6106 = vld [vmem:[%s6098 + $0x38] sm:$0xff]
    %v6108 = vsel %vm4912, %v6034, 0
    %v6111 = vsel %vm4912, %v6035, 0
    %v6114 = vsel %vm4912, %v6036, 0
    %v6117 = vsel %vm4912, %v6037, 0
    %v6120 = vsel %vm4912, %v6038, 0
    %v6123 = vsel %vm4912, %v6039, 0
    %v6126 = vsel %vm4912, %v6040, 0
    %v6129 = vsel %vm4912, %v6041, 0
    %v6132 = vsel %vm4912, %v6042, 0
    %v6135 = vsel %vm4912, %v6043, 0
    %v6138 = vsel %vm4912, %v6044, 0
    %v6141 = vsel %vm4912, %v6045, 0
    %v6144 = vsel %vm4912, %v6046, 0
    %v6147 = vsel %vm4912, %v6047, 0
    %v6150 = vsel %vm4912, %v6048, 0
    %v6153 = vsel %vm4912, %v6049, 0
    %v6156 = vsel %vm4912, %v6050, 0
    %v6159 = vsel %vm4912, %v6051, 0
    %v6162 = vsel %vm4912, %v6052, 0
    %v6165 = vsel %vm4912, %v6053, 0
    %v6168 = vsel %vm4912, %v6054, 0
    %v6171 = vsel %vm4912, %v6055, 0
    %v6174 = vsel %vm4912, %v6056, 0
    %v6177 = vsel %vm4912, %v6057, 0
    %v6180 = vsel %vm4912, %v6058, 0
    %v6183 = vsel %vm4912, %v6059, 0
    %v6186 = vsel %vm4912, %v6060, 0
    %v6189 = vsel %vm4912, %v6061, 0
    %v6192 = vsel %vm4912, %v6062, 0
    %v6195 = vsel %vm4912, %v6063, 0
    %v6198 = vsel %vm4912, %v6064, 0
    %v6201 = vsel %vm4912, %v6065, 0
    %v6204 = vsel %vm4912, %v6066, 0
    %v6207 = vsel %vm4912, %v6067, 0
    %v6210 = vsel %vm4912, %v6068, 0
    %v6213 = vsel %vm4912, %v6069, 0
    %v6216 = vsel %vm4912, %v6070, 0
    %v6219 = vsel %vm4912, %v6071, 0
    %v6222 = vsel %vm4912, %v6072, 0
    %v6225 = vsel %vm4912, %v6073, 0
    %v6228 = vsel %vm4912, %v6074, 0
    %v6231 = vsel %vm4912, %v6075, 0
    %v6234 = vsel %vm4912, %v6076, 0
    %v6237 = vsel %vm4912, %v6077, 0
    %v6240 = vsel %vm4912, %v6078, 0
    %v6243 = vsel %vm4912, %v6079, 0
    %v6246 = vsel %vm4912, %v6080, 0
    %v6249 = vsel %vm4912, %v6081, 0
    %v6252 = vsel %vm4912, %v6082, 0
    %v6255 = vsel %vm4912, %v6083, 0
    %v6258 = vsel %vm4912, %v6084, 0
    %v6261 = vsel %vm4912, %v6085, 0
    %v6264 = vsel %vm4912, %v6086, 0
    %v6267 = vsel %vm4912, %v6087, 0
    %v6270 = vsel %vm4912, %v6088, 0
    %v6273 = vsel %vm4912, %v6089, 0
    %v6276 = vsel %vm4912, %v6090, 0
    %v6279 = vsel %vm4912, %v6091, 0
    %v6282 = vsel %vm4912, %v6092, 0
    %v6285 = vsel %vm4912, %v6093, 0
    %v6288 = vsel %vm4912, %v6094, 0
    %v6291 = vsel %vm4912, %v6095, 0
    %v6294 = vsel %vm4912, %v6096, 0
    %v6297 = vsel %vm4912, %v6097, 0
    %6299 = vmatpush.msra.mxu0 0.0
    %6300 = vmatpush.msra.mxu0 0.0
    %6301 = vmatpush.msra.mxu0 0.0
    %6302 = vmatpush.msra.mxu0 0.0
    %6303 = vmatpush.msra.mxu0 0.0
    %6304 = vmatpush.msra.mxu0 0.0
    %6305 = vmatpush.msra.mxu0 0.0
    %6306 = vmatpush.msra.mxu0 0.0
    %6307 = vmatpush.msra.mxu0 %v6106
    %6308 = vmatpush.msra.mxu0 %v6105
    %6309 = vmatpush.msra.mxu0 %v6104
    %6310 = vmatpush.msra.mxu0 %v6103
    %6311 = vmatpush.msra.mxu0 %v6102
    %6312 = vmatpush.msra.mxu0 %v6101
    %6313 = vmatpush.msra.mxu0 %v6100
    %6314 = vmatpush.msra.mxu0 %v6099
    %6315 = vmatmul.f32.gmra.mxu0 %v6108
    %v6316 = vpop.f32.mrf.mxu0
    %v6317 = vadd.f32 0.0, %v6316
    %6318 = vmatmul.f32.gmra.mxu0 %v6111
    %v6319 = vpop.f32.mrf.mxu0
    %v6320 = vadd.f32 0.0, %v6319
    %6321 = vmatmul.f32.gmra.mxu0 %v6114
    %v6322 = vpop.f32.mrf.mxu0
    %v6323 = vadd.f32 0.0, %v6322
    %6324 = vmatmul.f32.gmra.mxu0 %v6117
    %v6325 = vpop.f32.mrf.mxu0
    %v6326 = vadd.f32 0.0, %v6325
    %6327 = vmatmul.f32.gmra.mxu0 %v6120
    %v6328 = vpop.f32.mrf.mxu0
    %v6329 = vadd.f32 0.0, %v6328
    %6330 = vmatmul.f32.gmra.mxu0 %v6123
    %v6331 = vpop.f32.mrf.mxu0
    %v6332 = vadd.f32 0.0, %v6331
    %6333 = vmatmul.f32.gmra.mxu0 %v6126
    %v6334 = vpop.f32.mrf.mxu0
    %v6335 = vadd.f32 0.0, %v6334
    %6336 = vmatmul.f32.gmra.mxu0 %v6129
    %v6337 = vpop.f32.mrf.mxu0
    %v6338 = vadd.f32 0.0, %v6337
    %6339 = vmatmul.f32.gmra.mxu0 %v6132
    %v6340 = vpop.f32.mrf.mxu0
    %v6341 = vadd.f32 0.0, %v6340
    %6342 = vmatmul.f32.gmra.mxu0 %v6135
    %v6343 = vpop.f32.mrf.mxu0
    %v6344 = vadd.f32 0.0, %v6343
    %6345 = vmatmul.f32.gmra.mxu0 %v6138
    %v6346 = vpop.f32.mrf.mxu0
    %v6347 = vadd.f32 0.0, %v6346
    %6348 = vmatmul.f32.gmra.mxu0 %v6141
    %v6349 = vpop.f32.mrf.mxu0
    %v6350 = vadd.f32 0.0, %v6349
    %6351 = vmatmul.f32.gmra.mxu0 %v6144
    %v6352 = vpop.f32.mrf.mxu0
    %v6353 = vadd.f32 0.0, %v6352
    %6354 = vmatmul.f32.gmra.mxu0 %v6147
    %v6355 = vpop.f32.mrf.mxu0
    %v6356 = vadd.f32 0.0, %v6355
    %6357 = vmatmul.f32.gmra.mxu0 %v6150
    %v6358 = vpop.f32.mrf.mxu0
    %v6359 = vadd.f32 0.0, %v6358
    %6360 = vmatmul.f32.gmra.mxu0 %v6153
    %v6361 = vpop.f32.mrf.mxu0
    %v6362 = vadd.f32 0.0, %v6361
    %6363 = vmatmul.f32.gmra.mxu0 %v6156
    %v6364 = vpop.f32.mrf.mxu0
    %v6365 = vadd.f32 0.0, %v6364
    %6366 = vmatmul.f32.gmra.mxu0 %v6159
    %v6367 = vpop.f32.mrf.mxu0
    %v6368 = vadd.f32 0.0, %v6367
    %6369 = vmatmul.f32.gmra.mxu0 %v6162
    %v6370 = vpop.f32.mrf.mxu0
    %v6371 = vadd.f32 0.0, %v6370
    %6372 = vmatmul.f32.gmra.mxu0 %v6165
    %v6373 = vpop.f32.mrf.mxu0
    %v6374 = vadd.f32 0.0, %v6373
    %6375 = vmatmul.f32.gmra.mxu0 %v6168
    %v6376 = vpop.f32.mrf.mxu0
    %v6377 = vadd.f32 0.0, %v6376
    %6378 = vmatmul.f32.gmra.mxu0 %v6171
    %v6379 = vpop.f32.mrf.mxu0
    %v6380 = vadd.f32 0.0, %v6379
    %6381 = vmatmul.f32.gmra.mxu0 %v6174
    %v6382 = vpop.f32.mrf.mxu0
    %v6383 = vadd.f32 0.0, %v6382
    %6384 = vmatmul.f32.gmra.mxu0 %v6177
    %v6385 = vpop.f32.mrf.mxu0
    %v6386 = vadd.f32 0.0, %v6385
    %6387 = vmatmul.f32.gmra.mxu0 %v6180
    %v6388 = vpop.f32.mrf.mxu0
    %v6389 = vadd.f32 0.0, %v6388
    %6390 = vmatmul.f32.gmra.mxu0 %v6183
    %v6391 = vpop.f32.mrf.mxu0
    %v6392 = vadd.f32 0.0, %v6391
    %6393 = vmatmul.f32.gmra.mxu0 %v6186
    %v6394 = vpop.f32.mrf.mxu0
    %v6395 = vadd.f32 0.0, %v6394
    %6396 = vmatmul.f32.gmra.mxu0 %v6189
    %v6397 = vpop.f32.mrf.mxu0
    %v6398 = vadd.f32 0.0, %v6397
    %6399 = vmatmul.f32.gmra.mxu0 %v6192
    %v6400 = vpop.f32.mrf.mxu0
    %v6401 = vadd.f32 0.0, %v6400
    %6402 = vmatmul.f32.gmra.mxu0 %v6195
    %v6403 = vpop.f32.mrf.mxu0
    %v6404 = vadd.f32 0.0, %v6403
    %6405 = vmatmul.f32.gmra.mxu0 %v6198
    %v6406 = vpop.f32.mrf.mxu0
    %v6407 = vadd.f32 0.0, %v6406
    %6408 = vmatmul.f32.gmra.mxu0 %v6201
    %v6409 = vpop.f32.mrf.mxu0
    %v6410 = vadd.f32 0.0, %v6409
    %6411 = vmatmul.f32.gmra.mxu0 %v6204
    %v6412 = vpop.f32.mrf.mxu0
    %v6413 = vadd.f32 0.0, %v6412
    %6414 = vmatmul.f32.gmra.mxu0 %v6207
    %v6415 = vpop.f32.mrf.mxu0
    %v6416 = vadd.f32 0.0, %v6415
    %6417 = vmatmul.f32.gmra.mxu0 %v6210
    %v6418 = vpop.f32.mrf.mxu0
    %v6419 = vadd.f32 0.0, %v6418
    %6420 = vmatmul.f32.gmra.mxu0 %v6213
    %v6421 = vpop.f32.mrf.mxu0
    %v6422 = vadd.f32 0.0, %v6421
    %6423 = vmatmul.f32.gmra.mxu0 %v6216
    %v6424 = vpop.f32.mrf.mxu0
    %v6425 = vadd.f32 0.0, %v6424
    %6426 = vmatmul.f32.gmra.mxu0 %v6219
    %v6427 = vpop.f32.mrf.mxu0
    %v6428 = vadd.f32 0.0, %v6427
    %6429 = vmatmul.f32.gmra.mxu0 %v6222
    %v6430 = vpop.f32.mrf.mxu0
    %v6431 = vadd.f32 0.0, %v6430
    %6432 = vmatmul.f32.gmra.mxu0 %v6225
    %v6433 = vpop.f32.mrf.mxu0
    %v6434 = vadd.f32 0.0, %v6433
    %6435 = vmatmul.f32.gmra.mxu0 %v6228
    %v6436 = vpop.f32.mrf.mxu0
    %v6437 = vadd.f32 0.0, %v6436
    %6438 = vmatmul.f32.gmra.mxu0 %v6231
    %v6439 = vpop.f32.mrf.mxu0
    %v6440 = vadd.f32 0.0, %v6439
    %6441 = vmatmul.f32.gmra.mxu0 %v6234
    %v6442 = vpop.f32.mrf.mxu0
    %v6443 = vadd.f32 0.0, %v6442
    %6444 = vmatmul.f32.gmra.mxu0 %v6237
    %v6445 = vpop.f32.mrf.mxu0
    %v6446 = vadd.f32 0.0, %v6445
    %6447 = vmatmul.f32.gmra.mxu0 %v6240
    %v6448 = vpop.f32.mrf.mxu0
    %v6449 = vadd.f32 0.0, %v6448
    %6450 = vmatmul.f32.gmra.mxu0 %v6243
    %v6451 = vpop.f32.mrf.mxu0
    %v6452 = vadd.f32 0.0, %v6451
    %6453 = vmatmul.f32.gmra.mxu0 %v6246
    %v6454 = vpop.f32.mrf.mxu0
    %v6455 = vadd.f32 0.0, %v6454
    %6456 = vmatmul.f32.gmra.mxu0 %v6249
    %v6457 = vpop.f32.mrf.mxu0
    %v6458 = vadd.f32 0.0, %v6457
    %6459 = vmatmul.f32.gmra.mxu0 %v6252
    %v6460 = vpop.f32.mrf.mxu0
    %v6461 = vadd.f32 0.0, %v6460
    %6462 = vmatmul.f32.gmra.mxu0 %v6255
    %v6463 = vpop.f32.mrf.mxu0
    %v6464 = vadd.f32 0.0, %v6463
    %6465 = vmatmul.f32.gmra.mxu0 %v6258
    %v6466 = vpop.f32.mrf.mxu0
    %v6467 = vadd.f32 0.0, %v6466
    %6468 = vmatmul.f32.gmra.mxu0 %v6261
    %v6469 = vpop.f32.mrf.mxu0
    %v6470 = vadd.f32 0.0, %v6469
    %6471 = vmatmul.f32.gmra.mxu0 %v6264
    %v6472 = vpop.f32.mrf.mxu0
    %v6473 = vadd.f32 0.0, %v6472
    %6474 = vmatmul.f32.gmra.mxu0 %v6267
    %v6475 = vpop.f32.mrf.mxu0
    %v6476 = vadd.f32 0.0, %v6475
    %6477 = vmatmul.f32.gmra.mxu0 %v6270
    %v6478 = vpop.f32.mrf.mxu0
    %v6479 = vadd.f32 0.0, %v6478
    %6480 = vmatmul.f32.gmra.mxu0 %v6273
    %v6481 = vpop.f32.mrf.mxu0
    %v6482 = vadd.f32 0.0, %v6481
    %6483 = vmatmul.f32.gmra.mxu0 %v6276
    %v6484 = vpop.f32.mrf.mxu0
    %v6485 = vadd.f32 0.0, %v6484
    %6486 = vmatmul.f32.gmra.mxu0 %v6279
    %v6487 = vpop.f32.mrf.mxu0
    %v6488 = vadd.f32 0.0, %v6487
    %6489 = vmatmul.f32.gmra.mxu0 %v6282
    %v6490 = vpop.f32.mrf.mxu0
    %v6491 = vadd.f32 0.0, %v6490
    %6492 = vmatmul.f32.gmra.mxu0 %v6285
    %v6493 = vpop.f32.mrf.mxu0
    %v6494 = vadd.f32 0.0, %v6493
    %6495 = vmatmul.f32.gmra.mxu0 %v6288
    %v6496 = vpop.f32.mrf.mxu0
    %v6497 = vadd.f32 0.0, %v6496
    %6498 = vmatmul.f32.gmra.mxu0 %v6291
    %v6499 = vpop.f32.mrf.mxu0
    %v6500 = vadd.f32 0.0, %v6499
    %6501 = vmatmul.f32.gmra.mxu0 %v6294
    %v6502 = vpop.f32.mrf.mxu0
    %v6503 = vadd.f32 0.0, %v6502
    %6504 = vmatmul.f32.gmra.mxu0 %v6297
    %v6505 = vpop.f32.mrf.mxu0
    %v6506 = vadd.f32 0.0, %v6505
    %6507 = vdwg.mxu0
    %v6508 = vadd.f32 %v5843, %v6317
    %v6509 = vadd.f32 %v5846, %v6320
    %v6510 = vadd.f32 %v5849, %v6323
    %v6511 = vadd.f32 %v5852, %v6326
    %v6512 = vadd.f32 %v5855, %v6329
    %v6513 = vadd.f32 %v5858, %v6332
    %v6514 = vadd.f32 %v5861, %v6335
    %v6515 = vadd.f32 %v5864, %v6338
    %v6516 = vadd.f32 %v5867, %v6341
    %v6517 = vadd.f32 %v5870, %v6344
    %v6518 = vadd.f32 %v5873, %v6347
    %v6519 = vadd.f32 %v5876, %v6350
    %v6520 = vadd.f32 %v5879, %v6353
    %v6521 = vadd.f32 %v5882, %v6356
    %v6522 = vadd.f32 %v5885, %v6359
    %v6523 = vadd.f32 %v5888, %v6362
    %v6524 = vadd.f32 %v5891, %v6365
    %v6525 = vadd.f32 %v5894, %v6368
    %v6526 = vadd.f32 %v5897, %v6371
    %v6527 = vadd.f32 %v5900, %v6374
    %v6528 = vadd.f32 %v5903, %v6377
    %v6529 = vadd.f32 %v5906, %v6380
    %v6530 = vadd.f32 %v5909, %v6383
    %v6531 = vadd.f32 %v5912, %v6386
    %v6532 = vadd.f32 %v5915, %v6389
    %v6533 = vadd.f32 %v5918, %v6392
    %v6534 = vadd.f32 %v5921, %v6395
    %v6535 = vadd.f32 %v5924, %v6398
    %v6536 = vadd.f32 %v5927, %v6401
    %v6537 = vadd.f32 %v5930, %v6404
    %v6538 = vadd.f32 %v5933, %v6407
    %v6539 = vadd.f32 %v5936, %v6410
    %v6540 = vadd.f32 %v5939, %v6413
    %v6541 = vadd.f32 %v5942, %v6416
    %v6542 = vadd.f32 %v5945, %v6419
    %v6543 = vadd.f32 %v5948, %v6422
    %v6544 = vadd.f32 %v5951, %v6425
    %v6545 = vadd.f32 %v5954, %v6428
    %v6546 = vadd.f32 %v5957, %v6431
    %v6547 = vadd.f32 %v5960, %v6434
    %v6548 = vadd.f32 %v5963, %v6437
    %v6549 = vadd.f32 %v5966, %v6440
    %v6550 = vadd.f32 %v5969, %v6443
    %v6551 = vadd.f32 %v5972, %v6446
    %v6552 = vadd.f32 %v5975, %v6449
    %v6553 = vadd.f32 %v5978, %v6452
    %v6554 = vadd.f32 %v5981, %v6455
    %v6555 = vadd.f32 %v5984, %v6458
    %v6556 = vadd.f32 %v5987, %v6461
    %v6557 = vadd.f32 %v5990, %v6464
    %v6558 = vadd.f32 %v5993, %v6467
    %v6559 = vadd.f32 %v5996, %v6470
    %v6560 = vadd.f32 %v5999, %v6473
    %v6561 = vadd.f32 %v6002, %v6476
    %v6562 = vadd.f32 %v6005, %v6479
    %v6563 = vadd.f32 %v6008, %v6482
    %v6564 = vadd.f32 %v6011, %v6485
    %v6565 = vadd.f32 %v6014, %v6488
    %v6566 = vadd.f32 %v6017, %v6491
    %v6567 = vadd.f32 %v6020, %v6494
    %v6568 = vadd.f32 %v6023, %v6497
    %v6569 = vadd.f32 %v6026, %v6500
    %v6570 = vadd.f32 %v6029, %v6503
    %v6571 = vadd.f32 %v6032, %v6506
    %v6572 = vld [vmem:[%s5022] sm:$0xff]
    %v6573 = vld [vmem:[%s5022 + $0x8] sm:$0xff]
    %v6574 = vld [vmem:[%s5022 + $0x18] sm:$0xff]
    %v6575 = vld [vmem:[%s5022 + $0x20] sm:$0xff]
    %v6576 = vld [vmem:[%s5022 + $0x30] sm:$0xff]
    %v6577 = vld [vmem:[%s5022 + $0x38] sm:$0xff]
    %v6578 = vld [vmem:[%s5022 + $0x48] sm:$0xff]
    %v6579 = vld [vmem:[%s5022 + $0x50] sm:$0xff]
    %v6580 = vld [vmem:[%s5022 + $0x60] sm:$0xff]
    %v6581 = vld [vmem:[%s5022 + $0x68] sm:$0xff]
    %v6582 = vld [vmem:[%s5022 + $0x78] sm:$0xff]
    %v6583 = vld [vmem:[%s5022 + $0x80] sm:$0xff]
    %v6584 = vld [vmem:[%s5022 + $0x90] sm:$0xff]
    %v6585 = vld [vmem:[%s5022 + $0x98] sm:$0xff]
    %v6586 = vld [vmem:[%s5022 + $0xa8] sm:$0xff]
    %v6587 = vld [vmem:[%s5022 + $0xb0] sm:$0xff]
    %v6588 = vld [vmem:[%s5022 + $0xc0] sm:$0xff]
    %v6589 = vld [vmem:[%s5022 + $0xc8] sm:$0xff]
    %v6590 = vld [vmem:[%s5022 + $0xd8] sm:$0xff]
    %v6591 = vld [vmem:[%s5022 + $0xe0] sm:$0xff]
    %v6592 = vld [vmem:[%s5022 + $0xf0] sm:$0xff]
    %v6593 = vld [vmem:[%s5022 + $0xf8] sm:$0xff]
    %v6594 = vld [vmem:[%s5022 + $0x108] sm:$0xff]
    %v6595 = vld [vmem:[%s5022 + $0x110] sm:$0xff]
    %v6596 = vld [vmem:[%s5022 + $0x120] sm:$0xff]
    %v6597 = vld [vmem:[%s5022 + $0x128] sm:$0xff]
    %v6598 = vld [vmem:[%s5022 + $0x138] sm:$0xff]
    %v6599 = vld [vmem:[%s5022 + $0x140] sm:$0xff]
    %v6600 = vld [vmem:[%s5022 + $0x150] sm:$0xff]
    %v6601 = vld [vmem:[%s5022 + $0x158] sm:$0xff]
    %v6602 = vld [vmem:[%s5022 + $0x168] sm:$0xff]
    %v6603 = vld [vmem:[%s5022 + $0x170] sm:$0xff]
    %v6604 = vld [vmem:[%s5022 + $0x1b0] sm:$0xff]
    %v6605 = vld [vmem:[%s5022 + $0x1b8] sm:$0xff]
    %v6606 = vld [vmem:[%s5022 + $0x1c8] sm:$0xff]
    %v6607 = vld [vmem:[%s5022 + $0x1d0] sm:$0xff]
    %v6608 = vld [vmem:[%s5022 + $0x1e0] sm:$0xff]
    %v6609 = vld [vmem:[%s5022 + $0x1e8] sm:$0xff]
    %v6610 = vld [vmem:[%s5022 + $0x1f8] sm:$0xff]
    %v6611 = vld [vmem:[%s5022 + $0x200] sm:$0xff]
    %v6612 = vld [vmem:[%s5022 + $0x210] sm:$0xff]
    %v6613 = vld [vmem:[%s5022 + $0x218] sm:$0xff]
    %v6614 = vld [vmem:[%s5022 + $0x228] sm:$0xff]
    %v6615 = vld [vmem:[%s5022 + $0x230] sm:$0xff]
    %v6616 = vld [vmem:[%s5022 + $0x240] sm:$0xff]
    %v6617 = vld [vmem:[%s5022 + $0x248] sm:$0xff]
    %v6618 = vld [vmem:[%s5022 + $0x258] sm:$0xff]
    %v6619 = vld [vmem:[%s5022 + $0x260] sm:$0xff]
    %v6620 = vld [vmem:[%s5022 + $0x270] sm:$0xff]
    %v6621 = vld [vmem:[%s5022 + $0x278] sm:$0xff]
    %v6622 = vld [vmem:[%s5022 + $0x288] sm:$0xff]
    %v6623 = vld [vmem:[%s5022 + $0x290] sm:$0xff]
    %v6624 = vld [vmem:[%s5022 + $0x2a0] sm:$0xff]
    %v6625 = vld [vmem:[%s5022 + $0x2a8] sm:$0xff]
    %v6626 = vld [vmem:[%s5022 + $0x2b8] sm:$0xff]
    %v6627 = vld [vmem:[%s5022 + $0x2c0] sm:$0xff]
    %v6628 = vld [vmem:[%s5022 + $0x2d0] sm:$0xff]
    %v6629 = vld [vmem:[%s5022 + $0x2d8] sm:$0xff]
    %v6630 = vld [vmem:[%s5022 + $0x2e8] sm:$0xff]
    %v6631 = vld [vmem:[%s5022 + $0x2f0] sm:$0xff]
    %v6632 = vld [vmem:[%s5022 + $0x300] sm:$0xff]
    %v6633 = vld [vmem:[%s5022 + $0x308] sm:$0xff]
    %v6634 = vld [vmem:[%s5022 + $0x318] sm:$0xff]
    %v6635 = vld [vmem:[%s5022 + $0x320] sm:$0xff]
    %s6636 = scalar_lea.vmem %s3, 192
    %v6637 = vld [vmem:[%s6636] sm:$0xff]
    %v6638 = vld [vmem:[%s6636 + $0x8] sm:$0xff]
    %v6639 = vld [vmem:[%s6636 + $0x10] sm:$0xff]
    %v6640 = vld [vmem:[%s6636 + $0x18] sm:$0xff]
    %v6641 = vld [vmem:[%s6636 + $0x20] sm:$0xff]
    %v6642 = vld [vmem:[%s6636 + $0x28] sm:$0xff]
    %v6643 = vld [vmem:[%s6636 + $0x30] sm:$0xff]
    %v6644 = vld [vmem:[%s6636 + $0x38] sm:$0xff]
    %v6646 = vsel %vm4912, %v6572, 0
    %v6649 = vsel %vm4912, %v6573, 0
    %v6652 = vsel %vm4912, %v6574, 0
    %v6655 = vsel %vm4912, %v6575, 0
    %v6658 = vsel %vm4912, %v6576, 0
    %v6661 = vsel %vm4912, %v6577, 0
    %v6664 = vsel %vm4912, %v6578, 0
    %v6667 = vsel %vm4912, %v6579, 0
    %v6670 = vsel %vm4912, %v6580, 0
    %v6673 = vsel %vm4912, %v6581, 0
    %v6676 = vsel %vm4912, %v6582, 0
    %v6679 = vsel %vm4912, %v6583, 0
    %v6682 = vsel %vm4912, %v6584, 0
    %v6685 = vsel %vm4912, %v6585, 0
    %v6688 = vsel %vm4912, %v6586, 0
    %v6691 = vsel %vm4912, %v6587, 0
    %v6694 = vsel %vm4912, %v6588, 0
    %v6697 = vsel %vm4912, %v6589, 0
    %v6700 = vsel %vm4912, %v6590, 0
    %v6703 = vsel %vm4912, %v6591, 0
    %v6706 = vsel %vm4912, %v6592, 0
    %v6709 = vsel %vm4912, %v6593, 0
    %v6712 = vsel %vm4912, %v6594, 0
    %v6715 = vsel %vm4912, %v6595, 0
    %v6718 = vsel %vm4912, %v6596, 0
    %v6721 = vsel %vm4912, %v6597, 0
    %v6724 = vsel %vm4912, %v6598, 0
    %v6727 = vsel %vm4912, %v6599, 0
    %v6730 = vsel %vm4912, %v6600, 0
    %v6733 = vsel %vm4912, %v6601, 0
    %v6736 = vsel %vm4912, %v6602, 0
    %v6739 = vsel %vm4912, %v6603, 0
    %v6742 = vsel %vm4912, %v6604, 0
    %v6745 = vsel %vm4912, %v6605, 0
    %v6748 = vsel %vm4912, %v6606, 0
    %v6751 = vsel %vm4912, %v6607, 0
    %v6754 = vsel %vm4912, %v6608, 0
    %v6757 = vsel %vm4912, %v6609, 0
    %v6760 = vsel %vm4912, %v6610, 0
    %v6763 = vsel %vm4912, %v6611, 0
    %v6766 = vsel %vm4912, %v6612, 0
    %v6769 = vsel %vm4912, %v6613, 0
    %v6772 = vsel %vm4912, %v6614, 0
    %v6775 = vsel %vm4912, %v6615, 0
    %v6778 = vsel %vm4912, %v6616, 0
    %v6781 = vsel %vm4912, %v6617, 0
    %v6784 = vsel %vm4912, %v6618, 0
    %v6787 = vsel %vm4912, %v6619, 0
    %v6790 = vsel %vm4912, %v6620, 0
    %v6793 = vsel %vm4912, %v6621, 0
    %v6796 = vsel %vm4912, %v6622, 0
    %v6799 = vsel %vm4912, %v6623, 0
    %v6802 = vsel %vm4912, %v6624, 0
    %v6805 = vsel %vm4912, %v6625, 0
    %v6808 = vsel %vm4912, %v6626, 0
    %v6811 = vsel %vm4912, %v6627, 0
    %v6814 = vsel %vm4912, %v6628, 0
    %v6817 = vsel %vm4912, %v6629, 0
    %v6820 = vsel %vm4912, %v6630, 0
    %v6823 = vsel %vm4912, %v6631, 0
    %v6826 = vsel %vm4912, %v6632, 0
    %v6829 = vsel %vm4912, %v6633, 0
    %v6832 = vsel %vm4912, %v6634, 0
    %v6835 = vsel %vm4912, %v6635, 0
    %6837 = vmatpush.msra.mxu0 0.0
    %6838 = vmatpush.msra.mxu0 0.0
    %6839 = vmatpush.msra.mxu0 0.0
    %6840 = vmatpush.msra.mxu0 0.0
    %6841 = vmatpush.msra.mxu0 0.0
    %6842 = vmatpush.msra.mxu0 0.0
    %6843 = vmatpush.msra.mxu0 0.0
    %6844 = vmatpush.msra.mxu0 0.0
    %6845 = vmatpush.msra.mxu0 %v6644
    %6846 = vmatpush.msra.mxu0 %v6643
    %6847 = vmatpush.msra.mxu0 %v6642
    %6848 = vmatpush.msra.mxu0 %v6641
    %6849 = vmatpush.msra.mxu0 %v6640
    %6850 = vmatpush.msra.mxu0 %v6639
    %6851 = vmatpush.msra.mxu0 %v6638
    %6852 = vmatpush.msra.mxu0 %v6637
    %6853 = vmatmul.f32.gmra.mxu0 %v6646
    %v6854 = vpop.f32.mrf.mxu0
    %v6855 = vadd.f32 0.0, %v6854
    %6856 = vmatmul.f32.gmra.mxu0 %v6649
    %v6857 = vpop.f32.mrf.mxu0
    %v6858 = vadd.f32 0.0, %v6857
    %6859 = vmatmul.f32.gmra.mxu0 %v6652
    %v6860 = vpop.f32.mrf.mxu0
    %v6861 = vadd.f32 0.0, %v6860
    %6862 = vmatmul.f32.gmra.mxu0 %v6655
    %v6863 = vpop.f32.mrf.mxu0
    %v6864 = vadd.f32 0.0, %v6863
    %6865 = vmatmul.f32.gmra.mxu0 %v6658
    %v6866 = vpop.f32.mrf.mxu0
    %v6867 = vadd.f32 0.0, %v6866
    %6868 = vmatmul.f32.gmra.mxu0 %v6661
    %v6869 = vpop.f32.mrf.mxu0
    %v6870 = vadd.f32 0.0, %v6869
    %6871 = vmatmul.f32.gmra.mxu0 %v6664
    %v6872 = vpop.f32.mrf.mxu0
    %v6873 = vadd.f32 0.0, %v6872
    %6874 = vmatmul.f32.gmra.mxu0 %v6667
    %v6875 = vpop.f32.mrf.mxu0
    %v6876 = vadd.f32 0.0, %v6875
    %6877 = vmatmul.f32.gmra.mxu0 %v6670
    %v6878 = vpop.f32.mrf.mxu0
    %v6879 = vadd.f32 0.0, %v6878
    %6880 = vmatmul.f32.gmra.mxu0 %v6673
    %v6881 = vpop.f32.mrf.mxu0
    %v6882 = vadd.f32 0.0, %v6881
    %6883 = vmatmul.f32.gmra.mxu0 %v6676
    %v6884 = vpop.f32.mrf.mxu0
    %v6885 = vadd.f32 0.0, %v6884
    %6886 = vmatmul.f32.gmra.mxu0 %v6679
    %v6887 = vpop.f32.mrf.mxu0
    %v6888 = vadd.f32 0.0, %v6887
    %6889 = vmatmul.f32.gmra.mxu0 %v6682
    %v6890 = vpop.f32.mrf.mxu0
    %v6891 = vadd.f32 0.0, %v6890
    %6892 = vmatmul.f32.gmra.mxu0 %v6685
    %v6893 = vpop.f32.mrf.mxu0
    %v6894 = vadd.f32 0.0, %v6893
    %6895 = vmatmul.f32.gmra.mxu0 %v6688
    %v6896 = vpop.f32.mrf.mxu0
    %v6897 = vadd.f32 0.0, %v6896
    %6898 = vmatmul.f32.gmra.mxu0 %v6691
    %v6899 = vpop.f32.mrf.mxu0
    %v6900 = vadd.f32 0.0, %v6899
    %6901 = vmatmul.f32.gmra.mxu0 %v6694
    %v6902 = vpop.f32.mrf.mxu0
    %v6903 = vadd.f32 0.0, %v6902
    %6904 = vmatmul.f32.gmra.mxu0 %v6697
    %v6905 = vpop.f32.mrf.mxu0
    %v6906 = vadd.f32 0.0, %v6905
    %6907 = vmatmul.f32.gmra.mxu0 %v6700
    %v6908 = vpop.f32.mrf.mxu0
    %v6909 = vadd.f32 0.0, %v6908
    %6910 = vmatmul.f32.gmra.mxu0 %v6703
    %v6911 = vpop.f32.mrf.mxu0
    %v6912 = vadd.f32 0.0, %v6911
    %6913 = vmatmul.f32.gmra.mxu0 %v6706
    %v6914 = vpop.f32.mrf.mxu0
    %v6915 = vadd.f32 0.0, %v6914
    %6916 = vmatmul.f32.gmra.mxu0 %v6709
    %v6917 = vpop.f32.mrf.mxu0
    %v6918 = vadd.f32 0.0, %v6917
    %6919 = vmatmul.f32.gmra.mxu0 %v6712
    %v6920 = vpop.f32.mrf.mxu0
    %v6921 = vadd.f32 0.0, %v6920
    %6922 = vmatmul.f32.gmra.mxu0 %v6715
    %v6923 = vpop.f32.mrf.mxu0
    %v6924 = vadd.f32 0.0, %v6923
    %6925 = vmatmul.f32.gmra.mxu0 %v6718
    %v6926 = vpop.f32.mrf.mxu0
    %v6927 = vadd.f32 0.0, %v6926
    %6928 = vmatmul.f32.gmra.mxu0 %v6721
    %v6929 = vpop.f32.mrf.mxu0
    %v6930 = vadd.f32 0.0, %v6929
    %6931 = vmatmul.f32.gmra.mxu0 %v6724
    %v6932 = vpop.f32.mrf.mxu0
    %v6933 = vadd.f32 0.0, %v6932
    %6934 = vmatmul.f32.gmra.mxu0 %v6727
    %v6935 = vpop.f32.mrf.mxu0
    %v6936 = vadd.f32 0.0, %v6935
    %6937 = vmatmul.f32.gmra.mxu0 %v6730
    %v6938 = vpop.f32.mrf.mxu0
    %v6939 = vadd.f32 0.0, %v6938
    %6940 = vmatmul.f32.gmra.mxu0 %v6733
    %v6941 = vpop.f32.mrf.mxu0
    %v6942 = vadd.f32 0.0, %v6941
    %6943 = vmatmul.f32.gmra.mxu0 %v6736
    %v6944 = vpop.f32.mrf.mxu0
    %v6945 = vadd.f32 0.0, %v6944
    %6946 = vmatmul.f32.gmra.mxu0 %v6739
    %v6947 = vpop.f32.mrf.mxu0
    %v6948 = vadd.f32 0.0, %v6947
    %6949 = vmatmul.f32.gmra.mxu0 %v6742
    %v6950 = vpop.f32.mrf.mxu0
    %v6951 = vadd.f32 0.0, %v6950
    %6952 = vmatmul.f32.gmra.mxu0 %v6745
    %v6953 = vpop.f32.mrf.mxu0
    %v6954 = vadd.f32 0.0, %v6953
    %6955 = vmatmul.f32.gmra.mxu0 %v6748
    %v6956 = vpop.f32.mrf.mxu0
    %v6957 = vadd.f32 0.0, %v6956
    %6958 = vmatmul.f32.gmra.mxu0 %v6751
    %v6959 = vpop.f32.mrf.mxu0
    %v6960 = vadd.f32 0.0, %v6959
    %6961 = vmatmul.f32.gmra.mxu0 %v6754
    %v6962 = vpop.f32.mrf.mxu0
    %v6963 = vadd.f32 0.0, %v6962
    %6964 = vmatmul.f32.gmra.mxu0 %v6757
    %v6965 = vpop.f32.mrf.mxu0
    %v6966 = vadd.f32 0.0, %v6965
    %6967 = vmatmul.f32.gmra.mxu0 %v6760
    %v6968 = vpop.f32.mrf.mxu0
    %v6969 = vadd.f32 0.0, %v6968
    %6970 = vmatmul.f32.gmra.mxu0 %v6763
    %v6971 = vpop.f32.mrf.mxu0
    %v6972 = vadd.f32 0.0, %v6971
    %6973 = vmatmul.f32.gmra.mxu0 %v6766
    %v6974 = vpop.f32.mrf.mxu0
    %v6975 = vadd.f32 0.0, %v6974
    %6976 = vmatmul.f32.gmra.mxu0 %v6769
    %v6977 = vpop.f32.mrf.mxu0
    %v6978 = vadd.f32 0.0, %v6977
    %6979 = vmatmul.f32.gmra.mxu0 %v6772
    %v6980 = vpop.f32.mrf.mxu0
    %v6981 = vadd.f32 0.0, %v6980
    %6982 = vmatmul.f32.gmra.mxu0 %v6775
    %v6983 = vpop.f32.mrf.mxu0
    %v6984 = vadd.f32 0.0, %v6983
    %6985 = vmatmul.f32.gmra.mxu0 %v6778
    %v6986 = vpop.f32.mrf.mxu0
    %v6987 = vadd.f32 0.0, %v6986
    %6988 = vmatmul.f32.gmra.mxu0 %v6781
    %v6989 = vpop.f32.mrf.mxu0
    %v6990 = vadd.f32 0.0, %v6989
    %6991 = vmatmul.f32.gmra.mxu0 %v6784
    %v6992 = vpop.f32.mrf.mxu0
    %v6993 = vadd.f32 0.0, %v6992
    %6994 = vmatmul.f32.gmra.mxu0 %v6787
    %v6995 = vpop.f32.mrf.mxu0
    %v6996 = vadd.f32 0.0, %v6995
    %6997 = vmatmul.f32.gmra.mxu0 %v6790
    %v6998 = vpop.f32.mrf.mxu0
    %v6999 = vadd.f32 0.0, %v6998
    %7000 = vmatmul.f32.gmra.mxu0 %v6793
    %v7001 = vpop.f32.mrf.mxu0
    %v7002 = vadd.f32 0.0, %v7001
    %7003 = vmatmul.f32.gmra.mxu0 %v6796
    %v7004 = vpop.f32.mrf.mxu0
    %v7005 = vadd.f32 0.0, %v7004
    %7006 = vmatmul.f32.gmra.mxu0 %v6799
    %v7007 = vpop.f32.mrf.mxu0
    %v7008 = vadd.f32 0.0, %v7007
    %7009 = vmatmul.f32.gmra.mxu0 %v6802
    %v7010 = vpop.f32.mrf.mxu0
    %v7011 = vadd.f32 0.0, %v7010
    %7012 = vmatmul.f32.gmra.mxu0 %v6805
    %v7013 = vpop.f32.mrf.mxu0
    %v7014 = vadd.f32 0.0, %v7013
    %7015 = vmatmul.f32.gmra.mxu0 %v6808
    %v7016 = vpop.f32.mrf.mxu0
    %v7017 = vadd.f32 0.0, %v7016
    %7018 = vmatmul.f32.gmra.mxu0 %v6811
    %v7019 = vpop.f32.mrf.mxu0
    %v7020 = vadd.f32 0.0, %v7019
    %7021 = vmatmul.f32.gmra.mxu0 %v6814
    %v7022 = vpop.f32.mrf.mxu0
    %v7023 = vadd.f32 0.0, %v7022
    %7024 = vmatmul.f32.gmra.mxu0 %v6817
    %v7025 = vpop.f32.mrf.mxu0
    %v7026 = vadd.f32 0.0, %v7025
    %7027 = vmatmul.f32.gmra.mxu0 %v6820
    %v7028 = vpop.f32.mrf.mxu0
    %v7029 = vadd.f32 0.0, %v7028
    %7030 = vmatmul.f32.gmra.mxu0 %v6823
    %v7031 = vpop.f32.mrf.mxu0
    %v7032 = vadd.f32 0.0, %v7031
    %7033 = vmatmul.f32.gmra.mxu0 %v6826
    %v7034 = vpop.f32.mrf.mxu0
    %v7035 = vadd.f32 0.0, %v7034
    %7036 = vmatmul.f32.gmra.mxu0 %v6829
    %v7037 = vpop.f32.mrf.mxu0
    %v7038 = vadd.f32 0.0, %v7037
    %7039 = vmatmul.f32.gmra.mxu0 %v6832
    %v7040 = vpop.f32.mrf.mxu0
    %v7041 = vadd.f32 0.0, %v7040
    %7042 = vmatmul.f32.gmra.mxu0 %v6835
    %v7043 = vpop.f32.mrf.mxu0
    %v7044 = vadd.f32 0.0, %v7043
    %7045 = vdwg.mxu0
    %v7046 = vadd.f32 %v6508, %v6855
    %v7047 = vadd.f32 %v6509, %v6858
    %v7048 = vadd.f32 %v6510, %v6861
    %v7049 = vadd.f32 %v6511, %v6864
    %v7050 = vadd.f32 %v6512, %v6867
    %v7051 = vadd.f32 %v6513, %v6870
    %v7052 = vadd.f32 %v6514, %v6873
    %v7053 = vadd.f32 %v6515, %v6876
    %v7054 = vadd.f32 %v6516, %v6879
    %v7055 = vadd.f32 %v6517, %v6882
    %v7056 = vadd.f32 %v6518, %v6885
    %v7057 = vadd.f32 %v6519, %v6888
    %v7058 = vadd.f32 %v6520, %v6891
    %v7059 = vadd.f32 %v6521, %v6894
    %v7060 = vadd.f32 %v6522, %v6897
    %v7061 = vadd.f32 %v6523, %v6900
    %v7062 = vadd.f32 %v6524, %v6903
    %v7063 = vadd.f32 %v6525, %v6906
    %v7064 = vadd.f32 %v6526, %v6909
    %v7065 = vadd.f32 %v6527, %v6912
    %v7066 = vadd.f32 %v6528, %v6915
    %v7067 = vadd.f32 %v6529, %v6918
    %v7068 = vadd.f32 %v6530, %v6921
    %v7069 = vadd.f32 %v6531, %v6924
    %v7070 = vadd.f32 %v6532, %v6927
    %v7071 = vadd.f32 %v6533, %v6930
    %v7072 = vadd.f32 %v6534, %v6933
    %v7073 = vadd.f32 %v6535, %v6936
    %v7074 = vadd.f32 %v6536, %v6939
    %v7075 = vadd.f32 %v6537, %v6942
    %v7076 = vadd.f32 %v6538, %v6945
    %v7077 = vadd.f32 %v6539, %v6948
    %v7078 = vadd.f32 %v6540, %v6951
    %v7079 = vadd.f32 %v6541, %v6954
    %v7080 = vadd.f32 %v6542, %v6957
    %v7081 = vadd.f32 %v6543, %v6960
    %v7082 = vadd.f32 %v6544, %v6963
    %v7083 = vadd.f32 %v6545, %v6966
    %v7084 = vadd.f32 %v6546, %v6969
    %v7085 = vadd.f32 %v6547, %v6972
    %v7086 = vadd.f32 %v6548, %v6975
    %v7087 = vadd.f32 %v6549, %v6978
    %v7088 = vadd.f32 %v6550, %v6981
    %v7089 = vadd.f32 %v6551, %v6984
    %v7090 = vadd.f32 %v6552, %v6987
    %v7091 = vadd.f32 %v6553, %v6990
    %v7092 = vadd.f32 %v6554, %v6993
    %v7093 = vadd.f32 %v6555, %v6996
    %v7094 = vadd.f32 %v6556, %v6999
    %v7095 = vadd.f32 %v6557, %v7002
    %v7096 = vadd.f32 %v6558, %v7005
    %v7097 = vadd.f32 %v6559, %v7008
    %v7098 = vadd.f32 %v6560, %v7011
    %v7099 = vadd.f32 %v6561, %v7014
    %v7100 = vadd.f32 %v6562, %v7017
    %v7101 = vadd.f32 %v6563, %v7020
    %v7102 = vadd.f32 %v6564, %v7023
    %v7103 = vadd.f32 %v6565, %v7026
    %v7104 = vadd.f32 %v6566, %v7029
    %v7105 = vadd.f32 %v6567, %v7032
    %v7106 = vadd.f32 %v6568, %v7035
    %v7107 = vadd.f32 %v6569, %v7038
    %v7108 = vadd.f32 %v6570, %v7041
    %v7109 = vadd.f32 %v6571, %v7044
    %v7110 = vld [vmem:[%s5022 + $0x1] sm:$0xff]
    %v7111 = vld [vmem:[%s5022 + $0x9] sm:$0xff]
    %v7112 = vld [vmem:[%s5022 + $0x19] sm:$0xff]
    %v7113 = vld [vmem:[%s5022 + $0x21] sm:$0xff]
    %v7114 = vld [vmem:[%s5022 + $0x31] sm:$0xff]
    %v7115 = vld [vmem:[%s5022 + $0x39] sm:$0xff]
    %v7116 = vld [vmem:[%s5022 + $0x49] sm:$0xff]
    %v7117 = vld [vmem:[%s5022 + $0x51] sm:$0xff]
    %v7118 = vld [vmem:[%s5022 + $0x61] sm:$0xff]
    %v7119 = vld [vmem:[%s5022 + $0x69] sm:$0xff]
    %v7120 = vld [vmem:[%s5022 + $0x79] sm:$0xff]
    %v7121 = vld [vmem:[%s5022 + $0x81] sm:$0xff]
    %v7122 = vld [vmem:[%s5022 + $0x91] sm:$0xff]
    %v7123 = vld [vmem:[%s5022 + $0x99] sm:$0xff]
    %v7124 = vld [vmem:[%s5022 + $0xa9] sm:$0xff]
    %v7125 = vld [vmem:[%s5022 + $0xb1] sm:$0xff]
    %v7126 = vld [vmem:[%s5022 + $0xc1] sm:$0xff]
    %v7127 = vld [vmem:[%s5022 + $0xc9] sm:$0xff]
    %v7128 = vld [vmem:[%s5022 + $0xd9] sm:$0xff]
    %v7129 = vld [vmem:[%s5022 + $0xe1] sm:$0xff]
    %v7130 = vld [vmem:[%s5022 + $0xf1] sm:$0xff]
    %v7131 = vld [vmem:[%s5022 + $0xf9] sm:$0xff]
    %v7132 = vld [vmem:[%s5022 + $0x109] sm:$0xff]
    %v7133 = vld [vmem:[%s5022 + $0x111] sm:$0xff]
    %v7134 = vld [vmem:[%s5022 + $0x121] sm:$0xff]
    %v7135 = vld [vmem:[%s5022 + $0x129] sm:$0xff]
    %v7136 = vld [vmem:[%s5022 + $0x139] sm:$0xff]
    %v7137 = vld [vmem:[%s5022 + $0x141] sm:$0xff]
    %v7138 = vld [vmem:[%s5022 + $0x151] sm:$0xff]
    %v7139 = vld [vmem:[%s5022 + $0x159] sm:$0xff]
    %v7140 = vld [vmem:[%s5022 + $0x169] sm:$0xff]
    %v7141 = vld [vmem:[%s5022 + $0x171] sm:$0xff]
    %v7142 = vld [vmem:[%s5022 + $0x1b1] sm:$0xff]
    %v7143 = vld [vmem:[%s5022 + $0x1b9] sm:$0xff]
    %v7144 = vld [vmem:[%s5022 + $0x1c9] sm:$0xff]
    %v7145 = vld [vmem:[%s5022 + $0x1d1] sm:$0xff]
    %v7146 = vld [vmem:[%s5022 + $0x1e1] sm:$0xff]
    %v7147 = vld [vmem:[%s5022 + $0x1e9] sm:$0xff]
    %v7148 = vld [vmem:[%s5022 + $0x1f9] sm:$0xff]
    %v7149 = vld [vmem:[%s5022 + $0x201] sm:$0xff]
    %v7150 = vld [vmem:[%s5022 + $0x211] sm:$0xff]
    %v7151 = vld [vmem:[%s5022 + $0x219] sm:$0xff]
    %v7152 = vld [vmem:[%s5022 + $0x229] sm:$0xff]
    %v7153 = vld [vmem:[%s5022 + $0x231] sm:$0xff]
    %v7154 = vld [vmem:[%s5022 + $0x241] sm:$0xff]
    %v7155 = vld [vmem:[%s5022 + $0x249] sm:$0xff]
    %v7156 = vld [vmem:[%s5022 + $0x259] sm:$0xff]
    %v7157 = vld [vmem:[%s5022 + $0x261] sm:$0xff]
    %v7158 = vld [vmem:[%s5022 + $0x271] sm:$0xff]
    %v7159 = vld [vmem:[%s5022 + $0x279] sm:$0xff]
    %v7160 = vld [vmem:[%s5022 + $0x289] sm:$0xff]
    %v7161 = vld [vmem:[%s5022 + $0x291] sm:$0xff]
    %v7162 = vld [vmem:[%s5022 + $0x2a1] sm:$0xff]
    %v7163 = vld [vmem:[%s5022 + $0x2a9] sm:$0xff]
    %v7164 = vld [vmem:[%s5022 + $0x2b9] sm:$0xff]
    %v7165 = vld [vmem:[%s5022 + $0x2c1] sm:$0xff]
    %v7166 = vld [vmem:[%s5022 + $0x2d1] sm:$0xff]
    %v7167 = vld [vmem:[%s5022 + $0x2d9] sm:$0xff]
    %v7168 = vld [vmem:[%s5022 + $0x2e9] sm:$0xff]
    %v7169 = vld [vmem:[%s5022 + $0x2f1] sm:$0xff]
    %v7170 = vld [vmem:[%s5022 + $0x301] sm:$0xff]
    %v7171 = vld [vmem:[%s5022 + $0x309] sm:$0xff]
    %v7172 = vld [vmem:[%s5022 + $0x319] sm:$0xff]
    %v7173 = vld [vmem:[%s5022 + $0x321] sm:$0xff]
    %s7174 = scalar_lea.vmem %s3, 256
    %v7175 = vld [vmem:[%s7174] sm:$0xff]
    %v7176 = vld [vmem:[%s7174 + $0x8] sm:$0xff]
    %v7177 = vld [vmem:[%s7174 + $0x10] sm:$0xff]
    %v7178 = vld [vmem:[%s7174 + $0x18] sm:$0xff]
    %v7179 = vld [vmem:[%s7174 + $0x20] sm:$0xff]
    %v7180 = vld [vmem:[%s7174 + $0x28] sm:$0xff]
    %v7181 = vld [vmem:[%s7174 + $0x30] sm:$0xff]
    %v7182 = vld [vmem:[%s7174 + $0x38] sm:$0xff]
    %v7184 = vsel %vm4912, %v7110, 0
    %v7187 = vsel %vm4912, %v7111, 0
    %v7190 = vsel %vm4912, %v7112, 0
    %v7193 = vsel %vm4912, %v7113, 0
    %v7196 = vsel %vm4912, %v7114, 0
    %v7199 = vsel %vm4912, %v7115, 0
    %v7202 = vsel %vm4912, %v7116, 0
    %v7205 = vsel %vm4912, %v7117, 0
    %v7208 = vsel %vm4912, %v7118, 0
    %v7211 = vsel %vm4912, %v7119, 0
    %v7214 = vsel %vm4912, %v7120, 0
    %v7217 = vsel %vm4912, %v7121, 0
    %v7220 = vsel %vm4912, %v7122, 0
    %v7223 = vsel %vm4912, %v7123, 0
    %v7226 = vsel %vm4912, %v7124, 0
    %v7229 = vsel %vm4912, %v7125, 0
    %v7232 = vsel %vm4912, %v7126, 0
    %v7235 = vsel %vm4912, %v7127, 0
    %v7238 = vsel %vm4912, %v7128, 0
    %v7241 = vsel %vm4912, %v7129, 0
    %v7244 = vsel %vm4912, %v7130, 0
    %v7247 = vsel %vm4912, %v7131, 0
    %v7250 = vsel %vm4912, %v7132, 0
    %v7253 = vsel %vm4912, %v7133, 0
    %v7256 = vsel %vm4912, %v7134, 0
    %v7259 = vsel %vm4912, %v7135, 0
    %v7262 = vsel %vm4912, %v7136, 0
    %v7265 = vsel %vm4912, %v7137, 0
    %v7268 = vsel %vm4912, %v7138, 0
    %v7271 = vsel %vm4912, %v7139, 0
    %v7274 = vsel %vm4912, %v7140, 0
    %v7277 = vsel %vm4912, %v7141, 0
    %v7280 = vsel %vm4912, %v7142, 0
    %v7283 = vsel %vm4912, %v7143, 0
    %v7286 = vsel %vm4912, %v7144, 0
    %v7289 = vsel %vm4912, %v7145, 0
    %v7292 = vsel %vm4912, %v7146, 0
    %v7295 = vsel %vm4912, %v7147, 0
    %v7298 = vsel %vm4912, %v7148, 0
    %v7301 = vsel %vm4912, %v7149, 0
    %v7304 = vsel %vm4912, %v7150, 0
    %v7307 = vsel %vm4912, %v7151, 0
    %v7310 = vsel %vm4912, %v7152, 0
    %v7313 = vsel %vm4912, %v7153, 0
    %v7316 = vsel %vm4912, %v7154, 0
    %v7319 = vsel %vm4912, %v7155, 0
    %v7322 = vsel %vm4912, %v7156, 0
    %v7325 = vsel %vm4912, %v7157, 0
    %v7328 = vsel %vm4912, %v7158, 0
    %v7331 = vsel %vm4912, %v7159, 0
    %v7334 = vsel %vm4912, %v7160, 0
    %v7337 = vsel %vm4912, %v7161, 0
    %v7340 = vsel %vm4912, %v7162, 0
    %v7343 = vsel %vm4912, %v7163, 0
    %v7346 = vsel %vm4912, %v7164, 0
    %v7349 = vsel %vm4912, %v7165, 0
    %v7352 = vsel %vm4912, %v7166, 0
    %v7355 = vsel %vm4912, %v7167, 0
    %v7358 = vsel %vm4912, %v7168, 0
    %v7361 = vsel %vm4912, %v7169, 0
    %v7364 = vsel %vm4912, %v7170, 0
    %v7367 = vsel %vm4912, %v7171, 0
    %v7370 = vsel %vm4912, %v7172, 0
    %v7373 = vsel %vm4912, %v7173, 0
    %7375 = vmatpush.msra.mxu0 0.0
    %7376 = vmatpush.msra.mxu0 0.0
    %7377 = vmatpush.msra.mxu0 0.0
    %7378 = vmatpush.msra.mxu0 0.0
    %7379 = vmatpush.msra.mxu0 0.0
    %7380 = vmatpush.msra.mxu0 0.0
    %7381 = vmatpush.msra.mxu0 0.0
    %7382 = vmatpush.msra.mxu0 0.0
    %7383 = vmatpush.msra.mxu0 %v7182
    %7384 = vmatpush.msra.mxu0 %v7181
    %7385 = vmatpush.msra.mxu0 %v7180
    %7386 = vmatpush.msra.mxu0 %v7179
    %7387 = vmatpush.msra.mxu0 %v7178
    %7388 = vmatpush.msra.mxu0 %v7177
    %7389 = vmatpush.msra.mxu0 %v7176
    %7390 = vmatpush.msra.mxu0 %v7175
    %7391 = vmatmul.f32.gmra.mxu0 %v7184
    %v7392 = vpop.f32.mrf.mxu0
    %v7393 = vadd.f32 0.0, %v7392
    %7394 = vmatmul.f32.gmra.mxu0 %v7187
    %v7395 = vpop.f32.mrf.mxu0
    %v7396 = vadd.f32 0.0, %v7395
    %7397 = vmatmul.f32.gmra.mxu0 %v7190
    %v7398 = vpop.f32.mrf.mxu0
    %v7399 = vadd.f32 0.0, %v7398
    %7400 = vmatmul.f32.gmra.mxu0 %v7193
    %v7401 = vpop.f32.mrf.mxu0
    %v7402 = vadd.f32 0.0, %v7401
    %7403 = vmatmul.f32.gmra.mxu0 %v7196
    %v7404 = vpop.f32.mrf.mxu0
    %v7405 = vadd.f32 0.0, %v7404
    %7406 = vmatmul.f32.gmra.mxu0 %v7199
    %v7407 = vpop.f32.mrf.mxu0
    %v7408 = vadd.f32 0.0, %v7407
    %7409 = vmatmul.f32.gmra.mxu0 %v7202
    %v7410 = vpop.f32.mrf.mxu0
    %v7411 = vadd.f32 0.0, %v7410
    %7412 = vmatmul.f32.gmra.mxu0 %v7205
    %v7413 = vpop.f32.mrf.mxu0
    %v7414 = vadd.f32 0.0, %v7413
    %7415 = vmatmul.f32.gmra.mxu0 %v7208
    %v7416 = vpop.f32.mrf.mxu0
    %v7417 = vadd.f32 0.0, %v7416
    %7418 = vmatmul.f32.gmra.mxu0 %v7211
    %v7419 = vpop.f32.mrf.mxu0
    %v7420 = vadd.f32 0.0, %v7419
    %7421 = vmatmul.f32.gmra.mxu0 %v7214
    %v7422 = vpop.f32.mrf.mxu0
    %v7423 = vadd.f32 0.0, %v7422
    %7424 = vmatmul.f32.gmra.mxu0 %v7217
    %v7425 = vpop.f32.mrf.mxu0
    %v7426 = vadd.f32 0.0, %v7425
    %7427 = vmatmul.f32.gmra.mxu0 %v7220
    %v7428 = vpop.f32.mrf.mxu0
    %v7429 = vadd.f32 0.0, %v7428
    %7430 = vmatmul.f32.gmra.mxu0 %v7223
    %v7431 = vpop.f32.mrf.mxu0
    %v7432 = vadd.f32 0.0, %v7431
    %7433 = vmatmul.f32.gmra.mxu0 %v7226
    %v7434 = vpop.f32.mrf.mxu0
    %v7435 = vadd.f32 0.0, %v7434
    %7436 = vmatmul.f32.gmra.mxu0 %v7229
    %v7437 = vpop.f32.mrf.mxu0
    %v7438 = vadd.f32 0.0, %v7437
    %7439 = vmatmul.f32.gmra.mxu0 %v7232
    %v7440 = vpop.f32.mrf.mxu0
    %v7441 = vadd.f32 0.0, %v7440
    %7442 = vmatmul.f32.gmra.mxu0 %v7235
    %v7443 = vpop.f32.mrf.mxu0
    %v7444 = vadd.f32 0.0, %v7443
    %7445 = vmatmul.f32.gmra.mxu0 %v7238
    %v7446 = vpop.f32.mrf.mxu0
    %v7447 = vadd.f32 0.0, %v7446
    %7448 = vmatmul.f32.gmra.mxu0 %v7241
    %v7449 = vpop.f32.mrf.mxu0
    %v7450 = vadd.f32 0.0, %v7449
    %7451 = vmatmul.f32.gmra.mxu0 %v7244
    %v7452 = vpop.f32.mrf.mxu0
    %v7453 = vadd.f32 0.0, %v7452
    %7454 = vmatmul.f32.gmra.mxu0 %v7247
    %v7455 = vpop.f32.mrf.mxu0
    %v7456 = vadd.f32 0.0, %v7455
    %7457 = vmatmul.f32.gmra.mxu0 %v7250
    %v7458 = vpop.f32.mrf.mxu0
    %v7459 = vadd.f32 0.0, %v7458
    %7460 = vmatmul.f32.gmra.mxu0 %v7253
    %v7461 = vpop.f32.mrf.mxu0
    %v7462 = vadd.f32 0.0, %v7461
    %7463 = vmatmul.f32.gmra.mxu0 %v7256
    %v7464 = vpop.f32.mrf.mxu0
    %v7465 = vadd.f32 0.0, %v7464
    %7466 = vmatmul.f32.gmra.mxu0 %v7259
    %v7467 = vpop.f32.mrf.mxu0
    %v7468 = vadd.f32 0.0, %v7467
    %7469 = vmatmul.f32.gmra.mxu0 %v7262
    %v7470 = vpop.f32.mrf.mxu0
    %v7471 = vadd.f32 0.0, %v7470
    %7472 = vmatmul.f32.gmra.mxu0 %v7265
    %v7473 = vpop.f32.mrf.mxu0
    %v7474 = vadd.f32 0.0, %v7473
    %7475 = vmatmul.f32.gmra.mxu0 %v7268
    %v7476 = vpop.f32.mrf.mxu0
    %v7477 = vadd.f32 0.0, %v7476
    %7478 = vmatmul.f32.gmra.mxu0 %v7271
    %v7479 = vpop.f32.mrf.mxu0
    %v7480 = vadd.f32 0.0, %v7479
    %7481 = vmatmul.f32.gmra.mxu0 %v7274
    %v7482 = vpop.f32.mrf.mxu0
    %v7483 = vadd.f32 0.0, %v7482
    %7484 = vmatmul.f32.gmra.mxu0 %v7277
    %v7485 = vpop.f32.mrf.mxu0
    %v7486 = vadd.f32 0.0, %v7485
    %7487 = vmatmul.f32.gmra.mxu0 %v7280
    %v7488 = vpop.f32.mrf.mxu0
    %v7489 = vadd.f32 0.0, %v7488
    %7490 = vmatmul.f32.gmra.mxu0 %v7283
    %v7491 = vpop.f32.mrf.mxu0
    %v7492 = vadd.f32 0.0, %v7491
    %7493 = vmatmul.f32.gmra.mxu0 %v7286
    %v7494 = vpop.f32.mrf.mxu0
    %v7495 = vadd.f32 0.0, %v7494
    %7496 = vmatmul.f32.gmra.mxu0 %v7289
    %v7497 = vpop.f32.mrf.mxu0
    %v7498 = vadd.f32 0.0, %v7497
    %7499 = vmatmul.f32.gmra.mxu0 %v7292
    %v7500 = vpop.f32.mrf.mxu0
    %v7501 = vadd.f32 0.0, %v7500
    %7502 = vmatmul.f32.gmra.mxu0 %v7295
    %v7503 = vpop.f32.mrf.mxu0
    %v7504 = vadd.f32 0.0, %v7503
    %7505 = vmatmul.f32.gmra.mxu0 %v7298
    %v7506 = vpop.f32.mrf.mxu0
    %v7507 = vadd.f32 0.0, %v7506
    %7508 = vmatmul.f32.gmra.mxu0 %v7301
    %v7509 = vpop.f32.mrf.mxu0
    %v7510 = vadd.f32 0.0, %v7509
    %7511 = vmatmul.f32.gmra.mxu0 %v7304
    %v7512 = vpop.f32.mrf.mxu0
    %v7513 = vadd.f32 0.0, %v7512
    %7514 = vmatmul.f32.gmra.mxu0 %v7307
    %v7515 = vpop.f32.mrf.mxu0
    %v7516 = vadd.f32 0.0, %v7515
    %7517 = vmatmul.f32.gmra.mxu0 %v7310
    %v7518 = vpop.f32.mrf.mxu0
    %v7519 = vadd.f32 0.0, %v7518
    %7520 = vmatmul.f32.gmra.mxu0 %v7313
    %v7521 = vpop.f32.mrf.mxu0
    %v7522 = vadd.f32 0.0, %v7521
    %7523 = vmatmul.f32.gmra.mxu0 %v7316
    %v7524 = vpop.f32.mrf.mxu0
    %v7525 = vadd.f32 0.0, %v7524
    %7526 = vmatmul.f32.gmra.mxu0 %v7319
    %v7527 = vpop.f32.mrf.mxu0
    %v7528 = vadd.f32 0.0, %v7527
    %7529 = vmatmul.f32.gmra.mxu0 %v7322
    %v7530 = vpop.f32.mrf.mxu0
    %v7531 = vadd.f32 0.0, %v7530
    %7532 = vmatmul.f32.gmra.mxu0 %v7325
    %v7533 = vpop.f32.mrf.mxu0
    %v7534 = vadd.f32 0.0, %v7533
    %7535 = vmatmul.f32.gmra.mxu0 %v7328
    %v7536 = vpop.f32.mrf.mxu0
    %v7537 = vadd.f32 0.0, %v7536
    %7538 = vmatmul.f32.gmra.mxu0 %v7331
    %v7539 = vpop.f32.mrf.mxu0
    %v7540 = vadd.f32 0.0, %v7539
    %7541 = vmatmul.f32.gmra.mxu0 %v7334
    %v7542 = vpop.f32.mrf.mxu0
    %v7543 = vadd.f32 0.0, %v7542
    %7544 = vmatmul.f32.gmra.mxu0 %v7337
    %v7545 = vpop.f32.mrf.mxu0
    %v7546 = vadd.f32 0.0, %v7545
    %7547 = vmatmul.f32.gmra.mxu0 %v7340
    %v7548 = vpop.f32.mrf.mxu0
    %v7549 = vadd.f32 0.0, %v7548
    %7550 = vmatmul.f32.gmra.mxu0 %v7343
    %v7551 = vpop.f32.mrf.mxu0
    %v7552 = vadd.f32 0.0, %v7551
    %7553 = vmatmul.f32.gmra.mxu0 %v7346
    %v7554 = vpop.f32.mrf.mxu0
    %v7555 = vadd.f32 0.0, %v7554
    %7556 = vmatmul.f32.gmra.mxu0 %v7349
    %v7557 = vpop.f32.mrf.mxu0
    %v7558 = vadd.f32 0.0, %v7557
    %7559 = vmatmul.f32.gmra.mxu0 %v7352
    %v7560 = vpop.f32.mrf.mxu0
    %v7561 = vadd.f32 0.0, %v7560
    %7562 = vmatmul.f32.gmra.mxu0 %v7355
    %v7563 = vpop.f32.mrf.mxu0
    %v7564 = vadd.f32 0.0, %v7563
    %7565 = vmatmul.f32.gmra.mxu0 %v7358
    %v7566 = vpop.f32.mrf.mxu0
    %v7567 = vadd.f32 0.0, %v7566
    %7568 = vmatmul.f32.gmra.mxu0 %v7361
    %v7569 = vpop.f32.mrf.mxu0
    %v7570 = vadd.f32 0.0, %v7569
    %7571 = vmatmul.f32.gmra.mxu0 %v7364
    %v7572 = vpop.f32.mrf.mxu0
    %v7573 = vadd.f32 0.0, %v7572
    %7574 = vmatmul.f32.gmra.mxu0 %v7367
    %v7575 = vpop.f32.mrf.mxu0
    %v7576 = vadd.f32 0.0, %v7575
    %7577 = vmatmul.f32.gmra.mxu0 %v7370
    %v7578 = vpop.f32.mrf.mxu0
    %v7579 = vadd.f32 0.0, %v7578
    %7580 = vmatmul.f32.gmra.mxu0 %v7373
    %v7581 = vpop.f32.mrf.mxu0
    %v7582 = vadd.f32 0.0, %v7581
    %7583 = vdwg.mxu0
    %v7584 = vadd.f32 %v7046, %v7393
    %v7585 = vadd.f32 %v7047, %v7396
    %v7586 = vadd.f32 %v7048, %v7399
    %v7587 = vadd.f32 %v7049, %v7402
    %v7588 = vadd.f32 %v7050, %v7405
    %v7589 = vadd.f32 %v7051, %v7408
    %v7590 = vadd.f32 %v7052, %v7411
    %v7591 = vadd.f32 %v7053, %v7414
    %v7592 = vadd.f32 %v7054, %v7417
    %v7593 = vadd.f32 %v7055, %v7420
    %v7594 = vadd.f32 %v7056, %v7423
    %v7595 = vadd.f32 %v7057, %v7426
    %v7596 = vadd.f32 %v7058, %v7429
    %v7597 = vadd.f32 %v7059, %v7432
    %v7598 = vadd.f32 %v7060, %v7435
    %v7599 = vadd.f32 %v7061, %v7438
    %v7600 = vadd.f32 %v7062, %v7441
    %v7601 = vadd.f32 %v7063, %v7444
    %v7602 = vadd.f32 %v7064, %v7447
    %v7603 = vadd.f32 %v7065, %v7450
    %v7604 = vadd.f32 %v7066, %v7453
    %v7605 = vadd.f32 %v7067, %v7456
    %v7606 = vadd.f32 %v7068, %v7459
    %v7607 = vadd.f32 %v7069, %v7462
    %v7608 = vadd.f32 %v7070, %v7465
    %v7609 = vadd.f32 %v7071, %v7468
    %v7610 = vadd.f32 %v7072, %v7471
    %v7611 = vadd.f32 %v7073, %v7474
    %v7612 = vadd.f32 %v7074, %v7477
    %v7613 = vadd.f32 %v7075, %v7480
    %v7614 = vadd.f32 %v7076, %v7483
    %v7615 = vadd.f32 %v7077, %v7486
    %v7616 = vadd.f32 %v7078, %v7489
    %v7617 = vadd.f32 %v7079, %v7492
    %v7618 = vadd.f32 %v7080, %v7495
    %v7619 = vadd.f32 %v7081, %v7498
    %v7620 = vadd.f32 %v7082, %v7501
    %v7621 = vadd.f32 %v7083, %v7504
    %v7622 = vadd.f32 %v7084, %v7507
    %v7623 = vadd.f32 %v7085, %v7510
    %v7624 = vadd.f32 %v7086, %v7513
    %v7625 = vadd.f32 %v7087, %v7516
    %v7626 = vadd.f32 %v7088, %v7519
    %v7627 = vadd.f32 %v7089, %v7522
    %v7628 = vadd.f32 %v7090, %v7525
    %v7629 = vadd.f32 %v7091, %v7528
    %v7630 = vadd.f32 %v7092, %v7531
    %v7631 = vadd.f32 %v7093, %v7534
    %v7632 = vadd.f32 %v7094, %v7537
    %v7633 = vadd.f32 %v7095, %v7540
    %v7634 = vadd.f32 %v7096, %v7543
    %v7635 = vadd.f32 %v7097, %v7546
    %v7636 = vadd.f32 %v7098, %v7549
    %v7637 = vadd.f32 %v7099, %v7552
    %v7638 = vadd.f32 %v7100, %v7555
    %v7639 = vadd.f32 %v7101, %v7558
    %v7640 = vadd.f32 %v7102, %v7561
    %v7641 = vadd.f32 %v7103, %v7564
    %v7642 = vadd.f32 %v7104, %v7567
    %v7643 = vadd.f32 %v7105, %v7570
    %v7644 = vadd.f32 %v7106, %v7573
    %v7645 = vadd.f32 %v7107, %v7576
    %v7646 = vadd.f32 %v7108, %v7579
    %v7647 = vadd.f32 %v7109, %v7582
    %v7648 = vld [vmem:[%s5022 + $0x2] sm:$0xff]
    %v7649 = vld [vmem:[%s5022 + $0xa] sm:$0xff]
    %v7650 = vld [vmem:[%s5022 + $0x1a] sm:$0xff]
    %v7651 = vld [vmem:[%s5022 + $0x22] sm:$0xff]
    %v7652 = vld [vmem:[%s5022 + $0x32] sm:$0xff]
    %v7653 = vld [vmem:[%s5022 + $0x3a] sm:$0xff]
    %v7654 = vld [vmem:[%s5022 + $0x4a] sm:$0xff]
    %v7655 = vld [vmem:[%s5022 + $0x52] sm:$0xff]
    %v7656 = vld [vmem:[%s5022 + $0x62] sm:$0xff]
    %v7657 = vld [vmem:[%s5022 + $0x6a] sm:$0xff]
    %v7658 = vld [vmem:[%s5022 + $0x7a] sm:$0xff]
    %v7659 = vld [vmem:[%s5022 + $0x82] sm:$0xff]
    %v7660 = vld [vmem:[%s5022 + $0x92] sm:$0xff]
    %v7661 = vld [vmem:[%s5022 + $0x9a] sm:$0xff]
    %v7662 = vld [vmem:[%s5022 + $0xaa] sm:$0xff]
    %v7663 = vld [vmem:[%s5022 + $0xb2] sm:$0xff]
    %v7664 = vld [vmem:[%s5022 + $0xc2] sm:$0xff]
    %v7665 = vld [vmem:[%s5022 + $0xca] sm:$0xff]
    %v7666 = vld [vmem:[%s5022 + $0xda] sm:$0xff]
    %v7667 = vld [vmem:[%s5022 + $0xe2] sm:$0xff]
    %v7668 = vld [vmem:[%s5022 + $0xf2] sm:$0xff]
    %v7669 = vld [vmem:[%s5022 + $0xfa] sm:$0xff]
    %v7670 = vld [vmem:[%s5022 + $0x10a] sm:$0xff]
    %v7671 = vld [vmem:[%s5022 + $0x112] sm:$0xff]
    %v7672 = vld [vmem:[%s5022 + $0x122] sm:$0xff]
    %v7673 = vld [vmem:[%s5022 + $0x12a] sm:$0xff]
    %v7674 = vld [vmem:[%s5022 + $0x13a] sm:$0xff]
    %v7675 = vld [vmem:[%s5022 + $0x142] sm:$0xff]
    %v7676 = vld [vmem:[%s5022 + $0x152] sm:$0xff]
    %v7677 = vld [vmem:[%s5022 + $0x15a] sm:$0xff]
    %v7678 = vld [vmem:[%s5022 + $0x16a] sm:$0xff]
    %v7679 = vld [vmem:[%s5022 + $0x172] sm:$0xff]
    %v7680 = vld [vmem:[%s5022 + $0x1b2] sm:$0xff]
    %v7681 = vld [vmem:[%s5022 + $0x1ba] sm:$0xff]
    %v7682 = vld [vmem:[%s5022 + $0x1ca] sm:$0xff]
    %v7683 = vld [vmem:[%s5022 + $0x1d2] sm:$0xff]
    %v7684 = vld [vmem:[%s5022 + $0x1e2] sm:$0xff]
    %v7685 = vld [vmem:[%s5022 + $0x1ea] sm:$0xff]
    %v7686 = vld [vmem:[%s5022 + $0x1fa] sm:$0xff]
    %v7687 = vld [vmem:[%s5022 + $0x202] sm:$0xff]
    %v7688 = vld [vmem:[%s5022 + $0x212] sm:$0xff]
    %v7689 = vld [vmem:[%s5022 + $0x21a] sm:$0xff]
    %v7690 = vld [vmem:[%s5022 + $0x22a] sm:$0xff]
    %v7691 = vld [vmem:[%s5022 + $0x232] sm:$0xff]
    %v7692 = vld [vmem:[%s5022 + $0x242] sm:$0xff]
    %v7693 = vld [vmem:[%s5022 + $0x24a] sm:$0xff]
    %v7694 = vld [vmem:[%s5022 + $0x25a] sm:$0xff]
    %v7695 = vld [vmem:[%s5022 + $0x262] sm:$0xff]
    %v7696 = vld [vmem:[%s5022 + $0x272] sm:$0xff]
    %v7697 = vld [vmem:[%s5022 + $0x27a] sm:$0xff]
    %v7698 = vld [vmem:[%s5022 + $0x28a] sm:$0xff]
    %v7699 = vld [vmem:[%s5022 + $0x292] sm:$0xff]
    %v7700 = vld [vmem:[%s5022 + $0x2a2] sm:$0xff]
    %v7701 = vld [vmem:[%s5022 + $0x2aa] sm:$0xff]
    %v7702 = vld [vmem:[%s5022 + $0x2ba] sm:$0xff]
    %v7703 = vld [vmem:[%s5022 + $0x2c2] sm:$0xff]
    %v7704 = vld [vmem:[%s5022 + $0x2d2] sm:$0xff]
    %v7705 = vld [vmem:[%s5022 + $0x2da] sm:$0xff]
    %v7706 = vld [vmem:[%s5022 + $0x2ea] sm:$0xff]
    %v7707 = vld [vmem:[%s5022 + $0x2f2] sm:$0xff]
    %v7708 = vld [vmem:[%s5022 + $0x302] sm:$0xff]
    %v7709 = vld [vmem:[%s5022 + $0x30a] sm:$0xff]
    %v7710 = vld [vmem:[%s5022 + $0x31a] sm:$0xff]
    %v7711 = vld [vmem:[%s5022 + $0x322] sm:$0xff]
    %s7712 = scalar_lea.vmem %s3, 320
    %v7713 = vld [vmem:[%s7712] sm:$0xff]
    %v7714 = vld [vmem:[%s7712 + $0x8] sm:$0xff]
    %v7715 = vld [vmem:[%s7712 + $0x10] sm:$0xff]
    %v7716 = vld [vmem:[%s7712 + $0x18] sm:$0xff]
    %v7717 = vld [vmem:[%s7712 + $0x20] sm:$0xff]
    %v7718 = vld [vmem:[%s7712 + $0x28] sm:$0xff]
    %v7719 = vld [vmem:[%s7712 + $0x30] sm:$0xff]
    %v7720 = vld [vmem:[%s7712 + $0x38] sm:$0xff]
    %v7722 = vsel %vm4912, %v7648, 0
    %v7725 = vsel %vm4912, %v7649, 0
    %v7728 = vsel %vm4912, %v7650, 0
    %v7731 = vsel %vm4912, %v7651, 0
    %v7734 = vsel %vm4912, %v7652, 0
    %v7737 = vsel %vm4912, %v7653, 0
    %v7740 = vsel %vm4912, %v7654, 0
    %v7743 = vsel %vm4912, %v7655, 0
    %v7746 = vsel %vm4912, %v7656, 0
    %v7749 = vsel %vm4912, %v7657, 0
    %v7752 = vsel %vm4912, %v7658, 0
    %v7755 = vsel %vm4912, %v7659, 0
    %v7758 = vsel %vm4912, %v7660, 0
    %v7761 = vsel %vm4912, %v7661, 0
    %v7764 = vsel %vm4912, %v7662, 0
    %v7767 = vsel %vm4912, %v7663, 0
    %v7770 = vsel %vm4912, %v7664, 0
    %v7773 = vsel %vm4912, %v7665, 0
    %v7776 = vsel %vm4912, %v7666, 0
    %v7779 = vsel %vm4912, %v7667, 0
    %v7782 = vsel %vm4912, %v7668, 0
    %v7785 = vsel %vm4912, %v7669, 0
    %v7788 = vsel %vm4912, %v7670, 0
    %v7791 = vsel %vm4912, %v7671, 0
    %v7794 = vsel %vm4912, %v7672, 0
    %v7797 = vsel %vm4912, %v7673, 0
    %v7800 = vsel %vm4912, %v7674, 0
    %v7803 = vsel %vm4912, %v7675, 0
    %v7806 = vsel %vm4912, %v7676, 0
    %v7809 = vsel %vm4912, %v7677, 0
    %v7812 = vsel %vm4912, %v7678, 0
    %v7815 = vsel %vm4912, %v7679, 0
    %v7818 = vsel %vm4912, %v7680, 0
    %v7821 = vsel %vm4912, %v7681, 0
    %v7824 = vsel %vm4912, %v7682, 0
    %v7827 = vsel %vm4912, %v7683, 0
    %v7830 = vsel %vm4912, %v7684, 0
    %v7833 = vsel %vm4912, %v7685, 0
    %v7836 = vsel %vm4912, %v7686, 0
    %v7839 = vsel %vm4912, %v7687, 0
    %v7842 = vsel %vm4912, %v7688, 0
    %v7845 = vsel %vm4912, %v7689, 0
    %v7848 = vsel %vm4912, %v7690, 0
    %v7851 = vsel %vm4912, %v7691, 0
    %v7854 = vsel %vm4912, %v7692, 0
    %v7857 = vsel %vm4912, %v7693, 0
    %v7860 = vsel %vm4912, %v7694, 0
    %v7863 = vsel %vm4912, %v7695, 0
    %v7866 = vsel %vm4912, %v7696, 0
    %v7869 = vsel %vm4912, %v7697, 0
    %v7872 = vsel %vm4912, %v7698, 0
    %v7875 = vsel %vm4912, %v7699, 0
    %v7878 = vsel %vm4912, %v7700, 0
    %v7881 = vsel %vm4912, %v7701, 0
    %v7884 = vsel %vm4912, %v7702, 0
    %v7887 = vsel %vm4912, %v7703, 0
    %v7890 = vsel %vm4912, %v7704, 0
    %v7893 = vsel %vm4912, %v7705, 0
    %v7896 = vsel %vm4912, %v7706, 0
    %v7899 = vsel %vm4912, %v7707, 0
    %v7902 = vsel %vm4912, %v7708, 0
    %v7905 = vsel %vm4912, %v7709, 0
    %v7908 = vsel %vm4912, %v7710, 0
    %v7911 = vsel %vm4912, %v7711, 0
    %7913 = vmatpush.msra.mxu0 0.0
    %7914 = vmatpush.msra.mxu0 0.0
    %7915 = vmatpush.msra.mxu0 0.0
    %7916 = vmatpush.msra.mxu0 0.0
    %7917 = vmatpush.msra.mxu0 0.0
    %7918 = vmatpush.msra.mxu0 0.0
    %7919 = vmatpush.msra.mxu0 0.0
    %7920 = vmatpush.msra.mxu0 0.0
    %7921 = vmatpush.msra.mxu0 %v7720
    %7922 = vmatpush.msra.mxu0 %v7719
    %7923 = vmatpush.msra.mxu0 %v7718
    %7924 = vmatpush.msra.mxu0 %v7717
    %7925 = vmatpush.msra.mxu0 %v7716
    %7926 = vmatpush.msra.mxu0 %v7715
    %7927 = vmatpush.msra.mxu0 %v7714
    %7928 = vmatpush.msra.mxu0 %v7713
    %7929 = vmatmul.f32.gmra.mxu0 %v7722
    %v7930 = vpop.f32.mrf.mxu0
    %v7931 = vadd.f32 0.0, %v7930
    %7932 = vmatmul.f32.gmra.mxu0 %v7725
    %v7933 = vpop.f32.mrf.mxu0
    %v7934 = vadd.f32 0.0, %v7933
    %7935 = vmatmul.f32.gmra.mxu0 %v7728
    %v7936 = vpop.f32.mrf.mxu0
    %v7937 = vadd.f32 0.0, %v7936
    %7938 = vmatmul.f32.gmra.mxu0 %v7731
    %v7939 = vpop.f32.mrf.mxu0
    %v7940 = vadd.f32 0.0, %v7939
    %7941 = vmatmul.f32.gmra.mxu0 %v7734
    %v7942 = vpop.f32.mrf.mxu0
    %v7943 = vadd.f32 0.0, %v7942
    %7944 = vmatmul.f32.gmra.mxu0 %v7737
    %v7945 = vpop.f32.mrf.mxu0
    %v7946 = vadd.f32 0.0, %v7945
    %7947 = vmatmul.f32.gmra.mxu0 %v7740
    %v7948 = vpop.f32.mrf.mxu0
    %v7949 = vadd.f32 0.0, %v7948
    %7950 = vmatmul.f32.gmra.mxu0 %v7743
    %v7951 = vpop.f32.mrf.mxu0
    %v7952 = vadd.f32 0.0, %v7951
    %7953 = vmatmul.f32.gmra.mxu0 %v7746
    %v7954 = vpop.f32.mrf.mxu0
    %v7955 = vadd.f32 0.0, %v7954
    %7956 = vmatmul.f32.gmra.mxu0 %v7749
    %v7957 = vpop.f32.mrf.mxu0
    %v7958 = vadd.f32 0.0, %v7957
    %7959 = vmatmul.f32.gmra.mxu0 %v7752
    %v7960 = vpop.f32.mrf.mxu0
    %v7961 = vadd.f32 0.0, %v7960
    %7962 = vmatmul.f32.gmra.mxu0 %v7755
    %v7963 = vpop.f32.mrf.mxu0
    %v7964 = vadd.f32 0.0, %v7963
    %7965 = vmatmul.f32.gmra.mxu0 %v7758
    %v7966 = vpop.f32.mrf.mxu0
    %v7967 = vadd.f32 0.0, %v7966
    %7968 = vmatmul.f32.gmra.mxu0 %v7761
    %v7969 = vpop.f32.mrf.mxu0
    %v7970 = vadd.f32 0.0, %v7969
    %7971 = vmatmul.f32.gmra.mxu0 %v7764
    %v7972 = vpop.f32.mrf.mxu0
    %v7973 = vadd.f32 0.0, %v7972
    %7974 = vmatmul.f32.gmra.mxu0 %v7767
    %v7975 = vpop.f32.mrf.mxu0
    %v7976 = vadd.f32 0.0, %v7975
    %7977 = vmatmul.f32.gmra.mxu0 %v7770
    %v7978 = vpop.f32.mrf.mxu0
    %v7979 = vadd.f32 0.0, %v7978
    %7980 = vmatmul.f32.gmra.mxu0 %v7773
    %v7981 = vpop.f32.mrf.mxu0
    %v7982 = vadd.f32 0.0, %v7981
    %7983 = vmatmul.f32.gmra.mxu0 %v7776
    %v7984 = vpop.f32.mrf.mxu0
    %v7985 = vadd.f32 0.0, %v7984
    %7986 = vmatmul.f32.gmra.mxu0 %v7779
    %v7987 = vpop.f32.mrf.mxu0
    %v7988 = vadd.f32 0.0, %v7987
    %7989 = vmatmul.f32.gmra.mxu0 %v7782
    %v7990 = vpop.f32.mrf.mxu0
    %v7991 = vadd.f32 0.0, %v7990
    %7992 = vmatmul.f32.gmra.mxu0 %v7785
    %v7993 = vpop.f32.mrf.mxu0
    %v7994 = vadd.f32 0.0, %v7993
    %7995 = vmatmul.f32.gmra.mxu0 %v7788
    %v7996 = vpop.f32.mrf.mxu0
    %v7997 = vadd.f32 0.0, %v7996
    %7998 = vmatmul.f32.gmra.mxu0 %v7791
    %v7999 = vpop.f32.mrf.mxu0
    %v8000 = vadd.f32 0.0, %v7999
    %8001 = vmatmul.f32.gmra.mxu0 %v7794
    %v8002 = vpop.f32.mrf.mxu0
    %v8003 = vadd.f32 0.0, %v8002
    %8004 = vmatmul.f32.gmra.mxu0 %v7797
    %v8005 = vpop.f32.mrf.mxu0
    %v8006 = vadd.f32 0.0, %v8005
    %8007 = vmatmul.f32.gmra.mxu0 %v7800
    %v8008 = vpop.f32.mrf.mxu0
    %v8009 = vadd.f32 0.0, %v8008
    %8010 = vmatmul.f32.gmra.mxu0 %v7803
    %v8011 = vpop.f32.mrf.mxu0
    %v8012 = vadd.f32 0.0, %v8011
    %8013 = vmatmul.f32.gmra.mxu0 %v7806
    %v8014 = vpop.f32.mrf.mxu0
    %v8015 = vadd.f32 0.0, %v8014
    %8016 = vmatmul.f32.gmra.mxu0 %v7809
    %v8017 = vpop.f32.mrf.mxu0
    %v8018 = vadd.f32 0.0, %v8017
    %8019 = vmatmul.f32.gmra.mxu0 %v7812
    %v8020 = vpop.f32.mrf.mxu0
    %v8021 = vadd.f32 0.0, %v8020
    %8022 = vmatmul.f32.gmra.mxu0 %v7815
    %v8023 = vpop.f32.mrf.mxu0
    %v8024 = vadd.f32 0.0, %v8023
    %8025 = vmatmul.f32.gmra.mxu0 %v7818
    %v8026 = vpop.f32.mrf.mxu0
    %v8027 = vadd.f32 0.0, %v8026
    %8028 = vmatmul.f32.gmra.mxu0 %v7821
    %v8029 = vpop.f32.mrf.mxu0
    %v8030 = vadd.f32 0.0, %v8029
    %8031 = vmatmul.f32.gmra.mxu0 %v7824
    %v8032 = vpop.f32.mrf.mxu0
    %v8033 = vadd.f32 0.0, %v8032
    %8034 = vmatmul.f32.gmra.mxu0 %v7827
    %v8035 = vpop.f32.mrf.mxu0
    %v8036 = vadd.f32 0.0, %v8035
    %8037 = vmatmul.f32.gmra.mxu0 %v7830
    %v8038 = vpop.f32.mrf.mxu0
    %v8039 = vadd.f32 0.0, %v8038
    %8040 = vmatmul.f32.gmra.mxu0 %v7833
    %v8041 = vpop.f32.mrf.mxu0
    %v8042 = vadd.f32 0.0, %v8041
    %8043 = vmatmul.f32.gmra.mxu0 %v7836
    %v8044 = vpop.f32.mrf.mxu0
    %v8045 = vadd.f32 0.0, %v8044
    %8046 = vmatmul.f32.gmra.mxu0 %v7839
    %v8047 = vpop.f32.mrf.mxu0
    %v8048 = vadd.f32 0.0, %v8047
    %8049 = vmatmul.f32.gmra.mxu0 %v7842
    %v8050 = vpop.f32.mrf.mxu0
    %v8051 = vadd.f32 0.0, %v8050
    %8052 = vmatmul.f32.gmra.mxu0 %v7845
    %v8053 = vpop.f32.mrf.mxu0
    %v8054 = vadd.f32 0.0, %v8053
    %8055 = vmatmul.f32.gmra.mxu0 %v7848
    %v8056 = vpop.f32.mrf.mxu0
    %v8057 = vadd.f32 0.0, %v8056
    %8058 = vmatmul.f32.gmra.mxu0 %v7851
    %v8059 = vpop.f32.mrf.mxu0
    %v8060 = vadd.f32 0.0, %v8059
    %8061 = vmatmul.f32.gmra.mxu0 %v7854
    %v8062 = vpop.f32.mrf.mxu0
    %v8063 = vadd.f32 0.0, %v8062
    %8064 = vmatmul.f32.gmra.mxu0 %v7857
    %v8065 = vpop.f32.mrf.mxu0
    %v8066 = vadd.f32 0.0, %v8065
    %8067 = vmatmul.f32.gmra.mxu0 %v7860
    %v8068 = vpop.f32.mrf.mxu0
    %v8069 = vadd.f32 0.0, %v8068
    %8070 = vmatmul.f32.gmra.mxu0 %v7863
    %v8071 = vpop.f32.mrf.mxu0
    %v8072 = vadd.f32 0.0, %v8071
    %8073 = vmatmul.f32.gmra.mxu0 %v7866
    %v8074 = vpop.f32.mrf.mxu0
    %v8075 = vadd.f32 0.0, %v8074
    %8076 = vmatmul.f32.gmra.mxu0 %v7869
    %v8077 = vpop.f32.mrf.mxu0
    %v8078 = vadd.f32 0.0, %v8077
    %8079 = vmatmul.f32.gmra.mxu0 %v7872
    %v8080 = vpop.f32.mrf.mxu0
    %v8081 = vadd.f32 0.0, %v8080
    %8082 = vmatmul.f32.gmra.mxu0 %v7875
    %v8083 = vpop.f32.mrf.mxu0
    %v8084 = vadd.f32 0.0, %v8083
    %8085 = vmatmul.f32.gmra.mxu0 %v7878
    %v8086 = vpop.f32.mrf.mxu0
    %v8087 = vadd.f32 0.0, %v8086
    %8088 = vmatmul.f32.gmra.mxu0 %v7881
    %v8089 = vpop.f32.mrf.mxu0
    %v8090 = vadd.f32 0.0, %v8089
    %8091 = vmatmul.f32.gmra.mxu0 %v7884
    %v8092 = vpop.f32.mrf.mxu0
    %v8093 = vadd.f32 0.0, %v8092
    %8094 = vmatmul.f32.gmra.mxu0 %v7887
    %v8095 = vpop.f32.mrf.mxu0
    %v8096 = vadd.f32 0.0, %v8095
    %8097 = vmatmul.f32.gmra.mxu0 %v7890
    %v8098 = vpop.f32.mrf.mxu0
    %v8099 = vadd.f32 0.0, %v8098
    %8100 = vmatmul.f32.gmra.mxu0 %v7893
    %v8101 = vpop.f32.mrf.mxu0
    %v8102 = vadd.f32 0.0, %v8101
    %8103 = vmatmul.f32.gmra.mxu0 %v7896
    %v8104 = vpop.f32.mrf.mxu0
    %v8105 = vadd.f32 0.0, %v8104
    %8106 = vmatmul.f32.gmra.mxu0 %v7899
    %v8107 = vpop.f32.mrf.mxu0
    %v8108 = vadd.f32 0.0, %v8107
    %8109 = vmatmul.f32.gmra.mxu0 %v7902
    %v8110 = vpop.f32.mrf.mxu0
    %v8111 = vadd.f32 0.0, %v8110
    %8112 = vmatmul.f32.gmra.mxu0 %v7905
    %v8113 = vpop.f32.mrf.mxu0
    %v8114 = vadd.f32 0.0, %v8113
    %8115 = vmatmul.f32.gmra.mxu0 %v7908
    %v8116 = vpop.f32.mrf.mxu0
    %v8117 = vadd.f32 0.0, %v8116
    %8118 = vmatmul.f32.gmra.mxu0 %v7911
    %v8119 = vpop.f32.mrf.mxu0
    %v8120 = vadd.f32 0.0, %v8119
    %8121 = vdwg.mxu0
    %v8122 = vadd.f32 %v7584, %v7931
    %v8123 = vadd.f32 %v7585, %v7934
    %v8124 = vadd.f32 %v7586, %v7937
    %v8125 = vadd.f32 %v7587, %v7940
    %v8126 = vadd.f32 %v7588, %v7943
    %v8127 = vadd.f32 %v7589, %v7946
    %v8128 = vadd.f32 %v7590, %v7949
    %v8129 = vadd.f32 %v7591, %v7952
    %v8130 = vadd.f32 %v7592, %v7955
    %v8131 = vadd.f32 %v7593, %v7958
    %v8132 = vadd.f32 %v7594, %v7961
    %v8133 = vadd.f32 %v7595, %v7964
    %v8134 = vadd.f32 %v7596, %v7967
    %v8135 = vadd.f32 %v7597, %v7970
    %v8136 = vadd.f32 %v7598, %v7973
    %v8137 = vadd.f32 %v7599, %v7976
    %v8138 = vadd.f32 %v7600, %v7979
    %v8139 = vadd.f32 %v7601, %v7982
    %v8140 = vadd.f32 %v7602, %v7985
    %v8141 = vadd.f32 %v7603, %v7988
    %v8142 = vadd.f32 %v7604, %v7991
    %v8143 = vadd.f32 %v7605, %v7994
    %v8144 = vadd.f32 %v7606, %v7997
    %v8145 = vadd.f32 %v7607, %v8000
    %v8146 = vadd.f32 %v7608, %v8003
    %v8147 = vadd.f32 %v7609, %v8006
    %v8148 = vadd.f32 %v7610, %v8009
    %v8149 = vadd.f32 %v7611, %v8012
    %v8150 = vadd.f32 %v7612, %v8015
    %v8151 = vadd.f32 %v7613, %v8018
    %v8152 = vadd.f32 %v7614, %v8021
    %v8153 = vadd.f32 %v7615, %v8024
    %v8154 = vadd.f32 %v7616, %v8027
    %v8155 = vadd.f32 %v7617, %v8030
    %v8156 = vadd.f32 %v7618, %v8033
    %v8157 = vadd.f32 %v7619, %v8036
    %v8158 = vadd.f32 %v7620, %v8039
    %v8159 = vadd.f32 %v7621, %v8042
    %v8160 = vadd.f32 %v7622, %v8045
    %v8161 = vadd.f32 %v7623, %v8048
    %v8162 = vadd.f32 %v7624, %v8051
    %v8163 = vadd.f32 %v7625, %v8054
    %v8164 = vadd.f32 %v7626, %v8057
    %v8165 = vadd.f32 %v7627, %v8060
    %v8166 = vadd.f32 %v7628, %v8063
    %v8167 = vadd.f32 %v7629, %v8066
    %v8168 = vadd.f32 %v7630, %v8069
    %v8169 = vadd.f32 %v7631, %v8072
    %v8170 = vadd.f32 %v7632, %v8075
    %v8171 = vadd.f32 %v7633, %v8078
    %v8172 = vadd.f32 %v7634, %v8081
    %v8173 = vadd.f32 %v7635, %v8084
    %v8174 = vadd.f32 %v7636, %v8087
    %v8175 = vadd.f32 %v7637, %v8090
    %v8176 = vadd.f32 %v7638, %v8093
    %v8177 = vadd.f32 %v7639, %v8096
    %v8178 = vadd.f32 %v7640, %v8099
    %v8179 = vadd.f32 %v7641, %v8102
    %v8180 = vadd.f32 %v7642, %v8105
    %v8181 = vadd.f32 %v7643, %v8108
    %v8182 = vadd.f32 %v7644, %v8111
    %v8183 = vadd.f32 %v7645, %v8114
    %v8184 = vadd.f32 %v7646, %v8117
    %v8185 = vadd.f32 %v7647, %v8120
    %s8186 = scalar_lea.vmem [#allocation2], 48
    %v8187 = vld [vmem:[%s8186] sm:$0xff]
    %v8188 = vld [vmem:[%s8186 + $0x8] sm:$0xff]
    %v8189 = vld [vmem:[%s8186 + $0x18] sm:$0xff]
    %v8190 = vld [vmem:[%s8186 + $0x20] sm:$0xff]
    %v8191 = vld [vmem:[%s8186 + $0x30] sm:$0xff]
    %v8192 = vld [vmem:[%s8186 + $0x38] sm:$0xff]
    %v8193 = vld [vmem:[%s8186 + $0x48] sm:$0xff]
    %v8194 = vld [vmem:[%s8186 + $0x50] sm:$0xff]
    %v8195 = vld [vmem:[%s8186 + $0x60] sm:$0xff]
    %v8196 = vld [vmem:[%s8186 + $0x68] sm:$0xff]
    %v8197 = vld [vmem:[%s8186 + $0x78] sm:$0xff]
    %v8198 = vld [vmem:[%s8186 + $0x80] sm:$0xff]
    %v8199 = vld [vmem:[%s8186 + $0x90] sm:$0xff]
    %v8200 = vld [vmem:[%s8186 + $0x98] sm:$0xff]
    %v8201 = vld [vmem:[%s8186 + $0xa8] sm:$0xff]
    %v8202 = vld [vmem:[%s8186 + $0xb0] sm:$0xff]
    %v8203 = vld [vmem:[%s8186 + $0xc0] sm:$0xff]
    %v8204 = vld [vmem:[%s8186 + $0xc8] sm:$0xff]
    %v8205 = vld [vmem:[%s8186 + $0xd8] sm:$0xff]
    %v8206 = vld [vmem:[%s8186 + $0xe0] sm:$0xff]
    %v8207 = vld [vmem:[%s8186 + $0xf0] sm:$0xff]
    %v8208 = vld [vmem:[%s8186 + $0xf8] sm:$0xff]
    %v8209 = vld [vmem:[%s8186 + $0x108] sm:$0xff]
    %v8210 = vld [vmem:[%s8186 + $0x110] sm:$0xff]
    %v8211 = vld [vmem:[%s8186 + $0x120] sm:$0xff]
    %v8212 = vld [vmem:[%s8186 + $0x128] sm:$0xff]
    %v8213 = vld [vmem:[%s8186 + $0x138] sm:$0xff]
    %v8214 = vld [vmem:[%s8186 + $0x140] sm:$0xff]
    %v8215 = vld [vmem:[%s8186 + $0x150] sm:$0xff]
    %v8216 = vld [vmem:[%s8186 + $0x158] sm:$0xff]
    %v8217 = vld [vmem:[%s8186 + $0x168] sm:$0xff]
    %v8218 = vld [vmem:[%s8186 + $0x170] sm:$0xff]
    %v8219 = vld [vmem:[%s8186 + $0x1b0] sm:$0xff]
    %v8220 = vld [vmem:[%s8186 + $0x1b8] sm:$0xff]
    %v8221 = vld [vmem:[%s8186 + $0x1c8] sm:$0xff]
    %v8222 = vld [vmem:[%s8186 + $0x1d0] sm:$0xff]
    %v8223 = vld [vmem:[%s8186 + $0x1e0] sm:$0xff]
    %v8224 = vld [vmem:[%s8186 + $0x1e8] sm:$0xff]
    %v8225 = vld [vmem:[%s8186 + $0x1f8] sm:$0xff]
    %v8226 = vld [vmem:[%s8186 + $0x200] sm:$0xff]
    %v8227 = vld [vmem:[%s8186 + $0x210] sm:$0xff]
    %v8228 = vld [vmem:[%s8186 + $0x218] sm:$0xff]
    %v8229 = vld [vmem:[%s8186 + $0x228] sm:$0xff]
    %v8230 = vld [vmem:[%s8186 + $0x230] sm:$0xff]
    %v8231 = vld [vmem:[%s8186 + $0x240] sm:$0xff]
    %v8232 = vld [vmem:[%s8186 + $0x248] sm:$0xff]
    %v8233 = vld [vmem:[%s8186 + $0x258] sm:$0xff]
    %v8234 = vld [vmem:[%s8186 + $0x260] sm:$0xff]
    %v8235 = vld [vmem:[%s8186 + $0x270] sm:$0xff]
    %v8236 = vld [vmem:[%s8186 + $0x278] sm:$0xff]
    %v8237 = vld [vmem:[%s8186 + $0x288] sm:$0xff]
    %v8238 = vld [vmem:[%s8186 + $0x290] sm:$0xff]
    %v8239 = vld [vmem:[%s8186 + $0x2a0] sm:$0xff]
    %v8240 = vld [vmem:[%s8186 + $0x2a8] sm:$0xff]
    %v8241 = vld [vmem:[%s8186 + $0x2b8] sm:$0xff]
    %v8242 = vld [vmem:[%s8186 + $0x2c0] sm:$0xff]
    %v8243 = vld [vmem:[%s8186 + $0x2d0] sm:$0xff]
    %v8244 = vld [vmem:[%s8186 + $0x2d8] sm:$0xff]
    %v8245 = vld [vmem:[%s8186 + $0x2e8] sm:$0xff]
    %v8246 = vld [vmem:[%s8186 + $0x2f0] sm:$0xff]
    %v8247 = vld [vmem:[%s8186 + $0x300] sm:$0xff]
    %v8248 = vld [vmem:[%s8186 + $0x308] sm:$0xff]
    %v8249 = vld [vmem:[%s8186 + $0x318] sm:$0xff]
    %v8250 = vld [vmem:[%s8186 + $0x320] sm:$0xff]
    %s8251 = scalar_lea.vmem %s3, 384
    %v8252 = vld [vmem:[%s8251] sm:$0xff]
    %v8253 = vld [vmem:[%s8251 + $0x8] sm:$0xff]
    %v8254 = vld [vmem:[%s8251 + $0x10] sm:$0xff]
    %v8255 = vld [vmem:[%s8251 + $0x18] sm:$0xff]
    %v8256 = vld [vmem:[%s8251 + $0x20] sm:$0xff]
    %v8257 = vld [vmem:[%s8251 + $0x28] sm:$0xff]
    %v8258 = vld [vmem:[%s8251 + $0x30] sm:$0xff]
    %v8259 = vld [vmem:[%s8251 + $0x38] sm:$0xff]
    %v8261 = vsel %vm4912, %v8187, 0
    %v8264 = vsel %vm4912, %v8188, 0
    %v8267 = vsel %vm4912, %v8189, 0
    %v8270 = vsel %vm4912, %v8190, 0
    %v8273 = vsel %vm4912, %v8191, 0
    %v8276 = vsel %vm4912, %v8192, 0
    %v8279 = vsel %vm4912, %v8193, 0
    %v8282 = vsel %vm4912, %v8194, 0
    %v8285 = vsel %vm4912, %v8195, 0
    %v8288 = vsel %vm4912, %v8196, 0
    %v8291 = vsel %vm4912, %v8197, 0
    %v8294 = vsel %vm4912, %v8198, 0
    %v8297 = vsel %vm4912, %v8199, 0
    %v8300 = vsel %vm4912, %v8200, 0
    %v8303 = vsel %vm4912, %v8201, 0
    %v8306 = vsel %vm4912, %v8202, 0
    %v8309 = vsel %vm4912, %v8203, 0
    %v8312 = vsel %vm4912, %v8204, 0
    %v8315 = vsel %vm4912, %v8205, 0
    %v8318 = vsel %vm4912, %v8206, 0
    %v8321 = vsel %vm4912, %v8207, 0
    %v8324 = vsel %vm4912, %v8208, 0
    %v8327 = vsel %vm4912, %v8209, 0
    %v8330 = vsel %vm4912, %v8210, 0
    %v8333 = vsel %vm4912, %v8211, 0
    %v8336 = vsel %vm4912, %v8212, 0
    %v8339 = vsel %vm4912, %v8213, 0
    %v8342 = vsel %vm4912, %v8214, 0
    %v8345 = vsel %vm4912, %v8215, 0
    %v8348 = vsel %vm4912, %v8216, 0
    %v8351 = vsel %vm4912, %v8217, 0
    %v8354 = vsel %vm4912, %v8218, 0
    %v8357 = vsel %vm4912, %v8219, 0
    %v8360 = vsel %vm4912, %v8220, 0
    %v8363 = vsel %vm4912, %v8221, 0
    %v8366 = vsel %vm4912, %v8222, 0
    %v8369 = vsel %vm4912, %v8223, 0
    %v8372 = vsel %vm4912, %v8224, 0
    %v8375 = vsel %vm4912, %v8225, 0
    %v8378 = vsel %vm4912, %v8226, 0
    %v8381 = vsel %vm4912, %v8227, 0
    %v8384 = vsel %vm4912, %v8228, 0
    %v8387 = vsel %vm4912, %v8229, 0
    %v8390 = vsel %vm4912, %v8230, 0
    %v8393 = vsel %vm4912, %v8231, 0
    %v8396 = vsel %vm4912, %v8232, 0
    %v8399 = vsel %vm4912, %v8233, 0
    %v8402 = vsel %vm4912, %v8234, 0
    %v8405 = vsel %vm4912, %v8235, 0
    %v8408 = vsel %vm4912, %v8236, 0
    %v8411 = vsel %vm4912, %v8237, 0
    %v8414 = vsel %vm4912, %v8238, 0
    %v8417 = vsel %vm4912, %v8239, 0
    %v8420 = vsel %vm4912, %v8240, 0
    %v8423 = vsel %vm4912, %v8241, 0
    %v8426 = vsel %vm4912, %v8242, 0
    %v8429 = vsel %vm4912, %v8243, 0
    %v8432 = vsel %vm4912, %v8244, 0
    %v8435 = vsel %vm4912, %v8245, 0
    %v8438 = vsel %vm4912, %v8246, 0
    %v8441 = vsel %vm4912, %v8247, 0
    %v8444 = vsel %vm4912, %v8248, 0
    %v8447 = vsel %vm4912, %v8249, 0
    %v8450 = vsel %vm4912, %v8250, 0
    %8452 = vmatpush.msra.mxu0 0.0
    %8453 = vmatpush.msra.mxu0 0.0
    %8454 = vmatpush.msra.mxu0 0.0
    %8455 = vmatpush.msra.mxu0 0.0
    %8456 = vmatpush.msra.mxu0 0.0
    %8457 = vmatpush.msra.mxu0 0.0
    %8458 = vmatpush.msra.mxu0 0.0
    %8459 = vmatpush.msra.mxu0 0.0
    %8460 = vmatpush.msra.mxu0 %v8259
    %8461 = vmatpush.msra.mxu0 %v8258
    %8462 = vmatpush.msra.mxu0 %v8257
    %8463 = vmatpush.msra.mxu0 %v8256
    %8464 = vmatpush.msra.mxu0 %v8255
    %8465 = vmatpush.msra.mxu0 %v8254
    %8466 = vmatpush.msra.mxu0 %v8253
    %8467 = vmatpush.msra.mxu0 %v8252
    %8468 = vmatmul.f32.gmra.mxu0 %v8261
    %v8469 = vpop.f32.mrf.mxu0
    %v8470 = vadd.f32 0.0, %v8469
    %8471 = vmatmul.f32.gmra.mxu0 %v8264
    %v8472 = vpop.f32.mrf.mxu0
    %v8473 = vadd.f32 0.0, %v8472
    %8474 = vmatmul.f32.gmra.mxu0 %v8267
    %v8475 = vpop.f32.mrf.mxu0
    %v8476 = vadd.f32 0.0, %v8475
    %8477 = vmatmul.f32.gmra.mxu0 %v8270
    %v8478 = vpop.f32.mrf.mxu0
    %v8479 = vadd.f32 0.0, %v8478
    %8480 = vmatmul.f32.gmra.mxu0 %v8273
    %v8481 = vpop.f32.mrf.mxu0
    %v8482 = vadd.f32 0.0, %v8481
    %8483 = vmatmul.f32.gmra.mxu0 %v8276
    %v8484 = vpop.f32.mrf.mxu0
    %v8485 = vadd.f32 0.0, %v8484
    %8486 = vmatmul.f32.gmra.mxu0 %v8279
    %v8487 = vpop.f32.mrf.mxu0
    %v8488 = vadd.f32 0.0, %v8487
    %8489 = vmatmul.f32.gmra.mxu0 %v8282
    %v8490 = vpop.f32.mrf.mxu0
    %v8491 = vadd.f32 0.0, %v8490
    %8492 = vmatmul.f32.gmra.mxu0 %v8285
    %v8493 = vpop.f32.mrf.mxu0
    %v8494 = vadd.f32 0.0, %v8493
    %8495 = vmatmul.f32.gmra.mxu0 %v8288
    %v8496 = vpop.f32.mrf.mxu0
    %v8497 = vadd.f32 0.0, %v8496
    %8498 = vmatmul.f32.gmra.mxu0 %v8291
    %v8499 = vpop.f32.mrf.mxu0
    %v8500 = vadd.f32 0.0, %v8499
    %8501 = vmatmul.f32.gmra.mxu0 %v8294
    %v8502 = vpop.f32.mrf.mxu0
    %v8503 = vadd.f32 0.0, %v8502
    %8504 = vmatmul.f32.gmra.mxu0 %v8297
    %v8505 = vpop.f32.mrf.mxu0
    %v8506 = vadd.f32 0.0, %v8505
    %8507 = vmatmul.f32.gmra.mxu0 %v8300
    %v8508 = vpop.f32.mrf.mxu0
    %v8509 = vadd.f32 0.0, %v8508
    %8510 = vmatmul.f32.gmra.mxu0 %v8303
    %v8511 = vpop.f32.mrf.mxu0
    %v8512 = vadd.f32 0.0, %v8511
    %8513 = vmatmul.f32.gmra.mxu0 %v8306
    %v8514 = vpop.f32.mrf.mxu0
    %v8515 = vadd.f32 0.0, %v8514
    %8516 = vmatmul.f32.gmra.mxu0 %v8309
    %v8517 = vpop.f32.mrf.mxu0
    %v8518 = vadd.f32 0.0, %v8517
    %8519 = vmatmul.f32.gmra.mxu0 %v8312
    %v8520 = vpop.f32.mrf.mxu0
    %v8521 = vadd.f32 0.0, %v8520
    %8522 = vmatmul.f32.gmra.mxu0 %v8315
    %v8523 = vpop.f32.mrf.mxu0
    %v8524 = vadd.f32 0.0, %v8523
    %8525 = vmatmul.f32.gmra.mxu0 %v8318
    %v8526 = vpop.f32.mrf.mxu0
    %v8527 = vadd.f32 0.0, %v8526
    %8528 = vmatmul.f32.gmra.mxu0 %v8321
    %v8529 = vpop.f32.mrf.mxu0
    %v8530 = vadd.f32 0.0, %v8529
    %8531 = vmatmul.f32.gmra.mxu0 %v8324
    %v8532 = vpop.f32.mrf.mxu0
    %v8533 = vadd.f32 0.0, %v8532
    %8534 = vmatmul.f32.gmra.mxu0 %v8327
    %v8535 = vpop.f32.mrf.mxu0
    %v8536 = vadd.f32 0.0, %v8535
    %8537 = vmatmul.f32.gmra.mxu0 %v8330
    %v8538 = vpop.f32.mrf.mxu0
    %v8539 = vadd.f32 0.0, %v8538
    %8540 = vmatmul.f32.gmra.mxu0 %v8333
    %v8541 = vpop.f32.mrf.mxu0
    %v8542 = vadd.f32 0.0, %v8541
    %8543 = vmatmul.f32.gmra.mxu0 %v8336
    %v8544 = vpop.f32.mrf.mxu0
    %v8545 = vadd.f32 0.0, %v8544
    %8546 = vmatmul.f32.gmra.mxu0 %v8339
    %v8547 = vpop.f32.mrf.mxu0
    %v8548 = vadd.f32 0.0, %v8547
    %8549 = vmatmul.f32.gmra.mxu0 %v8342
    %v8550 = vpop.f32.mrf.mxu0
    %v8551 = vadd.f32 0.0, %v8550
    %8552 = vmatmul.f32.gmra.mxu0 %v8345
    %v8553 = vpop.f32.mrf.mxu0
    %v8554 = vadd.f32 0.0, %v8553
    %8555 = vmatmul.f32.gmra.mxu0 %v8348
    %v8556 = vpop.f32.mrf.mxu0
    %v8557 = vadd.f32 0.0, %v8556
    %8558 = vmatmul.f32.gmra.mxu0 %v8351
    %v8559 = vpop.f32.mrf.mxu0
    %v8560 = vadd.f32 0.0, %v8559
    %8561 = vmatmul.f32.gmra.mxu0 %v8354
    %v8562 = vpop.f32.mrf.mxu0
    %v8563 = vadd.f32 0.0, %v8562
    %8564 = vmatmul.f32.gmra.mxu0 %v8357
    %v8565 = vpop.f32.mrf.mxu0
    %v8566 = vadd.f32 0.0, %v8565
    %8567 = vmatmul.f32.gmra.mxu0 %v8360
    %v8568 = vpop.f32.mrf.mxu0
    %v8569 = vadd.f32 0.0, %v8568
    %8570 = vmatmul.f32.gmra.mxu0 %v8363
    %v8571 = vpop.f32.mrf.mxu0
    %v8572 = vadd.f32 0.0, %v8571
    %8573 = vmatmul.f32.gmra.mxu0 %v8366
    %v8574 = vpop.f32.mrf.mxu0
    %v8575 = vadd.f32 0.0, %v8574
    %8576 = vmatmul.f32.gmra.mxu0 %v8369
    %v8577 = vpop.f32.mrf.mxu0
    %v8578 = vadd.f32 0.0, %v8577
    %8579 = vmatmul.f32.gmra.mxu0 %v8372
    %v8580 = vpop.f32.mrf.mxu0
    %v8581 = vadd.f32 0.0, %v8580
    %8582 = vmatmul.f32.gmra.mxu0 %v8375
    %v8583 = vpop.f32.mrf.mxu0
    %v8584 = vadd.f32 0.0, %v8583
    %8585 = vmatmul.f32.gmra.mxu0 %v8378
    %v8586 = vpop.f32.mrf.mxu0
    %v8587 = vadd.f32 0.0, %v8586
    %8588 = vmatmul.f32.gmra.mxu0 %v8381
    %v8589 = vpop.f32.mrf.mxu0
    %v8590 = vadd.f32 0.0, %v8589
    %8591 = vmatmul.f32.gmra.mxu0 %v8384
    %v8592 = vpop.f32.mrf.mxu0
    %v8593 = vadd.f32 0.0, %v8592
    %8594 = vmatmul.f32.gmra.mxu0 %v8387
    %v8595 = vpop.f32.mrf.mxu0
    %v8596 = vadd.f32 0.0, %v8595
    %8597 = vmatmul.f32.gmra.mxu0 %v8390
    %v8598 = vpop.f32.mrf.mxu0
    %v8599 = vadd.f32 0.0, %v8598
    %8600 = vmatmul.f32.gmra.mxu0 %v8393
    %v8601 = vpop.f32.mrf.mxu0
    %v8602 = vadd.f32 0.0, %v8601
    %8603 = vmatmul.f32.gmra.mxu0 %v8396
    %v8604 = vpop.f32.mrf.mxu0
    %v8605 = vadd.f32 0.0, %v8604
    %8606 = vmatmul.f32.gmra.mxu0 %v8399
    %v8607 = vpop.f32.mrf.mxu0
    %v8608 = vadd.f32 0.0, %v8607
    %8609 = vmatmul.f32.gmra.mxu0 %v8402
    %v8610 = vpop.f32.mrf.mxu0
    %v8611 = vadd.f32 0.0, %v8610
    %8612 = vmatmul.f32.gmra.mxu0 %v8405
    %v8613 = vpop.f32.mrf.mxu0
    %v8614 = vadd.f32 0.0, %v8613
    %8615 = vmatmul.f32.gmra.mxu0 %v8408
    %v8616 = vpop.f32.mrf.mxu0
    %v8617 = vadd.f32 0.0, %v8616
    %8618 = vmatmul.f32.gmra.mxu0 %v8411
    %v8619 = vpop.f32.mrf.mxu0
    %v8620 = vadd.f32 0.0, %v8619
    %8621 = vmatmul.f32.gmra.mxu0 %v8414
    %v8622 = vpop.f32.mrf.mxu0
    %v8623 = vadd.f32 0.0, %v8622
    %8624 = vmatmul.f32.gmra.mxu0 %v8417
    %v8625 = vpop.f32.mrf.mxu0
    %v8626 = vadd.f32 0.0, %v8625
    %8627 = vmatmul.f32.gmra.mxu0 %v8420
    %v8628 = vpop.f32.mrf.mxu0
    %v8629 = vadd.f32 0.0, %v8628
    %8630 = vmatmul.f32.gmra.mxu0 %v8423
    %v8631 = vpop.f32.mrf.mxu0
    %v8632 = vadd.f32 0.0, %v8631
    %8633 = vmatmul.f32.gmra.mxu0 %v8426
    %v8634 = vpop.f32.mrf.mxu0
    %v8635 = vadd.f32 0.0, %v8634
    %8636 = vmatmul.f32.gmra.mxu0 %v8429
    %v8637 = vpop.f32.mrf.mxu0
    %v8638 = vadd.f32 0.0, %v8637
    %8639 = vmatmul.f32.gmra.mxu0 %v8432
    %v8640 = vpop.f32.mrf.mxu0
    %v8641 = vadd.f32 0.0, %v8640
    %8642 = vmatmul.f32.gmra.mxu0 %v8435
    %v8643 = vpop.f32.mrf.mxu0
    %v8644 = vadd.f32 0.0, %v8643
    %8645 = vmatmul.f32.gmra.mxu0 %v8438
    %v8646 = vpop.f32.mrf.mxu0
    %v8647 = vadd.f32 0.0, %v8646
    %8648 = vmatmul.f32.gmra.mxu0 %v8441
    %v8649 = vpop.f32.mrf.mxu0
    %v8650 = vadd.f32 0.0, %v8649
    %8651 = vmatmul.f32.gmra.mxu0 %v8444
    %v8652 = vpop.f32.mrf.mxu0
    %v8653 = vadd.f32 0.0, %v8652
    %8654 = vmatmul.f32.gmra.mxu0 %v8447
    %v8655 = vpop.f32.mrf.mxu0
    %v8656 = vadd.f32 0.0, %v8655
    %8657 = vmatmul.f32.gmra.mxu0 %v8450
    %v8658 = vpop.f32.mrf.mxu0
    %v8659 = vadd.f32 0.0, %v8658
    %8660 = vdwg.mxu0
    %v8661 = vadd.f32 %v8122, %v8470
    %v8662 = vadd.f32 %v8123, %v8473
    %v8663 = vadd.f32 %v8124, %v8476
    %v8664 = vadd.f32 %v8125, %v8479
    %v8665 = vadd.f32 %v8126, %v8482
    %v8666 = vadd.f32 %v8127, %v8485
    %v8667 = vadd.f32 %v8128, %v8488
    %v8668 = vadd.f32 %v8129, %v8491
    %v8669 = vadd.f32 %v8130, %v8494
    %v8670 = vadd.f32 %v8131, %v8497
    %v8671 = vadd.f32 %v8132, %v8500
    %v8672 = vadd.f32 %v8133, %v8503
    %v8673 = vadd.f32 %v8134, %v8506
    %v8674 = vadd.f32 %v8135, %v8509
    %v8675 = vadd.f32 %v8136, %v8512
    %v8676 = vadd.f32 %v8137, %v8515
    %v8677 = vadd.f32 %v8138, %v8518
    %v8678 = vadd.f32 %v8139, %v8521
    %v8679 = vadd.f32 %v8140, %v8524
    %v8680 = vadd.f32 %v8141, %v8527
    %v8681 = vadd.f32 %v8142, %v8530
    %v8682 = vadd.f32 %v8143, %v8533
    %v8683 = vadd.f32 %v8144, %v8536
    %v8684 = vadd.f32 %v8145, %v8539
    %v8685 = vadd.f32 %v8146, %v8542
    %v8686 = vadd.f32 %v8147, %v8545
    %v8687 = vadd.f32 %v8148, %v8548
    %v8688 = vadd.f32 %v8149, %v8551
    %v8689 = vadd.f32 %v8150, %v8554
    %v8690 = vadd.f32 %v8151, %v8557
    %v8691 = vadd.f32 %v8152, %v8560
    %v8692 = vadd.f32 %v8153, %v8563
    %v8693 = vadd.f32 %v8154, %v8566
    %v8694 = vadd.f32 %v8155, %v8569
    %v8695 = vadd.f32 %v8156, %v8572
    %v8696 = vadd.f32 %v8157, %v8575
    %v8697 = vadd.f32 %v8158, %v8578
    %v8698 = vadd.f32 %v8159, %v8581
    %v8699 = vadd.f32 %v8160, %v8584
    %v8700 = vadd.f32 %v8161, %v8587
    %v8701 = vadd.f32 %v8162, %v8590
    %v8702 = vadd.f32 %v8163, %v8593
    %v8703 = vadd.f32 %v8164, %v8596
    %v8704 = vadd.f32 %v8165, %v8599
    %v8705 = vadd.f32 %v8166, %v8602
    %v8706 = vadd.f32 %v8167, %v8605
    %v8707 = vadd.f32 %v8168, %v8608
    %v8708 = vadd.f32 %v8169, %v8611
    %v8709 = vadd.f32 %v8170, %v8614
    %v8710 = vadd.f32 %v8171, %v8617
    %v8711 = vadd.f32 %v8172, %v8620
    %v8712 = vadd.f32 %v8173, %v8623
    %v8713 = vadd.f32 %v8174, %v8626
    %v8714 = vadd.f32 %v8175, %v8629
    %v8715 = vadd.f32 %v8176, %v8632
    %v8716 = vadd.f32 %v8177, %v8635
    %v8717 = vadd.f32 %v8178, %v8638
    %v8718 = vadd.f32 %v8179, %v8641
    %v8719 = vadd.f32 %v8180, %v8644
    %v8720 = vadd.f32 %v8181, %v8647
    %v8721 = vadd.f32 %v8182, %v8650
    %v8722 = vadd.f32 %v8183, %v8653
    %v8723 = vadd.f32 %v8184, %v8656
    %v8724 = vadd.f32 %v8185, %v8659
    %v8725 = vld [vmem:[%s8186 + $0x1] sm:$0xff]
    %v8726 = vld [vmem:[%s8186 + $0x9] sm:$0xff]
    %v8727 = vld [vmem:[%s8186 + $0x19] sm:$0xff]
    %v8728 = vld [vmem:[%s8186 + $0x21] sm:$0xff]
    %v8729 = vld [vmem:[%s8186 + $0x31] sm:$0xff]
    %v8730 = vld [vmem:[%s8186 + $0x39] sm:$0xff]
    %v8731 = vld [vmem:[%s8186 + $0x49] sm:$0xff]
    %v8732 = vld [vmem:[%s8186 + $0x51] sm:$0xff]
    %v8733 = vld [vmem:[%s8186 + $0x61] sm:$0xff]
    %v8734 = vld [vmem:[%s8186 + $0x69] sm:$0xff]
    %v8735 = vld [vmem:[%s8186 + $0x79] sm:$0xff]
    %v8736 = vld [vmem:[%s8186 + $0x81] sm:$0xff]
    %v8737 = vld [vmem:[%s8186 + $0x91] sm:$0xff]
    %v8738 = vld [vmem:[%s8186 + $0x99] sm:$0xff]
    %v8739 = vld [vmem:[%s8186 + $0xa9] sm:$0xff]
    %v8740 = vld [vmem:[%s8186 + $0xb1] sm:$0xff]
    %v8741 = vld [vmem:[%s8186 + $0xc1] sm:$0xff]
    %v8742 = vld [vmem:[%s8186 + $0xc9] sm:$0xff]
    %v8743 = vld [vmem:[%s8186 + $0xd9] sm:$0xff]
    %v8744 = vld [vmem:[%s8186 + $0xe1] sm:$0xff]
    %v8745 = vld [vmem:[%s8186 + $0xf1] sm:$0xff]
    %v8746 = vld [vmem:[%s8186 + $0xf9] sm:$0xff]
    %v8747 = vld [vmem:[%s8186 + $0x109] sm:$0xff]
    %v8748 = vld [vmem:[%s8186 + $0x111] sm:$0xff]
    %v8749 = vld [vmem:[%s8186 + $0x121] sm:$0xff]
    %v8750 = vld [vmem:[%s8186 + $0x129] sm:$0xff]
    %v8751 = vld [vmem:[%s8186 + $0x139] sm:$0xff]
    %v8752 = vld [vmem:[%s8186 + $0x141] sm:$0xff]
    %v8753 = vld [vmem:[%s8186 + $0x151] sm:$0xff]
    %v8754 = vld [vmem:[%s8186 + $0x159] sm:$0xff]
    %v8755 = vld [vmem:[%s8186 + $0x169] sm:$0xff]
    %v8756 = vld [vmem:[%s8186 + $0x171] sm:$0xff]
    %v8757 = vld [vmem:[%s8186 + $0x1b1] sm:$0xff]
    %v8758 = vld [vmem:[%s8186 + $0x1b9] sm:$0xff]
    %v8759 = vld [vmem:[%s8186 + $0x1c9] sm:$0xff]
    %v8760 = vld [vmem:[%s8186 + $0x1d1] sm:$0xff]
    %v8761 = vld [vmem:[%s8186 + $0x1e1] sm:$0xff]
    %v8762 = vld [vmem:[%s8186 + $0x1e9] sm:$0xff]
    %v8763 = vld [vmem:[%s8186 + $0x1f9] sm:$0xff]
    %v8764 = vld [vmem:[%s8186 + $0x201] sm:$0xff]
    %v8765 = vld [vmem:[%s8186 + $0x211] sm:$0xff]
    %v8766 = vld [vmem:[%s8186 + $0x219] sm:$0xff]
    %v8767 = vld [vmem:[%s8186 + $0x229] sm:$0xff]
    %v8768 = vld [vmem:[%s8186 + $0x231] sm:$0xff]
    %v8769 = vld [vmem:[%s8186 + $0x241] sm:$0xff]
    %v8770 = vld [vmem:[%s8186 + $0x249] sm:$0xff]
    %v8771 = vld [vmem:[%s8186 + $0x259] sm:$0xff]
    %v8772 = vld [vmem:[%s8186 + $0x261] sm:$0xff]
    %v8773 = vld [vmem:[%s8186 + $0x271] sm:$0xff]
    %v8774 = vld [vmem:[%s8186 + $0x279] sm:$0xff]
    %v8775 = vld [vmem:[%s8186 + $0x289] sm:$0xff]
    %v8776 = vld [vmem:[%s8186 + $0x291] sm:$0xff]
    %v8777 = vld [vmem:[%s8186 + $0x2a1] sm:$0xff]
    %v8778 = vld [vmem:[%s8186 + $0x2a9] sm:$0xff]
    %v8779 = vld [vmem:[%s8186 + $0x2b9] sm:$0xff]
    %v8780 = vld [vmem:[%s8186 + $0x2c1] sm:$0xff]
    %v8781 = vld [vmem:[%s8186 + $0x2d1] sm:$0xff]
    %v8782 = vld [vmem:[%s8186 + $0x2d9] sm:$0xff]
    %v8783 = vld [vmem:[%s8186 + $0x2e9] sm:$0xff]
    %v8784 = vld [vmem:[%s8186 + $0x2f1] sm:$0xff]
    %v8785 = vld [vmem:[%s8186 + $0x301] sm:$0xff]
    %v8786 = vld [vmem:[%s8186 + $0x309] sm:$0xff]
    %v8787 = vld [vmem:[%s8186 + $0x319] sm:$0xff]
    %v8788 = vld [vmem:[%s8186 + $0x321] sm:$0xff]
    %s8789 = scalar_lea.vmem %s3, 448
    %v8790 = vld [vmem:[%s8789] sm:$0xff]
    %v8791 = vld [vmem:[%s8789 + $0x8] sm:$0xff]
    %v8792 = vld [vmem:[%s8789 + $0x10] sm:$0xff]
    %v8793 = vld [vmem:[%s8789 + $0x18] sm:$0xff]
    %v8794 = vld [vmem:[%s8789 + $0x20] sm:$0xff]
    %v8795 = vld [vmem:[%s8789 + $0x28] sm:$0xff]
    %v8796 = vld [vmem:[%s8789 + $0x30] sm:$0xff]
    %v8797 = vld [vmem:[%s8789 + $0x38] sm:$0xff]
    %v8799 = vsel %vm4912, %v8725, 0
    %v8802 = vsel %vm4912, %v8726, 0
    %v8805 = vsel %vm4912, %v8727, 0
    %v8808 = vsel %vm4912, %v8728, 0
    %v8811 = vsel %vm4912, %v8729, 0
    %v8814 = vsel %vm4912, %v8730, 0
    %v8817 = vsel %vm4912, %v8731, 0
    %v8820 = vsel %vm4912, %v8732, 0
    %v8823 = vsel %vm4912, %v8733, 0
    %v8826 = vsel %vm4912, %v8734, 0
    %v8829 = vsel %vm4912, %v8735, 0
    %v8832 = vsel %vm4912, %v8736, 0
    %v8835 = vsel %vm4912, %v8737, 0
    %v8838 = vsel %vm4912, %v8738, 0
    %v8841 = vsel %vm4912, %v8739, 0
    %v8844 = vsel %vm4912, %v8740, 0
    %v8847 = vsel %vm4912, %v8741, 0
    %v8850 = vsel %vm4912, %v8742, 0
    %v8853 = vsel %vm4912, %v8743, 0
    %v8856 = vsel %vm4912, %v8744, 0
    %v8859 = vsel %vm4912, %v8745, 0
    %v8862 = vsel %vm4912, %v8746, 0
    %v8865 = vsel %vm4912, %v8747, 0
    %v8868 = vsel %vm4912, %v8748, 0
    %v8871 = vsel %vm4912, %v8749, 0
    %v8874 = vsel %vm4912, %v8750, 0
    %v8877 = vsel %vm4912, %v8751, 0
    %v8880 = vsel %vm4912, %v8752, 0
    %v8883 = vsel %vm4912, %v8753, 0
    %v8886 = vsel %vm4912, %v8754, 0
    %v8889 = vsel %vm4912, %v8755, 0
    %v8892 = vsel %vm4912, %v8756, 0
    %v8895 = vsel %vm4912, %v8757, 0
    %v8898 = vsel %vm4912, %v8758, 0
    %v8901 = vsel %vm4912, %v8759, 0
    %v8904 = vsel %vm4912, %v8760, 0
    %v8907 = vsel %vm4912, %v8761, 0
    %v8910 = vsel %vm4912, %v8762, 0
    %v8913 = vsel %vm4912, %v8763, 0
    %v8916 = vsel %vm4912, %v8764, 0
    %v8919 = vsel %vm4912, %v8765, 0
    %v8922 = vsel %vm4912, %v8766, 0
    %v8925 = vsel %vm4912, %v8767, 0
    %v8928 = vsel %vm4912, %v8768, 0
    %v8931 = vsel %vm4912, %v8769, 0
    %v8934 = vsel %vm4912, %v8770, 0
    %v8937 = vsel %vm4912, %v8771, 0
    %v8940 = vsel %vm4912, %v8772, 0
    %v8943 = vsel %vm4912, %v8773, 0
    %v8946 = vsel %vm4912, %v8774, 0
    %v8949 = vsel %vm4912, %v8775, 0
    %v8952 = vsel %vm4912, %v8776, 0
    %v8955 = vsel %vm4912, %v8777, 0
    %v8958 = vsel %vm4912, %v8778, 0
    %v8961 = vsel %vm4912, %v8779, 0
    %v8964 = vsel %vm4912, %v8780, 0
    %v8967 = vsel %vm4912, %v8781, 0
    %v8970 = vsel %vm4912, %v8782, 0
    %v8973 = vsel %vm4912, %v8783, 0
    %v8976 = vsel %vm4912, %v8784, 0
    %v8979 = vsel %vm4912, %v8785, 0
    %v8982 = vsel %vm4912, %v8786, 0
    %v8985 = vsel %vm4912, %v8787, 0
    %v8988 = vsel %vm4912, %v8788, 0
    %8990 = vmatpush.msra.mxu0 0.0
    %8991 = vmatpush.msra.mxu0 0.0
    %8992 = vmatpush.msra.mxu0 0.0
    %8993 = vmatpush.msra.mxu0 0.0
    %8994 = vmatpush.msra.mxu0 0.0
    %8995 = vmatpush.msra.mxu0 0.0
    %8996 = vmatpush.msra.mxu0 0.0
    %8997 = vmatpush.msra.mxu0 0.0
    %8998 = vmatpush.msra.mxu0 %v8797
    %8999 = vmatpush.msra.mxu0 %v8796
    %9000 = vmatpush.msra.mxu0 %v8795
    %9001 = vmatpush.msra.mxu0 %v8794
    %9002 = vmatpush.msra.mxu0 %v8793
    %9003 = vmatpush.msra.mxu0 %v8792
    %9004 = vmatpush.msra.mxu0 %v8791
    %9005 = vmatpush.msra.mxu0 %v8790
    %9006 = vmatmul.f32.gmra.mxu0 %v8799
    %v9007 = vpop.f32.mrf.mxu0
    %v9008 = vadd.f32 0.0, %v9007
    %9009 = vmatmul.f32.gmra.mxu0 %v8802
    %v9010 = vpop.f32.mrf.mxu0
    %v9011 = vadd.f32 0.0, %v9010
    %9012 = vmatmul.f32.gmra.mxu0 %v8805
    %v9013 = vpop.f32.mrf.mxu0
    %v9014 = vadd.f32 0.0, %v9013
    %9015 = vmatmul.f32.gmra.mxu0 %v8808
    %v9016 = vpop.f32.mrf.mxu0
    %v9017 = vadd.f32 0.0, %v9016
    %9018 = vmatmul.f32.gmra.mxu0 %v8811
    %v9019 = vpop.f32.mrf.mxu0
    %v9020 = vadd.f32 0.0, %v9019
    %9021 = vmatmul.f32.gmra.mxu0 %v8814
    %v9022 = vpop.f32.mrf.mxu0
    %v9023 = vadd.f32 0.0, %v9022
    %9024 = vmatmul.f32.gmra.mxu0 %v8817
    %v9025 = vpop.f32.mrf.mxu0
    %v9026 = vadd.f32 0.0, %v9025
    %9027 = vmatmul.f32.gmra.mxu0 %v8820
    %v9028 = vpop.f32.mrf.mxu0
    %v9029 = vadd.f32 0.0, %v9028
    %9030 = vmatmul.f32.gmra.mxu0 %v8823
    %v9031 = vpop.f32.mrf.mxu0
    %v9032 = vadd.f32 0.0, %v9031
    %9033 = vmatmul.f32.gmra.mxu0 %v8826
    %v9034 = vpop.f32.mrf.mxu0
    %v9035 = vadd.f32 0.0, %v9034
    %9036 = vmatmul.f32.gmra.mxu0 %v8829
    %v9037 = vpop.f32.mrf.mxu0
    %v9038 = vadd.f32 0.0, %v9037
    %9039 = vmatmul.f32.gmra.mxu0 %v8832
    %v9040 = vpop.f32.mrf.mxu0
    %v9041 = vadd.f32 0.0, %v9040
    %9042 = vmatmul.f32.gmra.mxu0 %v8835
    %v9043 = vpop.f32.mrf.mxu0
    %v9044 = vadd.f32 0.0, %v9043
    %9045 = vmatmul.f32.gmra.mxu0 %v8838
    %v9046 = vpop.f32.mrf.mxu0
    %v9047 = vadd.f32 0.0, %v9046
    %9048 = vmatmul.f32.gmra.mxu0 %v8841
    %v9049 = vpop.f32.mrf.mxu0
    %v9050 = vadd.f32 0.0, %v9049
    %9051 = vmatmul.f32.gmra.mxu0 %v8844
    %v9052 = vpop.f32.mrf.mxu0
    %v9053 = vadd.f32 0.0, %v9052
    %9054 = vmatmul.f32.gmra.mxu0 %v8847
    %v9055 = vpop.f32.mrf.mxu0
    %v9056 = vadd.f32 0.0, %v9055
    %9057 = vmatmul.f32.gmra.mxu0 %v8850
    %v9058 = vpop.f32.mrf.mxu0
    %v9059 = vadd.f32 0.0, %v9058
    %9060 = vmatmul.f32.gmra.mxu0 %v8853
    %v9061 = vpop.f32.mrf.mxu0
    %v9062 = vadd.f32 0.0, %v9061
    %9063 = vmatmul.f32.gmra.mxu0 %v8856
    %v9064 = vpop.f32.mrf.mxu0
    %v9065 = vadd.f32 0.0, %v9064
    %9066 = vmatmul.f32.gmra.mxu0 %v8859
    %v9067 = vpop.f32.mrf.mxu0
    %v9068 = vadd.f32 0.0, %v9067
    %9069 = vmatmul.f32.gmra.mxu0 %v8862
    %v9070 = vpop.f32.mrf.mxu0
    %v9071 = vadd.f32 0.0, %v9070
    %9072 = vmatmul.f32.gmra.mxu0 %v8865
    %v9073 = vpop.f32.mrf.mxu0
    %v9074 = vadd.f32 0.0, %v9073
    %9075 = vmatmul.f32.gmra.mxu0 %v8868
    %v9076 = vpop.f32.mrf.mxu0
    %v9077 = vadd.f32 0.0, %v9076
    %9078 = vmatmul.f32.gmra.mxu0 %v8871
    %v9079 = vpop.f32.mrf.mxu0
    %v9080 = vadd.f32 0.0, %v9079
    %9081 = vmatmul.f32.gmra.mxu0 %v8874
    %v9082 = vpop.f32.mrf.mxu0
    %v9083 = vadd.f32 0.0, %v9082
    %9084 = vmatmul.f32.gmra.mxu0 %v8877
    %v9085 = vpop.f32.mrf.mxu0
    %v9086 = vadd.f32 0.0, %v9085
    %9087 = vmatmul.f32.gmra.mxu0 %v8880
    %v9088 = vpop.f32.mrf.mxu0
    %v9089 = vadd.f32 0.0, %v9088
    %9090 = vmatmul.f32.gmra.mxu0 %v8883
    %v9091 = vpop.f32.mrf.mxu0
    %v9092 = vadd.f32 0.0, %v9091
    %9093 = vmatmul.f32.gmra.mxu0 %v8886
    %v9094 = vpop.f32.mrf.mxu0
    %v9095 = vadd.f32 0.0, %v9094
    %9096 = vmatmul.f32.gmra.mxu0 %v8889
    %v9097 = vpop.f32.mrf.mxu0
    %v9098 = vadd.f32 0.0, %v9097
    %9099 = vmatmul.f32.gmra.mxu0 %v8892
    %v9100 = vpop.f32.mrf.mxu0
    %v9101 = vadd.f32 0.0, %v9100
    %9102 = vmatmul.f32.gmra.mxu0 %v8895
    %v9103 = vpop.f32.mrf.mxu0
    %v9104 = vadd.f32 0.0, %v9103
    %9105 = vmatmul.f32.gmra.mxu0 %v8898
    %v9106 = vpop.f32.mrf.mxu0
    %v9107 = vadd.f32 0.0, %v9106
    %9108 = vmatmul.f32.gmra.mxu0 %v8901
    %v9109 = vpop.f32.mrf.mxu0
    %v9110 = vadd.f32 0.0, %v9109
    %9111 = vmatmul.f32.gmra.mxu0 %v8904
    %v9112 = vpop.f32.mrf.mxu0
    %v9113 = vadd.f32 0.0, %v9112
    %9114 = vmatmul.f32.gmra.mxu0 %v8907
    %v9115 = vpop.f32.mrf.mxu0
    %v9116 = vadd.f32 0.0, %v9115
    %9117 = vmatmul.f32.gmra.mxu0 %v8910
    %v9118 = vpop.f32.mrf.mxu0
    %v9119 = vadd.f32 0.0, %v9118
    %9120 = vmatmul.f32.gmra.mxu0 %v8913
    %v9121 = vpop.f32.mrf.mxu0
    %v9122 = vadd.f32 0.0, %v9121
    %9123 = vmatmul.f32.gmra.mxu0 %v8916
    %v9124 = vpop.f32.mrf.mxu0
    %v9125 = vadd.f32 0.0, %v9124
    %9126 = vmatmul.f32.gmra.mxu0 %v8919
    %v9127 = vpop.f32.mrf.mxu0
    %v9128 = vadd.f32 0.0, %v9127
    %9129 = vmatmul.f32.gmra.mxu0 %v8922
    %v9130 = vpop.f32.mrf.mxu0
    %v9131 = vadd.f32 0.0, %v9130
    %9132 = vmatmul.f32.gmra.mxu0 %v8925
    %v9133 = vpop.f32.mrf.mxu0
    %v9134 = vadd.f32 0.0, %v9133
    %9135 = vmatmul.f32.gmra.mxu0 %v8928
    %v9136 = vpop.f32.mrf.mxu0
    %v9137 = vadd.f32 0.0, %v9136
    %9138 = vmatmul.f32.gmra.mxu0 %v8931
    %v9139 = vpop.f32.mrf.mxu0
    %v9140 = vadd.f32 0.0, %v9139
    %9141 = vmatmul.f32.gmra.mxu0 %v8934
    %v9142 = vpop.f32.mrf.mxu0
    %v9143 = vadd.f32 0.0, %v9142
    %9144 = vmatmul.f32.gmra.mxu0 %v8937
    %v9145 = vpop.f32.mrf.mxu0
    %v9146 = vadd.f32 0.0, %v9145
    %9147 = vmatmul.f32.gmra.mxu0 %v8940
    %v9148 = vpop.f32.mrf.mxu0
    %v9149 = vadd.f32 0.0, %v9148
    %9150 = vmatmul.f32.gmra.mxu0 %v8943
    %v9151 = vpop.f32.mrf.mxu0
    %v9152 = vadd.f32 0.0, %v9151
    %9153 = vmatmul.f32.gmra.mxu0 %v8946
    %v9154 = vpop.f32.mrf.mxu0
    %v9155 = vadd.f32 0.0, %v9154
    %9156 = vmatmul.f32.gmra.mxu0 %v8949
    %v9157 = vpop.f32.mrf.mxu0
    %v9158 = vadd.f32 0.0, %v9157
    %9159 = vmatmul.f32.gmra.mxu0 %v8952
    %v9160 = vpop.f32.mrf.mxu0
    %v9161 = vadd.f32 0.0, %v9160
    %9162 = vmatmul.f32.gmra.mxu0 %v8955
    %v9163 = vpop.f32.mrf.mxu0
    %v9164 = vadd.f32 0.0, %v9163
    %9165 = vmatmul.f32.gmra.mxu0 %v8958
    %v9166 = vpop.f32.mrf.mxu0
    %v9167 = vadd.f32 0.0, %v9166
    %9168 = vmatmul.f32.gmra.mxu0 %v8961
    %v9169 = vpop.f32.mrf.mxu0
    %v9170 = vadd.f32 0.0, %v9169
    %9171 = vmatmul.f32.gmra.mxu0 %v8964
    %v9172 = vpop.f32.mrf.mxu0
    %v9173 = vadd.f32 0.0, %v9172
    %9174 = vmatmul.f32.gmra.mxu0 %v8967
    %v9175 = vpop.f32.mrf.mxu0
    %v9176 = vadd.f32 0.0, %v9175
    %9177 = vmatmul.f32.gmra.mxu0 %v8970
    %v9178 = vpop.f32.mrf.mxu0
    %v9179 = vadd.f32 0.0, %v9178
    %9180 = vmatmul.f32.gmra.mxu0 %v8973
    %v9181 = vpop.f32.mrf.mxu0
    %v9182 = vadd.f32 0.0, %v9181
    %9183 = vmatmul.f32.gmra.mxu0 %v8976
    %v9184 = vpop.f32.mrf.mxu0
    %v9185 = vadd.f32 0.0, %v9184
    %9186 = vmatmul.f32.gmra.mxu0 %v8979
    %v9187 = vpop.f32.mrf.mxu0
    %v9188 = vadd.f32 0.0, %v9187
    %9189 = vmatmul.f32.gmra.mxu0 %v8982
    %v9190 = vpop.f32.mrf.mxu0
    %v9191 = vadd.f32 0.0, %v9190
    %9192 = vmatmul.f32.gmra.mxu0 %v8985
    %v9193 = vpop.f32.mrf.mxu0
    %v9194 = vadd.f32 0.0, %v9193
    %9195 = vmatmul.f32.gmra.mxu0 %v8988
    %v9196 = vpop.f32.mrf.mxu0
    %v9197 = vadd.f32 0.0, %v9196
    %9198 = vdwg.mxu0
    %v9199 = vadd.f32 %v8661, %v9008
    %v9200 = vadd.f32 %v8662, %v9011
    %v9201 = vadd.f32 %v8663, %v9014
    %v9202 = vadd.f32 %v8664, %v9017
    %v9203 = vadd.f32 %v8665, %v9020
    %v9204 = vadd.f32 %v8666, %v9023
    %v9205 = vadd.f32 %v8667, %v9026
    %v9206 = vadd.f32 %v8668, %v9029
    %v9207 = vadd.f32 %v8669, %v9032
    %v9208 = vadd.f32 %v8670, %v9035
    %v9209 = vadd.f32 %v8671, %v9038
    %v9210 = vadd.f32 %v8672, %v9041
    %v9211 = vadd.f32 %v8673, %v9044
    %v9212 = vadd.f32 %v8674, %v9047
    %v9213 = vadd.f32 %v8675, %v9050
    %v9214 = vadd.f32 %v8676, %v9053
    %v9215 = vadd.f32 %v8677, %v9056
    %v9216 = vadd.f32 %v8678, %v9059
    %v9217 = vadd.f32 %v8679, %v9062
    %v9218 = vadd.f32 %v8680, %v9065
    %v9219 = vadd.f32 %v8681, %v9068
    %v9220 = vadd.f32 %v8682, %v9071
    %v9221 = vadd.f32 %v8683, %v9074
    %v9222 = vadd.f32 %v8684, %v9077
    %v9223 = vadd.f32 %v8685, %v9080
    %v9224 = vadd.f32 %v8686, %v9083
    %v9225 = vadd.f32 %v8687, %v9086
    %v9226 = vadd.f32 %v8688, %v9089
    %v9227 = vadd.f32 %v8689, %v9092
    %v9228 = vadd.f32 %v8690, %v9095
    %v9229 = vadd.f32 %v8691, %v9098
    %v9230 = vadd.f32 %v8692, %v9101
    %v9231 = vadd.f32 %v8693, %v9104
    %v9232 = vadd.f32 %v8694, %v9107
    %v9233 = vadd.f32 %v8695, %v9110
    %v9234 = vadd.f32 %v8696, %v9113
    %v9235 = vadd.f32 %v8697, %v9116
    %v9236 = vadd.f32 %v8698, %v9119
    %v9237 = vadd.f32 %v8699, %v9122
    %v9238 = vadd.f32 %v8700, %v9125
    %v9239 = vadd.f32 %v8701, %v9128
    %v9240 = vadd.f32 %v8702, %v9131
    %v9241 = vadd.f32 %v8703, %v9134
    %v9242 = vadd.f32 %v8704, %v9137
    %v9243 = vadd.f32 %v8705, %v9140
    %v9244 = vadd.f32 %v8706, %v9143
    %v9245 = vadd.f32 %v8707, %v9146
    %v9246 = vadd.f32 %v8708, %v9149
    %v9247 = vadd.f32 %v8709, %v9152
    %v9248 = vadd.f32 %v8710, %v9155
    %v9249 = vadd.f32 %v8711, %v9158
    %v9250 = vadd.f32 %v8712, %v9161
    %v9251 = vadd.f32 %v8713, %v9164
    %v9252 = vadd.f32 %v8714, %v9167
    %v9253 = vadd.f32 %v8715, %v9170
    %v9254 = vadd.f32 %v8716, %v9173
    %v9255 = vadd.f32 %v8717, %v9176
    %v9256 = vadd.f32 %v8718, %v9179
    %v9257 = vadd.f32 %v8719, %v9182
    %v9258 = vadd.f32 %v8720, %v9185
    %v9259 = vadd.f32 %v8721, %v9188
    %v9260 = vadd.f32 %v8722, %v9191
    %v9261 = vadd.f32 %v8723, %v9194
    %v9262 = vadd.f32 %v8724, %v9197
    %v9263 = vld [vmem:[%s8186 + $0x2] sm:$0xff]
    %v9264 = vld [vmem:[%s8186 + $0xa] sm:$0xff]
    %v9265 = vld [vmem:[%s8186 + $0x1a] sm:$0xff]
    %v9266 = vld [vmem:[%s8186 + $0x22] sm:$0xff]
    %v9267 = vld [vmem:[%s8186 + $0x32] sm:$0xff]
    %v9268 = vld [vmem:[%s8186 + $0x3a] sm:$0xff]
    %v9269 = vld [vmem:[%s8186 + $0x4a] sm:$0xff]
    %v9270 = vld [vmem:[%s8186 + $0x52] sm:$0xff]
    %v9271 = vld [vmem:[%s8186 + $0x62] sm:$0xff]
    %v9272 = vld [vmem:[%s8186 + $0x6a] sm:$0xff]
    %v9273 = vld [vmem:[%s8186 + $0x7a] sm:$0xff]
    %v9274 = vld [vmem:[%s8186 + $0x82] sm:$0xff]
    %v9275 = vld [vmem:[%s8186 + $0x92] sm:$0xff]
    %v9276 = vld [vmem:[%s8186 + $0x9a] sm:$0xff]
    %v9277 = vld [vmem:[%s8186 + $0xaa] sm:$0xff]
    %v9278 = vld [vmem:[%s8186 + $0xb2] sm:$0xff]
    %v9279 = vld [vmem:[%s8186 + $0xc2] sm:$0xff]
    %v9280 = vld [vmem:[%s8186 + $0xca] sm:$0xff]
    %v9281 = vld [vmem:[%s8186 + $0xda] sm:$0xff]
    %v9282 = vld [vmem:[%s8186 + $0xe2] sm:$0xff]
    %v9283 = vld [vmem:[%s8186 + $0xf2] sm:$0xff]
    %v9284 = vld [vmem:[%s8186 + $0xfa] sm:$0xff]
    %v9285 = vld [vmem:[%s8186 + $0x10a] sm:$0xff]
    %v9286 = vld [vmem:[%s8186 + $0x112] sm:$0xff]
    %v9287 = vld [vmem:[%s8186 + $0x122] sm:$0xff]
    %v9288 = vld [vmem:[%s8186 + $0x12a] sm:$0xff]
    %v9289 = vld [vmem:[%s8186 + $0x13a] sm:$0xff]
    %v9290 = vld [vmem:[%s8186 + $0x142] sm:$0xff]
    %v9291 = vld [vmem:[%s8186 + $0x152] sm:$0xff]
    %v9292 = vld [vmem:[%s8186 + $0x15a] sm:$0xff]
    %v9293 = vld [vmem:[%s8186 + $0x16a] sm:$0xff]
    %v9294 = vld [vmem:[%s8186 + $0x172] sm:$0xff]
    %v9295 = vld [vmem:[%s8186 + $0x1b2] sm:$0xff]
    %v9296 = vld [vmem:[%s8186 + $0x1ba] sm:$0xff]
    %v9297 = vld [vmem:[%s8186 + $0x1ca] sm:$0xff]
    %v9298 = vld [vmem:[%s8186 + $0x1d2] sm:$0xff]
    %v9299 = vld [vmem:[%s8186 + $0x1e2] sm:$0xff]
    %v9300 = vld [vmem:[%s8186 + $0x1ea] sm:$0xff]
    %v9301 = vld [vmem:[%s8186 + $0x1fa] sm:$0xff]
    %v9302 = vld [vmem:[%s8186 + $0x202] sm:$0xff]
    %v9303 = vld [vmem:[%s8186 + $0x212] sm:$0xff]
    %v9304 = vld [vmem:[%s8186 + $0x21a] sm:$0xff]
    %v9305 = vld [vmem:[%s8186 + $0x22a] sm:$0xff]
    %v9306 = vld [vmem:[%s8186 + $0x232] sm:$0xff]
    %v9307 = vld [vmem:[%s8186 + $0x242] sm:$0xff]
    %v9308 = vld [vmem:[%s8186 + $0x24a] sm:$0xff]
    %v9309 = vld [vmem:[%s8186 + $0x25a] sm:$0xff]
    %v9310 = vld [vmem:[%s8186 + $0x262] sm:$0xff]
    %v9311 = vld [vmem:[%s8186 + $0x272] sm:$0xff]
    %v9312 = vld [vmem:[%s8186 + $0x27a] sm:$0xff]
    %v9313 = vld [vmem:[%s8186 + $0x28a] sm:$0xff]
    %v9314 = vld [vmem:[%s8186 + $0x292] sm:$0xff]
    %v9315 = vld [vmem:[%s8186 + $0x2a2] sm:$0xff]
    %v9316 = vld [vmem:[%s8186 + $0x2aa] sm:$0xff]
    %v9317 = vld [vmem:[%s8186 + $0x2ba] sm:$0xff]
    %v9318 = vld [vmem:[%s8186 + $0x2c2] sm:$0xff]
    %v9319 = vld [vmem:[%s8186 + $0x2d2] sm:$0xff]
    %v9320 = vld [vmem:[%s8186 + $0x2da] sm:$0xff]
    %v9321 = vld [vmem:[%s8186 + $0x2ea] sm:$0xff]
    %v9322 = vld [vmem:[%s8186 + $0x2f2] sm:$0xff]
    %v9323 = vld [vmem:[%s8186 + $0x302] sm:$0xff]
    %v9324 = vld [vmem:[%s8186 + $0x30a] sm:$0xff]
    %v9325 = vld [vmem:[%s8186 + $0x31a] sm:$0xff]
    %v9326 = vld [vmem:[%s8186 + $0x322] sm:$0xff]
    %s9327 = scalar_lea.vmem %s3, 512
    %v9328 = vld [vmem:[%s9327] sm:$0xff]
    %v9329 = vld [vmem:[%s9327 + $0x8] sm:$0xff]
    %v9330 = vld [vmem:[%s9327 + $0x10] sm:$0xff]
    %v9331 = vld [vmem:[%s9327 + $0x18] sm:$0xff]
    %v9332 = vld [vmem:[%s9327 + $0x20] sm:$0xff]
    %v9333 = vld [vmem:[%s9327 + $0x28] sm:$0xff]
    %v9334 = vld [vmem:[%s9327 + $0x30] sm:$0xff]
    %v9335 = vld [vmem:[%s9327 + $0x38] sm:$0xff]
    %v9337 = vsel %vm4912, %v9263, 0
    %v9340 = vsel %vm4912, %v9264, 0
    %v9343 = vsel %vm4912, %v9265, 0
    %v9346 = vsel %vm4912, %v9266, 0
    %v9349 = vsel %vm4912, %v9267, 0
    %v9352 = vsel %vm4912, %v9268, 0
    %v9355 = vsel %vm4912, %v9269, 0
    %v9358 = vsel %vm4912, %v9270, 0
    %v9361 = vsel %vm4912, %v9271, 0
    %v9364 = vsel %vm4912, %v9272, 0
    %v9367 = vsel %vm4912, %v9273, 0
    %v9370 = vsel %vm4912, %v9274, 0
    %v9373 = vsel %vm4912, %v9275, 0
    %v9376 = vsel %vm4912, %v9276, 0
    %v9379 = vsel %vm4912, %v9277, 0
    %v9382 = vsel %vm4912, %v9278, 0
    %v9385 = vsel %vm4912, %v9279, 0
    %v9388 = vsel %vm4912, %v9280, 0
    %v9391 = vsel %vm4912, %v9281, 0
    %v9394 = vsel %vm4912, %v9282, 0
    %v9397 = vsel %vm4912, %v9283, 0
    %v9400 = vsel %vm4912, %v9284, 0
    %v9403 = vsel %vm4912, %v9285, 0
    %v9406 = vsel %vm4912, %v9286, 0
    %v9409 = vsel %vm4912, %v9287, 0
    %v9412 = vsel %vm4912, %v9288, 0
    %v9415 = vsel %vm4912, %v9289, 0
    %v9418 = vsel %vm4912, %v9290, 0
    %v9421 = vsel %vm4912, %v9291, 0
    %v9424 = vsel %vm4912, %v9292, 0
    %v9427 = vsel %vm4912, %v9293, 0
    %v9430 = vsel %vm4912, %v9294, 0
    %v9433 = vsel %vm4912, %v9295, 0
    %v9436 = vsel %vm4912, %v9296, 0
    %v9439 = vsel %vm4912, %v9297, 0
    %v9442 = vsel %vm4912, %v9298, 0
    %v9445 = vsel %vm4912, %v9299, 0
    %v9448 = vsel %vm4912, %v9300, 0
    %v9451 = vsel %vm4912, %v9301, 0
    %v9454 = vsel %vm4912, %v9302, 0
    %v9457 = vsel %vm4912, %v9303, 0
    %v9460 = vsel %vm4912, %v9304, 0
    %v9463 = vsel %vm4912, %v9305, 0
    %v9466 = vsel %vm4912, %v9306, 0
    %v9469 = vsel %vm4912, %v9307, 0
    %v9472 = vsel %vm4912, %v9308, 0
    %v9475 = vsel %vm4912, %v9309, 0
    %v9478 = vsel %vm4912, %v9310, 0
    %v9481 = vsel %vm4912, %v9311, 0
    %v9484 = vsel %vm4912, %v9312, 0
    %v9487 = vsel %vm4912, %v9313, 0
    %v9490 = vsel %vm4912, %v9314, 0
    %v9493 = vsel %vm4912, %v9315, 0
    %v9496 = vsel %vm4912, %v9316, 0
    %v9499 = vsel %vm4912, %v9317, 0
    %v9502 = vsel %vm4912, %v9318, 0
    %v9505 = vsel %vm4912, %v9319, 0
    %v9508 = vsel %vm4912, %v9320, 0
    %v9511 = vsel %vm4912, %v9321, 0
    %v9514 = vsel %vm4912, %v9322, 0
    %v9517 = vsel %vm4912, %v9323, 0
    %v9520 = vsel %vm4912, %v9324, 0
    %v9523 = vsel %vm4912, %v9325, 0
    %v9526 = vsel %vm4912, %v9326, 0
    %9528 = vmatpush.msra.mxu0 0.0
    %9529 = vmatpush.msra.mxu0 0.0
    %9530 = vmatpush.msra.mxu0 0.0
    %9531 = vmatpush.msra.mxu0 0.0
    %9532 = vmatpush.msra.mxu0 0.0
    %9533 = vmatpush.msra.mxu0 0.0
    %9534 = vmatpush.msra.mxu0 0.0
    %9535 = vmatpush.msra.mxu0 0.0
    %9536 = vmatpush.msra.mxu0 %v9335
    %9537 = vmatpush.msra.mxu0 %v9334
    %9538 = vmatpush.msra.mxu0 %v9333
    %9539 = vmatpush.msra.mxu0 %v9332
    %9540 = vmatpush.msra.mxu0 %v9331
    %9541 = vmatpush.msra.mxu0 %v9330
    %9542 = vmatpush.msra.mxu0 %v9329
    %9543 = vmatpush.msra.mxu0 %v9328
    %9544 = vmatmul.f32.gmra.mxu0 %v9337
    %v9545 = vpop.f32.mrf.mxu0
    %v9546 = vadd.f32 0.0, %v9545
    %9547 = vmatmul.f32.gmra.mxu0 %v9340
    %v9548 = vpop.f32.mrf.mxu0
    %v9549 = vadd.f32 0.0, %v9548
    %9550 = vmatmul.f32.gmra.mxu0 %v9343
    %v9551 = vpop.f32.mrf.mxu0
    %v9552 = vadd.f32 0.0, %v9551
    %9553 = vmatmul.f32.gmra.mxu0 %v9346
    %v9554 = vpop.f32.mrf.mxu0
    %v9555 = vadd.f32 0.0, %v9554
    %9556 = vmatmul.f32.gmra.mxu0 %v9349
    %v9557 = vpop.f32.mrf.mxu0
    %v9558 = vadd.f32 0.0, %v9557
    %9559 = vmatmul.f32.gmra.mxu0 %v9352
    %v9560 = vpop.f32.mrf.mxu0
    %v9561 = vadd.f32 0.0, %v9560
    %9562 = vmatmul.f32.gmra.mxu0 %v9355
    %v9563 = vpop.f32.mrf.mxu0
    %v9564 = vadd.f32 0.0, %v9563
    %9565 = vmatmul.f32.gmra.mxu0 %v9358
    %v9566 = vpop.f32.mrf.mxu0
    %v9567 = vadd.f32 0.0, %v9566
    %9568 = vmatmul.f32.gmra.mxu0 %v9361
    %v9569 = vpop.f32.mrf.mxu0
    %v9570 = vadd.f32 0.0, %v9569
    %9571 = vmatmul.f32.gmra.mxu0 %v9364
    %v9572 = vpop.f32.mrf.mxu0
    %v9573 = vadd.f32 0.0, %v9572
    %9574 = vmatmul.f32.gmra.mxu0 %v9367
    %v9575 = vpop.f32.mrf.mxu0
    %v9576 = vadd.f32 0.0, %v9575
    %9577 = vmatmul.f32.gmra.mxu0 %v9370
    %v9578 = vpop.f32.mrf.mxu0
    %v9579 = vadd.f32 0.0, %v9578
    %9580 = vmatmul.f32.gmra.mxu0 %v9373
    %v9581 = vpop.f32.mrf.mxu0
    %v9582 = vadd.f32 0.0, %v9581
    %9583 = vmatmul.f32.gmra.mxu0 %v9376
    %v9584 = vpop.f32.mrf.mxu0
    %v9585 = vadd.f32 0.0, %v9584
    %9586 = vmatmul.f32.gmra.mxu0 %v9379
    %v9587 = vpop.f32.mrf.mxu0
    %v9588 = vadd.f32 0.0, %v9587
    %9589 = vmatmul.f32.gmra.mxu0 %v9382
    %v9590 = vpop.f32.mrf.mxu0
    %v9591 = vadd.f32 0.0, %v9590
    %9592 = vmatmul.f32.gmra.mxu0 %v9385
    %v9593 = vpop.f32.mrf.mxu0
    %v9594 = vadd.f32 0.0, %v9593
    %9595 = vmatmul.f32.gmra.mxu0 %v9388
    %v9596 = vpop.f32.mrf.mxu0
    %v9597 = vadd.f32 0.0, %v9596
    %9598 = vmatmul.f32.gmra.mxu0 %v9391
    %v9599 = vpop.f32.mrf.mxu0
    %v9600 = vadd.f32 0.0, %v9599
    %9601 = vmatmul.f32.gmra.mxu0 %v9394
    %v9602 = vpop.f32.mrf.mxu0
    %v9603 = vadd.f32 0.0, %v9602
    %9604 = vmatmul.f32.gmra.mxu0 %v9397
    %v9605 = vpop.f32.mrf.mxu0
    %v9606 = vadd.f32 0.0, %v9605
    %9607 = vmatmul.f32.gmra.mxu0 %v9400
    %v9608 = vpop.f32.mrf.mxu0
    %v9609 = vadd.f32 0.0, %v9608
    %9610 = vmatmul.f32.gmra.mxu0 %v9403
    %v9611 = vpop.f32.mrf.mxu0
    %v9612 = vadd.f32 0.0, %v9611
    %9613 = vmatmul.f32.gmra.mxu0 %v9406
    %v9614 = vpop.f32.mrf.mxu0
    %v9615 = vadd.f32 0.0, %v9614
    %9616 = vmatmul.f32.gmra.mxu0 %v9409
    %v9617 = vpop.f32.mrf.mxu0
    %v9618 = vadd.f32 0.0, %v9617
    %9619 = vmatmul.f32.gmra.mxu0 %v9412
    %v9620 = vpop.f32.mrf.mxu0
    %v9621 = vadd.f32 0.0, %v9620
    %9622 = vmatmul.f32.gmra.mxu0 %v9415
    %v9623 = vpop.f32.mrf.mxu0
    %v9624 = vadd.f32 0.0, %v9623
    %9625 = vmatmul.f32.gmra.mxu0 %v9418
    %v9626 = vpop.f32.mrf.mxu0
    %v9627 = vadd.f32 0.0, %v9626
    %9628 = vmatmul.f32.gmra.mxu0 %v9421
    %v9629 = vpop.f32.mrf.mxu0
    %v9630 = vadd.f32 0.0, %v9629
    %9631 = vmatmul.f32.gmra.mxu0 %v9424
    %v9632 = vpop.f32.mrf.mxu0
    %v9633 = vadd.f32 0.0, %v9632
    %9634 = vmatmul.f32.gmra.mxu0 %v9427
    %v9635 = vpop.f32.mrf.mxu0
    %v9636 = vadd.f32 0.0, %v9635
    %9637 = vmatmul.f32.gmra.mxu0 %v9430
    %v9638 = vpop.f32.mrf.mxu0
    %v9639 = vadd.f32 0.0, %v9638
    %9640 = vmatmul.f32.gmra.mxu0 %v9433
    %v9641 = vpop.f32.mrf.mxu0
    %v9642 = vadd.f32 0.0, %v9641
    %9643 = vmatmul.f32.gmra.mxu0 %v9436
    %v9644 = vpop.f32.mrf.mxu0
    %v9645 = vadd.f32 0.0, %v9644
    %9646 = vmatmul.f32.gmra.mxu0 %v9439
    %v9647 = vpop.f32.mrf.mxu0
    %v9648 = vadd.f32 0.0, %v9647
    %9649 = vmatmul.f32.gmra.mxu0 %v9442
    %v9650 = vpop.f32.mrf.mxu0
    %v9651 = vadd.f32 0.0, %v9650
    %9652 = vmatmul.f32.gmra.mxu0 %v9445
    %v9653 = vpop.f32.mrf.mxu0
    %v9654 = vadd.f32 0.0, %v9653
    %9655 = vmatmul.f32.gmra.mxu0 %v9448
    %v9656 = vpop.f32.mrf.mxu0
    %v9657 = vadd.f32 0.0, %v9656
    %9658 = vmatmul.f32.gmra.mxu0 %v9451
    %v9659 = vpop.f32.mrf.mxu0
    %v9660 = vadd.f32 0.0, %v9659
    %9661 = vmatmul.f32.gmra.mxu0 %v9454
    %v9662 = vpop.f32.mrf.mxu0
    %v9663 = vadd.f32 0.0, %v9662
    %9664 = vmatmul.f32.gmra.mxu0 %v9457
    %v9665 = vpop.f32.mrf.mxu0
    %v9666 = vadd.f32 0.0, %v9665
    %9667 = vmatmul.f32.gmra.mxu0 %v9460
    %v9668 = vpop.f32.mrf.mxu0
    %v9669 = vadd.f32 0.0, %v9668
    %9670 = vmatmul.f32.gmra.mxu0 %v9463
    %v9671 = vpop.f32.mrf.mxu0
    %v9672 = vadd.f32 0.0, %v9671
    %9673 = vmatmul.f32.gmra.mxu0 %v9466
    %v9674 = vpop.f32.mrf.mxu0
    %v9675 = vadd.f32 0.0, %v9674
    %9676 = vmatmul.f32.gmra.mxu0 %v9469
    %v9677 = vpop.f32.mrf.mxu0
    %v9678 = vadd.f32 0.0, %v9677
    %9679 = vmatmul.f32.gmra.mxu0 %v9472
    %v9680 = vpop.f32.mrf.mxu0
    %v9681 = vadd.f32 0.0, %v9680
    %9682 = vmatmul.f32.gmra.mxu0 %v9475
    %v9683 = vpop.f32.mrf.mxu0
    %v9684 = vadd.f32 0.0, %v9683
    %9685 = vmatmul.f32.gmra.mxu0 %v9478
    %v9686 = vpop.f32.mrf.mxu0
    %v9687 = vadd.f32 0.0, %v9686
    %9688 = vmatmul.f32.gmra.mxu0 %v9481
    %v9689 = vpop.f32.mrf.mxu0
    %v9690 = vadd.f32 0.0, %v9689
    %9691 = vmatmul.f32.gmra.mxu0 %v9484
    %v9692 = vpop.f32.mrf.mxu0
    %v9693 = vadd.f32 0.0, %v9692
    %9694 = vmatmul.f32.gmra.mxu0 %v9487
    %v9695 = vpop.f32.mrf.mxu0
    %v9696 = vadd.f32 0.0, %v9695
    %9697 = vmatmul.f32.gmra.mxu0 %v9490
    %v9698 = vpop.f32.mrf.mxu0
    %v9699 = vadd.f32 0.0, %v9698
    %9700 = vmatmul.f32.gmra.mxu0 %v9493
    %v9701 = vpop.f32.mrf.mxu0
    %v9702 = vadd.f32 0.0, %v9701
    %9703 = vmatmul.f32.gmra.mxu0 %v9496
    %v9704 = vpop.f32.mrf.mxu0
    %v9705 = vadd.f32 0.0, %v9704
    %9706 = vmatmul.f32.gmra.mxu0 %v9499
    %v9707 = vpop.f32.mrf.mxu0
    %v9708 = vadd.f32 0.0, %v9707
    %9709 = vmatmul.f32.gmra.mxu0 %v9502
    %v9710 = vpop.f32.mrf.mxu0
    %v9711 = vadd.f32 0.0, %v9710
    %9712 = vmatmul.f32.gmra.mxu0 %v9505
    %v9713 = vpop.f32.mrf.mxu0
    %v9714 = vadd.f32 0.0, %v9713
    %9715 = vmatmul.f32.gmra.mxu0 %v9508
    %v9716 = vpop.f32.mrf.mxu0
    %v9717 = vadd.f32 0.0, %v9716
    %9718 = vmatmul.f32.gmra.mxu0 %v9511
    %v9719 = vpop.f32.mrf.mxu0
    %v9720 = vadd.f32 0.0, %v9719
    %9721 = vmatmul.f32.gmra.mxu0 %v9514
    %v9722 = vpop.f32.mrf.mxu0
    %v9723 = vadd.f32 0.0, %v9722
    %9724 = vmatmul.f32.gmra.mxu0 %v9517
    %v9725 = vpop.f32.mrf.mxu0
    %v9726 = vadd.f32 0.0, %v9725
    %9727 = vmatmul.f32.gmra.mxu0 %v9520
    %v9728 = vpop.f32.mrf.mxu0
    %v9729 = vadd.f32 0.0, %v9728
    %9730 = vmatmul.f32.gmra.mxu0 %v9523
    %v9731 = vpop.f32.mrf.mxu0
    %v9732 = vadd.f32 0.0, %v9731
    %9733 = vmatmul.f32.gmra.mxu0 %v9526
    %v9734 = vpop.f32.mrf.mxu0
    %v9735 = vadd.f32 0.0, %v9734
    %9736 = vdwg.mxu0
    %v9737 = vadd.f32 %v9199, %v9546
    %v9738 = vadd.f32 %v9200, %v9549
    %v9739 = vadd.f32 %v9201, %v9552
    %v9740 = vadd.f32 %v9202, %v9555
    %v9741 = vadd.f32 %v9203, %v9558
    %v9742 = vadd.f32 %v9204, %v9561
    %v9743 = vadd.f32 %v9205, %v9564
    %v9744 = vadd.f32 %v9206, %v9567
    %v9745 = vadd.f32 %v9207, %v9570
    %v9746 = vadd.f32 %v9208, %v9573
    %v9747 = vadd.f32 %v9209, %v9576
    %v9748 = vadd.f32 %v9210, %v9579
    %v9749 = vadd.f32 %v9211, %v9582
    %v9750 = vadd.f32 %v9212, %v9585
    %v9751 = vadd.f32 %v9213, %v9588
    %v9752 = vadd.f32 %v9214, %v9591
    %v9753 = vadd.f32 %v9215, %v9594
    %v9754 = vadd.f32 %v9216, %v9597
    %v9755 = vadd.f32 %v9217, %v9600
    %v9756 = vadd.f32 %v9218, %v9603
    %v9757 = vadd.f32 %v9219, %v9606
    %v9758 = vadd.f32 %v9220, %v9609
    %v9759 = vadd.f32 %v9221, %v9612
    %v9760 = vadd.f32 %v9222, %v9615
    %v9761 = vadd.f32 %v9223, %v9618
    %v9762 = vadd.f32 %v9224, %v9621
    %v9763 = vadd.f32 %v9225, %v9624
    %v9764 = vadd.f32 %v9226, %v9627
    %v9765 = vadd.f32 %v9227, %v9630
    %v9766 = vadd.f32 %v9228, %v9633
    %v9767 = vadd.f32 %v9229, %v9636
    %v9768 = vadd.f32 %v9230, %v9639
    %v9769 = vadd.f32 %v9231, %v9642
    %v9770 = vadd.f32 %v9232, %v9645
    %v9771 = vadd.f32 %v9233, %v9648
    %v9772 = vadd.f32 %v9234, %v9651
    %v9773 = vadd.f32 %v9235, %v9654
    %v9774 = vadd.f32 %v9236, %v9657
    %v9775 = vadd.f32 %v9237, %v9660
    %v9776 = vadd.f32 %v9238, %v9663
    %v9777 = vadd.f32 %v9239, %v9666
    %v9778 = vadd.f32 %v9240, %v9669
    %v9779 = vadd.f32 %v9241, %v9672
    %v9780 = vadd.f32 %v9242, %v9675
    %v9781 = vadd.f32 %v9243, %v9678
    %v9782 = vadd.f32 %v9244, %v9681
    %v9783 = vadd.f32 %v9245, %v9684
    %v9784 = vadd.f32 %v9246, %v9687
    %v9785 = vadd.f32 %v9247, %v9690
    %v9786 = vadd.f32 %v9248, %v9693
    %v9787 = vadd.f32 %v9249, %v9696
    %v9788 = vadd.f32 %v9250, %v9699
    %v9789 = vadd.f32 %v9251, %v9702
    %v9790 = vadd.f32 %v9252, %v9705
    %v9791 = vadd.f32 %v9253, %v9708
    %v9792 = vadd.f32 %v9254, %v9711
    %v9793 = vadd.f32 %v9255, %v9714
    %v9794 = vadd.f32 %v9256, %v9717
    %v9795 = vadd.f32 %v9257, %v9720
    %v9796 = vadd.f32 %v9258, %v9723
    %v9797 = vadd.f32 %v9259, %v9726
    %v9798 = vadd.f32 %v9260, %v9729
    %v9799 = vadd.f32 %v9261, %v9732
    %v9800 = vadd.f32 %v9262, %v9735
    %v9801 = vld [vmem:[%s4] sm:$0x1]
    %v9803 = vperm.slane %v9801, 0
    %v9805 = vadd.f32 %v9737, %v9803
    %v9806 = vadd.f32 %v9738, %v9803
    %v9807 = vadd.f32 %v9739, %v9803
    %v9808 = vadd.f32 %v9740, %v9803
    %v9809 = vadd.f32 %v9741, %v9803
    %v9810 = vadd.f32 %v9742, %v9803
    %v9811 = vadd.f32 %v9743, %v9803
    %v9812 = vadd.f32 %v9744, %v9803
    %v9813 = vadd.f32 %v9745, %v9803
    %v9814 = vadd.f32 %v9746, %v9803
    %v9815 = vadd.f32 %v9747, %v9803
    %v9816 = vadd.f32 %v9748, %v9803
    %v9817 = vadd.f32 %v9749, %v9803
    %v9818 = vadd.f32 %v9750, %v9803
    %v9819 = vadd.f32 %v9751, %v9803
    %v9820 = vadd.f32 %v9752, %v9803
    %v9821 = vadd.f32 %v9753, %v9803
    %v9822 = vadd.f32 %v9754, %v9803
    %v9823 = vadd.f32 %v9755, %v9803
    %v9824 = vadd.f32 %v9756, %v9803
    %v9825 = vadd.f32 %v9757, %v9803
    %v9826 = vadd.f32 %v9758, %v9803
    %v9827 = vadd.f32 %v9759, %v9803
    %v9828 = vadd.f32 %v9760, %v9803
    %v9829 = vadd.f32 %v9761, %v9803
    %v9830 = vadd.f32 %v9762, %v9803
    %v9831 = vadd.f32 %v9763, %v9803
    %v9832 = vadd.f32 %v9764, %v9803
    %v9833 = vadd.f32 %v9765, %v9803
    %v9834 = vadd.f32 %v9766, %v9803
    %v9835 = vadd.f32 %v9767, %v9803
    %v9836 = vadd.f32 %v9768, %v9803
    %v9837 = vadd.f32 %v9769, %v9803
    %v9838 = vadd.f32 %v9770, %v9803
    %v9839 = vadd.f32 %v9771, %v9803
    %v9840 = vadd.f32 %v9772, %v9803
    %v9841 = vadd.f32 %v9773, %v9803
    %v9842 = vadd.f32 %v9774, %v9803
    %v9843 = vadd.f32 %v9775, %v9803
    %v9844 = vadd.f32 %v9776, %v9803
    %v9845 = vadd.f32 %v9777, %v9803
    %v9846 = vadd.f32 %v9778, %v9803
    %v9847 = vadd.f32 %v9779, %v9803
    %v9848 = vadd.f32 %v9780, %v9803
    %v9849 = vadd.f32 %v9781, %v9803
    %v9850 = vadd.f32 %v9782, %v9803
    %v9851 = vadd.f32 %v9783, %v9803
    %v9852 = vadd.f32 %v9784, %v9803
    %v9853 = vadd.f32 %v9785, %v9803
    %v9854 = vadd.f32 %v9786, %v9803
    %v9855 = vadd.f32 %v9787, %v9803
    %v9856 = vadd.f32 %v9788, %v9803
    %v9857 = vadd.f32 %v9789, %v9803
    %v9858 = vadd.f32 %v9790, %v9803
    %v9859 = vadd.f32 %v9791, %v9803
    %v9860 = vadd.f32 %v9792, %v9803
    %v9861 = vadd.f32 %v9793, %v9803
    %v9862 = vadd.f32 %v9794, %v9803
    %v9863 = vadd.f32 %v9795, %v9803
    %v9864 = vadd.f32 %v9796, %v9803
    %v9865 = vadd.f32 %v9797, %v9803
    %v9866 = vadd.f32 %v9798, %v9803
    %v9867 = vadd.f32 %v9799, %v9803
    %v9868 = vadd.f32 %v9800, %v9803
    %v9869 = vmax.f32 %v9805, 0.0
    %v9870 = vmax.f32 %v9806, 0.0
    %v9871 = vmax.f32 %v9807, 0.0
    %v9872 = vmax.f32 %v9808, 0.0
    %v9873 = vmax.f32 %v9809, 0.0
    %v9874 = vmax.f32 %v9810, 0.0
    %v9875 = vmax.f32 %v9811, 0.0
    %v9876 = vmax.f32 %v9812, 0.0
    %v9877 = vmax.f32 %v9813, 0.0
    %v9878 = vmax.f32 %v9814, 0.0
    %v9879 = vmax.f32 %v9815, 0.0
    %v9880 = vmax.f32 %v9816, 0.0
    %v9881 = vmax.f32 %v9817, 0.0
    %v9882 = vmax.f32 %v9818, 0.0
    %v9883 = vmax.f32 %v9819, 0.0
    %v9884 = vmax.f32 %v9820, 0.0
    %v9885 = vmax.f32 %v9821, 0.0
    %v9886 = vmax.f32 %v9822, 0.0
    %v9887 = vmax.f32 %v9823, 0.0
    %v9888 = vmax.f32 %v9824, 0.0
    %v9889 = vmax.f32 %v9825, 0.0
    %v9890 = vmax.f32 %v9826, 0.0
    %v9891 = vmax.f32 %v9827, 0.0
    %v9892 = vmax.f32 %v9828, 0.0
    %v9893 = vmax.f32 %v9829, 0.0
    %v9894 = vmax.f32 %v9830, 0.0
    %v9895 = vmax.f32 %v9831, 0.0
    %v9896 = vmax.f32 %v9832, 0.0
    %v9897 = vmax.f32 %v9833, 0.0
    %v9898 = vmax.f32 %v9834, 0.0
    %v9899 = vmax.f32 %v9835, 0.0
    %v9900 = vmax.f32 %v9836, 0.0
    %v9901 = vmax.f32 %v9837, 0.0
    %v9902 = vmax.f32 %v9838, 0.0
    %v9903 = vmax.f32 %v9839, 0.0
    %v9904 = vmax.f32 %v9840, 0.0
    %v9905 = vmax.f32 %v9841, 0.0
    %v9906 = vmax.f32 %v9842, 0.0
    %v9907 = vmax.f32 %v9843, 0.0
    %v9908 = vmax.f32 %v9844, 0.0
    %v9909 = vmax.f32 %v9845, 0.0
    %v9910 = vmax.f32 %v9846, 0.0
    %v9911 = vmax.f32 %v9847, 0.0
    %v9912 = vmax.f32 %v9848, 0.0
    %v9913 = vmax.f32 %v9849, 0.0
    %v9914 = vmax.f32 %v9850, 0.0
    %v9915 = vmax.f32 %v9851, 0.0
    %v9916 = vmax.f32 %v9852, 0.0
    %v9917 = vmax.f32 %v9853, 0.0
    %v9918 = vmax.f32 %v9854, 0.0
    %v9919 = vmax.f32 %v9855, 0.0
    %v9920 = vmax.f32 %v9856, 0.0
    %v9921 = vmax.f32 %v9857, 0.0
    %v9922 = vmax.f32 %v9858, 0.0
    %v9923 = vmax.f32 %v9859, 0.0
    %v9924 = vmax.f32 %v9860, 0.0
    %v9925 = vmax.f32 %v9861, 0.0
    %v9926 = vmax.f32 %v9862, 0.0
    %v9927 = vmax.f32 %v9863, 0.0
    %v9928 = vmax.f32 %v9864, 0.0
    %v9929 = vmax.f32 %v9865, 0.0
    %v9930 = vmax.f32 %v9866, 0.0
    %v9931 = vmax.f32 %v9867, 0.0
    %v9932 = vmax.f32 %v9868, 0.0
    %v9933 = vld [vmem:[%s5] sm:$0xff]
    %v9934 = vld [vmem:[%s5 + $0x8] sm:$0xff]
    %v9935 = vld [vmem:[%s5 + $0x10] sm:$0xff]
    %v9936 = vld [vmem:[%s5 + $0x18] sm:$0xff]
    %v9937 = vld [vmem:[%s5 + $0x20] sm:$0xff]
    %v9938 = vld [vmem:[%s5 + $0x28] sm:$0xff]
    %v9939 = vld [vmem:[%s5 + $0x30] sm:$0xff]
    %v9940 = vld [vmem:[%s5 + $0x38] sm:$0xff]
    %v9941 = vld [vmem:[%s6] sm:$0x1]
    %v9943 = vperm.slane %v9941, 0
    %v9946 = vsel %vm4912, %v9869, 0
    %v9949 = vsel %vm4912, %v9870, 0
    %v9952 = vsel %vm4912, %v9871, 0
    %v9955 = vsel %vm4912, %v9872, 0
    %v9958 = vsel %vm4912, %v9873, 0
    %v9961 = vsel %vm4912, %v9874, 0
    %v9964 = vsel %vm4912, %v9875, 0
    %v9967 = vsel %vm4912, %v9876, 0
    %v9970 = vsel %vm4912, %v9877, 0
    %v9973 = vsel %vm4912, %v9878, 0
    %v9976 = vsel %vm4912, %v9879, 0
    %v9979 = vsel %vm4912, %v9880, 0
    %v9982 = vsel %vm4912, %v9881, 0
    %v9985 = vsel %vm4912, %v9882, 0
    %v9988 = vsel %vm4912, %v9883, 0
    %v9991 = vsel %vm4912, %v9884, 0
    %v9994 = vsel %vm4912, %v9885, 0
    %v9997 = vsel %vm4912, %v9886, 0
    %v10000 = vsel %vm4912, %v9887, 0
    %v10003 = vsel %vm4912, %v9888, 0
    %v10006 = vsel %vm4912, %v9889, 0
    %v10009 = vsel %vm4912, %v9890, 0
    %v10012 = vsel %vm4912, %v9891, 0
    %v10015 = vsel %vm4912, %v9892, 0
    %v10018 = vsel %vm4912, %v9893, 0
    %v10021 = vsel %vm4912, %v9894, 0
    %v10024 = vsel %vm4912, %v9895, 0
    %v10027 = vsel %vm4912, %v9896, 0
    %v10030 = vsel %vm4912, %v9897, 0
    %v10033 = vsel %vm4912, %v9898, 0
    %v10036 = vsel %vm4912, %v9899, 0
    %v10039 = vsel %vm4912, %v9900, 0
    %v10042 = vsel %vm4912, %v9901, 0
    %v10045 = vsel %vm4912, %v9902, 0
    %v10048 = vsel %vm4912, %v9903, 0
    %v10051 = vsel %vm4912, %v9904, 0
    %v10054 = vsel %vm4912, %v9905, 0
    %v10057 = vsel %vm4912, %v9906, 0
    %v10060 = vsel %vm4912, %v9907, 0
    %v10063 = vsel %vm4912, %v9908, 0
    %v10066 = vsel %vm4912, %v9909, 0
    %v10069 = vsel %vm4912, %v9910, 0
    %v10072 = vsel %vm4912, %v9911, 0
    %v10075 = vsel %vm4912, %v9912, 0
    %v10078 = vsel %vm4912, %v9913, 0
    %v10081 = vsel %vm4912, %v9914, 0
    %v10084 = vsel %vm4912, %v9915, 0
    %v10087 = vsel %vm4912, %v9916, 0
    %v10090 = vsel %vm4912, %v9917, 0
    %v10093 = vsel %vm4912, %v9918, 0
    %v10096 = vsel %vm4912, %v9919, 0
    %v10099 = vsel %vm4912, %v9920, 0
    %v10102 = vsel %vm4912, %v9921, 0
    %v10105 = vsel %vm4912, %v9922, 0
    %v10108 = vsel %vm4912, %v9923, 0
    %v10111 = vsel %vm4912, %v9924, 0
    %v10114 = vsel %vm4912, %v9925, 0
    %v10117 = vsel %vm4912, %v9926, 0
    %v10120 = vsel %vm4912, %v9927, 0
    %v10123 = vsel %vm4912, %v9928, 0
    %v10126 = vsel %vm4912, %v9929, 0
    %v10129 = vsel %vm4912, %v9930, 0
    %v10132 = vsel %vm4912, %v9931, 0
    %v10135 = vsel %vm4912, %v9932, 0
    %10137 = vmatpush.msra.mxu0 0.0
    %10138 = vmatpush.msra.mxu0 0.0
    %10139 = vmatpush.msra.mxu0 0.0
    %10140 = vmatpush.msra.mxu0 0.0
    %10141 = vmatpush.msra.mxu0 0.0
    %10142 = vmatpush.msra.mxu0 0.0
    %10143 = vmatpush.msra.mxu0 0.0
    %10144 = vmatpush.msra.mxu0 0.0
    %10145 = vmatpush.msra.mxu0 %v9940
    %10146 = vmatpush.msra.mxu0 %v9939
    %10147 = vmatpush.msra.mxu0 %v9938
    %10148 = vmatpush.msra.mxu0 %v9937
    %10149 = vmatpush.msra.mxu0 %v9936
    %10150 = vmatpush.msra.mxu0 %v9935
    %10151 = vmatpush.msra.mxu0 %v9934
    %10152 = vmatpush.msra.mxu0 %v9933
    %10153 = vmatmul.f32.gmra.mxu0 %v9946
    %v10154 = vpop.f32.mrf.mxu0
    %v10155 = vadd.f32 %v9943, %v10154
    %10156 = vmatmul.f32.gmra.mxu0 %v9949
    %v10157 = vpop.f32.mrf.mxu0
    %v10158 = vadd.f32 %v9943, %v10157
    %10159 = vmatmul.f32.gmra.mxu0 %v9952
    %v10160 = vpop.f32.mrf.mxu0
    %v10161 = vadd.f32 %v9943, %v10160
    %10162 = vmatmul.f32.gmra.mxu0 %v9955
    %v10163 = vpop.f32.mrf.mxu0
    %v10164 = vadd.f32 %v9943, %v10163
    %10165 = vmatmul.f32.gmra.mxu0 %v9958
    %v10166 = vpop.f32.mrf.mxu0
    %v10167 = vadd.f32 %v9943, %v10166
    %10168 = vmatmul.f32.gmra.mxu0 %v9961
    %v10169 = vpop.f32.mrf.mxu0
    %v10170 = vadd.f32 %v9943, %v10169
    %10171 = vmatmul.f32.gmra.mxu0 %v9964
    %v10172 = vpop.f32.mrf.mxu0
    %v10173 = vadd.f32 %v9943, %v10172
    %10174 = vmatmul.f32.gmra.mxu0 %v9967
    %v10175 = vpop.f32.mrf.mxu0
    %v10176 = vadd.f32 %v9943, %v10175
    %10177 = vmatmul.f32.gmra.mxu0 %v9970
    %v10178 = vpop.f32.mrf.mxu0
    %v10179 = vadd.f32 %v9943, %v10178
    %10180 = vmatmul.f32.gmra.mxu0 %v9973
    %v10181 = vpop.f32.mrf.mxu0
    %v10182 = vadd.f32 %v9943, %v10181
    %10183 = vmatmul.f32.gmra.mxu0 %v9976
    %v10184 = vpop.f32.mrf.mxu0
    %v10185 = vadd.f32 %v9943, %v10184
    %10186 = vmatmul.f32.gmra.mxu0 %v9979
    %v10187 = vpop.f32.mrf.mxu0
    %v10188 = vadd.f32 %v9943, %v10187
    %10189 = vmatmul.f32.gmra.mxu0 %v9982
    %v10190 = vpop.f32.mrf.mxu0
    %v10191 = vadd.f32 %v9943, %v10190
    %10192 = vmatmul.f32.gmra.mxu0 %v9985
    %v10193 = vpop.f32.mrf.mxu0
    %v10194 = vadd.f32 %v9943, %v10193
    %10195 = vmatmul.f32.gmra.mxu0 %v9988
    %v10196 = vpop.f32.mrf.mxu0
    %v10197 = vadd.f32 %v9943, %v10196
    %10198 = vmatmul.f32.gmra.mxu0 %v9991
    %v10199 = vpop.f32.mrf.mxu0
    %v10200 = vadd.f32 %v9943, %v10199
    %10201 = vmatmul.f32.gmra.mxu0 %v9994
    %v10202 = vpop.f32.mrf.mxu0
    %v10203 = vadd.f32 %v9943, %v10202
    %10204 = vmatmul.f32.gmra.mxu0 %v9997
    %v10205 = vpop.f32.mrf.mxu0
    %v10206 = vadd.f32 %v9943, %v10205
    %10207 = vmatmul.f32.gmra.mxu0 %v10000
    %v10208 = vpop.f32.mrf.mxu0
    %v10209 = vadd.f32 %v9943, %v10208
    %10210 = vmatmul.f32.gmra.mxu0 %v10003
    %v10211 = vpop.f32.mrf.mxu0
    %v10212 = vadd.f32 %v9943, %v10211
    %10213 = vmatmul.f32.gmra.mxu0 %v10006
    %v10214 = vpop.f32.mrf.mxu0
    %v10215 = vadd.f32 %v9943, %v10214
    %10216 = vmatmul.f32.gmra.mxu0 %v10009
    %v10217 = vpop.f32.mrf.mxu0
    %v10218 = vadd.f32 %v9943, %v10217
    %10219 = vmatmul.f32.gmra.mxu0 %v10012
    %v10220 = vpop.f32.mrf.mxu0
    %v10221 = vadd.f32 %v9943, %v10220
    %10222 = vmatmul.f32.gmra.mxu0 %v10015
    %v10223 = vpop.f32.mrf.mxu0
    %v10224 = vadd.f32 %v9943, %v10223
    %10225 = vmatmul.f32.gmra.mxu0 %v10018
    %v10226 = vpop.f32.mrf.mxu0
    %v10227 = vadd.f32 %v9943, %v10226
    %10228 = vmatmul.f32.gmra.mxu0 %v10021
    %v10229 = vpop.f32.mrf.mxu0
    %v10230 = vadd.f32 %v9943, %v10229
    %10231 = vmatmul.f32.gmra.mxu0 %v10024
    %v10232 = vpop.f32.mrf.mxu0
    %v10233 = vadd.f32 %v9943, %v10232
    %10234 = vmatmul.f32.gmra.mxu0 %v10027
    %v10235 = vpop.f32.mrf.mxu0
    %v10236 = vadd.f32 %v9943, %v10235
    %10237 = vmatmul.f32.gmra.mxu0 %v10030
    %v10238 = vpop.f32.mrf.mxu0
    %v10239 = vadd.f32 %v9943, %v10238
    %10240 = vmatmul.f32.gmra.mxu0 %v10033
    %v10241 = vpop.f32.mrf.mxu0
    %v10242 = vadd.f32 %v9943, %v10241
    %10243 = vmatmul.f32.gmra.mxu0 %v10036
    %v10244 = vpop.f32.mrf.mxu0
    %v10245 = vadd.f32 %v9943, %v10244
    %10246 = vmatmul.f32.gmra.mxu0 %v10039
    %v10247 = vpop.f32.mrf.mxu0
    %v10248 = vadd.f32 %v9943, %v10247
    %10249 = vmatmul.f32.gmra.mxu0 %v10042
    %v10250 = vpop.f32.mrf.mxu0
    %v10251 = vadd.f32 %v9943, %v10250
    %10252 = vmatmul.f32.gmra.mxu0 %v10045
    %v10253 = vpop.f32.mrf.mxu0
    %v10254 = vadd.f32 %v9943, %v10253
    %10255 = vmatmul.f32.gmra.mxu0 %v10048
    %v10256 = vpop.f32.mrf.mxu0
    %v10257 = vadd.f32 %v9943, %v10256
    %10258 = vmatmul.f32.gmra.mxu0 %v10051
    %v10259 = vpop.f32.mrf.mxu0
    %v10260 = vadd.f32 %v9943, %v10259
    %10261 = vmatmul.f32.gmra.mxu0 %v10054
    %v10262 = vpop.f32.mrf.mxu0
    %v10263 = vadd.f32 %v9943, %v10262
    %10264 = vmatmul.f32.gmra.mxu0 %v10057
    %v10265 = vpop.f32.mrf.mxu0
    %v10266 = vadd.f32 %v9943, %v10265
    %10267 = vmatmul.f32.gmra.mxu0 %v10060
    %v10268 = vpop.f32.mrf.mxu0
    %v10269 = vadd.f32 %v9943, %v10268
    %10270 = vmatmul.f32.gmra.mxu0 %v10063
    %v10271 = vpop.f32.mrf.mxu0
    %v10272 = vadd.f32 %v9943, %v10271
    %10273 = vmatmul.f32.gmra.mxu0 %v10066
    %v10274 = vpop.f32.mrf.mxu0
    %v10275 = vadd.f32 %v9943, %v10274
    %10276 = vmatmul.f32.gmra.mxu0 %v10069
    %v10277 = vpop.f32.mrf.mxu0
    %v10278 = vadd.f32 %v9943, %v10277
    %10279 = vmatmul.f32.gmra.mxu0 %v10072
    %v10280 = vpop.f32.mrf.mxu0
    %v10281 = vadd.f32 %v9943, %v10280
    %10282 = vmatmul.f32.gmra.mxu0 %v10075
    %v10283 = vpop.f32.mrf.mxu0
    %v10284 = vadd.f32 %v9943, %v10283
    %10285 = vmatmul.f32.gmra.mxu0 %v10078
    %v10286 = vpop.f32.mrf.mxu0
    %v10287 = vadd.f32 %v9943, %v10286
    %10288 = vmatmul.f32.gmra.mxu0 %v10081
    %v10289 = vpop.f32.mrf.mxu0
    %v10290 = vadd.f32 %v9943, %v10289
    %10291 = vmatmul.f32.gmra.mxu0 %v10084
    %v10292 = vpop.f32.mrf.mxu0
    %v10293 = vadd.f32 %v9943, %v10292
    %10294 = vmatmul.f32.gmra.mxu0 %v10087
    %v10295 = vpop.f32.mrf.mxu0
    %v10296 = vadd.f32 %v9943, %v10295
    %10297 = vmatmul.f32.gmra.mxu0 %v10090
    %v10298 = vpop.f32.mrf.mxu0
    %v10299 = vadd.f32 %v9943, %v10298
    %10300 = vmatmul.f32.gmra.mxu0 %v10093
    %v10301 = vpop.f32.mrf.mxu0
    %v10302 = vadd.f32 %v9943, %v10301
    %10303 = vmatmul.f32.gmra.mxu0 %v10096
    %v10304 = vpop.f32.mrf.mxu0
    %v10305 = vadd.f32 %v9943, %v10304
    %10306 = vmatmul.f32.gmra.mxu0 %v10099
    %v10307 = vpop.f32.mrf.mxu0
    %v10308 = vadd.f32 %v9943, %v10307
    %10309 = vmatmul.f32.gmra.mxu0 %v10102
    %v10310 = vpop.f32.mrf.mxu0
    %v10311 = vadd.f32 %v9943, %v10310
    %10312 = vmatmul.f32.gmra.mxu0 %v10105
    %v10313 = vpop.f32.mrf.mxu0
    %v10314 = vadd.f32 %v9943, %v10313
    %10315 = vmatmul.f32.gmra.mxu0 %v10108
    %v10316 = vpop.f32.mrf.mxu0
    %v10317 = vadd.f32 %v9943, %v10316
    %10318 = vmatmul.f32.gmra.mxu0 %v10111
    %v10319 = vpop.f32.mrf.mxu0
    %v10320 = vadd.f32 %v9943, %v10319
    %10321 = vmatmul.f32.gmra.mxu0 %v10114
    %v10322 = vpop.f32.mrf.mxu0
    %v10323 = vadd.f32 %v9943, %v10322
    %10324 = vmatmul.f32.gmra.mxu0 %v10117
    %v10325 = vpop.f32.mrf.mxu0
    %v10326 = vadd.f32 %v9943, %v10325
    %10327 = vmatmul.f32.gmra.mxu0 %v10120
    %v10328 = vpop.f32.mrf.mxu0
    %v10329 = vadd.f32 %v9943, %v10328
    %10330 = vmatmul.f32.gmra.mxu0 %v10123
    %v10331 = vpop.f32.mrf.mxu0
    %v10332 = vadd.f32 %v9943, %v10331
    %10333 = vmatmul.f32.gmra.mxu0 %v10126
    %v10334 = vpop.f32.mrf.mxu0
    %v10335 = vadd.f32 %v9943, %v10334
    %10336 = vmatmul.f32.gmra.mxu0 %v10129
    %v10337 = vpop.f32.mrf.mxu0
    %v10338 = vadd.f32 %v9943, %v10337
    %10339 = vmatmul.f32.gmra.mxu0 %v10132
    %v10340 = vpop.f32.mrf.mxu0
    %v10341 = vadd.f32 %v9943, %v10340
    %10342 = vmatmul.f32.gmra.mxu0 %v10135
    %v10343 = vpop.f32.mrf.mxu0
    %v10344 = vadd.f32 %v9943, %v10343
    %10345 = vdwg.mxu0
    %10346 = vst [vmem:[#allocation3] sm:$0xff] %v10155
    %10347 = vst [vmem:[#allocation3 + $0x8] sm:$0xff] %v10158
    %10348 = vst [vmem:[#allocation3 + $0x10] sm:$0xff] %v10161
    %10349 = vst [vmem:[#allocation3 + $0x18] sm:$0xff] %v10164
    %10350 = vst [vmem:[#allocation3 + $0x20] sm:$0xff] %v10167
    %10351 = vst [vmem:[#allocation3 + $0x28] sm:$0xff] %v10170
    %10352 = vst [vmem:[#allocation3 + $0x30] sm:$0xff] %v10173
    %10353 = vst [vmem:[#allocation3 + $0x38] sm:$0xff] %v10176
    %10354 = vst [vmem:[#allocation3 + $0x40] sm:$0xff] %v10179
    %10355 = vst [vmem:[#allocation3 + $0x48] sm:$0xff] %v10182
    %10356 = vst [vmem:[#allocation3 + $0x50] sm:$0xff] %v10185
    %10357 = vst [vmem:[#allocation3 + $0x58] sm:$0xff] %v10188
    %10358 = vst [vmem:[#allocation3 + $0x60] sm:$0xff] %v10191
    %10359 = vst [vmem:[#allocation3 + $0x68] sm:$0xff] %v10194
    %10360 = vst [vmem:[#allocation3 + $0x70] sm:$0xff] %v10197
    %10361 = vst [vmem:[#allocation3 + $0x78] sm:$0xff] %v10200
    %10362 = vst [vmem:[#allocation3 + $0x80] sm:$0xff] %v10203
    %10363 = vst [vmem:[#allocation3 + $0x88] sm:$0xff] %v10206
    %10364 = vst [vmem:[#allocation3 + $0x90] sm:$0xff] %v10209
    %10365 = vst [vmem:[#allocation3 + $0x98] sm:$0xff] %v10212
    %10366 = vst [vmem:[#allocation3 + $0xa0] sm:$0xff] %v10215
    %10367 = vst [vmem:[#allocation3 + $0xa8] sm:$0xff] %v10218
    %10368 = vst [vmem:[#allocation3 + $0xb0] sm:$0xff] %v10221
    %10369 = vst [vmem:[#allocation3 + $0xb8] sm:$0xff] %v10224
    %10370 = vst [vmem:[#allocation3 + $0xc0] sm:$0xff] %v10227
    %10371 = vst [vmem:[#allocation3 + $0xc8] sm:$0xff] %v10230
    %10372 = vst [vmem:[#allocation3 + $0xd0] sm:$0xff] %v10233
    %10373 = vst [vmem:[#allocation3 + $0xd8] sm:$0xff] %v10236
    %10374 = vst [vmem:[#allocation3 + $0xe0] sm:$0xff] %v10239
    %10375 = vst [vmem:[#allocation3 + $0xe8] sm:$0xff] %v10242
    %10376 = vst [vmem:[#allocation3 + $0xf0] sm:$0xff] %v10245
    %10377 = vst [vmem:[#allocation3 + $0xf8] sm:$0xff] %v10248
    %10378 = vst [vmem:[#allocation3 + $0x100] sm:$0xff] %v10251
    %10379 = vst [vmem:[#allocation3 + $0x108] sm:$0xff] %v10254
    %10380 = vst [vmem:[#allocation3 + $0x110] sm:$0xff] %v10257
    %10381 = vst [vmem:[#allocation3 + $0x118] sm:$0xff] %v10260
    %10382 = vst [vmem:[#allocation3 + $0x120] sm:$0xff] %v10263
    %10383 = vst [vmem:[#allocation3 + $0x128] sm:$0xff] %v10266
    %10384 = vst [vmem:[#allocation3 + $0x130] sm:$0xff] %v10269
    %10385 = vst [vmem:[#allocation3 + $0x138] sm:$0xff] %v10272
    %10386 = vst [vmem:[#allocation3 + $0x140] sm:$0xff] %v10275
    %10387 = vst [vmem:[#allocation3 + $0x148] sm:$0xff] %v10278
    %10388 = vst [vmem:[#allocation3 + $0x150] sm:$0xff] %v10281
    %10389 = vst [vmem:[#allocation3 + $0x158] sm:$0xff] %v10284
    %10390 = vst [vmem:[#allocation3 + $0x160] sm:$0xff] %v10287
    %10391 = vst [vmem:[#allocation3 + $0x168] sm:$0xff] %v10290
    %10392 = vst [vmem:[#allocation3 + $0x170] sm:$0xff] %v10293
    %10393 = vst [vmem:[#allocation3 + $0x178] sm:$0xff] %v10296
    %10394 = vst [vmem:[#allocation3 + $0x180] sm:$0xff] %v10299
    %10395 = vst [vmem:[#allocation3 + $0x188] sm:$0xff] %v10302
    %10396 = vst [vmem:[#allocation3 + $0x190] sm:$0xff] %v10305
    %10397 = vst [vmem:[#allocation3 + $0x198] sm:$0xff] %v10308
    %10398 = vst [vmem:[#allocation3 + $0x1a0] sm:$0xff] %v10311
    %10399 = vst [vmem:[#allocation3 + $0x1a8] sm:$0xff] %v10314
    %10400 = vst [vmem:[#allocation3 + $0x1b0] sm:$0xff] %v10317
    %10401 = vst [vmem:[#allocation3 + $0x1b8] sm:$0xff] %v10320
    %10402 = vst [vmem:[#allocation3 + $0x1c0] sm:$0xff] %v10323
    %10403 = vst [vmem:[#allocation3 + $0x1c8] sm:$0xff] %v10326
    %10404 = vst [vmem:[#allocation3 + $0x1d0] sm:$0xff] %v10329
    %10405 = vst [vmem:[#allocation3 + $0x1d8] sm:$0xff] %v10332
    %10406 = vst [vmem:[#allocation3 + $0x1e0] sm:$0xff] %v10335
    %10407 = vst [vmem:[#allocation3 + $0x1e8] sm:$0xff] %v10338
    %10408 = vst [vmem:[#allocation3 + $0x1f0] sm:$0xff] %v10341
    %10409 = vst [vmem:[#allocation3 + $0x1f8] sm:$0xff] %v10344
    // Predicated region
    $region30: #{tpu_custom_call.1} parent=1 // pred_check
      _
    $region31: #{tpu_custom_call.1} parent=1 // pred_check_branch
      %10411 = sbr.rel (0) target = $region33
    $region32: #{tpu_custom_call.1} parent=1 // pred_region
      %10413 = vsyncadd [#allocation4], 0
      %s10414 = sshll.u32 [#allocation3], 4
      %s10415 = int_to_ptr.vmem [resolvable:$true] %s10414
      %s10416 = sshll.u32 %s7, 4
      %s10417 = int_to_ptr.hbm [resolvable:$true] %s10416
      %10422 = dma.vmem_to_hbm [thread:$0]  %s10415, 8192, %s10417, [#allocation4], 128, 128, 8
    $region33: #{tpu_custom_call.1} parent=1 // pred_fallthru
      _
    // Predicated region
    $region34: #{tpu_custom_call.1} parent=1 // pred_check
      _
    $region35: #{tpu_custom_call.1} parent=1 // pred_check_branch
      %10424 = sbr.rel (0) target = $region37
    $region36: #{tpu_custom_call.1} parent=1 // pred_region
      %10426 = dma.done [#allocation4], 8192
    $region37: #{tpu_custom_call.1} parent=1 // pred_fallthru
      _
    %10427 = vsyncpa [#allocation4], 1

</llo_original>
